<compile_context>
chip_gen: v7x
topology: tpu7x:2x2x1
jax: 0.10.0
libtpu: 0.0.40
codegen_flags: <defaults>
</compile_context>

<pallas_src>
import functools

import jax
import jax.numpy as jnp
from jax import lax
from jax.experimental import pallas as pl
from jax.experimental.pallas import tpu as pltpu


# --------------------------------------------------------------------------------------
# Fused encoder kernel (all convs + pool(s) + global mean + 1x1 head, one image per step)
# --------------------------------------------------------------------------------------
def _make_encoder_kernel(layer_meta):
    """layer_meta[i]: dict(H, W, cin, cout, pool, gmean) for conv layer i (static)."""
    n_layers = len(layer_meta)

    def kernel(*refs):
        x_ref = refs[0]
        w_refs = refs[1:1 + n_layers]                       # packed (9*cin, cout) bf16
        b_refs = refs[1 + n_layers:1 + 2 * n_layers]        # (1, cout) f32
        hw_ref = refs[1 + 2 * n_layers]                     # (C_last, 2*latent) f32
        hb_ref = refs[2 + 2 * n_layers]                     # (1, 2*latent) f32
        out_ref = refs[3 + 2 * n_layers]                    # (1, 1, 2*latent) f32
        pool_scr = refs[4 + 2 * n_layers]                   # VMEM (M0, Cmax) f32

        feat = x_ref[0]                                     # (H0*W0, Cin0) bf16

        for li, meta in enumerate(layer_meta):
            H, W = meta["H"], meta["W"]
            cin, cout = meta["cin"], meta["cout"]
            M = H * W
            G = W + 8                                       # zero guard (>= W+1)

            # --- im2col: 9 sublane-shifted slices of a zero-guarded flat buffer -------
            zeros_g = jnp.zeros((G, cin), feat.dtype)
            padded = jnp.concatenate([zeros_g, feat, zeros_g], axis=0)   # (2G+M, cin)
            col_idx = lax.broadcasted_iota(jnp.int32, (M, 1), 0) % W
            m_left = col_idx >= 1                           # valid for ox = -1
            m_right = col_idx <= W - 2                      # valid for ox = +1

            taps = []
            for oy in (-1, 0, 1):
                for ox in (-1, 0, 1):
                    start = G + oy * W + ox                 # static offset
                    t = padded[start:start + M, :]          # (M, cin)
                    if ox == -1:
                        t = jnp.where(m_left, t, jnp.zeros_like(t))
                    elif ox == 1:
                        t = jnp.where(m_right, t, jnp.zeros_like(t))
                    taps.append(t)
            col = jnp.concatenate(taps, axis=1)             # (M, 9*cin) bf16

            # --- one deep-K matmul + bias + ReLU (f32 accumulation) -------------------
            acc = jnp.dot(col, w_refs[li][...],
                          preferred_element_type=jnp.float32)            # (M, cout)
            y = jnp.maximum(acc + b_refs[li][...], 0.0)                  # f32

            if meta["gmean"]:
                # Global spatial mean + fused 1x1 head: only (1, 2*latent) leaves VMEM.
                mean = jnp.sum(y, axis=0, keepdims=True) * (1.0 / M)     # (1, cout) f32
                mls = jnp.dot(mean, hw_ref[...],
                              preferred_element_type=jnp.float32) + hb_ref[...]
                out_ref[0, :, :] = mls
            elif meta["pool"]:
                # 2x2 avg-pool: horizontal pairs via stride-2 sublane reads of scratch,
                # vertical pairs via blocked row adds.  All f32, no pooling matrix.
                Ho, Wo = H // 2, W // 2
                pool_scr[0:M, 0:cout] = y
                even = pool_scr[pl.ds(0, M // 2, 2), pl.ds(0, cout)]     # rows 0,2,4,..
                odd = pool_scr[pl.ds(1, M // 2, 2), pl.ds(0, cout)]      # rows 1,3,5,..
                hsum = even + odd                                        # (H*Wo, cout)
                parts = []
                for yo in range(Ho):
                    top = hsum[(2 * yo) * Wo:(2 * yo) * Wo + Wo, :]
                    bot = hsum[(2 * yo + 1) * Wo:(2 * yo + 1) * Wo + Wo, :]
                    parts.append(top + bot)
                pooled = jnp.concatenate(parts, axis=0) * 0.25           # (Ho*Wo, cout)
                feat = pooled.astype(jnp.bfloat16)
            else:
                feat = y.astype(jnp.bfloat16)

    return kernel


# --------------------------------------------------------------------------------------
# Forward pass (prior if segm is None, posterior otherwise)
# --------------------------------------------------------------------------------------
def axis_aligned_conv_gaussian_forward(x_nchw, params, latent_dim, segm_nchw=None):
    if segm_nchw is not None:
        x_nchw = jnp.concatenate([x_nchw, segm_nchw], axis=1)            # posterior concat

    B, Cin, H0, W0 = x_nchw.shape
    # Contiguous channels-last slab per image -> dense DMA burst for the Cin=4 layer 0.
    x_flat = jnp.transpose(x_nchw, (0, 2, 3, 1)).reshape(B, H0 * W0, Cin)
    x_flat = x_flat.astype(jnp.bfloat16)

    # Static per-layer metadata + packed weights (im2col layout, bf16).
    blocks = params["blocks"]
    layer_meta, w_list, b_list = [], [], []
    curH, curW = H0, W0
    for bi, block in enumerate(blocks):
        for ci, (w, b) in enumerate(block):
            cin, cout = w.shape[2], w.shape[3]
            last_of_block = ci == len(block) - 1
            last_block = bi == len(blocks) - 1
            layer_meta.append(dict(H=curH, W=curW, cin=cin, cout=cout,
                                   pool=last_of_block and not last_block,
                                   gmean=last_of_block and last_block))
            w_list.append(w.reshape(9 * cin, cout).astype(jnp.bfloat16))  # (9*cin, cout)
            b_list.append(b.astype(jnp.float32))                          # (1, cout)
            if last_of_block and not last_block:
                curH, curW = curH // 2, curW // 2
    head_w = params["head_w"].astype(jnp.float32)                          # (C_last, 2L)
    head_b = params["head_b"].reshape(1, -1).astype(jnp.float32)           # (1, 2L)

    kernel = _make_encoder_kernel(layer_meta)

    in_specs = [pl.BlockSpec((1, H0 * W0, Cin), lambda b_: (b_, 0, 0))]
    for wmat in w_list:
        in_specs.append(pl.BlockSpec(wmat.shape, lambda b_: (0, 0)))      # resident
    for bvec in b_list:
        in_specs.append(pl.BlockSpec(bvec.shape, lambda b_: (0, 0)))
    in_specs.append(pl.BlockSpec(head_w.shape, lambda b_: (0, 0)))
    in_specs.append(pl.BlockSpec(head_b.shape, lambda b_: (0, 0)))

    out_shape = jax.ShapeDtypeStruct((B, 1, 2 * latent_dim), jnp.float32)
    out_spec = pl.BlockSpec((1, 1, 2 * latent_dim), lambda b_: (b_, 0, 0))

    max_c = max(m["cout"] for m in layer_meta)
    scratch_shapes = [pltpu.VMEM((H0 * W0, max_c), jnp.float32)]           # pool staging

    mls = pl.pallas_call(
        kernel,
        out_shape=out_shape,
        grid=(B,),
        in_specs=in_specs,
        out_specs=out_spec,
        scratch_shapes=scratch_shapes,
        compiler_params=pltpu.CompilerParams(
            dimension_semantics=("parallel",)),                           # batch across TCs
    )(x_flat, *w_list, *b_list, head_w, head_b)

    mls = mls.reshape(B, 2 * latent_dim)
    mu = mls[:, :latent_dim]
    log_sigma = mls[:, latent_dim:]
    # TODO(synk): torch.distributions Independent(Normal(mu, exp(log_sigma)), 1) has no
    # Pallas/JAX-array equivalent; caller builds the distribution from (mu, log_sigma).
    return mu, log_sigma


# --------------------------------------------------------------------------------------
# Pure-JAX reference (identical bf16/f32 cast points)
# --------------------------------------------------------------------------------------
def axis_aligned_conv_gaussian_reference(x_nchw, params, latent_dim, segm_nchw=None):
    if segm_nchw is not None:
        x_nchw = jnp.concatenate([x_nchw, segm_nchw], axis=1)
    h = jnp.transpose(x_nchw, (0, 2, 3, 1)).astype(jnp.bfloat16)
    blocks = params["blocks"]
    for bi, block in enumerate(blocks):
        for ci, (w, b) in enumerate(block):
            y = lax.conv_general_dilated(
                h, w.astype(jnp.bfloat16),
                window_strides=(1, 1), padding=((1, 1), (1, 1)),
                dimension_numbers=("NHWC", "HWIO", "NHWC"),
                preferred_element_type=jnp.float32)
            y = jnp.maximum(y + b.reshape(1, 1, 1, -1), 0.0)
            last_of_block = ci == len(block) - 1
            if last_of_block and bi == len(blocks) - 1:
                h = jnp.mean(y, axis=(1, 2))                               # (B, C) f32
            elif last_of_block:
                Bn, Hn, Wn, Cn = y.shape
                h = y.reshape(Bn, Hn // 2, 2, Wn // 2, 2, Cn).mean(axis=(2, 4))
                h = h.astype(jnp.bfloat16)
            else:
                h = y.astype(jnp.bfloat16)
    mls = h @ params["head_w"] + params["head_b"]
    return mls[:, :latent_dim], mls[:, latent_dim:]


# --------------------------------------------------------------------------------------
# Deterministic synthetic parameters (stand-in for the torch initializers)
# --------------------------------------------------------------------------------------
def init_params(key, input_channels, num_filters, no_convs_per_block, latent_dim,
                num_classes, posterior=False):
    c_prev = input_channels + (num_classes if posterior else 0)
    params = {"blocks": []}
    k = key
    for nf in num_filters:
        block = []
        for j in range(no_convs_per_block):
            c_in = c_prev if j == 0 else nf
            k, kw, kb = jax.random.split(k, 3)
            # weights stored as (kh, kw, Cin, Cout) == torch weight.permute(2, 3, 1, 0)
            w = jax.random.normal(kw, (3, 3, c_in, nf), jnp.float32) * (2.0 / (9 * c_in)) ** 0.5
            b = 0.01 * jax.random.normal(kb, (1, nf), jnp.float32)
            block.append((w, b))
        params["blocks"].append(block)
        c_prev = nf
    k, kw, kb = jax.random.split(k, 3)
    params["head_w"] = (jax.random.normal(kw, (num_filters[-1], 2 * latent_dim), jnp.float32)
                        * (2.0 / num_filters[-1]) ** 0.5)
    params["head_b"] = jax.random.normal(kb, (2 * latent_dim,), jnp.float32)
    return params


if __name__ == "__main__":
    # Small config consistent with the module: prior net (segm=None),
    # num_filters=[32, 64], no_convs_per_block=2, latent_dim=6, batch=2, 4x16x16 input.
    B, Cin, Hin, Win = 2, 4, 16, 16
    num_filters = [32, 64]
    no_convs_per_block = 2
    latent_dim = 6
    num_classes = 4          # only used for the posterior channel concat

    key = jax.random.PRNGKey(0)
    kx, kp = jax.random.split(key)
    x = jax.random.normal(kx, (B, Cin, Hin, Win), jnp.float32)             # NCHW like torch

    params = init_params(kp, Cin, num_filters, no_convs_per_block, latent_dim,
                         num_classes, posterior=False)

    fwd = jax.jit(functools.partial(axis_aligned_conv_gaussian_forward,
                                    latent_dim=latent_dim))
    mu, log_sigma = jax.block_until_ready(fwd(x, params))
    sigma = jnp.exp(log_sigma)   # scale of the Independent(Normal(mu, sigma), 1) dist

    mu_ref, ls_ref = axis_aligned_conv_gaussian_reference(x, params, latent_dim)
    assert mu.shape == (B, latent_dim) and log_sigma.shape == (B, latent_dim)
    assert float(jnp.max(jnp.abs(mu - mu_ref))) < 2e-2, "mu mismatch vs reference"
    assert float(jnp.max(jnp.abs(log_sigma - ls_ref))) < 2e-2, "log_sigma mismatch vs reference"
    assert bool(jnp.all(sigma > 0.0))

    print("KERNEL_OK")
</pallas_src>

<mosaic_0001>
module attributes {stable_mosaic.version = 11 : i64} {
  func.func @kernel(%arg0: i32, %arg1: memref<1x256x4xbf16, #tpu.memory_space<vmem>>, %arg2: memref<36x32xbf16, #tpu.memory_space<vmem>>, %arg3: memref<288x32xbf16, #tpu.memory_space<vmem>>, %arg4: memref<288x64xbf16, #tpu.memory_space<vmem>>, %arg5: memref<576x64xbf16, #tpu.memory_space<vmem>>, %arg6: memref<1x32xf32, #tpu.memory_space<vmem>>, %arg7: memref<1x32xf32, #tpu.memory_space<vmem>>, %arg8: memref<1x64xf32, #tpu.memory_space<vmem>>, %arg9: memref<1x64xf32, #tpu.memory_space<vmem>>, %arg10: memref<64x12xf32, #tpu.memory_space<vmem>>, %arg11: memref<1x12xf32, #tpu.memory_space<vmem>>, %arg12: memref<1x1x12xf32, #tpu.memory_space<vmem>>, %arg13: memref<256x64xf32, #tpu.memory_space<vmem>>) attributes {dimension_semantics = [#tpu.dimension_semantics<parallel>], iteration_bounds = array<i64: 2>, scalar_prefetch = 0 : i64, scratch_operands = 1 : i64, tpu.core_type = #tpu.core_type<tc>, window_params = [{transform_indices = @transform_0, window_bounds = array<i64: 1, 256, 4>}, {pipeline_mode = #tpu.pipeline_mode<synchronous>, transform_indices = @transform_1, window_bounds = array<i64: 36, 32>}, {pipeline_mode = #tpu.pipeline_mode<synchronous>, transform_indices = @transform_2, window_bounds = array<i64: 288, 32>}, {pipeline_mode = #tpu.pipeline_mode<synchronous>, transform_indices = @transform_3, window_bounds = array<i64: 288, 64>}, {pipeline_mode = #tpu.pipeline_mode<synchronous>, transform_indices = @transform_4, window_bounds = array<i64: 576, 64>}, {pipeline_mode = #tpu.pipeline_mode<synchronous>, transform_indices = @transform_5, window_bounds = array<i64: 1, 32>}, {pipeline_mode = #tpu.pipeline_mode<synchronous>, transform_indices = @transform_6, window_bounds = array<i64: 1, 32>}, {pipeline_mode = #tpu.pipeline_mode<synchronous>, transform_indices = @transform_7, window_bounds = array<i64: 1, 64>}, {pipeline_mode = #tpu.pipeline_mode<synchronous>, transform_indices = @transform_8, window_bounds = array<i64: 1, 64>}, {pipeline_mode = #tpu.pipeline_mode<synchronous>, transform_indices = @transform_9, window_bounds = array<i64: 64, 12>}, {pipeline_mode = #tpu.pipeline_mode<synchronous>, transform_indices = @transform_10, window_bounds = array<i64: 1, 12>}, {transform_indices = @transform_11, window_bounds = array<i64: 1, 1, 12>}]} {
    %c0 = arith.constant 0 : index
    %c0_0 = arith.constant 0 : index
    %c0_1 = arith.constant 0 : index
    %0 = vector.load %arg1[%c0, %c0_0, %c0_1] : memref<1x256x4xbf16, #tpu.memory_space<vmem>>, vector<1x256x4xbf16>
    %1 = vector.shape_cast %0 : vector<1x256x4xbf16> to vector<256x4xbf16>
    %cst = arith.constant 0.000000e+00 : bf16
    %2 = vector.broadcast %cst : bf16 to vector<24x4xbf16>
    %3 = tpu.concatenate %2, %1, %2 in 0 : vector<24x4xbf16>, vector<256x4xbf16>, vector<24x4xbf16> -> vector<304x4xbf16>
    %4 = tpu.iota {dimensions = array<i32: 0>} : vector<256x1xi32>
    %c16_i32 = arith.constant 16 : i32
    %c0_i32 = arith.constant 0 : i32
    %5 = arith.cmpi eq, %c16_i32, %c0_i32 : i32
    %c1_i32 = arith.constant 1 : i32
    %6 = arith.select %5, %c1_i32, %c16_i32 : i32
    %7 = vector.broadcast %6 : i32 to vector<256x1xi32>
    %8 = arith.remsi %4, %7 : vector<256x1xi32>
    %c0_i32_2 = arith.constant 0 : i32
    %9 = vector.broadcast %c0_i32_2 : i32 to vector<256x1xi32>
    %10 = arith.cmpi ne, %8, %9 : vector<256x1xi32>
    %c0_i32_3 = arith.constant 0 : i32
    %11 = vector.broadcast %c0_i32_3 : i32 to vector<256x1xi32>
    %12 = arith.cmpi slt, %8, %11 : vector<256x1xi32>
    %c0_i32_4 = arith.constant 0 : i32
    %13 = arith.cmpi slt, %6, %c0_i32_4 : i32
    %14 = vector.broadcast %13 : i1 to vector<256x1xi1>
    %15 = vector.broadcast %14 : vector<256x1xi1> to vector<256x1xi1>
    %16 = arith.xori %12, %15 : vector<256x1xi1>
    %17 = arith.andi %16, %10 : vector<256x1xi1>
    %18 = vector.broadcast %6 : i32 to vector<256x1xi32>
    %19 = arith.addi %8, %18 : vector<256x1xi32>
    %20 = arith.select %17, %19, %8 : vector<256x1xi1>, vector<256x1xi32>
    %c1_i32_5 = arith.constant 1 : i32
    %21 = vector.broadcast %c1_i32_5 : i32 to vector<256x1xi32>
    %22 = arith.cmpi sge, %20, %21 : vector<256x1xi32>
    %c14_i32 = arith.constant 14 : i32
    %23 = vector.broadcast %c14_i32 : i32 to vector<256x1xi32>
    %24 = arith.cmpi sle, %20, %23 : vector<256x1xi32>
    %25 = vector.extract_strided_slice %3 {offsets = [7, 0], sizes = [256, 4], strides = [1, 1]} : vector<304x4xbf16> to vector<256x4xbf16>
    %cst_6 = arith.constant 0.000000e+00 : bf16
    %26 = vector.broadcast %cst_6 : bf16 to vector<256x4xbf16>
    %27 = vector.shape_cast %22 : vector<256x1xi1> to vector<256x1xi1>
    %28 = vector.broadcast %27 : vector<256x1xi1> to vector<256x4xi1>
    %29 = arith.select %28, %25, %26 : vector<256x4xi1>, vector<256x4xbf16>
    %30 = vector.extract_strided_slice %3 {offsets = [8, 0], sizes = [256, 4], strides = [1, 1]} : vector<304x4xbf16> to vector<256x4xbf16>
    %31 = vector.extract_strided_slice %3 {offsets = [9, 0], sizes = [256, 4], strides = [1, 1]} : vector<304x4xbf16> to vector<256x4xbf16>
    %cst_7 = arith.constant 0.000000e+00 : bf16
    %32 = vector.broadcast %cst_7 : bf16 to vector<256x4xbf16>
    %33 = vector.shape_cast %24 : vector<256x1xi1> to vector<256x1xi1>
    %34 = vector.broadcast %33 : vector<256x1xi1> to vector<256x4xi1>
    %35 = arith.select %34, %31, %32 : vector<256x4xi1>, vector<256x4xbf16>
    %36 = vector.extract_strided_slice %3 {offsets = [23, 0], sizes = [256, 4], strides = [1, 1]} : vector<304x4xbf16> to vector<256x4xbf16>
    %cst_8 = arith.constant 0.000000e+00 : bf16
    %37 = vector.broadcast %cst_8 : bf16 to vector<256x4xbf16>
    %38 = vector.shape_cast %22 : vector<256x1xi1> to vector<256x1xi1>
    %39 = vector.broadcast %38 : vector<256x1xi1> to vector<256x4xi1>
    %40 = arith.select %39, %36, %37 : vector<256x4xi1>, vector<256x4xbf16>
    %41 = vector.extract_strided_slice %3 {offsets = [24, 0], sizes = [256, 4], strides = [1, 1]} : vector<304x4xbf16> to vector<256x4xbf16>
    %42 = vector.extract_strided_slice %3 {offsets = [25, 0], sizes = [256, 4], strides = [1, 1]} : vector<304x4xbf16> to vector<256x4xbf16>
    %cst_9 = arith.constant 0.000000e+00 : bf16
    %43 = vector.broadcast %cst_9 : bf16 to vector<256x4xbf16>
    %44 = vector.shape_cast %24 : vector<256x1xi1> to vector<256x1xi1>
    %45 = vector.broadcast %44 : vector<256x1xi1> to vector<256x4xi1>
    %46 = arith.select %45, %42, %43 : vector<256x4xi1>, vector<256x4xbf16>
    %47 = vector.extract_strided_slice %3 {offsets = [39, 0], sizes = [256, 4], strides = [1, 1]} : vector<304x4xbf16> to vector<256x4xbf16>
    %cst_10 = arith.constant 0.000000e+00 : bf16
    %48 = vector.broadcast %cst_10 : bf16 to vector<256x4xbf16>
    %49 = vector.shape_cast %22 : vector<256x1xi1> to vector<256x1xi1>
    %50 = vector.broadcast %49 : vector<256x1xi1> to vector<256x4xi1>
    %51 = arith.select %50, %47, %48 : vector<256x4xi1>, vector<256x4xbf16>
    %52 = vector.extract_strided_slice %3 {offsets = [40, 0], sizes = [256, 4], strides = [1, 1]} : vector<304x4xbf16> to vector<256x4xbf16>
    %53 = vector.extract_strided_slice %3 {offsets = [41, 0], sizes = [256, 4], strides = [1, 1]} : vector<304x4xbf16> to vector<256x4xbf16>
    %cst_11 = arith.constant 0.000000e+00 : bf16
    %54 = vector.broadcast %cst_11 : bf16 to vector<256x4xbf16>
    %55 = vector.shape_cast %24 : vector<256x1xi1> to vector<256x1xi1>
    %56 = vector.broadcast %55 : vector<256x1xi1> to vector<256x4xi1>
    %57 = arith.select %56, %53, %54 : vector<256x4xi1>, vector<256x4xbf16>
    %58 = tpu.concatenate %29, %30, %35, %40, %41, %46, %51, %52, %57 in 1 : vector<256x4xbf16>, vector<256x4xbf16>, vector<256x4xbf16>, vector<256x4xbf16>, vector<256x4xbf16>, vector<256x4xbf16>, vector<256x4xbf16>, vector<256x4xbf16>, vector<256x4xbf16> -> vector<256x36xbf16>
    %c0_12 = arith.constant 0 : index
    %c0_13 = arith.constant 0 : index
    %59 = vector.load %arg2[%c0_12, %c0_13] : memref<36x32xbf16, #tpu.memory_space<vmem>>, vector<36x32xbf16>
    %cst_14 = arith.constant dense<0.000000e+00> : vector<256x32xf32>
    %60 = tpu.matmul %58, %59, %cst_14 {dimension_numbers = #tpu.dot_dimension_numbers<[1], [0], [0], [1], [0, 0, 1, 1], [], []>} : vector<256x36xbf16>, vector<36x32xbf16>, vector<256x32xf32> -> vector<256x32xf32>
    %c0_15 = arith.constant 0 : index
    %c0_16 = arith.constant 0 : index
    %61 = vector.load %arg6[%c0_15, %c0_16] : memref<1x32xf32, #tpu.memory_space<vmem>>, vector<1x32xf32>
    %62 = vector.broadcast %61 : vector<1x32xf32> to vector<256x32xf32>
    %63 = arith.addf %60, %62 : vector<256x32xf32>
    %cst_17 = arith.constant 0.000000e+00 : f32
    %64 = vector.broadcast %cst_17 : f32 to vector<256x32xf32>
    %65 = arith.maximumf %63, %64 : vector<256x32xf32>
    %66 = arith.truncf %65 : vector<256x32xf32> to vector<256x32xbf16>
    %cst_18 = arith.constant 0.000000e+00 : bf16
    %67 = vector.broadcast %cst_18 : bf16 to vector<24x32xbf16>
    %68 = tpu.concatenate %67, %66, %67 in 0 : vector<24x32xbf16>, vector<256x32xbf16>, vector<24x32xbf16> -> vector<304x32xbf16>
    %69 = tpu.iota {dimensions = array<i32: 0>} : vector<256x1xi32>
    %c16_i32_19 = arith.constant 16 : i32
    %c0_i32_20 = arith.constant 0 : i32
    %70 = arith.cmpi eq, %c16_i32_19, %c0_i32_20 : i32
    %c1_i32_21 = arith.constant 1 : i32
    %71 = arith.select %70, %c1_i32_21, %c16_i32_19 : i32
    %72 = vector.broadcast %71 : i32 to vector<256x1xi32>
    %73 = arith.remsi %69, %72 : vector<256x1xi32>
    %c0_i32_22 = arith.constant 0 : i32
    %74 = vector.broadcast %c0_i32_22 : i32 to vector<256x1xi32>
    %75 = arith.cmpi ne, %73, %74 : vector<256x1xi32>
    %c0_i32_23 = arith.constant 0 : i32
    %76 = vector.broadcast %c0_i32_23 : i32 to vector<256x1xi32>
    %77 = arith.cmpi slt, %73, %76 : vector<256x1xi32>
    %c0_i32_24 = arith.constant 0 : i32
    %78 = arith.cmpi slt, %71, %c0_i32_24 : i32
    %79 = vector.broadcast %78 : i1 to vector<256x1xi1>
    %80 = vector.broadcast %79 : vector<256x1xi1> to vector<256x1xi1>
    %81 = arith.xori %77, %80 : vector<256x1xi1>
    %82 = arith.andi %81, %75 : vector<256x1xi1>
    %83 = vector.broadcast %71 : i32 to vector<256x1xi32>
    %84 = arith.addi %73, %83 : vector<256x1xi32>
    %85 = arith.select %82, %84, %73 : vector<256x1xi1>, vector<256x1xi32>
    %c1_i32_25 = arith.constant 1 : i32
    %86 = vector.broadcast %c1_i32_25 : i32 to vector<256x1xi32>
    %87 = arith.cmpi sge, %85, %86 : vector<256x1xi32>
    %c14_i32_26 = arith.constant 14 : i32
    %88 = vector.broadcast %c14_i32_26 : i32 to vector<256x1xi32>
    %89 = arith.cmpi sle, %85, %88 : vector<256x1xi32>
    %90 = vector.extract_strided_slice %68 {offsets = [7, 0], sizes = [256, 32], strides = [1, 1]} : vector<304x32xbf16> to vector<256x32xbf16>
    %cst_27 = arith.constant 0.000000e+00 : bf16
    %91 = vector.broadcast %cst_27 : bf16 to vector<256x32xbf16>
    %92 = vector.shape_cast %87 : vector<256x1xi1> to vector<256x1xi1>
    %93 = vector.broadcast %92 : vector<256x1xi1> to vector<256x32xi1>
    %94 = arith.select %93, %90, %91 : vector<256x32xi1>, vector<256x32xbf16>
    %95 = vector.extract_strided_slice %68 {offsets = [8, 0], sizes = [256, 32], strides = [1, 1]} : vector<304x32xbf16> to vector<256x32xbf16>
    %96 = vector.extract_strided_slice %68 {offsets = [9, 0], sizes = [256, 32], strides = [1, 1]} : vector<304x32xbf16> to vector<256x32xbf16>
    %cst_28 = arith.constant 0.000000e+00 : bf16
    %97 = vector.broadcast %cst_28 : bf16 to vector<256x32xbf16>
    %98 = vector.shape_cast %89 : vector<256x1xi1> to vector<256x1xi1>
    %99 = vector.broadcast %98 : vector<256x1xi1> to vector<256x32xi1>
    %100 = arith.select %99, %96, %97 : vector<256x32xi1>, vector<256x32xbf16>
    %101 = vector.extract_strided_slice %68 {offsets = [23, 0], sizes = [256, 32], strides = [1, 1]} : vector<304x32xbf16> to vector<256x32xbf16>
    %cst_29 = arith.constant 0.000000e+00 : bf16
    %102 = vector.broadcast %cst_29 : bf16 to vector<256x32xbf16>
    %103 = vector.shape_cast %87 : vector<256x1xi1> to vector<256x1xi1>
    %104 = vector.broadcast %103 : vector<256x1xi1> to vector<256x32xi1>
    %105 = arith.select %104, %101, %102 : vector<256x32xi1>, vector<256x32xbf16>
    %106 = vector.extract_strided_slice %68 {offsets = [24, 0], sizes = [256, 32], strides = [1, 1]} : vector<304x32xbf16> to vector<256x32xbf16>
    %107 = vector.extract_strided_slice %68 {offsets = [25, 0], sizes = [256, 32], strides = [1, 1]} : vector<304x32xbf16> to vector<256x32xbf16>
    %cst_30 = arith.constant 0.000000e+00 : bf16
    %108 = vector.broadcast %cst_30 : bf16 to vector<256x32xbf16>
    %109 = vector.shape_cast %89 : vector<256x1xi1> to vector<256x1xi1>
    %110 = vector.broadcast %109 : vector<256x1xi1> to vector<256x32xi1>
    %111 = arith.select %110, %107, %108 : vector<256x32xi1>, vector<256x32xbf16>
    %112 = vector.extract_strided_slice %68 {offsets = [39, 0], sizes = [256, 32], strides = [1, 1]} : vector<304x32xbf16> to vector<256x32xbf16>
    %cst_31 = arith.constant 0.000000e+00 : bf16
    %113 = vector.broadcast %cst_31 : bf16 to vector<256x32xbf16>
    %114 = vector.shape_cast %87 : vector<256x1xi1> to vector<256x1xi1>
    %115 = vector.broadcast %114 : vector<256x1xi1> to vector<256x32xi1>
    %116 = arith.select %115, %112, %113 : vector<256x32xi1>, vector<256x32xbf16>
    %117 = vector.extract_strided_slice %68 {offsets = [40, 0], sizes = [256, 32], strides = [1, 1]} : vector<304x32xbf16> to vector<256x32xbf16>
    %118 = vector.extract_strided_slice %68 {offsets = [41, 0], sizes = [256, 32], strides = [1, 1]} : vector<304x32xbf16> to vector<256x32xbf16>
    %cst_32 = arith.constant 0.000000e+00 : bf16
    %119 = vector.broadcast %cst_32 : bf16 to vector<256x32xbf16>
    %120 = vector.shape_cast %89 : vector<256x1xi1> to vector<256x1xi1>
    %121 = vector.broadcast %120 : vector<256x1xi1> to vector<256x32xi1>
    %122 = arith.select %121, %118, %119 : vector<256x32xi1>, vector<256x32xbf16>
    %123 = tpu.concatenate %94, %95, %100, %105, %106, %111, %116, %117, %122 in 1 : vector<256x32xbf16>, vector<256x32xbf16>, vector<256x32xbf16>, vector<256x32xbf16>, vector<256x32xbf16>, vector<256x32xbf16>, vector<256x32xbf16>, vector<256x32xbf16>, vector<256x32xbf16> -> vector<256x288xbf16>
    %c0_33 = arith.constant 0 : index
    %c0_34 = arith.constant 0 : index
    %124 = vector.load %arg3[%c0_33, %c0_34] : memref<288x32xbf16, #tpu.memory_space<vmem>>, vector<288x32xbf16>
    %cst_35 = arith.constant dense<0.000000e+00> : vector<256x32xf32>
    %125 = tpu.matmul %123, %124, %cst_35 {dimension_numbers = #tpu.dot_dimension_numbers<[1], [0], [0], [1], [0, 0, 1, 1], [], []>} : vector<256x288xbf16>, vector<288x32xbf16>, vector<256x32xf32> -> vector<256x32xf32>
    %c0_36 = arith.constant 0 : index
    %c0_37 = arith.constant 0 : index
    %126 = vector.load %arg7[%c0_36, %c0_37] : memref<1x32xf32, #tpu.memory_space<vmem>>, vector<1x32xf32>
    %127 = vector.broadcast %126 : vector<1x32xf32> to vector<256x32xf32>
    %128 = arith.addf %125, %127 : vector<256x32xf32>
    %cst_38 = arith.constant 0.000000e+00 : f32
    %129 = vector.broadcast %cst_38 : f32 to vector<256x32xf32>
    %130 = arith.maximumf %128, %129 : vector<256x32xf32>
    %c0_39 = arith.constant 0 : index
    %c0_40 = arith.constant 0 : index
    %131 = vector.load %arg13[%c0_39, %c0_40] : memref<256x64xf32, #tpu.memory_space<vmem>>, vector<256x32xf32>
    tpu.vector_store %arg13[%c0_39, %c0_40], %130 {strides = array<i32>} : memref<256x64xf32, #tpu.memory_space<vmem>>, vector<256x32xf32>,
    %c0_41 = arith.constant 0 : index
    %c0_42 = arith.constant 0 : index
    %132 = tpu.strided_load %arg13[%c0_41, %c0_42] {strides = array<i32: 2, 1>} : memref<256x64xf32, #tpu.memory_space<vmem>>, vector<128x32xf32>
    %c1 = arith.constant 1 : index
    %c0_43 = arith.constant 0 : index
    %133 = tpu.strided_load %arg13[%c1, %c0_43] {strides = array<i32: 2, 1>} : memref<256x64xf32, #tpu.memory_space<vmem>>, vector<128x32xf32>
    %134 = arith.addf %132, %133 : vector<128x32xf32>
    %135 = vector.extract_strided_slice %134 {offsets = [0, 0], sizes = [8, 32], strides = [1, 1]} : vector<128x32xf32> to vector<8x32xf32>
    %136 = vector.extract_strided_slice %134 {offsets = [8, 0], sizes = [8, 32], strides = [1, 1]} : vector<128x32xf32> to vector<8x32xf32>
    %137 = arith.addf %135, %136 : vector<8x32xf32>
    %138 = vector.extract_strided_slice %134 {offsets = [16, 0], sizes = [8, 32], strides = [1, 1]} : vector<128x32xf32> to vector<8x32xf32>
    %139 = vector.extract_strided_slice %134 {offsets = [24, 0], sizes = [8, 32], strides = [1, 1]} : vector<128x32xf32> to vector<8x32xf32>
    %140 = arith.addf %138, %139 : vector<8x32xf32>
    %141 = vector.extract_strided_slice %134 {offsets = [32, 0], sizes = [8, 32], strides = [1, 1]} : vector<128x32xf32> to vector<8x32xf32>
    %142 = vector.extract_strided_slice %134 {offsets = [40, 0], sizes = [8, 32], strides = [1, 1]} : vector<128x32xf32> to vector<8x32xf32>
    %143 = arith.addf %141, %142 : vector<8x32xf32>
    %144 = vector.extract_strided_slice %134 {offsets = [48, 0], sizes = [8, 32], strides = [1, 1]} : vector<128x32xf32> to vector<8x32xf32>
    %145 = vector.extract_strided_slice %134 {offsets = [56, 0], sizes = [8, 32], strides = [1, 1]} : vector<128x32xf32> to vector<8x32xf32>
    %146 = arith.addf %144, %145 : vector<8x32xf32>
    %147 = vector.extract_strided_slice %134 {offsets = [64, 0], sizes = [8, 32], strides = [1, 1]} : vector<128x32xf32> to vector<8x32xf32>
    %148 = vector.extract_strided_slice %134 {offsets = [72, 0], sizes = [8, 32], strides = [1, 1]} : vector<128x32xf32> to vector<8x32xf32>
    %149 = arith.addf %147, %148 : vector<8x32xf32>
    %150 = vector.extract_strided_slice %134 {offsets = [80, 0], sizes = [8, 32], strides = [1, 1]} : vector<128x32xf32> to vector<8x32xf32>
    %151 = vector.extract_strided_slice %134 {offsets = [88, 0], sizes = [8, 32], strides = [1, 1]} : vector<128x32xf32> to vector<8x32xf32>
    %152 = arith.addf %150, %151 : vector<8x32xf32>
    %153 = vector.extract_strided_slice %134 {offsets = [96, 0], sizes = [8, 32], strides = [1, 1]} : vector<128x32xf32> to vector<8x32xf32>
    %154 = vector.extract_strided_slice %134 {offsets = [104, 0], sizes = [8, 32], strides = [1, 1]} : vector<128x32xf32> to vector<8x32xf32>
    %155 = arith.addf %153, %154 : vector<8x32xf32>
    %156 = vector.extract_strided_slice %134 {offsets = [112, 0], sizes = [8, 32], strides = [1, 1]} : vector<128x32xf32> to vector<8x32xf32>
    %157 = vector.extract_strided_slice %134 {offsets = [120, 0], sizes = [8, 32], strides = [1, 1]} : vector<128x32xf32> to vector<8x32xf32>
    %158 = arith.addf %156, %157 : vector<8x32xf32>
    %159 = tpu.concatenate %137, %140, %143, %146, %149, %152, %155, %158 in 0 : vector<8x32xf32>, vector<8x32xf32>, vector<8x32xf32>, vector<8x32xf32>, vector<8x32xf32>, vector<8x32xf32>, vector<8x32xf32>, vector<8x32xf32> -> vector<64x32xf32>
    %cst_44 = arith.constant 2.500000e-01 : f32
    %160 = vector.broadcast %cst_44 : f32 to vector<64x32xf32>
    %161 = arith.mulf %159, %160 : vector<64x32xf32>
    %162 = arith.truncf %161 : vector<64x32xf32> to vector<64x32xbf16>
    %cst_45 = arith.constant 0.000000e+00 : bf16
    %163 = vector.broadcast %cst_45 : bf16 to vector<16x32xbf16>
    %164 = tpu.concatenate %163, %162, %163 in 0 : vector<16x32xbf16>, vector<64x32xbf16>, vector<16x32xbf16> -> vector<96x32xbf16>
    %165 = tpu.iota {dimensions = array<i32: 0>} : vector<64x1xi32>
    %c8_i32 = arith.constant 8 : i32
    %c0_i32_46 = arith.constant 0 : i32
    %166 = arith.cmpi eq, %c8_i32, %c0_i32_46 : i32
    %c1_i32_47 = arith.constant 1 : i32
    %167 = arith.select %166, %c1_i32_47, %c8_i32 : i32
    %168 = vector.broadcast %167 : i32 to vector<64x1xi32>
    %169 = arith.remsi %165, %168 : vector<64x1xi32>
    %c0_i32_48 = arith.constant 0 : i32
    %170 = vector.broadcast %c0_i32_48 : i32 to vector<64x1xi32>
    %171 = arith.cmpi ne, %169, %170 : vector<64x1xi32>
    %c0_i32_49 = arith.constant 0 : i32
    %172 = vector.broadcast %c0_i32_49 : i32 to vector<64x1xi32>
    %173 = arith.cmpi slt, %169, %172 : vector<64x1xi32>
    %c0_i32_50 = arith.constant 0 : i32
    %174 = arith.cmpi slt, %167, %c0_i32_50 : i32
    %175 = vector.broadcast %174 : i1 to vector<64x1xi1>
    %176 = vector.broadcast %175 : vector<64x1xi1> to vector<64x1xi1>
    %177 = arith.xori %173, %176 : vector<64x1xi1>
    %178 = arith.andi %177, %171 : vector<64x1xi1>
    %179 = vector.broadcast %167 : i32 to vector<64x1xi32>
    %180 = arith.addi %169, %179 : vector<64x1xi32>
    %181 = arith.select %178, %180, %169 : vector<64x1xi1>, vector<64x1xi32>
    %c1_i32_51 = arith.constant 1 : i32
    %182 = vector.broadcast %c1_i32_51 : i32 to vector<64x1xi32>
    %183 = arith.cmpi sge, %181, %182 : vector<64x1xi32>
    %c6_i32 = arith.constant 6 : i32
    %184 = vector.broadcast %c6_i32 : i32 to vector<64x1xi32>
    %185 = arith.cmpi sle, %181, %184 : vector<64x1xi32>
    %186 = vector.extract_strided_slice %164 {offsets = [7, 0], sizes = [64, 32], strides = [1, 1]} : vector<96x32xbf16> to vector<64x32xbf16>
    %cst_52 = arith.constant 0.000000e+00 : bf16
    %187 = vector.broadcast %cst_52 : bf16 to vector<64x32xbf16>
    %188 = vector.shape_cast %183 : vector<64x1xi1> to vector<64x1xi1>
    %189 = vector.broadcast %188 : vector<64x1xi1> to vector<64x32xi1>
    %190 = arith.select %189, %186, %187 : vector<64x32xi1>, vector<64x32xbf16>
    %191 = vector.extract_strided_slice %164 {offsets = [8, 0], sizes = [64, 32], strides = [1, 1]} : vector<96x32xbf16> to vector<64x32xbf16>
    %192 = vector.extract_strided_slice %164 {offsets = [9, 0], sizes = [64, 32], strides = [1, 1]} : vector<96x32xbf16> to vector<64x32xbf16>
    %cst_53 = arith.constant 0.000000e+00 : bf16
    %193 = vector.broadcast %cst_53 : bf16 to vector<64x32xbf16>
    %194 = vector.shape_cast %185 : vector<64x1xi1> to vector<64x1xi1>
    %195 = vector.broadcast %194 : vector<64x1xi1> to vector<64x32xi1>
    %196 = arith.select %195, %192, %193 : vector<64x32xi1>, vector<64x32xbf16>
    %197 = vector.extract_strided_slice %164 {offsets = [15, 0], sizes = [64, 32], strides = [1, 1]} : vector<96x32xbf16> to vector<64x32xbf16>
    %cst_54 = arith.constant 0.000000e+00 : bf16
    %198 = vector.broadcast %cst_54 : bf16 to vector<64x32xbf16>
    %199 = vector.shape_cast %183 : vector<64x1xi1> to vector<64x1xi1>
    %200 = vector.broadcast %199 : vector<64x1xi1> to vector<64x32xi1>
    %201 = arith.select %200, %197, %198 : vector<64x32xi1>, vector<64x32xbf16>
    %202 = vector.extract_strided_slice %164 {offsets = [16, 0], sizes = [64, 32], strides = [1, 1]} : vector<96x32xbf16> to vector<64x32xbf16>
    %203 = vector.extract_strided_slice %164 {offsets = [17, 0], sizes = [64, 32], strides = [1, 1]} : vector<96x32xbf16> to vector<64x32xbf16>
    %cst_55 = arith.constant 0.000000e+00 : bf16
    %204 = vector.broadcast %cst_55 : bf16 to vector<64x32xbf16>
    %205 = vector.shape_cast %185 : vector<64x1xi1> to vector<64x1xi1>
    %206 = vector.broadcast %205 : vector<64x1xi1> to vector<64x32xi1>
    %207 = arith.select %206, %203, %204 : vector<64x32xi1>, vector<64x32xbf16>
    %208 = vector.extract_strided_slice %164 {offsets = [23, 0], sizes = [64, 32], strides = [1, 1]} : vector<96x32xbf16> to vector<64x32xbf16>
    %cst_56 = arith.constant 0.000000e+00 : bf16
    %209 = vector.broadcast %cst_56 : bf16 to vector<64x32xbf16>
    %210 = vector.shape_cast %183 : vector<64x1xi1> to vector<64x1xi1>
    %211 = vector.broadcast %210 : vector<64x1xi1> to vector<64x32xi1>
    %212 = arith.select %211, %208, %209 : vector<64x32xi1>, vector<64x32xbf16>
    %213 = vector.extract_strided_slice %164 {offsets = [24, 0], sizes = [64, 32], strides = [1, 1]} : vector<96x32xbf16> to vector<64x32xbf16>
    %214 = vector.extract_strided_slice %164 {offsets = [25, 0], sizes = [64, 32], strides = [1, 1]} : vector<96x32xbf16> to vector<64x32xbf16>
    %cst_57 = arith.constant 0.000000e+00 : bf16
    %215 = vector.broadcast %cst_57 : bf16 to vector<64x32xbf16>
    %216 = vector.shape_cast %185 : vector<64x1xi1> to vector<64x1xi1>
    %217 = vector.broadcast %216 : vector<64x1xi1> to vector<64x32xi1>
    %218 = arith.select %217, %214, %215 : vector<64x32xi1>, vector<64x32xbf16>
    %219 = tpu.concatenate %190, %191, %196, %201, %202, %207, %212, %213, %218 in 1 : vector<64x32xbf16>, vector<64x32xbf16>, vector<64x32xbf16>, vector<64x32xbf16>, vector<64x32xbf16>, vector<64x32xbf16>, vector<64x32xbf16>, vector<64x32xbf16>, vector<64x32xbf16> -> vector<64x288xbf16>
    %c0_58 = arith.constant 0 : index
    %c0_59 = arith.constant 0 : index
    %220 = vector.load %arg4[%c0_58, %c0_59] : memref<288x64xbf16, #tpu.memory_space<vmem>>, vector<288x64xbf16>
    %cst_60 = arith.constant dense<0.000000e+00> : vector<64x64xf32>
    %221 = tpu.matmul %219, %220, %cst_60 {dimension_numbers = #tpu.dot_dimension_numbers<[1], [0], [0], [1], [0, 0, 1, 1], [], []>} : vector<64x288xbf16>, vector<288x64xbf16>, vector<64x64xf32> -> vector<64x64xf32>
    %c0_61 = arith.constant 0 : index
    %c0_62 = arith.constant 0 : index
    %222 = vector.load %arg8[%c0_61, %c0_62] : memref<1x64xf32, #tpu.memory_space<vmem>>, vector<1x64xf32>
    %223 = vector.broadcast %222 : vector<1x64xf32> to vector<64x64xf32>
    %224 = arith.addf %221, %223 : vector<64x64xf32>
    %cst_63 = arith.constant 0.000000e+00 : f32
    %225 = vector.broadcast %cst_63 : f32 to vector<64x64xf32>
    %226 = arith.maximumf %224, %225 : vector<64x64xf32>
    %227 = arith.truncf %226 : vector<64x64xf32> to vector<64x64xbf16>
    %cst_64 = arith.constant 0.000000e+00 : bf16
    %228 = vector.broadcast %cst_64 : bf16 to vector<16x64xbf16>
    %229 = tpu.concatenate %228, %227, %228 in 0 : vector<16x64xbf16>, vector<64x64xbf16>, vector<16x64xbf16> -> vector<96x64xbf16>
    %230 = tpu.iota {dimensions = array<i32: 0>} : vector<64x1xi32>
    %c8_i32_65 = arith.constant 8 : i32
    %c0_i32_66 = arith.constant 0 : i32
    %231 = arith.cmpi eq, %c8_i32_65, %c0_i32_66 : i32
    %c1_i32_67 = arith.constant 1 : i32
    %232 = arith.select %231, %c1_i32_67, %c8_i32_65 : i32
    %233 = vector.broadcast %232 : i32 to vector<64x1xi32>
    %234 = arith.remsi %230, %233 : vector<64x1xi32>
    %c0_i32_68 = arith.constant 0 : i32
    %235 = vector.broadcast %c0_i32_68 : i32 to vector<64x1xi32>
    %236 = arith.cmpi ne, %234, %235 : vector<64x1xi32>
    %c0_i32_69 = arith.constant 0 : i32
    %237 = vector.broadcast %c0_i32_69 : i32 to vector<64x1xi32>
    %238 = arith.cmpi slt, %234, %237 : vector<64x1xi32>
    %c0_i32_70 = arith.constant 0 : i32
    %239 = arith.cmpi slt, %232, %c0_i32_70 : i32
    %240 = vector.broadcast %239 : i1 to vector<64x1xi1>
    %241 = vector.broadcast %240 : vector<64x1xi1> to vector<64x1xi1>
    %242 = arith.xori %238, %241 : vector<64x1xi1>
    %243 = arith.andi %242, %236 : vector<64x1xi1>
    %244 = vector.broadcast %232 : i32 to vector<64x1xi32>
    %245 = arith.addi %234, %244 : vector<64x1xi32>
    %246 = arith.select %243, %245, %234 : vector<64x1xi1>, vector<64x1xi32>
    %c1_i32_71 = arith.constant 1 : i32
    %247 = vector.broadcast %c1_i32_71 : i32 to vector<64x1xi32>
    %248 = arith.cmpi sge, %246, %247 : vector<64x1xi32>
    %c6_i32_72 = arith.constant 6 : i32
    %249 = vector.broadcast %c6_i32_72 : i32 to vector<64x1xi32>
    %250 = arith.cmpi sle, %246, %249 : vector<64x1xi32>
    %251 = vector.extract_strided_slice %229 {offsets = [7, 0], sizes = [64, 64], strides = [1, 1]} : vector<96x64xbf16> to vector<64x64xbf16>
    %cst_73 = arith.constant 0.000000e+00 : bf16
    %252 = vector.broadcast %cst_73 : bf16 to vector<64x64xbf16>
    %253 = vector.shape_cast %248 : vector<64x1xi1> to vector<64x1xi1>
    %254 = vector.broadcast %253 : vector<64x1xi1> to vector<64x64xi1>
    %255 = arith.select %254, %251, %252 : vector<64x64xi1>, vector<64x64xbf16>
    %256 = vector.extract_strided_slice %229 {offsets = [8, 0], sizes = [64, 64], strides = [1, 1]} : vector<96x64xbf16> to vector<64x64xbf16>
    %257 = vector.extract_strided_slice %229 {offsets = [9, 0], sizes = [64, 64], strides = [1, 1]} : vector<96x64xbf16> to vector<64x64xbf16>
    %cst_74 = arith.constant 0.000000e+00 : bf16
    %258 = vector.broadcast %cst_74 : bf16 to vector<64x64xbf16>
    %259 = vector.shape_cast %250 : vector<64x1xi1> to vector<64x1xi1>
    %260 = vector.broadcast %259 : vector<64x1xi1> to vector<64x64xi1>
    %261 = arith.select %260, %257, %258 : vector<64x64xi1>, vector<64x64xbf16>
    %262 = vector.extract_strided_slice %229 {offsets = [15, 0], sizes = [64, 64], strides = [1, 1]} : vector<96x64xbf16> to vector<64x64xbf16>
    %cst_75 = arith.constant 0.000000e+00 : bf16
    %263 = vector.broadcast %cst_75 : bf16 to vector<64x64xbf16>
    %264 = vector.shape_cast %248 : vector<64x1xi1> to vector<64x1xi1>
    %265 = vector.broadcast %264 : vector<64x1xi1> to vector<64x64xi1>
    %266 = arith.select %265, %262, %263 : vector<64x64xi1>, vector<64x64xbf16>
    %267 = vector.extract_strided_slice %229 {offsets = [16, 0], sizes = [64, 64], strides = [1, 1]} : vector<96x64xbf16> to vector<64x64xbf16>
    %268 = vector.extract_strided_slice %229 {offsets = [17, 0], sizes = [64, 64], strides = [1, 1]} : vector<96x64xbf16> to vector<64x64xbf16>
    %cst_76 = arith.constant 0.000000e+00 : bf16
    %269 = vector.broadcast %cst_76 : bf16 to vector<64x64xbf16>
    %270 = vector.shape_cast %250 : vector<64x1xi1> to vector<64x1xi1>
    %271 = vector.broadcast %270 : vector<64x1xi1> to vector<64x64xi1>
    %272 = arith.select %271, %268, %269 : vector<64x64xi1>, vector<64x64xbf16>
    %273 = vector.extract_strided_slice %229 {offsets = [23, 0], sizes = [64, 64], strides = [1, 1]} : vector<96x64xbf16> to vector<64x64xbf16>
    %cst_77 = arith.constant 0.000000e+00 : bf16
    %274 = vector.broadcast %cst_77 : bf16 to vector<64x64xbf16>
    %275 = vector.shape_cast %248 : vector<64x1xi1> to vector<64x1xi1>
    %276 = vector.broadcast %275 : vector<64x1xi1> to vector<64x64xi1>
    %277 = arith.select %276, %273, %274 : vector<64x64xi1>, vector<64x64xbf16>
    %278 = vector.extract_strided_slice %229 {offsets = [24, 0], sizes = [64, 64], strides = [1, 1]} : vector<96x64xbf16> to vector<64x64xbf16>
    %279 = vector.extract_strided_slice %229 {offsets = [25, 0], sizes = [64, 64], strides = [1, 1]} : vector<96x64xbf16> to vector<64x64xbf16>
    %cst_78 = arith.constant 0.000000e+00 : bf16
    %280 = vector.broadcast %cst_78 : bf16 to vector<64x64xbf16>
    %281 = vector.shape_cast %250 : vector<64x1xi1> to vector<64x1xi1>
    %282 = vector.broadcast %281 : vector<64x1xi1> to vector<64x64xi1>
    %283 = arith.select %282, %279, %280 : vector<64x64xi1>, vector<64x64xbf16>
    %284 = tpu.concatenate %255, %256, %261, %266, %267, %272, %277, %278, %283 in 1 : vector<64x64xbf16>, vector<64x64xbf16>, vector<64x64xbf16>, vector<64x64xbf16>, vector<64x64xbf16>, vector<64x64xbf16>, vector<64x64xbf16>, vector<64x64xbf16>, vector<64x64xbf16> -> vector<64x576xbf16>
    %c0_79 = arith.constant 0 : index
    %c0_80 = arith.constant 0 : index
    %285 = vector.load %arg5[%c0_79, %c0_80] : memref<576x64xbf16, #tpu.memory_space<vmem>>, vector<576x64xbf16>
    %cst_81 = arith.constant dense<0.000000e+00> : vector<64x64xf32>
    %286 = tpu.matmul %284, %285, %cst_81 {dimension_numbers = #tpu.dot_dimension_numbers<[1], [0], [0], [1], [0, 0, 1, 1], [], []>} : vector<64x576xbf16>, vector<576x64xbf16>, vector<64x64xf32> -> vector<64x64xf32>
    %c0_82 = arith.constant 0 : index
    %c0_83 = arith.constant 0 : index
    %287 = vector.load %arg9[%c0_82, %c0_83] : memref<1x64xf32, #tpu.memory_space<vmem>>, vector<1x64xf32>
    %288 = vector.broadcast %287 : vector<1x64xf32> to vector<64x64xf32>
    %289 = arith.addf %286, %288 : vector<64x64xf32>
    %cst_84 = arith.constant 0.000000e+00 : f32
    %290 = vector.broadcast %cst_84 : f32 to vector<64x64xf32>
    %291 = arith.maximumf %289, %290 : vector<64x64xf32>
    %cst_85 = arith.constant dense<0.000000e+00> : vector<64xf32>
    %292 = vector.multi_reduction <add>, %291, %cst_85 [0] : vector<64x64xf32> to vector<64xf32>
    %293 = vector.shape_cast %292 : vector<64xf32> to vector<1x64xf32>
    %cst_86 = arith.constant 1.562500e-02 : f32
    %294 = vector.broadcast %cst_86 : f32 to vector<1x64xf32>
    %295 = arith.mulf %293, %294 : vector<1x64xf32>
    %c0_87 = arith.constant 0 : index
    %c0_88 = arith.constant 0 : index
    %296 = vector.load %arg10[%c0_87, %c0_88] : memref<64x12xf32, #tpu.memory_space<vmem>>, vector<64x12xf32>
    %cst_89 = arith.constant dense<0.000000e+00> : vector<1x12xf32>
    %297 = tpu.matmul %295, %296, %cst_89 {dimension_numbers = #tpu.dot_dimension_numbers<[1], [0], [0], [1], [0, 0, 1, 1], [], []>} : vector<1x64xf32>, vector<64x12xf32>, vector<1x12xf32> -> vector<1x12xf32>
    %c0_90 = arith.constant 0 : index
    %c0_91 = arith.constant 0 : index
    %298 = vector.load %arg11[%c0_90, %c0_91] : memref<1x12xf32, #tpu.memory_space<vmem>>, vector<1x12xf32>
    %299 = arith.addf %297, %298 : vector<1x12xf32>
    %c0_92 = arith.constant 0 : index
    %c0_93 = arith.constant 0 : index
    %c0_94 = arith.constant 0 : index
    %300 = vector.load %arg12[%c0_92, %c0_93, %c0_94] : memref<1x1x12xf32, #tpu.memory_space<vmem>>, vector<1x1x12xf32>
    %301 = vector.shape_cast %300 : vector<1x1x12xf32> to vector<1x12xf32>
    %302 = vector.shape_cast %299 : vector<1x12xf32> to vector<1x1x12xf32>
    tpu.vector_store %arg12[%c0_92, %c0_93, %c0_94], %302 {strides = array<i32>} : memref<1x1x12xf32, #tpu.memory_space<vmem>>, vector<1x1x12xf32>,
    return
  }
  func.func @transform_0(%arg0: i32) -> (i32, i32, i32) {
    %c0_i32 = arith.constant 0 : i32
    %c0_i32_0 = arith.constant 0 : i32
    %c0_i32_1 = arith.constant 0 : i32
    return %arg0, %c0_i32, %c0_i32_0 : i32, i32, i32
  }
  func.func @transform_1(%arg0: i32) -> (i32, i32) {
    %c0_i32 = arith.constant 0 : i32
    %c0_i32_0 = arith.constant 0 : i32
    %c0_i32_1 = arith.constant 0 : i32
    return %c0_i32, %c0_i32_0 : i32, i32
  }
  func.func @transform_2(%arg0: i32) -> (i32, i32) {
    %c0_i32 = arith.constant 0 : i32
    %c0_i32_0 = arith.constant 0 : i32
    %c0_i32_1 = arith.constant 0 : i32
    return %c0_i32, %c0_i32_0 : i32, i32
  }
  func.func @transform_3(%arg0: i32) -> (i32, i32) {
    %c0_i32 = arith.constant 0 : i32
    %c0_i32_0 = arith.constant 0 : i32
    %c0_i32_1 = arith.constant 0 : i32
    return %c0_i32, %c0_i32_0 : i32, i32
  }
  func.func @transform_4(%arg0: i32) -> (i32, i32) {
    %c0_i32 = arith.constant 0 : i32
    %c0_i32_0 = arith.constant 0 : i32
    %c0_i32_1 = arith.constant 0 : i32
    return %c0_i32, %c0_i32_0 : i32, i32
  }
  func.func @transform_5(%arg0: i32) -> (i32, i32) {
    %c0_i32 = arith.constant 0 : i32
    %c0_i32_0 = arith.constant 0 : i32
    %c0_i32_1 = arith.constant 0 : i32
    return %c0_i32, %c0_i32_0 : i32, i32
  }
  func.func @transform_6(%arg0: i32) -> (i32, i32) {
    %c0_i32 = arith.constant 0 : i32
    %c0_i32_0 = arith.constant 0 : i32
    %c0_i32_1 = arith.constant 0 : i32
    return %c0_i32, %c0_i32_0 : i32, i32
  }
  func.func @transform_7(%arg0: i32) -> (i32, i32) {
    %c0_i32 = arith.constant 0 : i32
    %c0_i32_0 = arith.constant 0 : i32
    %c0_i32_1 = arith.constant 0 : i32
    return %c0_i32, %c0_i32_0 : i32, i32
  }
  func.func @transform_8(%arg0: i32) -> (i32, i32) {
    %c0_i32 = arith.constant 0 : i32
    %c0_i32_0 = arith.constant 0 : i32
    %c0_i32_1 = arith.constant 0 : i32
    return %c0_i32, %c0_i32_0 : i32, i32
  }
  func.func @transform_9(%arg0: i32) -> (i32, i32) {
    %c0_i32 = arith.constant 0 : i32
    %c0_i32_0 = arith.constant 0 : i32
    %c0_i32_1 = arith.constant 0 : i32
    return %c0_i32, %c0_i32_0 : i32, i32
  }
  func.func @transform_10(%arg0: i32) -> (i32, i32) {
    %c0_i32 = arith.constant 0 : i32
    %c0_i32_0 = arith.constant 0 : i32
    %c0_i32_1 = arith.constant 0 : i32
    return %c0_i32, %c0_i32_0 : i32, i32
  }
  func.func @transform_11(%arg0: i32) -> (i32, i32, i32) {
    %c0_i32 = arith.constant 0 : i32
    %c0_i32_0 = arith.constant 0 : i32
    %c0_i32_1 = arith.constant 0 : i32
    return %arg0, %c0_i32, %c0_i32_0 : i32, i32, i32
  }
}

</mosaic_0001>

<llo_original>
// kernel: axis_aligned_conv_gaussian_forward.1
$region0: #{axis_aligned_conv_gaussian_forward.1}
  #allocation0 [shape = 'u32[]', space=smem, size = 0x4, offset = 0x4, fixed_abs, tag = 'smem constant byte address 0x4 - core index']
  #allocation1 [shape = 'u32[144,128]{1,0:T(1,128)}', space=vmem, size = 0x12000, scoped, tag = 'internal scratch']
  #allocation2 [shape = 'f32[256,64]{1,0:T(8,128)}', space=vmem, size = 0x20000, scoped, tag = 'scratch operand']
  %s0 = inlined_call_operand.vmem [shape: bf16[2,256,4], index: 0, kind: input, shape index: {}]
  %s1 = inlined_call_operand.vmem [shape: bf16[36,32], index: 1, kind: input, shape index: {}]
  %s2 = inlined_call_operand.vmem [shape: bf16[288,32], index: 2, kind: input, shape index: {}]
  %s3 = inlined_call_operand.vmem [shape: bf16[288,64], index: 3, kind: input, shape index: {}]
  %s4 = inlined_call_operand.vmem [shape: bf16[576,64], index: 4, kind: input, shape index: {}]
  %s5 = inlined_call_operand.vmem [shape: f32[1,32], index: 5, kind: input, shape index: {}]
  %s6 = inlined_call_operand.vmem [shape: f32[1,32], index: 6, kind: input, shape index: {}]
  %s7 = inlined_call_operand.vmem [shape: f32[1,64], index: 7, kind: input, shape index: {}]
  %s8 = inlined_call_operand.vmem [shape: f32[1,64], index: 8, kind: input, shape index: {}]
  %s9 = inlined_call_operand.vmem [shape: f32[64,12], index: 9, kind: input, shape index: {}]
  %s10 = inlined_call_operand.vmem [shape: f32[1,12], index: 10, kind: input, shape index: {}]
  %s11 = inlined_call_operand.vmem [shape: f32[2,1,12], index: 11, kind: output, shape index: {}]
  %s12 = sld [smem:[#allocation0]]
  $region77: #{axis_aligned_conv_gaussian_forward.1} parent=0
    _
  %s14 = ssub.s32 1, %s12
  %s15 = scalar_select 0, %s14, %s12
  loop: start=0, step=1, limit=4
  $region2: #{axis_aligned_conv_gaussian_forward.1} parent=0 // loop_pre_header
    _
  $region3: #{axis_aligned_conv_gaussian_forward.1} parent=0 // loop_header
    %s17 = sphi 0, %s21
    %p18 = scmp.ge.s32.totalorder %s17, 4
    %s27 = sphi 0, %s29
    %s30 = sphi 0, %s27
    %s31 = sphi 0, %s30
    %s47 = sphi 0, %s31
    %s51 = sphi 0, %s51
    %s53 = sphi 0, %s51
    %s54 = sphi 0, %s53
    %s68 = sphi 0, %s54
    %s72 = sphi 0, %s72
    %s74 = sphi 0, %s72
    %s75 = sphi 0, %s74
    %s89 = sphi 0, %s75
    %s93 = sphi 0, %s93
    %s95 = sphi 0, %s93
    %s96 = sphi 0, %s95
    %s110 = sphi 0, %s96
    %s114 = sphi 0, %s114
    %s116 = sphi 0, %s114
    %s117 = sphi 0, %s116
    %s131 = sphi 0, %s117
    %s135 = sphi 0, %s135
    %s137 = sphi 0, %s135
    %s138 = sphi 0, %s137
    %s152 = sphi 0, %s138
    %s156 = sphi 0, %s156
    %s158 = sphi 0, %s156
    %s159 = sphi 0, %s158
    %s173 = sphi 0, %s159
    %s177 = sphi 0, %s177
    %s179 = sphi 0, %s177
    %s180 = sphi 0, %s179
    %s194 = sphi 0, %s180
    %s198 = sphi 0, %s198
    %s200 = sphi 0, %s198
    %s201 = sphi 0, %s200
    %s215 = sphi 0, %s201
    %s219 = sphi 0, %s219
    %s221 = sphi 0, %s219
    %s222 = sphi 0, %s221
    %s236 = sphi 0, %s222
    %s240 = sphi 0, %s240
    %s242 = sphi 0, %s240
    %s243 = sphi 0, %s242
    %s257 = sphi 0, %s243
    %s263 = sphi 0, %s265
    %s266 = sphi 0, %s263
    %s267 = sphi 0, %s266
    %s283 = sphi 0, %s267
  $region4: #{axis_aligned_conv_gaussian_forward.1} parent=0 // loop_header_branch
    %20 = sbr.rel (%p18) target = $region8
  $region5: #{axis_aligned_conv_gaussian_forward.1} parent=0 // loop_body
    %s22 = ssub.s32 %s17, 1
    %s23 = ssub.s32 %s17, 2
    %s24 = sadd.s32 %s17, 1
    %s25 = ssub.s32 %s17, %s24
    %p26 = scmp.eq.s32.totalorder %s25, 0
    %s28 = sadd.s32 %s27, 1
    %s29 = scalar_select %p26, %s27, %s28
    %p32 = pneg %p26
    %p33 = scmp.eq.s32.totalorder %s17, 1
    %p34 = por %p32, %p33
    %p35 = scmp.ne.s32.totalorder %s27, %s30
    %p36 = scmp.eq.s32.totalorder %s17, 0
    %p37 = por %p35, %p36
    %p38 = scmp.ne.s32.totalorder %s27, %s30
    %p39 = scmp.eq.s32.totalorder %s22, 1
    %p40 = por %p38, %p39
    %p41 = scmp.ne.s32.totalorder %s30, %s31
    %p42 = scmp.eq.s32.totalorder %s22, 0
    %p43 = por %p41, %p42
    %p44 = scmp.ne.s32.totalorder %s30, %s31
    %p45 = scmp.eq.s32.totalorder %s23, 1
    %p46 = por %p44, %p45
    %p48 = scmp.ne.s32.totalorder %s31, %s47
    %p49 = scmp.eq.s32.totalorder %s23, 0
    %p50 = por %p48, %p49
    %s52 = sadd.s32 %s51, 1
    %p55 = scmp.eq.s32.totalorder %s17, 1
    %p56 = scmp.ne.s32.totalorder %s51, %s53
    %p57 = scmp.eq.s32.totalorder %s17, 0
    %p58 = por %p56, %p57
    %p59 = scmp.ne.s32.totalorder %s51, %s53
    %p60 = scmp.eq.s32.totalorder %s22, 1
    %p61 = por %p59, %p60
    %p62 = scmp.ne.s32.totalorder %s53, %s54
    %p63 = scmp.eq.s32.totalorder %s22, 0
    %p64 = por %p62, %p63
    %p65 = scmp.ne.s32.totalorder %s53, %s54
    %p66 = scmp.eq.s32.totalorder %s23, 1
    %p67 = por %p65, %p66
    %p69 = scmp.ne.s32.totalorder %s54, %s68
    %p70 = scmp.eq.s32.totalorder %s23, 0
    %p71 = por %p69, %p70
    %s73 = sadd.s32 %s72, 1
    %p76 = scmp.eq.s32.totalorder %s17, 1
    %p77 = scmp.ne.s32.totalorder %s72, %s74
    %p78 = scmp.eq.s32.totalorder %s17, 0
    %p79 = por %p77, %p78
    %p80 = scmp.ne.s32.totalorder %s72, %s74
    %p81 = scmp.eq.s32.totalorder %s22, 1
    %p82 = por %p80, %p81
    %p83 = scmp.ne.s32.totalorder %s74, %s75
    %p84 = scmp.eq.s32.totalorder %s22, 0
    %p85 = por %p83, %p84
    %p86 = scmp.ne.s32.totalorder %s74, %s75
    %p87 = scmp.eq.s32.totalorder %s23, 1
    %p88 = por %p86, %p87
    %p90 = scmp.ne.s32.totalorder %s75, %s89
    %p91 = scmp.eq.s32.totalorder %s23, 0
    %p92 = por %p90, %p91
    %s94 = sadd.s32 %s93, 1
    %p97 = scmp.eq.s32.totalorder %s17, 1
    %p98 = scmp.ne.s32.totalorder %s93, %s95
    %p99 = scmp.eq.s32.totalorder %s17, 0
    %p100 = por %p98, %p99
    %p101 = scmp.ne.s32.totalorder %s93, %s95
    %p102 = scmp.eq.s32.totalorder %s22, 1
    %p103 = por %p101, %p102
    %p104 = scmp.ne.s32.totalorder %s95, %s96
    %p105 = scmp.eq.s32.totalorder %s22, 0
    %p106 = por %p104, %p105
    %p107 = scmp.ne.s32.totalorder %s95, %s96
    %p108 = scmp.eq.s32.totalorder %s23, 1
    %p109 = por %p107, %p108
    %p111 = scmp.ne.s32.totalorder %s96, %s110
    %p112 = scmp.eq.s32.totalorder %s23, 0
    %p113 = por %p111, %p112
    %s115 = sadd.s32 %s114, 1
    %p118 = scmp.eq.s32.totalorder %s17, 1
    %p119 = scmp.ne.s32.totalorder %s114, %s116
    %p120 = scmp.eq.s32.totalorder %s17, 0
    %p121 = por %p119, %p120
    %p122 = scmp.ne.s32.totalorder %s114, %s116
    %p123 = scmp.eq.s32.totalorder %s22, 1
    %p124 = por %p122, %p123
    %p125 = scmp.ne.s32.totalorder %s116, %s117
    %p126 = scmp.eq.s32.totalorder %s22, 0
    %p127 = por %p125, %p126
    %p128 = scmp.ne.s32.totalorder %s116, %s117
    %p129 = scmp.eq.s32.totalorder %s23, 1
    %p130 = por %p128, %p129
    %p132 = scmp.ne.s32.totalorder %s117, %s131
    %p133 = scmp.eq.s32.totalorder %s23, 0
    %p134 = por %p132, %p133
    %s136 = sadd.s32 %s135, 1
    %p139 = scmp.eq.s32.totalorder %s17, 1
    %p140 = scmp.ne.s32.totalorder %s135, %s137
    %p141 = scmp.eq.s32.totalorder %s17, 0
    %p142 = por %p140, %p141
    %p143 = scmp.ne.s32.totalorder %s135, %s137
    %p144 = scmp.eq.s32.totalorder %s22, 1
    %p145 = por %p143, %p144
    %p146 = scmp.ne.s32.totalorder %s137, %s138
    %p147 = scmp.eq.s32.totalorder %s22, 0
    %p148 = por %p146, %p147
    %p149 = scmp.ne.s32.totalorder %s137, %s138
    %p150 = scmp.eq.s32.totalorder %s23, 1
    %p151 = por %p149, %p150
    %p153 = scmp.ne.s32.totalorder %s138, %s152
    %p154 = scmp.eq.s32.totalorder %s23, 0
    %p155 = por %p153, %p154
    %s157 = sadd.s32 %s156, 1
    %p160 = scmp.eq.s32.totalorder %s17, 1
    %p161 = scmp.ne.s32.totalorder %s156, %s158
    %p162 = scmp.eq.s32.totalorder %s17, 0
    %p163 = por %p161, %p162
    %p164 = scmp.ne.s32.totalorder %s156, %s158
    %p165 = scmp.eq.s32.totalorder %s22, 1
    %p166 = por %p164, %p165
    %p167 = scmp.ne.s32.totalorder %s158, %s159
    %p168 = scmp.eq.s32.totalorder %s22, 0
    %p169 = por %p167, %p168
    %p170 = scmp.ne.s32.totalorder %s158, %s159
    %p171 = scmp.eq.s32.totalorder %s23, 1
    %p172 = por %p170, %p171
    %p174 = scmp.ne.s32.totalorder %s159, %s173
    %p175 = scmp.eq.s32.totalorder %s23, 0
    %p176 = por %p174, %p175
    %s178 = sadd.s32 %s177, 1
    %p181 = scmp.eq.s32.totalorder %s17, 1
    %p182 = scmp.ne.s32.totalorder %s177, %s179
    %p183 = scmp.eq.s32.totalorder %s17, 0
    %p184 = por %p182, %p183
    %p185 = scmp.ne.s32.totalorder %s177, %s179
    %p186 = scmp.eq.s32.totalorder %s22, 1
    %p187 = por %p185, %p186
    %p188 = scmp.ne.s32.totalorder %s179, %s180
    %p189 = scmp.eq.s32.totalorder %s22, 0
    %p190 = por %p188, %p189
    %p191 = scmp.ne.s32.totalorder %s179, %s180
    %p192 = scmp.eq.s32.totalorder %s23, 1
    %p193 = por %p191, %p192
    %p195 = scmp.ne.s32.totalorder %s180, %s194
    %p196 = scmp.eq.s32.totalorder %s23, 0
    %p197 = por %p195, %p196
    %s199 = sadd.s32 %s198, 1
    %p202 = scmp.eq.s32.totalorder %s17, 1
    %p203 = scmp.ne.s32.totalorder %s198, %s200
    %p204 = scmp.eq.s32.totalorder %s17, 0
    %p205 = por %p203, %p204
    %p206 = scmp.ne.s32.totalorder %s198, %s200
    %p207 = scmp.eq.s32.totalorder %s22, 1
    %p208 = por %p206, %p207
    %p209 = scmp.ne.s32.totalorder %s200, %s201
    %p210 = scmp.eq.s32.totalorder %s22, 0
    %p211 = por %p209, %p210
    %p212 = scmp.ne.s32.totalorder %s200, %s201
    %p213 = scmp.eq.s32.totalorder %s23, 1
    %p214 = por %p212, %p213
    %p216 = scmp.ne.s32.totalorder %s201, %s215
    %p217 = scmp.eq.s32.totalorder %s23, 0
    %p218 = por %p216, %p217
    %s220 = sadd.s32 %s219, 1
    %p223 = scmp.eq.s32.totalorder %s17, 1
    %p224 = scmp.ne.s32.totalorder %s219, %s221
    %p225 = scmp.eq.s32.totalorder %s17, 0
    %p226 = por %p224, %p225
    %p227 = scmp.ne.s32.totalorder %s219, %s221
    %p228 = scmp.eq.s32.totalorder %s22, 1
    %p229 = por %p227, %p228
    %p230 = scmp.ne.s32.totalorder %s221, %s222
    %p231 = scmp.eq.s32.totalorder %s22, 0
    %p232 = por %p230, %p231
    %p233 = scmp.ne.s32.totalorder %s221, %s222
    %p234 = scmp.eq.s32.totalorder %s23, 1
    %p235 = por %p233, %p234
    %p237 = scmp.ne.s32.totalorder %s222, %s236
    %p238 = scmp.eq.s32.totalorder %s23, 0
    %p239 = por %p237, %p238
    %s241 = sadd.s32 %s240, 1
    %p244 = scmp.eq.s32.totalorder %s17, 1
    %p245 = scmp.ne.s32.totalorder %s240, %s242
    %p246 = scmp.eq.s32.totalorder %s17, 0
    %p247 = por %p245, %p246
    %p248 = scmp.ne.s32.totalorder %s240, %s242
    %p249 = scmp.eq.s32.totalorder %s22, 1
    %p250 = por %p248, %p249
    %p251 = scmp.ne.s32.totalorder %s242, %s243
    %p252 = scmp.eq.s32.totalorder %s22, 0
    %p253 = por %p251, %p252
    %p254 = scmp.ne.s32.totalorder %s242, %s243
    %p255 = scmp.eq.s32.totalorder %s23, 1
    %p256 = por %p254, %p255
    %p258 = scmp.ne.s32.totalorder %s243, %s257
    %p259 = scmp.eq.s32.totalorder %s23, 0
    %p260 = por %p258, %p259
    %s261 = ssub.s32 %s17, %s24
    %p262 = scmp.eq.s32.totalorder %s261, 0
    %s264 = sadd.s32 %s263, 1
    %s265 = scalar_select %p262, %s263, %s264
    %p268 = pneg %p262
    %p269 = scmp.eq.s32.totalorder %s17, 1
    %p270 = por %p268, %p269
    %p271 = scmp.ne.s32.totalorder %s263, %s266
    %p272 = scmp.eq.s32.totalorder %s17, 0
    %p273 = por %p271, %p272
    %p274 = scmp.ne.s32.totalorder %s263, %s266
    %p275 = scmp.eq.s32.totalorder %s22, 1
    %p276 = por %p274, %p275
    %p277 = scmp.ne.s32.totalorder %s266, %s267
    %p278 = scmp.eq.s32.totalorder %s22, 0
    %p279 = por %p277, %p278
    %p280 = scmp.ne.s32.totalorder %s266, %s267
    %p281 = scmp.eq.s32.totalorder %s23, 1
    %p282 = por %p280, %p281
    %p284 = scmp.ne.s32.totalorder %s267, %s283
    %p285 = scmp.eq.s32.totalorder %s23, 0
    %p286 = por %p284, %p285
    %p287 = scmp.le.s32.totalorder 1, %s17
    %p288 = scmp.lt.s32.totalorder %s17, 3
    %p289 = pnand %p287, %p288
    %p290 = pneg %p289
    // Predicated region
    $region9: #{axis_aligned_conv_gaussian_forward.1} parent=5 // pred_check
      _
    $region10: #{axis_aligned_conv_gaussian_forward.1} parent=5 // pred_check_branch
      %292 = sbr.rel (%p289) target = $region12
    $region11: #{axis_aligned_conv_gaussian_forward.1} parent=5 // pred_region
      %s293 = ssub.s32 %s17, 1
      // Predicated region
      $region13: #{axis_aligned_conv_gaussian_forward.1} parent=11 // pred_check
        %p294 = pneg %p64
      $region14: #{axis_aligned_conv_gaussian_forward.1} parent=11 // pred_check_branch
        %296 = sbr.rel (%p294) target = $region16
      $region15: #{axis_aligned_conv_gaussian_forward.1} parent=11 // pred_region
        _
      $region16: #{axis_aligned_conv_gaussian_forward.1} parent=11 // pred_fallthru
        _
      // Predicated region
      $region17: #{axis_aligned_conv_gaussian_forward.1} parent=11 // pred_check
        %p297 = pneg %p85
      $region18: #{axis_aligned_conv_gaussian_forward.1} parent=11 // pred_check_branch
        %299 = sbr.rel (%p297) target = $region20
      $region19: #{axis_aligned_conv_gaussian_forward.1} parent=11 // pred_region
        _
      $region20: #{axis_aligned_conv_gaussian_forward.1} parent=11 // pred_fallthru
        _
      // Predicated region
      $region21: #{axis_aligned_conv_gaussian_forward.1} parent=11 // pred_check
        %p300 = pneg %p106
      $region22: #{axis_aligned_conv_gaussian_forward.1} parent=11 // pred_check_branch
        %302 = sbr.rel (%p300) target = $region24
      $region23: #{axis_aligned_conv_gaussian_forward.1} parent=11 // pred_region
        _
      $region24: #{axis_aligned_conv_gaussian_forward.1} parent=11 // pred_fallthru
        _
      // Predicated region
      $region25: #{axis_aligned_conv_gaussian_forward.1} parent=11 // pred_check
        %p303 = pneg %p127
      $region26: #{axis_aligned_conv_gaussian_forward.1} parent=11 // pred_check_branch
        %305 = sbr.rel (%p303) target = $region28
      $region27: #{axis_aligned_conv_gaussian_forward.1} parent=11 // pred_region
        _
      $region28: #{axis_aligned_conv_gaussian_forward.1} parent=11 // pred_fallthru
        _
      // Predicated region
      $region29: #{axis_aligned_conv_gaussian_forward.1} parent=11 // pred_check
        %p306 = pneg %p148
      $region30: #{axis_aligned_conv_gaussian_forward.1} parent=11 // pred_check_branch
        %308 = sbr.rel (%p306) target = $region32
      $region31: #{axis_aligned_conv_gaussian_forward.1} parent=11 // pred_region
        _
      $region32: #{axis_aligned_conv_gaussian_forward.1} parent=11 // pred_fallthru
        _
      // Predicated region
      $region33: #{axis_aligned_conv_gaussian_forward.1} parent=11 // pred_check
        %p309 = pneg %p169
      $region34: #{axis_aligned_conv_gaussian_forward.1} parent=11 // pred_check_branch
        %311 = sbr.rel (%p309) target = $region36
      $region35: #{axis_aligned_conv_gaussian_forward.1} parent=11 // pred_region
        _
      $region36: #{axis_aligned_conv_gaussian_forward.1} parent=11 // pred_fallthru
        _
      // Predicated region
      $region37: #{axis_aligned_conv_gaussian_forward.1} parent=11 // pred_check
        %p312 = pneg %p190
      $region38: #{axis_aligned_conv_gaussian_forward.1} parent=11 // pred_check_branch
        %314 = sbr.rel (%p312) target = $region40
      $region39: #{axis_aligned_conv_gaussian_forward.1} parent=11 // pred_region
        _
      $region40: #{axis_aligned_conv_gaussian_forward.1} parent=11 // pred_fallthru
        _
      // Predicated region
      $region41: #{axis_aligned_conv_gaussian_forward.1} parent=11 // pred_check
        %p315 = pneg %p211
      $region42: #{axis_aligned_conv_gaussian_forward.1} parent=11 // pred_check_branch
        %317 = sbr.rel (%p315) target = $region44
      $region43: #{axis_aligned_conv_gaussian_forward.1} parent=11 // pred_region
        _
      $region44: #{axis_aligned_conv_gaussian_forward.1} parent=11 // pred_fallthru
        _
      // Predicated region
      $region45: #{axis_aligned_conv_gaussian_forward.1} parent=11 // pred_check
        %p318 = pneg %p232
      $region46: #{axis_aligned_conv_gaussian_forward.1} parent=11 // pred_check_branch
        %320 = sbr.rel (%p318) target = $region48
      $region47: #{axis_aligned_conv_gaussian_forward.1} parent=11 // pred_region
        _
      $region48: #{axis_aligned_conv_gaussian_forward.1} parent=11 // pred_fallthru
        _
      // Predicated region
      $region49: #{axis_aligned_conv_gaussian_forward.1} parent=11 // pred_check
        %p321 = pneg %p253
      $region50: #{axis_aligned_conv_gaussian_forward.1} parent=11 // pred_check_branch
        %323 = sbr.rel (%p321) target = $region52
      $region51: #{axis_aligned_conv_gaussian_forward.1} parent=11 // pred_region
        _
      $region52: #{axis_aligned_conv_gaussian_forward.1} parent=11 // pred_fallthru
        _
    $region12: #{axis_aligned_conv_gaussian_forward.1} parent=5 // pred_fallthru
      _
    %p324 = scmp.lt.s32.totalorder %s17, 2
    // Predicated region
    $region53: #{axis_aligned_conv_gaussian_forward.1} parent=5 // pred_check
      %p325 = pneg %p324
    $region54: #{axis_aligned_conv_gaussian_forward.1} parent=5 // pred_check_branch
      %327 = sbr.rel (%p325) target = $region56
    $region55: #{axis_aligned_conv_gaussian_forward.1} parent=5 // pred_region
      // Predicated region
      $region57: #{axis_aligned_conv_gaussian_forward.1} parent=55 // pred_check
        %p328 = pneg %p37
      $region58: #{axis_aligned_conv_gaussian_forward.1} parent=55 // pred_check_branch
        %330 = sbr.rel (%p328) target = $region60
      $region59: #{axis_aligned_conv_gaussian_forward.1} parent=55 // pred_region
        %p331 = scmp.lt.s32.totalorder %s17, 1
        %s332 = scalar_select %p331, %s17, 1
        %s333 = smul.addr %s332, 32
        %s334 = smul.addr %s333, 4
        %s335 = scalar_lea.vmem %s0, %s334
      $region60: #{axis_aligned_conv_gaussian_forward.1} parent=55 // pred_fallthru
        _
    $region56: #{axis_aligned_conv_gaussian_forward.1} parent=5 // pred_fallthru
      _
    %p336 = scmp.le.s32.totalorder 1, %s17
    %p337 = scmp.lt.s32.totalorder %s17, 3
    %p338 = pnand %p336, %p337
    %p339 = pneg %p338
    // Predicated region
    $region61: #{axis_aligned_conv_gaussian_forward.1} parent=5 // pred_check
      _
    $region62: #{axis_aligned_conv_gaussian_forward.1} parent=5 // pred_check_branch
      %341 = sbr.rel (%p338) target = $region64
    $region63: #{axis_aligned_conv_gaussian_forward.1} parent=5 // pred_region
      %s342 = ssub.s32 %s17, 1
      %p343 = scmp.lt.s32.totalorder %s22, 1
      %s344 = scalar_select %p343, %s22, 1
      %s345 = smul.addr %s344, 32
      %s346 = smul.addr %s345, 4
      %s347 = scalar_lea.vmem %s0, %s346
      %p348 = pneg %p43
      %p349 = pneg %p40
      %p350 = pneg %p64
      %p351 = pneg %p61
      %p352 = pneg %p85
      %p353 = pneg %p82
      %p354 = pneg %p106
      %p355 = pneg %p103
      %p356 = pneg %p127
      %p357 = pneg %p124
      %p358 = pneg %p148
      %p359 = pneg %p145
      %p360 = pneg %p169
      %p361 = pneg %p166
      %p362 = pneg %p190
      %p363 = pneg %p187
      %p364 = pneg %p211
      %p365 = pneg %p208
      %p366 = pneg %p232
      %p367 = pneg %p229
      %p368 = pneg %p253
      %p369 = pneg %p250
      %p370 = pneg %p279
      %p371 = pneg %p276
      %p372 = scmp.lt.s32.totalorder %s22, 1
      %s373 = scalar_select %p372, %s22, 1
      %s374 = scalar_lea.vmem %s11, %s373
      %p375 = scmp.lt.s32.totalorder %s22, 1
      %s376 = scalar_select %p375, %s22, 1
      %s377 = smul.addr %s376, 32
      %s378 = smul.addr %s377, 4
      %s379 = scalar_lea.vmem %s0, %s378
      %p380 = scmp.lt.s32.totalorder %s22, 1
      %s381 = scalar_select %p380, %s22, 1
      %s382 = scalar_lea.vmem %s11, %s381
      %v386 = vld [vmem:[%s379] sm:$0xf]
      %v387 = vld [vmem:[%s379 + $0x4] sm:$0xf]
      %v388 = vld [vmem:[%s379 + $0x8] sm:$0xf]
      %v389 = vld [vmem:[%s379 + $0xc] sm:$0xf]
      %v390 = vld [vmem:[%s379 + $0x10] sm:$0xf]
      %v391 = vld [vmem:[%s379 + $0x14] sm:$0xf]
      %v392 = vld [vmem:[%s379 + $0x18] sm:$0xf]
      %v393 = vld [vmem:[%s379 + $0x1c] sm:$0xf]
      %v394 = vld [vmem:[%s379 + $0x20] sm:$0xf]
      %v395 = vld [vmem:[%s379 + $0x24] sm:$0xf]
      %v396 = vld [vmem:[%s379 + $0x28] sm:$0xf]
      %v397 = vld [vmem:[%s379 + $0x2c] sm:$0xf]
      %v398 = vld [vmem:[%s379 + $0x30] sm:$0xf]
      %v399 = vld [vmem:[%s379 + $0x34] sm:$0xf]
      %v400 = vld [vmem:[%s379 + $0x38] sm:$0xf]
      %v401 = vld [vmem:[%s379 + $0x3c] sm:$0xf]
      %v402 = vld [vmem:[%s379 + $0x40] sm:$0xf]
      %v403 = vld [vmem:[%s379 + $0x44] sm:$0xf]
      %v404 = vld [vmem:[%s379 + $0x48] sm:$0xf]
      %v405 = vld [vmem:[%s379 + $0x4c] sm:$0xf]
      %v406 = vld [vmem:[%s379 + $0x50] sm:$0xf]
      %v407 = vld [vmem:[%s379 + $0x54] sm:$0xf]
      %v408 = vld [vmem:[%s379 + $0x58] sm:$0xf]
      %v409 = vld [vmem:[%s379 + $0x5c] sm:$0xf]
      %v410 = vld [vmem:[%s379 + $0x60] sm:$0xf]
      %v411 = vld [vmem:[%s379 + $0x64] sm:$0xf]
      %v412 = vld [vmem:[%s379 + $0x68] sm:$0xf]
      %v413 = vld [vmem:[%s379 + $0x6c] sm:$0xf]
      %v414 = vld [vmem:[%s379 + $0x70] sm:$0xf]
      %v415 = vld [vmem:[%s379 + $0x74] sm:$0xf]
      %v416 = vld [vmem:[%s379 + $0x78] sm:$0xf]
      %v417 = vld [vmem:[%s379 + $0x7c] sm:$0xf]
      %v450 = vunpack.c.l.b16 %v386
      %v451 = vunpack.c.l.b16 %v387
      %v452 = vunpack.c.l.b16 %v388
      %v453 = vunpack.c.l.b16 %v389
      %v454 = vunpack.c.l.b16 %v390
      %v455 = vunpack.c.l.b16 %v391
      %v456 = vunpack.c.l.b16 %v392
      %v457 = vunpack.c.l.b16 %v393
      %v458 = vunpack.c.l.b16 %v394
      %v459 = vunpack.c.l.b16 %v395
      %v460 = vunpack.c.l.b16 %v396
      %v461 = vunpack.c.l.b16 %v397
      %v462 = vunpack.c.l.b16 %v398
      %v463 = vunpack.c.l.b16 %v399
      %v464 = vunpack.c.l.b16 %v400
      %v465 = vunpack.c.l.b16 %v401
      %v466 = vunpack.c.l.b16 %v402
      %v467 = vunpack.c.l.b16 %v403
      %v468 = vunpack.c.l.b16 %v404
      %v469 = vunpack.c.l.b16 %v405
      %v470 = vunpack.c.l.b16 %v406
      %v471 = vunpack.c.l.b16 %v407
      %v472 = vunpack.c.l.b16 %v408
      %v473 = vunpack.c.l.b16 %v409
      %v474 = vunpack.c.l.b16 %v410
      %v475 = vunpack.c.l.b16 %v411
      %v476 = vunpack.c.l.b16 %v412
      %v477 = vunpack.c.l.b16 %v413
      %v478 = vunpack.c.l.b16 %v414
      %v479 = vunpack.c.l.b16 %v415
      %v480 = vunpack.c.l.b16 %v416
      %v481 = vunpack.c.l.b16 %v417
      %v482 = vpack.c.b16 %v450, %v450
      %v483 = vpack.c.b16 %v452, %v451
      %v484 = vpack.c.b16 %v454, %v453
      %v485 = vpack.c.b16 %v456, %v455
      %v486 = vpack.c.b16 %v458, %v457
      %v487 = vpack.c.b16 %v460, %v459
      %v488 = vpack.c.b16 %v462, %v461
      %v489 = vpack.c.b16 %v464, %v463
      %v490 = vpack.c.b16 %v466, %v465
      %v491 = vpack.c.b16 %v468, %v467
      %v492 = vpack.c.b16 %v470, %v469
      %v493 = vpack.c.b16 %v472, %v471
      %v494 = vpack.c.b16 %v474, %v473
      %v495 = vpack.c.b16 %v476, %v475
      %v496 = vpack.c.b16 %v478, %v477
      %v497 = vpack.c.b16 %v480, %v479
      %v498 = vpack.c.b16 %v481, %v481
      %vm514 = vcmask 1043456
      %v517 = vsel %vm514, 0, %v482
      %v520 = vsel %vm514, %v498, 0
      %v522 = vlaneseq
      %v523 = vshrl.u32 %v522, 7
      %v524 = vadd.s32 %v523, 8
      %v525 = vadd.s32 %v523, 16
      %v526 = vadd.s32 %v523, 24
      %v527 = vadd.s32 %v523, 32
      %v528 = vadd.s32 %v523, 40
      %v529 = vadd.s32 %v523, 48
      %v530 = vadd.s32 %v523, 56
      %v531 = vadd.s32 %v523, 64
      %v532 = vadd.s32 %v523, 72
      %v533 = vadd.s32 %v523, 80
      %v534 = vadd.s32 %v523, 88
      %v535 = vadd.s32 %v523, 96
      %v536 = vadd.s32 %v523, 104
      %v537 = vadd.s32 %v523, 112
      %v538 = vadd.s32 %v523, 120
      %v539 = vadd.s32 %v523, 128
      %v540 = vadd.s32 %v523, 136
      %v541 = vadd.s32 %v523, 144
      %v542 = vadd.s32 %v523, 152
      %v543 = vadd.s32 %v523, 160
      %v544 = vadd.s32 %v523, 168
      %v545 = vadd.s32 %v523, 176
      %v546 = vadd.s32 %v523, 184
      %v547 = vadd.s32 %v523, 192
      %v548 = vadd.s32 %v523, 200
      %v549 = vadd.s32 %v523, 208
      %v550 = vadd.s32 %v523, 216
      %v551 = vadd.s32 %v523, 224
      %v552 = vadd.s32 %v523, 232
      %v553 = vadd.s32 %v523, 240
      %v554 = vadd.s32 %v523, 248
      %vm555 = vcmp.lt.s32.totalorder %v523, 0
      %v556 = vsub.s32 0, %v523
      %v557 = vsel %vm555, %v556, %v523
      %v558 = vshrl.u32 %v557, 4
      %v559 = vand.u32 %v557, 15
      %v560 = vsub.s32 0, %v559
      %v561 = vsel %vm555, %v560, %v559
      %vm562 = vcmp.lt.s32.totalorder %v524, 0
      %v563 = vsub.s32 0, %v524
      %v564 = vsel %vm562, %v563, %v524
      %v565 = vshrl.u32 %v564, 4
      %v566 = vand.u32 %v564, 15
      %v567 = vsub.s32 0, %v566
      %v568 = vsel %vm562, %v567, %v566
      %vm569 = vcmp.lt.s32.totalorder %v525, 0
      %v570 = vsub.s32 0, %v525
      %v571 = vsel %vm569, %v570, %v525
      %v572 = vshrl.u32 %v571, 4
      %v573 = vand.u32 %v571, 15
      %v574 = vsub.s32 0, %v573
      %v575 = vsel %vm569, %v574, %v573
      %vm576 = vcmp.lt.s32.totalorder %v526, 0
      %v577 = vsub.s32 0, %v526
      %v578 = vsel %vm576, %v577, %v526
      %v579 = vshrl.u32 %v578, 4
      %v580 = vand.u32 %v578, 15
      %v581 = vsub.s32 0, %v580
      %v582 = vsel %vm576, %v581, %v580
      %vm583 = vcmp.lt.s32.totalorder %v527, 0
      %v584 = vsub.s32 0, %v527
      %v585 = vsel %vm583, %v584, %v527
      %v586 = vshrl.u32 %v585, 4
      %v587 = vand.u32 %v585, 15
      %v588 = vsub.s32 0, %v587
      %v589 = vsel %vm583, %v588, %v587
      %vm590 = vcmp.lt.s32.totalorder %v528, 0
      %v591 = vsub.s32 0, %v528
      %v592 = vsel %vm590, %v591, %v528
      %v593 = vshrl.u32 %v592, 4
      %v594 = vand.u32 %v592, 15
      %v595 = vsub.s32 0, %v594
      %v596 = vsel %vm590, %v595, %v594
      %vm597 = vcmp.lt.s32.totalorder %v529, 0
      %v598 = vsub.s32 0, %v529
      %v599 = vsel %vm597, %v598, %v529
      %v600 = vshrl.u32 %v599, 4
      %v601 = vand.u32 %v599, 15
      %v602 = vsub.s32 0, %v601
      %v603 = vsel %vm597, %v602, %v601
      %vm604 = vcmp.lt.s32.totalorder %v530, 0
      %v605 = vsub.s32 0, %v530
      %v606 = vsel %vm604, %v605, %v530
      %v607 = vshrl.u32 %v606, 4
      %v608 = vand.u32 %v606, 15
      %v609 = vsub.s32 0, %v608
      %v610 = vsel %vm604, %v609, %v608
      %vm611 = vcmp.lt.s32.totalorder %v531, 0
      %v612 = vsub.s32 0, %v531
      %v613 = vsel %vm611, %v612, %v531
      %v614 = vshrl.u32 %v613, 4
      %v615 = vand.u32 %v613, 15
      %v616 = vsub.s32 0, %v615
      %v617 = vsel %vm611, %v616, %v615
      %vm618 = vcmp.lt.s32.totalorder %v532, 0
      %v619 = vsub.s32 0, %v532
      %v620 = vsel %vm618, %v619, %v532
      %v621 = vshrl.u32 %v620, 4
      %v622 = vand.u32 %v620, 15
      %v623 = vsub.s32 0, %v622
      %v624 = vsel %vm618, %v623, %v622
      %vm625 = vcmp.lt.s32.totalorder %v533, 0
      %v626 = vsub.s32 0, %v533
      %v627 = vsel %vm625, %v626, %v533
      %v628 = vshrl.u32 %v627, 4
      %v629 = vand.u32 %v627, 15
      %v630 = vsub.s32 0, %v629
      %v631 = vsel %vm625, %v630, %v629
      %vm632 = vcmp.lt.s32.totalorder %v534, 0
      %v633 = vsub.s32 0, %v534
      %v634 = vsel %vm632, %v633, %v534
      %v635 = vshrl.u32 %v634, 4
      %v636 = vand.u32 %v634, 15
      %v637 = vsub.s32 0, %v636
      %v638 = vsel %vm632, %v637, %v636
      %vm639 = vcmp.lt.s32.totalorder %v535, 0
      %v640 = vsub.s32 0, %v535
      %v641 = vsel %vm639, %v640, %v535
      %v642 = vshrl.u32 %v641, 4
      %v643 = vand.u32 %v641, 15
      %v644 = vsub.s32 0, %v643
      %v645 = vsel %vm639, %v644, %v643
      %vm646 = vcmp.lt.s32.totalorder %v536, 0
      %v647 = vsub.s32 0, %v536
      %v648 = vsel %vm646, %v647, %v536
      %v649 = vshrl.u32 %v648, 4
      %v650 = vand.u32 %v648, 15
      %v651 = vsub.s32 0, %v650
      %v652 = vsel %vm646, %v651, %v650
      %vm653 = vcmp.lt.s32.totalorder %v537, 0
      %v654 = vsub.s32 0, %v537
      %v655 = vsel %vm653, %v654, %v537
      %v656 = vshrl.u32 %v655, 4
      %v657 = vand.u32 %v655, 15
      %v658 = vsub.s32 0, %v657
      %v659 = vsel %vm653, %v658, %v657
      %vm660 = vcmp.lt.s32.totalorder %v538, 0
      %v661 = vsub.s32 0, %v538
      %v662 = vsel %vm660, %v661, %v538
      %v663 = vshrl.u32 %v662, 4
      %v664 = vand.u32 %v662, 15
      %v665 = vsub.s32 0, %v664
      %v666 = vsel %vm660, %v665, %v664
      %vm667 = vcmp.lt.s32.totalorder %v539, 0
      %v668 = vsub.s32 0, %v539
      %v669 = vsel %vm667, %v668, %v539
      %v670 = vshrl.u32 %v669, 4
      %v671 = vand.u32 %v669, 15
      %v672 = vsub.s32 0, %v671
      %v673 = vsel %vm667, %v672, %v671
      %vm674 = vcmp.lt.s32.totalorder %v540, 0
      %v675 = vsub.s32 0, %v540
      %v676 = vsel %vm674, %v675, %v540
      %v677 = vshrl.u32 %v676, 4
      %v678 = vand.u32 %v676, 15
      %v679 = vsub.s32 0, %v678
      %v680 = vsel %vm674, %v679, %v678
      %vm681 = vcmp.lt.s32.totalorder %v541, 0
      %v682 = vsub.s32 0, %v541
      %v683 = vsel %vm681, %v682, %v541
      %v684 = vshrl.u32 %v683, 4
      %v685 = vand.u32 %v683, 15
      %v686 = vsub.s32 0, %v685
      %v687 = vsel %vm681, %v686, %v685
      %vm688 = vcmp.lt.s32.totalorder %v542, 0
      %v689 = vsub.s32 0, %v542
      %v690 = vsel %vm688, %v689, %v542
      %v691 = vshrl.u32 %v690, 4
      %v692 = vand.u32 %v690, 15
      %v693 = vsub.s32 0, %v692
      %v694 = vsel %vm688, %v693, %v692
      %vm695 = vcmp.lt.s32.totalorder %v543, 0
      %v696 = vsub.s32 0, %v543
      %v697 = vsel %vm695, %v696, %v543
      %v698 = vshrl.u32 %v697, 4
      %v699 = vand.u32 %v697, 15
      %v700 = vsub.s32 0, %v699
      %v701 = vsel %vm695, %v700, %v699
      %vm702 = vcmp.lt.s32.totalorder %v544, 0
      %v703 = vsub.s32 0, %v544
      %v704 = vsel %vm702, %v703, %v544
      %v705 = vshrl.u32 %v704, 4
      %v706 = vand.u32 %v704, 15
      %v707 = vsub.s32 0, %v706
      %v708 = vsel %vm702, %v707, %v706
      %vm709 = vcmp.lt.s32.totalorder %v545, 0
      %v710 = vsub.s32 0, %v545
      %v711 = vsel %vm709, %v710, %v545
      %v712 = vshrl.u32 %v711, 4
      %v713 = vand.u32 %v711, 15
      %v714 = vsub.s32 0, %v713
      %v715 = vsel %vm709, %v714, %v713
      %vm716 = vcmp.lt.s32.totalorder %v546, 0
      %v717 = vsub.s32 0, %v546
      %v718 = vsel %vm716, %v717, %v546
      %v719 = vshrl.u32 %v718, 4
      %v720 = vand.u32 %v718, 15
      %v721 = vsub.s32 0, %v720
      %v722 = vsel %vm716, %v721, %v720
      %vm723 = vcmp.lt.s32.totalorder %v547, 0
      %v724 = vsub.s32 0, %v547
      %v725 = vsel %vm723, %v724, %v547
      %v726 = vshrl.u32 %v725, 4
      %v727 = vand.u32 %v725, 15
      %v728 = vsub.s32 0, %v727
      %v729 = vsel %vm723, %v728, %v727
      %vm730 = vcmp.lt.s32.totalorder %v548, 0
      %v731 = vsub.s32 0, %v548
      %v732 = vsel %vm730, %v731, %v548
      %v733 = vshrl.u32 %v732, 4
      %v734 = vand.u32 %v732, 15
      %v735 = vsub.s32 0, %v734
      %v736 = vsel %vm730, %v735, %v734
      %vm737 = vcmp.lt.s32.totalorder %v549, 0
      %v738 = vsub.s32 0, %v549
      %v739 = vsel %vm737, %v738, %v549
      %v740 = vshrl.u32 %v739, 4
      %v741 = vand.u32 %v739, 15
      %v742 = vsub.s32 0, %v741
      %v743 = vsel %vm737, %v742, %v741
      %vm744 = vcmp.lt.s32.totalorder %v550, 0
      %v745 = vsub.s32 0, %v550
      %v746 = vsel %vm744, %v745, %v550
      %v747 = vshrl.u32 %v746, 4
      %v748 = vand.u32 %v746, 15
      %v749 = vsub.s32 0, %v748
      %v750 = vsel %vm744, %v749, %v748
      %vm751 = vcmp.lt.s32.totalorder %v551, 0
      %v752 = vsub.s32 0, %v551
      %v753 = vsel %vm751, %v752, %v551
      %v754 = vshrl.u32 %v753, 4
      %v755 = vand.u32 %v753, 15
      %v756 = vsub.s32 0, %v755
      %v757 = vsel %vm751, %v756, %v755
      %vm758 = vcmp.lt.s32.totalorder %v552, 0
      %v759 = vsub.s32 0, %v552
      %v760 = vsel %vm758, %v759, %v552
      %v761 = vshrl.u32 %v760, 4
      %v762 = vand.u32 %v760, 15
      %v763 = vsub.s32 0, %v762
      %v764 = vsel %vm758, %v763, %v762
      %vm765 = vcmp.lt.s32.totalorder %v553, 0
      %v766 = vsub.s32 0, %v553
      %v767 = vsel %vm765, %v766, %v553
      %v768 = vshrl.u32 %v767, 4
      %v769 = vand.u32 %v767, 15
      %v770 = vsub.s32 0, %v769
      %v771 = vsel %vm765, %v770, %v769
      %vm772 = vcmp.lt.s32.totalorder %v554, 0
      %v773 = vsub.s32 0, %v554
      %v774 = vsel %vm772, %v773, %v554
      %v775 = vshrl.u32 %v774, 4
      %v776 = vand.u32 %v774, 15
      %v777 = vsub.s32 0, %v776
      %v778 = vsel %vm772, %v777, %v776
      %vm779 = vcmp.ne.s32.totalorder %v561, 0
      %vm780 = vcmp.ne.s32.totalorder %v568, 0
      %vm781 = vcmp.ne.s32.totalorder %v575, 0
      %vm782 = vcmp.ne.s32.totalorder %v582, 0
      %vm783 = vcmp.ne.s32.totalorder %v589, 0
      %vm784 = vcmp.ne.s32.totalorder %v596, 0
      %vm785 = vcmp.ne.s32.totalorder %v603, 0
      %vm786 = vcmp.ne.s32.totalorder %v610, 0
      %vm787 = vcmp.ne.s32.totalorder %v617, 0
      %vm788 = vcmp.ne.s32.totalorder %v624, 0
      %vm789 = vcmp.ne.s32.totalorder %v631, 0
      %vm790 = vcmp.ne.s32.totalorder %v638, 0
      %vm791 = vcmp.ne.s32.totalorder %v645, 0
      %vm792 = vcmp.ne.s32.totalorder %v652, 0
      %vm793 = vcmp.ne.s32.totalorder %v659, 0
      %vm794 = vcmp.ne.s32.totalorder %v666, 0
      %vm795 = vcmp.ne.s32.totalorder %v673, 0
      %vm796 = vcmp.ne.s32.totalorder %v680, 0
      %vm797 = vcmp.ne.s32.totalorder %v687, 0
      %vm798 = vcmp.ne.s32.totalorder %v694, 0
      %vm799 = vcmp.ne.s32.totalorder %v701, 0
      %vm800 = vcmp.ne.s32.totalorder %v708, 0
      %vm801 = vcmp.ne.s32.totalorder %v715, 0
      %vm802 = vcmp.ne.s32.totalorder %v722, 0
      %vm803 = vcmp.ne.s32.totalorder %v729, 0
      %vm804 = vcmp.ne.s32.totalorder %v736, 0
      %vm805 = vcmp.ne.s32.totalorder %v743, 0
      %vm806 = vcmp.ne.s32.totalorder %v750, 0
      %vm807 = vcmp.ne.s32.totalorder %v757, 0
      %vm808 = vcmp.ne.s32.totalorder %v764, 0
      %vm809 = vcmp.ne.s32.totalorder %v771, 0
      %vm810 = vcmp.ne.s32.totalorder %v778, 0
      %vm811 = vcmp.lt.s32.totalorder %v561, 0
      %vm812 = vcmp.lt.s32.totalorder %v568, 0
      %vm813 = vcmp.lt.s32.totalorder %v575, 0
      %vm814 = vcmp.lt.s32.totalorder %v582, 0
      %vm815 = vcmp.lt.s32.totalorder %v589, 0
      %vm816 = vcmp.lt.s32.totalorder %v596, 0
      %vm817 = vcmp.lt.s32.totalorder %v603, 0
      %vm818 = vcmp.lt.s32.totalorder %v610, 0
      %vm819 = vcmp.lt.s32.totalorder %v617, 0
      %vm820 = vcmp.lt.s32.totalorder %v624, 0
      %vm821 = vcmp.lt.s32.totalorder %v631, 0
      %vm822 = vcmp.lt.s32.totalorder %v638, 0
      %vm823 = vcmp.lt.s32.totalorder %v645, 0
      %vm824 = vcmp.lt.s32.totalorder %v652, 0
      %vm825 = vcmp.lt.s32.totalorder %v659, 0
      %vm826 = vcmp.lt.s32.totalorder %v666, 0
      %vm827 = vcmp.lt.s32.totalorder %v673, 0
      %vm828 = vcmp.lt.s32.totalorder %v680, 0
      %vm829 = vcmp.lt.s32.totalorder %v687, 0
      %vm830 = vcmp.lt.s32.totalorder %v694, 0
      %vm831 = vcmp.lt.s32.totalorder %v701, 0
      %vm832 = vcmp.lt.s32.totalorder %v708, 0
      %vm833 = vcmp.lt.s32.totalorder %v715, 0
      %vm834 = vcmp.lt.s32.totalorder %v722, 0
      %vm835 = vcmp.lt.s32.totalorder %v729, 0
      %vm836 = vcmp.lt.s32.totalorder %v736, 0
      %vm837 = vcmp.lt.s32.totalorder %v743, 0
      %vm838 = vcmp.lt.s32.totalorder %v750, 0
      %vm839 = vcmp.lt.s32.totalorder %v757, 0
      %vm840 = vcmp.lt.s32.totalorder %v764, 0
      %vm841 = vcmp.lt.s32.totalorder %v771, 0
      %vm842 = vcmp.lt.s32.totalorder %v778, 0
      %vm843 = vmand %vm811, %vm779
      %vm844 = vmand %vm812, %vm780
      %vm845 = vmand %vm813, %vm781
      %vm846 = vmand %vm814, %vm782
      %vm847 = vmand %vm815, %vm783
      %vm848 = vmand %vm816, %vm784
      %vm849 = vmand %vm817, %vm785
      %vm850 = vmand %vm818, %vm786
      %vm851 = vmand %vm819, %vm787
      %vm852 = vmand %vm820, %vm788
      %vm853 = vmand %vm821, %vm789
      %vm854 = vmand %vm822, %vm790
      %vm855 = vmand %vm823, %vm791
      %vm856 = vmand %vm824, %vm792
      %vm857 = vmand %vm825, %vm793
      %vm858 = vmand %vm826, %vm794
      %vm859 = vmand %vm827, %vm795
      %vm860 = vmand %vm828, %vm796
      %vm861 = vmand %vm829, %vm797
      %vm862 = vmand %vm830, %vm798
      %vm863 = vmand %vm831, %vm799
      %vm864 = vmand %vm832, %vm800
      %vm865 = vmand %vm833, %vm801
      %vm866 = vmand %vm834, %vm802
      %vm867 = vmand %vm835, %vm803
      %vm868 = vmand %vm836, %vm804
      %vm869 = vmand %vm837, %vm805
      %vm870 = vmand %vm838, %vm806
      %vm871 = vmand %vm839, %vm807
      %vm872 = vmand %vm840, %vm808
      %vm873 = vmand %vm841, %vm809
      %vm874 = vmand %vm842, %vm810
      %v875 = vadd.s32 %v561, 16
      %v876 = vadd.s32 %v568, 16
      %v877 = vadd.s32 %v575, 16
      %v878 = vadd.s32 %v582, 16
      %v879 = vadd.s32 %v589, 16
      %v880 = vadd.s32 %v596, 16
      %v881 = vadd.s32 %v603, 16
      %v882 = vadd.s32 %v610, 16
      %v883 = vadd.s32 %v617, 16
      %v884 = vadd.s32 %v624, 16
      %v885 = vadd.s32 %v631, 16
      %v886 = vadd.s32 %v638, 16
      %v887 = vadd.s32 %v645, 16
      %v888 = vadd.s32 %v652, 16
      %v889 = vadd.s32 %v659, 16
      %v890 = vadd.s32 %v666, 16
      %v891 = vadd.s32 %v673, 16
      %v892 = vadd.s32 %v680, 16
      %v893 = vadd.s32 %v687, 16
      %v894 = vadd.s32 %v694, 16
      %v895 = vadd.s32 %v701, 16
      %v896 = vadd.s32 %v708, 16
      %v897 = vadd.s32 %v715, 16
      %v898 = vadd.s32 %v722, 16
      %v899 = vadd.s32 %v729, 16
      %v900 = vadd.s32 %v736, 16
      %v901 = vadd.s32 %v743, 16
      %v902 = vadd.s32 %v750, 16
      %v903 = vadd.s32 %v757, 16
      %v904 = vadd.s32 %v764, 16
      %v905 = vadd.s32 %v771, 16
      %v906 = vadd.s32 %v778, 16
      %v907 = vsel %vm843, %v875, %v561
      %v908 = vsel %vm844, %v876, %v568
      %v909 = vsel %vm845, %v877, %v575
      %v910 = vsel %vm846, %v878, %v582
      %v911 = vsel %vm847, %v879, %v589
      %v912 = vsel %vm848, %v880, %v596
      %v913 = vsel %vm849, %v881, %v603
      %v914 = vsel %vm850, %v882, %v610
      %v915 = vsel %vm851, %v883, %v617
      %v916 = vsel %vm852, %v884, %v624
      %v917 = vsel %vm853, %v885, %v631
      %v918 = vsel %vm854, %v886, %v638
      %v919 = vsel %vm855, %v887, %v645
      %v920 = vsel %vm856, %v888, %v652
      %v921 = vsel %vm857, %v889, %v659
      %v922 = vsel %vm858, %v890, %v666
      %v923 = vsel %vm859, %v891, %v673
      %v924 = vsel %vm860, %v892, %v680
      %v925 = vsel %vm861, %v893, %v687
      %v926 = vsel %vm862, %v894, %v694
      %v927 = vsel %vm863, %v895, %v701
      %v928 = vsel %vm864, %v896, %v708
      %v929 = vsel %vm865, %v897, %v715
      %v930 = vsel %vm866, %v898, %v722
      %v931 = vsel %vm867, %v899, %v729
      %v932 = vsel %vm868, %v900, %v736
      %v933 = vsel %vm869, %v901, %v743
      %v934 = vsel %vm870, %v902, %v750
      %v935 = vsel %vm871, %v903, %v757
      %v936 = vsel %vm872, %v904, %v764
      %v937 = vsel %vm873, %v905, %v771
      %v938 = vsel %vm874, %v906, %v778
      %vm939 = vcmp.ge.s32.totalorder %v907, 1
      %vm940 = vcmp.ge.s32.totalorder %v908, 1
      %vm941 = vcmp.ge.s32.totalorder %v909, 1
      %vm942 = vcmp.ge.s32.totalorder %v910, 1
      %vm943 = vcmp.ge.s32.totalorder %v911, 1
      %vm944 = vcmp.ge.s32.totalorder %v912, 1
      %vm945 = vcmp.ge.s32.totalorder %v913, 1
      %vm946 = vcmp.ge.s32.totalorder %v914, 1
      %vm947 = vcmp.ge.s32.totalorder %v915, 1
      %vm948 = vcmp.ge.s32.totalorder %v916, 1
      %vm949 = vcmp.ge.s32.totalorder %v917, 1
      %vm950 = vcmp.ge.s32.totalorder %v918, 1
      %vm951 = vcmp.ge.s32.totalorder %v919, 1
      %vm952 = vcmp.ge.s32.totalorder %v920, 1
      %vm953 = vcmp.ge.s32.totalorder %v921, 1
      %vm954 = vcmp.ge.s32.totalorder %v922, 1
      %vm955 = vcmp.ge.s32.totalorder %v923, 1
      %vm956 = vcmp.ge.s32.totalorder %v924, 1
      %vm957 = vcmp.ge.s32.totalorder %v925, 1
      %vm958 = vcmp.ge.s32.totalorder %v926, 1
      %vm959 = vcmp.ge.s32.totalorder %v927, 1
      %vm960 = vcmp.ge.s32.totalorder %v928, 1
      %vm961 = vcmp.ge.s32.totalorder %v929, 1
      %vm962 = vcmp.ge.s32.totalorder %v930, 1
      %vm963 = vcmp.ge.s32.totalorder %v931, 1
      %vm964 = vcmp.ge.s32.totalorder %v932, 1
      %vm965 = vcmp.ge.s32.totalorder %v933, 1
      %vm966 = vcmp.ge.s32.totalorder %v934, 1
      %vm967 = vcmp.ge.s32.totalorder %v935, 1
      %vm968 = vcmp.ge.s32.totalorder %v936, 1
      %vm969 = vcmp.ge.s32.totalorder %v937, 1
      %vm970 = vcmp.ge.s32.totalorder %v938, 1
      %vm971 = vcmp.le.s32.totalorder %v907, 14
      %vm972 = vcmp.le.s32.totalorder %v908, 14
      %vm973 = vcmp.le.s32.totalorder %v909, 14
      %vm974 = vcmp.le.s32.totalorder %v910, 14
      %vm975 = vcmp.le.s32.totalorder %v911, 14
      %vm976 = vcmp.le.s32.totalorder %v912, 14
      %vm977 = vcmp.le.s32.totalorder %v913, 14
      %vm978 = vcmp.le.s32.totalorder %v914, 14
      %vm979 = vcmp.le.s32.totalorder %v915, 14
      %vm980 = vcmp.le.s32.totalorder %v916, 14
      %vm981 = vcmp.le.s32.totalorder %v917, 14
      %vm982 = vcmp.le.s32.totalorder %v918, 14
      %vm983 = vcmp.le.s32.totalorder %v919, 14
      %vm984 = vcmp.le.s32.totalorder %v920, 14
      %vm985 = vcmp.le.s32.totalorder %v921, 14
      %vm986 = vcmp.le.s32.totalorder %v922, 14
      %vm987 = vcmp.le.s32.totalorder %v923, 14
      %vm988 = vcmp.le.s32.totalorder %v924, 14
      %vm989 = vcmp.le.s32.totalorder %v925, 14
      %vm990 = vcmp.le.s32.totalorder %v926, 14
      %vm991 = vcmp.le.s32.totalorder %v927, 14
      %vm992 = vcmp.le.s32.totalorder %v928, 14
      %vm993 = vcmp.le.s32.totalorder %v929, 14
      %vm994 = vcmp.le.s32.totalorder %v930, 14
      %vm995 = vcmp.le.s32.totalorder %v931, 14
      %vm996 = vcmp.le.s32.totalorder %v932, 14
      %vm997 = vcmp.le.s32.totalorder %v933, 14
      %vm998 = vcmp.le.s32.totalorder %v934, 14
      %vm999 = vcmp.le.s32.totalorder %v935, 14
      %vm1000 = vcmp.le.s32.totalorder %v936, 14
      %vm1001 = vcmp.le.s32.totalorder %v937, 14
      %vm1002 = vcmp.le.s32.totalorder %v938, 14
      %v1003 = vsel %vm939, 1, 0
      %v1004 = vsel %vm940, 1, 0
      %v1005 = vsel %vm941, 1, 0
      %v1006 = vsel %vm942, 1, 0
      %v1007 = vsel %vm943, 1, 0
      %v1008 = vsel %vm944, 1, 0
      %v1009 = vsel %vm945, 1, 0
      %v1010 = vsel %vm946, 1, 0
      %v1011 = vsel %vm947, 1, 0
      %v1012 = vsel %vm948, 1, 0
      %v1013 = vsel %vm949, 1, 0
      %v1014 = vsel %vm950, 1, 0
      %v1015 = vsel %vm951, 1, 0
      %v1016 = vsel %vm952, 1, 0
      %v1017 = vsel %vm953, 1, 0
      %v1018 = vsel %vm954, 1, 0
      %v1019 = vsel %vm955, 1, 0
      %v1020 = vsel %vm956, 1, 0
      %v1021 = vsel %vm957, 1, 0
      %v1022 = vsel %vm958, 1, 0
      %v1023 = vsel %vm959, 1, 0
      %v1024 = vsel %vm960, 1, 0
      %v1025 = vsel %vm961, 1, 0
      %v1026 = vsel %vm962, 1, 0
      %v1027 = vsel %vm963, 1, 0
      %v1028 = vsel %vm964, 1, 0
      %v1029 = vsel %vm965, 1, 0
      %v1030 = vsel %vm966, 1, 0
      %v1031 = vsel %vm967, 1, 0
      %v1032 = vsel %vm968, 1, 0
      %v1033 = vsel %vm969, 1, 0
      %v1034 = vsel %vm970, 1, 0
      %vm1035 = vcmp.eq.s32.totalorder %v1003, 1
      %vm1036 = vcmp.eq.s32.totalorder %v1004, 1
      %vm1037 = vcmp.eq.s32.totalorder %v1005, 1
      %vm1038 = vcmp.eq.s32.totalorder %v1006, 1
      %vm1039 = vcmp.eq.s32.totalorder %v1007, 1
      %vm1040 = vcmp.eq.s32.totalorder %v1008, 1
      %vm1041 = vcmp.eq.s32.totalorder %v1009, 1
      %vm1042 = vcmp.eq.s32.totalorder %v1010, 1
      %vm1043 = vcmp.eq.s32.totalorder %v1011, 1
      %vm1044 = vcmp.eq.s32.totalorder %v1012, 1
      %vm1045 = vcmp.eq.s32.totalorder %v1013, 1
      %vm1046 = vcmp.eq.s32.totalorder %v1014, 1
      %vm1047 = vcmp.eq.s32.totalorder %v1015, 1
      %vm1048 = vcmp.eq.s32.totalorder %v1016, 1
      %vm1049 = vcmp.eq.s32.totalorder %v1017, 1
      %vm1050 = vcmp.eq.s32.totalorder %v1018, 1
      %vm1051 = vcmp.eq.s32.totalorder %v1019, 1
      %vm1052 = vcmp.eq.s32.totalorder %v1020, 1
      %vm1053 = vcmp.eq.s32.totalorder %v1021, 1
      %vm1054 = vcmp.eq.s32.totalorder %v1022, 1
      %vm1055 = vcmp.eq.s32.totalorder %v1023, 1
      %vm1056 = vcmp.eq.s32.totalorder %v1024, 1
      %vm1057 = vcmp.eq.s32.totalorder %v1025, 1
      %vm1058 = vcmp.eq.s32.totalorder %v1026, 1
      %vm1059 = vcmp.eq.s32.totalorder %v1027, 1
      %vm1060 = vcmp.eq.s32.totalorder %v1028, 1
      %vm1061 = vcmp.eq.s32.totalorder %v1029, 1
      %vm1062 = vcmp.eq.s32.totalorder %v1030, 1
      %vm1063 = vcmp.eq.s32.totalorder %v1031, 1
      %vm1064 = vcmp.eq.s32.totalorder %v1032, 1
      %vm1065 = vcmp.eq.s32.totalorder %v1033, 1
      %vm1066 = vcmp.eq.s32.totalorder %v1034, 1
      %vm1067 = vmpackc.low %vm1035, %vm1035
      %vm1068 = vmpackc.low %vm1036, %vm1036
      %vm1069 = vmpackc.low %vm1037, %vm1037
      %vm1070 = vmpackc.low %vm1038, %vm1038
      %vm1071 = vmpackc.low %vm1039, %vm1039
      %vm1072 = vmpackc.low %vm1040, %vm1040
      %vm1073 = vmpackc.low %vm1041, %vm1041
      %vm1074 = vmpackc.low %vm1042, %vm1042
      %vm1075 = vmpackc.low %vm1043, %vm1043
      %vm1076 = vmpackc.low %vm1044, %vm1044
      %vm1077 = vmpackc.low %vm1045, %vm1045
      %vm1078 = vmpackc.low %vm1046, %vm1046
      %vm1079 = vmpackc.low %vm1047, %vm1047
      %vm1080 = vmpackc.low %vm1048, %vm1048
      %vm1081 = vmpackc.low %vm1049, %vm1049
      %vm1082 = vmpackc.low %vm1050, %vm1050
      %vm1083 = vmpackc.low %vm1051, %vm1051
      %vm1084 = vmpackc.low %vm1052, %vm1052
      %vm1085 = vmpackc.low %vm1053, %vm1053
      %vm1086 = vmpackc.low %vm1054, %vm1054
      %vm1087 = vmpackc.low %vm1055, %vm1055
      %vm1088 = vmpackc.low %vm1056, %vm1056
      %vm1089 = vmpackc.low %vm1057, %vm1057
      %vm1090 = vmpackc.low %vm1058, %vm1058
      %vm1091 = vmpackc.low %vm1059, %vm1059
      %vm1092 = vmpackc.low %vm1060, %vm1060
      %vm1093 = vmpackc.low %vm1061, %vm1061
      %vm1094 = vmpackc.low %vm1062, %vm1062
      %vm1095 = vmpackc.low %vm1063, %vm1063
      %vm1096 = vmpackc.low %vm1064, %vm1064
      %vm1097 = vmpackc.low %vm1065, %vm1065
      %vm1098 = vmpackc.low %vm1066, %vm1066
      %v1099 = vsel %vm1067, 65537, 0
      %v1100 = vsel %vm1068, 65537, 0
      %v1101 = vsel %vm1069, 65537, 0
      %v1102 = vsel %vm1070, 65537, 0
      %v1103 = vsel %vm1071, 65537, 0
      %v1104 = vsel %vm1072, 65537, 0
      %v1105 = vsel %vm1073, 65537, 0
      %v1106 = vsel %vm1074, 65537, 0
      %v1107 = vsel %vm1075, 65537, 0
      %v1108 = vsel %vm1076, 65537, 0
      %v1109 = vsel %vm1077, 65537, 0
      %v1110 = vsel %vm1078, 65537, 0
      %v1111 = vsel %vm1079, 65537, 0
      %v1112 = vsel %vm1080, 65537, 0
      %v1113 = vsel %vm1081, 65537, 0
      %v1114 = vsel %vm1082, 65537, 0
      %v1115 = vsel %vm1083, 65537, 0
      %v1116 = vsel %vm1084, 65537, 0
      %v1117 = vsel %vm1085, 65537, 0
      %v1118 = vsel %vm1086, 65537, 0
      %v1119 = vsel %vm1087, 65537, 0
      %v1120 = vsel %vm1088, 65537, 0
      %v1121 = vsel %vm1089, 65537, 0
      %v1122 = vsel %vm1090, 65537, 0
      %v1123 = vsel %vm1091, 65537, 0
      %v1124 = vsel %vm1092, 65537, 0
      %v1125 = vsel %vm1093, 65537, 0
      %v1126 = vsel %vm1094, 65537, 0
      %v1127 = vsel %vm1095, 65537, 0
      %v1128 = vsel %vm1096, 65537, 0
      %v1129 = vsel %vm1097, 65537, 0
      %v1130 = vsel %vm1098, 65537, 0
      %v1131 = vunpack.c.l.b16 %v1099
      %v1132 = vunpack.c.l.b16 %v1100
      %v1133 = vunpack.c.l.b16 %v1101
      %v1134 = vunpack.c.l.b16 %v1102
      %v1135 = vunpack.c.l.b16 %v1103
      %v1136 = vunpack.c.l.b16 %v1104
      %v1137 = vunpack.c.l.b16 %v1105
      %v1138 = vunpack.c.l.b16 %v1106
      %v1139 = vunpack.c.l.b16 %v1107
      %v1140 = vunpack.c.l.b16 %v1108
      %v1141 = vunpack.c.l.b16 %v1109
      %v1142 = vunpack.c.l.b16 %v1110
      %v1143 = vunpack.c.l.b16 %v1111
      %v1144 = vunpack.c.l.b16 %v1112
      %v1145 = vunpack.c.l.b16 %v1113
      %v1146 = vunpack.c.l.b16 %v1114
      %v1147 = vunpack.c.l.b16 %v1115
      %v1148 = vunpack.c.l.b16 %v1116
      %v1149 = vunpack.c.l.b16 %v1117
      %v1150 = vunpack.c.l.b16 %v1118
      %v1151 = vunpack.c.l.b16 %v1119
      %v1152 = vunpack.c.l.b16 %v1120
      %v1153 = vunpack.c.l.b16 %v1121
      %v1154 = vunpack.c.l.b16 %v1122
      %v1155 = vunpack.c.l.b16 %v1123
      %v1156 = vunpack.c.l.b16 %v1124
      %v1157 = vunpack.c.l.b16 %v1125
      %v1158 = vunpack.c.l.b16 %v1126
      %v1159 = vunpack.c.l.b16 %v1127
      %v1160 = vunpack.c.l.b16 %v1128
      %v1161 = vunpack.c.l.b16 %v1129
      %v1162 = vunpack.c.l.b16 %v1130
      %v1163 = vpack.c.b16 %v1132, %v1131
      %v1164 = vpack.c.b16 %v1134, %v1133
      %v1165 = vpack.c.b16 %v1136, %v1135
      %v1166 = vpack.c.b16 %v1138, %v1137
      %v1167 = vpack.c.b16 %v1140, %v1139
      %v1168 = vpack.c.b16 %v1142, %v1141
      %v1169 = vpack.c.b16 %v1144, %v1143
      %v1170 = vpack.c.b16 %v1146, %v1145
      %v1171 = vpack.c.b16 %v1148, %v1147
      %v1172 = vpack.c.b16 %v1150, %v1149
      %v1173 = vpack.c.b16 %v1152, %v1151
      %v1174 = vpack.c.b16 %v1154, %v1153
      %v1175 = vpack.c.b16 %v1156, %v1155
      %v1176 = vpack.c.b16 %v1158, %v1157
      %v1177 = vpack.c.b16 %v1160, %v1159
      %v1178 = vpack.c.b16 %v1162, %v1161
      %vm1179 = vsmask.f32 3328
      %v1181 = vshrl.u32 %v1163, 16
      %v1183 = vrot.slane %v1181, 4
      %v1184 = vshll.u32 %v1163, 16
      %v1186 = vrot.slane %v1184, 5
      %v1187 = vor.u32 %v1183, %v1186
      %v1189 = vshrl.u32 %v1164, 16
      %v1191 = vrot.slane %v1189, 4
      %v1192 = vshll.u32 %v1164, 16
      %v1194 = vrot.slane %v1192, 5
      %v1195 = vor.u32 %v1191, %v1194
      %v1196 = vsel %vm1179, %v1187, %v1195
      %v1198 = vshrl.u32 %v1165, 16
      %v1200 = vrot.slane %v1198, 4
      %v1201 = vshll.u32 %v1165, 16
      %v1203 = vrot.slane %v1201, 5
      %v1204 = vor.u32 %v1200, %v1203
      %v1205 = vsel %vm1179, %v1195, %v1204
      %v1207 = vshrl.u32 %v1166, 16
      %v1209 = vrot.slane %v1207, 4
      %v1210 = vshll.u32 %v1166, 16
      %v1212 = vrot.slane %v1210, 5
      %v1213 = vor.u32 %v1209, %v1212
      %v1214 = vsel %vm1179, %v1204, %v1213
      %v1216 = vshrl.u32 %v1167, 16
      %v1218 = vrot.slane %v1216, 4
      %v1219 = vshll.u32 %v1167, 16
      %v1221 = vrot.slane %v1219, 5
      %v1222 = vor.u32 %v1218, %v1221
      %v1223 = vsel %vm1179, %v1213, %v1222
      %v1225 = vshrl.u32 %v1168, 16
      %v1227 = vrot.slane %v1225, 4
      %v1228 = vshll.u32 %v1168, 16
      %v1230 = vrot.slane %v1228, 5
      %v1231 = vor.u32 %v1227, %v1230
      %v1232 = vsel %vm1179, %v1222, %v1231
      %v1234 = vshrl.u32 %v1169, 16
      %v1236 = vrot.slane %v1234, 4
      %v1237 = vshll.u32 %v1169, 16
      %v1239 = vrot.slane %v1237, 5
      %v1240 = vor.u32 %v1236, %v1239
      %v1241 = vsel %vm1179, %v1231, %v1240
      %v1243 = vshrl.u32 %v1170, 16
      %v1245 = vrot.slane %v1243, 4
      %v1246 = vshll.u32 %v1170, 16
      %v1248 = vrot.slane %v1246, 5
      %v1249 = vor.u32 %v1245, %v1248
      %v1250 = vsel %vm1179, %v1240, %v1249
      %v1252 = vshrl.u32 %v1171, 16
      %v1254 = vrot.slane %v1252, 4
      %v1255 = vshll.u32 %v1171, 16
      %v1257 = vrot.slane %v1255, 5
      %v1258 = vor.u32 %v1254, %v1257
      %v1259 = vsel %vm1179, %v1249, %v1258
      %v1261 = vshrl.u32 %v1172, 16
      %v1263 = vrot.slane %v1261, 4
      %v1264 = vshll.u32 %v1172, 16
      %v1266 = vrot.slane %v1264, 5
      %v1267 = vor.u32 %v1263, %v1266
      %v1268 = vsel %vm1179, %v1258, %v1267
      %v1270 = vshrl.u32 %v1173, 16
      %v1272 = vrot.slane %v1270, 4
      %v1273 = vshll.u32 %v1173, 16
      %v1275 = vrot.slane %v1273, 5
      %v1276 = vor.u32 %v1272, %v1275
      %v1277 = vsel %vm1179, %v1267, %v1276
      %v1279 = vshrl.u32 %v1174, 16
      %v1281 = vrot.slane %v1279, 4
      %v1282 = vshll.u32 %v1174, 16
      %v1284 = vrot.slane %v1282, 5
      %v1285 = vor.u32 %v1281, %v1284
      %v1286 = vsel %vm1179, %v1276, %v1285
      %v1288 = vshrl.u32 %v1175, 16
      %v1290 = vrot.slane %v1288, 4
      %v1291 = vshll.u32 %v1175, 16
      %v1293 = vrot.slane %v1291, 5
      %v1294 = vor.u32 %v1290, %v1293
      %v1295 = vsel %vm1179, %v1285, %v1294
      %v1297 = vshrl.u32 %v1176, 16
      %v1299 = vrot.slane %v1297, 4
      %v1300 = vshll.u32 %v1176, 16
      %v1302 = vrot.slane %v1300, 5
      %v1303 = vor.u32 %v1299, %v1302
      %v1304 = vsel %vm1179, %v1294, %v1303
      %v1306 = vshrl.u32 %v1177, 16
      %v1308 = vrot.slane %v1306, 4
      %v1309 = vshll.u32 %v1177, 16
      %v1311 = vrot.slane %v1309, 5
      %v1312 = vor.u32 %v1308, %v1311
      %v1313 = vsel %vm1179, %v1303, %v1312
      %v1315 = vshrl.u32 %v1178, 16
      %v1317 = vrot.slane %v1315, 4
      %v1318 = vshll.u32 %v1178, 16
      %v1320 = vrot.slane %v1318, 5
      %v1321 = vor.u32 %v1317, %v1320
      %v1322 = vsel %vm1179, %v1312, %v1321
      %vm1323 = vcmp.ne.s16.totalorder %v1196, 0
      %vm1324 = vcmp.ne.s16.totalorder %v1205, 0
      %vm1325 = vcmp.ne.s16.totalorder %v1214, 0
      %vm1326 = vcmp.ne.s16.totalorder %v1223, 0
      %vm1327 = vcmp.ne.s16.totalorder %v1232, 0
      %vm1328 = vcmp.ne.s16.totalorder %v1241, 0
      %vm1329 = vcmp.ne.s16.totalorder %v1250, 0
      %vm1330 = vcmp.ne.s16.totalorder %v1259, 0
      %vm1331 = vcmp.ne.s16.totalorder %v1268, 0
      %vm1332 = vcmp.ne.s16.totalorder %v1277, 0
      %vm1333 = vcmp.ne.s16.totalorder %v1286, 0
      %vm1334 = vcmp.ne.s16.totalorder %v1295, 0
      %vm1335 = vcmp.ne.s16.totalorder %v1304, 0
      %vm1336 = vcmp.ne.s16.totalorder %v1313, 0
      %vm1337 = vcmp.ne.s16.totalorder %v1322, 0
      %vm1338 = vcmp.ne.s16.totalorder %v1321, 0
      %v1339 = vsel %vm1323, %v517, 0
      %v1340 = vsel %vm1324, %v483, 0
      %v1341 = vsel %vm1325, %v484, 0
      %v1342 = vsel %vm1326, %v485, 0
      %v1343 = vsel %vm1327, %v486, 0
      %v1344 = vsel %vm1328, %v487, 0
      %v1345 = vsel %vm1329, %v488, 0
      %v1346 = vsel %vm1330, %v489, 0
      %v1347 = vsel %vm1331, %v490, 0
      %v1348 = vsel %vm1332, %v491, 0
      %v1349 = vsel %vm1333, %v492, 0
      %v1350 = vsel %vm1334, %v493, 0
      %v1351 = vsel %vm1335, %v494, 0
      %v1352 = vsel %vm1336, %v495, 0
      %v1353 = vsel %vm1337, %v496, 0
      %v1354 = vsel %vm1338, %v497, 0
      %v1355 = vsel %vm971, 1, 0
      %v1356 = vsel %vm972, 1, 0
      %v1357 = vsel %vm973, 1, 0
      %v1358 = vsel %vm974, 1, 0
      %v1359 = vsel %vm975, 1, 0
      %v1360 = vsel %vm976, 1, 0
      %v1361 = vsel %vm977, 1, 0
      %v1362 = vsel %vm978, 1, 0
      %v1363 = vsel %vm979, 1, 0
      %v1364 = vsel %vm980, 1, 0
      %v1365 = vsel %vm981, 1, 0
      %v1366 = vsel %vm982, 1, 0
      %v1367 = vsel %vm983, 1, 0
      %v1368 = vsel %vm984, 1, 0
      %v1369 = vsel %vm985, 1, 0
      %v1370 = vsel %vm986, 1, 0
      %v1371 = vsel %vm987, 1, 0
      %v1372 = vsel %vm988, 1, 0
      %v1373 = vsel %vm989, 1, 0
      %v1374 = vsel %vm990, 1, 0
      %v1375 = vsel %vm991, 1, 0
      %v1376 = vsel %vm992, 1, 0
      %v1377 = vsel %vm993, 1, 0
      %v1378 = vsel %vm994, 1, 0
      %v1379 = vsel %vm995, 1, 0
      %v1380 = vsel %vm996, 1, 0
      %v1381 = vsel %vm997, 1, 0
      %v1382 = vsel %vm998, 1, 0
      %v1383 = vsel %vm999, 1, 0
      %v1384 = vsel %vm1000, 1, 0
      %v1385 = vsel %vm1001, 1, 0
      %v1386 = vsel %vm1002, 1, 0
      %vm1387 = vcmp.eq.s32.totalorder %v1355, 1
      %vm1388 = vcmp.eq.s32.totalorder %v1356, 1
      %vm1389 = vcmp.eq.s32.totalorder %v1357, 1
      %vm1390 = vcmp.eq.s32.totalorder %v1358, 1
      %vm1391 = vcmp.eq.s32.totalorder %v1359, 1
      %vm1392 = vcmp.eq.s32.totalorder %v1360, 1
      %vm1393 = vcmp.eq.s32.totalorder %v1361, 1
      %vm1394 = vcmp.eq.s32.totalorder %v1362, 1
      %vm1395 = vcmp.eq.s32.totalorder %v1363, 1
      %vm1396 = vcmp.eq.s32.totalorder %v1364, 1
      %vm1397 = vcmp.eq.s32.totalorder %v1365, 1
      %vm1398 = vcmp.eq.s32.totalorder %v1366, 1
      %vm1399 = vcmp.eq.s32.totalorder %v1367, 1
      %vm1400 = vcmp.eq.s32.totalorder %v1368, 1
      %vm1401 = vcmp.eq.s32.totalorder %v1369, 1
      %vm1402 = vcmp.eq.s32.totalorder %v1370, 1
      %vm1403 = vcmp.eq.s32.totalorder %v1371, 1
      %vm1404 = vcmp.eq.s32.totalorder %v1372, 1
      %vm1405 = vcmp.eq.s32.totalorder %v1373, 1
      %vm1406 = vcmp.eq.s32.totalorder %v1374, 1
      %vm1407 = vcmp.eq.s32.totalorder %v1375, 1
      %vm1408 = vcmp.eq.s32.totalorder %v1376, 1
      %vm1409 = vcmp.eq.s32.totalorder %v1377, 1
      %vm1410 = vcmp.eq.s32.totalorder %v1378, 1
      %vm1411 = vcmp.eq.s32.totalorder %v1379, 1
      %vm1412 = vcmp.eq.s32.totalorder %v1380, 1
      %vm1413 = vcmp.eq.s32.totalorder %v1381, 1
      %vm1414 = vcmp.eq.s32.totalorder %v1382, 1
      %vm1415 = vcmp.eq.s32.totalorder %v1383, 1
      %vm1416 = vcmp.eq.s32.totalorder %v1384, 1
      %vm1417 = vcmp.eq.s32.totalorder %v1385, 1
      %vm1418 = vcmp.eq.s32.totalorder %v1386, 1
      %vm1419 = vmpackc.low %vm1387, %vm1387
      %vm1420 = vmpackc.low %vm1388, %vm1388
      %vm1421 = vmpackc.low %vm1389, %vm1389
      %vm1422 = vmpackc.low %vm1390, %vm1390
      %vm1423 = vmpackc.low %vm1391, %vm1391
      %vm1424 = vmpackc.low %vm1392, %vm1392
      %vm1425 = vmpackc.low %vm1393, %vm1393
      %vm1426 = vmpackc.low %vm1394, %vm1394
      %vm1427 = vmpackc.low %vm1395, %vm1395
      %vm1428 = vmpackc.low %vm1396, %vm1396
      %vm1429 = vmpackc.low %vm1397, %vm1397
      %vm1430 = vmpackc.low %vm1398, %vm1398
      %vm1431 = vmpackc.low %vm1399, %vm1399
      %vm1432 = vmpackc.low %vm1400, %vm1400
      %vm1433 = vmpackc.low %vm1401, %vm1401
      %vm1434 = vmpackc.low %vm1402, %vm1402
      %vm1435 = vmpackc.low %vm1403, %vm1403
      %vm1436 = vmpackc.low %vm1404, %vm1404
      %vm1437 = vmpackc.low %vm1405, %vm1405
      %vm1438 = vmpackc.low %vm1406, %vm1406
      %vm1439 = vmpackc.low %vm1407, %vm1407
      %vm1440 = vmpackc.low %vm1408, %vm1408
      %vm1441 = vmpackc.low %vm1409, %vm1409
      %vm1442 = vmpackc.low %vm1410, %vm1410
      %vm1443 = vmpackc.low %vm1411, %vm1411
      %vm1444 = vmpackc.low %vm1412, %vm1412
      %vm1445 = vmpackc.low %vm1413, %vm1413
      %vm1446 = vmpackc.low %vm1414, %vm1414
      %vm1447 = vmpackc.low %vm1415, %vm1415
      %vm1448 = vmpackc.low %vm1416, %vm1416
      %vm1449 = vmpackc.low %vm1417, %vm1417
      %vm1450 = vmpackc.low %vm1418, %vm1418
      %v1451 = vsel %vm1419, 65537, 0
      %v1452 = vsel %vm1420, 65537, 0
      %v1453 = vsel %vm1421, 65537, 0
      %v1454 = vsel %vm1422, 65537, 0
      %v1455 = vsel %vm1423, 65537, 0
      %v1456 = vsel %vm1424, 65537, 0
      %v1457 = vsel %vm1425, 65537, 0
      %v1458 = vsel %vm1426, 65537, 0
      %v1459 = vsel %vm1427, 65537, 0
      %v1460 = vsel %vm1428, 65537, 0
      %v1461 = vsel %vm1429, 65537, 0
      %v1462 = vsel %vm1430, 65537, 0
      %v1463 = vsel %vm1431, 65537, 0
      %v1464 = vsel %vm1432, 65537, 0
      %v1465 = vsel %vm1433, 65537, 0
      %v1466 = vsel %vm1434, 65537, 0
      %v1467 = vsel %vm1435, 65537, 0
      %v1468 = vsel %vm1436, 65537, 0
      %v1469 = vsel %vm1437, 65537, 0
      %v1470 = vsel %vm1438, 65537, 0
      %v1471 = vsel %vm1439, 65537, 0
      %v1472 = vsel %vm1440, 65537, 0
      %v1473 = vsel %vm1441, 65537, 0
      %v1474 = vsel %vm1442, 65537, 0
      %v1475 = vsel %vm1443, 65537, 0
      %v1476 = vsel %vm1444, 65537, 0
      %v1477 = vsel %vm1445, 65537, 0
      %v1478 = vsel %vm1446, 65537, 0
      %v1479 = vsel %vm1447, 65537, 0
      %v1480 = vsel %vm1448, 65537, 0
      %v1481 = vsel %vm1449, 65537, 0
      %v1482 = vsel %vm1450, 65537, 0
      %v1483 = vunpack.c.l.b16 %v1451
      %v1484 = vunpack.c.l.b16 %v1452
      %v1485 = vunpack.c.l.b16 %v1453
      %v1486 = vunpack.c.l.b16 %v1454
      %v1487 = vunpack.c.l.b16 %v1455
      %v1488 = vunpack.c.l.b16 %v1456
      %v1489 = vunpack.c.l.b16 %v1457
      %v1490 = vunpack.c.l.b16 %v1458
      %v1491 = vunpack.c.l.b16 %v1459
      %v1492 = vunpack.c.l.b16 %v1460
      %v1493 = vunpack.c.l.b16 %v1461
      %v1494 = vunpack.c.l.b16 %v1462
      %v1495 = vunpack.c.l.b16 %v1463
      %v1496 = vunpack.c.l.b16 %v1464
      %v1497 = vunpack.c.l.b16 %v1465
      %v1498 = vunpack.c.l.b16 %v1466
      %v1499 = vunpack.c.l.b16 %v1467
      %v1500 = vunpack.c.l.b16 %v1468
      %v1501 = vunpack.c.l.b16 %v1469
      %v1502 = vunpack.c.l.b16 %v1470
      %v1503 = vunpack.c.l.b16 %v1471
      %v1504 = vunpack.c.l.b16 %v1472
      %v1505 = vunpack.c.l.b16 %v1473
      %v1506 = vunpack.c.l.b16 %v1474
      %v1507 = vunpack.c.l.b16 %v1475
      %v1508 = vunpack.c.l.b16 %v1476
      %v1509 = vunpack.c.l.b16 %v1477
      %v1510 = vunpack.c.l.b16 %v1478
      %v1511 = vunpack.c.l.b16 %v1479
      %v1512 = vunpack.c.l.b16 %v1480
      %v1513 = vunpack.c.l.b16 %v1481
      %v1514 = vunpack.c.l.b16 %v1482
      %v1515 = vpack.c.b16 %v1484, %v1483
      %v1516 = vpack.c.b16 %v1486, %v1485
      %v1517 = vpack.c.b16 %v1488, %v1487
      %v1518 = vpack.c.b16 %v1490, %v1489
      %v1519 = vpack.c.b16 %v1492, %v1491
      %v1520 = vpack.c.b16 %v1494, %v1493
      %v1521 = vpack.c.b16 %v1496, %v1495
      %v1522 = vpack.c.b16 %v1498, %v1497
      %v1523 = vpack.c.b16 %v1500, %v1499
      %v1524 = vpack.c.b16 %v1502, %v1501
      %v1525 = vpack.c.b16 %v1504, %v1503
      %v1526 = vpack.c.b16 %v1506, %v1505
      %v1527 = vpack.c.b16 %v1508, %v1507
      %v1528 = vpack.c.b16 %v1510, %v1509
      %v1529 = vpack.c.b16 %v1512, %v1511
      %v1530 = vpack.c.b16 %v1514, %v1513
      %vm1531 = vsmask.f32 4352
      %v1533 = vshrl.u32 %v1515, 16
      %v1535 = vrot.slane %v1533, 3
      %v1536 = vshll.u32 %v1515, 16
      %v1538 = vrot.slane %v1536, 4
      %v1539 = vor.u32 %v1535, %v1538
      %v1541 = vshrl.u32 %v1516, 16
      %v1543 = vrot.slane %v1541, 3
      %v1544 = vshll.u32 %v1516, 16
      %v1546 = vrot.slane %v1544, 4
      %v1547 = vor.u32 %v1543, %v1546
      %v1548 = vsel %vm1531, %v1539, %v1547
      %v1550 = vshrl.u32 %v1517, 16
      %v1552 = vrot.slane %v1550, 3
      %v1553 = vshll.u32 %v1517, 16
      %v1555 = vrot.slane %v1553, 4
      %v1556 = vor.u32 %v1552, %v1555
      %v1557 = vsel %vm1531, %v1547, %v1556
      %v1559 = vshrl.u32 %v1518, 16
      %v1561 = vrot.slane %v1559, 3
      %v1562 = vshll.u32 %v1518, 16
      %v1564 = vrot.slane %v1562, 4
      %v1565 = vor.u32 %v1561, %v1564
      %v1566 = vsel %vm1531, %v1556, %v1565
      %v1568 = vshrl.u32 %v1519, 16
      %v1570 = vrot.slane %v1568, 3
      %v1571 = vshll.u32 %v1519, 16
      %v1573 = vrot.slane %v1571, 4
      %v1574 = vor.u32 %v1570, %v1573
      %v1575 = vsel %vm1531, %v1565, %v1574
      %v1577 = vshrl.u32 %v1520, 16
      %v1579 = vrot.slane %v1577, 3
      %v1580 = vshll.u32 %v1520, 16
      %v1582 = vrot.slane %v1580, 4
      %v1583 = vor.u32 %v1579, %v1582
      %v1584 = vsel %vm1531, %v1574, %v1583
      %v1586 = vshrl.u32 %v1521, 16
      %v1588 = vrot.slane %v1586, 3
      %v1589 = vshll.u32 %v1521, 16
      %v1591 = vrot.slane %v1589, 4
      %v1592 = vor.u32 %v1588, %v1591
      %v1593 = vsel %vm1531, %v1583, %v1592
      %v1595 = vshrl.u32 %v1522, 16
      %v1597 = vrot.slane %v1595, 3
      %v1598 = vshll.u32 %v1522, 16
      %v1600 = vrot.slane %v1598, 4
      %v1601 = vor.u32 %v1597, %v1600
      %v1602 = vsel %vm1531, %v1592, %v1601
      %v1604 = vshrl.u32 %v1523, 16
      %v1606 = vrot.slane %v1604, 3
      %v1607 = vshll.u32 %v1523, 16
      %v1609 = vrot.slane %v1607, 4
      %v1610 = vor.u32 %v1606, %v1609
      %v1611 = vsel %vm1531, %v1601, %v1610
      %v1613 = vshrl.u32 %v1524, 16
      %v1615 = vrot.slane %v1613, 3
      %v1616 = vshll.u32 %v1524, 16
      %v1618 = vrot.slane %v1616, 4
      %v1619 = vor.u32 %v1615, %v1618
      %v1620 = vsel %vm1531, %v1610, %v1619
      %v1622 = vshrl.u32 %v1525, 16
      %v1624 = vrot.slane %v1622, 3
      %v1625 = vshll.u32 %v1525, 16
      %v1627 = vrot.slane %v1625, 4
      %v1628 = vor.u32 %v1624, %v1627
      %v1629 = vsel %vm1531, %v1619, %v1628
      %v1631 = vshrl.u32 %v1526, 16
      %v1633 = vrot.slane %v1631, 3
      %v1634 = vshll.u32 %v1526, 16
      %v1636 = vrot.slane %v1634, 4
      %v1637 = vor.u32 %v1633, %v1636
      %v1638 = vsel %vm1531, %v1628, %v1637
      %v1640 = vshrl.u32 %v1527, 16
      %v1642 = vrot.slane %v1640, 3
      %v1643 = vshll.u32 %v1527, 16
      %v1645 = vrot.slane %v1643, 4
      %v1646 = vor.u32 %v1642, %v1645
      %v1647 = vsel %vm1531, %v1637, %v1646
      %v1649 = vshrl.u32 %v1528, 16
      %v1651 = vrot.slane %v1649, 3
      %v1652 = vshll.u32 %v1528, 16
      %v1654 = vrot.slane %v1652, 4
      %v1655 = vor.u32 %v1651, %v1654
      %v1656 = vsel %vm1531, %v1646, %v1655
      %v1658 = vshrl.u32 %v1529, 16
      %v1660 = vrot.slane %v1658, 3
      %v1661 = vshll.u32 %v1529, 16
      %v1663 = vrot.slane %v1661, 4
      %v1664 = vor.u32 %v1660, %v1663
      %v1665 = vsel %vm1531, %v1655, %v1664
      %v1667 = vshrl.u32 %v1530, 16
      %v1669 = vrot.slane %v1667, 3
      %v1670 = vshll.u32 %v1530, 16
      %v1672 = vrot.slane %v1670, 4
      %v1673 = vor.u32 %v1669, %v1672
      %v1674 = vsel %vm1531, %v1664, %v1673
      %vm1675 = vcmp.ne.s16.totalorder %v1548, 0
      %vm1676 = vcmp.ne.s16.totalorder %v1557, 0
      %vm1677 = vcmp.ne.s16.totalorder %v1566, 0
      %vm1678 = vcmp.ne.s16.totalorder %v1575, 0
      %vm1679 = vcmp.ne.s16.totalorder %v1584, 0
      %vm1680 = vcmp.ne.s16.totalorder %v1593, 0
      %vm1681 = vcmp.ne.s16.totalorder %v1602, 0
      %vm1682 = vcmp.ne.s16.totalorder %v1611, 0
      %vm1683 = vcmp.ne.s16.totalorder %v1620, 0
      %vm1684 = vcmp.ne.s16.totalorder %v1629, 0
      %vm1685 = vcmp.ne.s16.totalorder %v1638, 0
      %vm1686 = vcmp.ne.s16.totalorder %v1647, 0
      %vm1687 = vcmp.ne.s16.totalorder %v1656, 0
      %vm1688 = vcmp.ne.s16.totalorder %v1665, 0
      %vm1689 = vcmp.ne.s16.totalorder %v1674, 0
      %vm1690 = vcmp.ne.s16.totalorder %v1673, 0
      %v1691 = vsel %vm1675, %v517, 0
      %v1692 = vsel %vm1676, %v483, 0
      %v1693 = vsel %vm1677, %v484, 0
      %v1694 = vsel %vm1678, %v485, 0
      %v1695 = vsel %vm1679, %v486, 0
      %v1696 = vsel %vm1680, %v487, 0
      %v1697 = vsel %vm1681, %v488, 0
      %v1698 = vsel %vm1682, %v489, 0
      %v1699 = vsel %vm1683, %v490, 0
      %v1700 = vsel %vm1684, %v491, 0
      %v1701 = vsel %vm1685, %v492, 0
      %v1702 = vsel %vm1686, %v493, 0
      %v1703 = vsel %vm1687, %v494, 0
      %v1704 = vsel %vm1688, %v495, 0
      %v1705 = vsel %vm1689, %v496, 0
      %v1706 = vsel %vm1690, %v497, 0
      %vm1707 = vcmp.ne.s16.totalorder %v1187, 0
      %v1708 = vsel %vm1707, %v517, 0
      %v1709 = vsel %vm1323, %v483, 0
      %v1710 = vsel %vm1324, %v484, 0
      %v1711 = vsel %vm1325, %v485, 0
      %v1712 = vsel %vm1326, %v486, 0
      %v1713 = vsel %vm1327, %v487, 0
      %v1714 = vsel %vm1328, %v488, 0
      %v1715 = vsel %vm1329, %v489, 0
      %v1716 = vsel %vm1330, %v490, 0
      %v1717 = vsel %vm1331, %v491, 0
      %v1718 = vsel %vm1332, %v492, 0
      %v1719 = vsel %vm1333, %v493, 0
      %v1720 = vsel %vm1334, %v494, 0
      %v1721 = vsel %vm1335, %v495, 0
      %v1722 = vsel %vm1336, %v496, 0
      %v1723 = vsel %vm1337, %v497, 0
      %v1724 = vsel %vm1338, %v520, 0
      %vm1725 = vcmp.ne.s16.totalorder %v1539, 0
      %v1726 = vsel %vm1725, %v517, 0
      %v1727 = vsel %vm1675, %v483, 0
      %v1728 = vsel %vm1676, %v484, 0
      %v1729 = vsel %vm1677, %v485, 0
      %v1730 = vsel %vm1678, %v486, 0
      %v1731 = vsel %vm1679, %v487, 0
      %v1732 = vsel %vm1680, %v488, 0
      %v1733 = vsel %vm1681, %v489, 0
      %v1734 = vsel %vm1682, %v490, 0
      %v1735 = vsel %vm1683, %v491, 0
      %v1736 = vsel %vm1684, %v492, 0
      %v1737 = vsel %vm1685, %v493, 0
      %v1738 = vsel %vm1686, %v494, 0
      %v1739 = vsel %vm1687, %v495, 0
      %v1740 = vsel %vm1688, %v496, 0
      %v1741 = vsel %vm1689, %v497, 0
      %v1742 = vsel %vm1690, %v520, 0
      %v1743 = vsel %vm1707, %v483, 0
      %v1744 = vsel %vm1323, %v484, 0
      %v1745 = vsel %vm1324, %v485, 0
      %v1746 = vsel %vm1325, %v486, 0
      %v1747 = vsel %vm1326, %v487, 0
      %v1748 = vsel %vm1327, %v488, 0
      %v1749 = vsel %vm1328, %v489, 0
      %v1750 = vsel %vm1329, %v490, 0
      %v1751 = vsel %vm1330, %v491, 0
      %v1752 = vsel %vm1331, %v492, 0
      %v1753 = vsel %vm1332, %v493, 0
      %v1754 = vsel %vm1333, %v494, 0
      %v1755 = vsel %vm1334, %v495, 0
      %v1756 = vsel %vm1335, %v496, 0
      %v1757 = vsel %vm1336, %v497, 0
      %v1758 = vsel %vm1337, %v520, 0
      %v1759 = vsel %vm1725, %v483, 0
      %v1760 = vsel %vm1675, %v484, 0
      %v1761 = vsel %vm1676, %v485, 0
      %v1762 = vsel %vm1677, %v486, 0
      %v1763 = vsel %vm1678, %v487, 0
      %v1764 = vsel %vm1679, %v488, 0
      %v1765 = vsel %vm1680, %v489, 0
      %v1766 = vsel %vm1681, %v490, 0
      %v1767 = vsel %vm1682, %v491, 0
      %v1768 = vsel %vm1683, %v492, 0
      %v1769 = vsel %vm1684, %v493, 0
      %v1770 = vsel %vm1685, %v494, 0
      %v1771 = vsel %vm1686, %v495, 0
      %v1772 = vsel %vm1687, %v496, 0
      %v1773 = vsel %vm1688, %v497, 0
      %v1774 = vsel %vm1689, %v520, 0
      %vm1775 = vsmask.f32 7424
      %v1776 = vshrl.u32 0, 16
      %v1778 = vshll.u32 0, 16
      %v1780 = vrot.slane %v1778, 1
      %v1781 = vor.u32 %v1776, %v1780
      %v1782 = vshll.u32 %v517, 16
      %v1784 = vrot.slane %v1782, 1
      %v1785 = vsel %vm1775, %v1781, %v1784
      %v1786 = vshrl.u32 %v517, 16
      %v1788 = vor.u32 %v1786, %v1784
      %v1790 = vshll.u32 %v483, 16
      %v1792 = vrot.slane %v1790, 1
      %v1793 = vsel %vm1775, %v1788, %v1792
      %v1794 = vshrl.u32 %v483, 16
      %v1796 = vor.u32 %v1794, %v1792
      %v1798 = vshll.u32 %v484, 16
      %v1800 = vrot.slane %v1798, 1
      %v1801 = vsel %vm1775, %v1796, %v1800
      %v1802 = vshrl.u32 %v484, 16
      %v1804 = vor.u32 %v1802, %v1800
      %v1806 = vshll.u32 %v485, 16
      %v1808 = vrot.slane %v1806, 1
      %v1809 = vsel %vm1775, %v1804, %v1808
      %v1810 = vshrl.u32 %v485, 16
      %v1812 = vor.u32 %v1810, %v1808
      %v1814 = vshll.u32 %v486, 16
      %v1816 = vrot.slane %v1814, 1
      %v1817 = vsel %vm1775, %v1812, %v1816
      %v1818 = vshrl.u32 %v486, 16
      %v1820 = vor.u32 %v1818, %v1816
      %v1822 = vshll.u32 %v487, 16
      %v1824 = vrot.slane %v1822, 1
      %v1825 = vsel %vm1775, %v1820, %v1824
      %v1826 = vshrl.u32 %v487, 16
      %v1828 = vor.u32 %v1826, %v1824
      %v1830 = vshll.u32 %v488, 16
      %v1832 = vrot.slane %v1830, 1
      %v1833 = vsel %vm1775, %v1828, %v1832
      %v1834 = vshrl.u32 %v488, 16
      %v1836 = vor.u32 %v1834, %v1832
      %v1838 = vshll.u32 %v489, 16
      %v1840 = vrot.slane %v1838, 1
      %v1841 = vsel %vm1775, %v1836, %v1840
      %v1842 = vshrl.u32 %v489, 16
      %v1844 = vor.u32 %v1842, %v1840
      %v1846 = vshll.u32 %v490, 16
      %v1848 = vrot.slane %v1846, 1
      %v1849 = vsel %vm1775, %v1844, %v1848
      %v1850 = vshrl.u32 %v490, 16
      %v1852 = vor.u32 %v1850, %v1848
      %v1854 = vshll.u32 %v491, 16
      %v1856 = vrot.slane %v1854, 1
      %v1857 = vsel %vm1775, %v1852, %v1856
      %v1858 = vshrl.u32 %v491, 16
      %v1860 = vor.u32 %v1858, %v1856
      %v1862 = vshll.u32 %v492, 16
      %v1864 = vrot.slane %v1862, 1
      %v1865 = vsel %vm1775, %v1860, %v1864
      %v1866 = vshrl.u32 %v492, 16
      %v1868 = vor.u32 %v1866, %v1864
      %v1870 = vshll.u32 %v493, 16
      %v1872 = vrot.slane %v1870, 1
      %v1873 = vsel %vm1775, %v1868, %v1872
      %v1874 = vshrl.u32 %v493, 16
      %v1876 = vor.u32 %v1874, %v1872
      %v1878 = vshll.u32 %v494, 16
      %v1880 = vrot.slane %v1878, 1
      %v1881 = vsel %vm1775, %v1876, %v1880
      %v1882 = vshrl.u32 %v494, 16
      %v1884 = vor.u32 %v1882, %v1880
      %v1886 = vshll.u32 %v495, 16
      %v1888 = vrot.slane %v1886, 1
      %v1889 = vsel %vm1775, %v1884, %v1888
      %v1890 = vshrl.u32 %v495, 16
      %v1892 = vor.u32 %v1890, %v1888
      %v1894 = vshll.u32 %v496, 16
      %v1896 = vrot.slane %v1894, 1
      %v1897 = vsel %vm1775, %v1892, %v1896
      %v1898 = vshrl.u32 %v496, 16
      %v1900 = vor.u32 %v1898, %v1896
      %v1902 = vshll.u32 %v497, 16
      %v1904 = vrot.slane %v1902, 1
      %v1905 = vsel %vm1775, %v1900, %v1904
      %v1906 = vshrl.u32 %v497, 16
      %v1908 = vor.u32 %v1906, %v1904
      %1909 = vrot.lane.b32.xlu0 %v1785, 4
      %v1910 = vpop.permute.xlu0 %1909
      %1911 = vrot.lane.b32.xlu0 %v1793, 4
      %v1912 = vpop.permute.xlu0 %1911
      %1913 = vrot.lane.b32.xlu0 %v1801, 4
      %v1914 = vpop.permute.xlu0 %1913
      %1915 = vrot.lane.b32.xlu0 %v1809, 4
      %v1916 = vpop.permute.xlu0 %1915
      %1917 = vrot.lane.b32.xlu0 %v1817, 4
      %v1918 = vpop.permute.xlu0 %1917
      %1919 = vrot.lane.b32.xlu0 %v1825, 4
      %v1920 = vpop.permute.xlu0 %1919
      %1921 = vrot.lane.b32.xlu0 %v1833, 4
      %v1922 = vpop.permute.xlu0 %1921
      %1923 = vrot.lane.b32.xlu0 %v1841, 4
      %v1924 = vpop.permute.xlu0 %1923
      %1925 = vrot.lane.b32.xlu0 %v1849, 4
      %v1926 = vpop.permute.xlu0 %1925
      %1927 = vrot.lane.b32.xlu0 %v1857, 4
      %v1928 = vpop.permute.xlu0 %1927
      %1929 = vrot.lane.b32.xlu0 %v1865, 4
      %v1930 = vpop.permute.xlu0 %1929
      %1931 = vrot.lane.b32.xlu0 %v1873, 4
      %v1932 = vpop.permute.xlu0 %1931
      %1933 = vrot.lane.b32.xlu0 %v1881, 4
      %v1934 = vpop.permute.xlu0 %1933
      %1935 = vrot.lane.b32.xlu0 %v1889, 4
      %v1936 = vpop.permute.xlu0 %1935
      %1937 = vrot.lane.b32.xlu0 %v1897, 4
      %v1938 = vpop.permute.xlu0 %1937
      %1939 = vrot.lane.b32.xlu0 %v1905, 4
      %v1940 = vpop.permute.xlu0 %1939
      %1941 = vrot.lane.b32.xlu0 %v1908, 4
      %v1942 = vpop.permute.xlu0 %1941
      %vm1960 = vcmask 1046528
      %v1961 = vrot.slane 0, 1
      %v1962 = vrot.slane %v1691, 1
      %v1963 = vsel %vm1960, %v1961, %v1962
      %v1964 = vrot.slane %v1692, 1
      %v1965 = vsel %vm1960, %v1962, %v1964
      %v1966 = vrot.slane %v1693, 1
      %v1967 = vsel %vm1960, %v1964, %v1966
      %v1968 = vrot.slane %v1694, 1
      %v1969 = vsel %vm1960, %v1966, %v1968
      %v1970 = vrot.slane %v1695, 1
      %v1971 = vsel %vm1960, %v1968, %v1970
      %v1972 = vrot.slane %v1696, 1
      %v1973 = vsel %vm1960, %v1970, %v1972
      %v1974 = vrot.slane %v1697, 1
      %v1975 = vsel %vm1960, %v1972, %v1974
      %v1976 = vrot.slane %v1698, 1
      %v1977 = vsel %vm1960, %v1974, %v1976
      %v1978 = vrot.slane %v1699, 1
      %v1979 = vsel %vm1960, %v1976, %v1978
      %v1980 = vrot.slane %v1700, 1
      %v1981 = vsel %vm1960, %v1978, %v1980
      %v1982 = vrot.slane %v1701, 1
      %v1983 = vsel %vm1960, %v1980, %v1982
      %v1984 = vrot.slane %v1702, 1
      %v1985 = vsel %vm1960, %v1982, %v1984
      %v1986 = vrot.slane %v1703, 1
      %v1987 = vsel %vm1960, %v1984, %v1986
      %v1988 = vrot.slane %v1704, 1
      %v1989 = vsel %vm1960, %v1986, %v1988
      %v1990 = vrot.slane %v1705, 1
      %v1991 = vsel %vm1960, %v1988, %v1990
      %v1992 = vrot.slane %v1706, 1
      %v1993 = vsel %vm1960, %v1990, %v1992
      %1994 = vrot.lane.b32.xlu0 %v1963, 8
      %v1995 = vpop.permute.xlu0 %1994
      %1996 = vrot.lane.b32.xlu0 %v1965, 8
      %v1997 = vpop.permute.xlu0 %1996
      %1998 = vrot.lane.b32.xlu0 %v1967, 8
      %v1999 = vpop.permute.xlu0 %1998
      %2000 = vrot.lane.b32.xlu0 %v1969, 8
      %v2001 = vpop.permute.xlu0 %2000
      %2002 = vrot.lane.b32.xlu0 %v1971, 8
      %v2003 = vpop.permute.xlu0 %2002
      %2004 = vrot.lane.b32.xlu0 %v1973, 8
      %v2005 = vpop.permute.xlu0 %2004
      %2006 = vrot.lane.b32.xlu0 %v1975, 8
      %v2007 = vpop.permute.xlu0 %2006
      %2008 = vrot.lane.b32.xlu0 %v1977, 8
      %v2009 = vpop.permute.xlu0 %2008
      %2010 = vrot.lane.b32.xlu0 %v1979, 8
      %v2011 = vpop.permute.xlu0 %2010
      %2012 = vrot.lane.b32.xlu0 %v1981, 8
      %v2013 = vpop.permute.xlu0 %2012
      %2014 = vrot.lane.b32.xlu0 %v1983, 8
      %v2015 = vpop.permute.xlu0 %2014
      %2016 = vrot.lane.b32.xlu0 %v1985, 8
      %v2017 = vpop.permute.xlu0 %2016
      %2018 = vrot.lane.b32.xlu0 %v1987, 8
      %v2019 = vpop.permute.xlu0 %2018
      %2020 = vrot.lane.b32.xlu0 %v1989, 8
      %v2021 = vpop.permute.xlu0 %2020
      %2022 = vrot.lane.b32.xlu0 %v1991, 8
      %v2023 = vpop.permute.xlu0 %2022
      %2024 = vrot.lane.b32.xlu0 %v1993, 8
      %v2025 = vpop.permute.xlu0 %2024
      %2026 = vrot.lane.b32.xlu0 %v1992, 8
      %v2027 = vpop.permute.xlu0 %2026
      %2045 = vrot.lane.b32.xlu0 %v1708, 12
      %v2046 = vpop.permute.xlu0 %2045
      %2047 = vrot.lane.b32.xlu0 %v1709, 12
      %v2048 = vpop.permute.xlu0 %2047
      %2049 = vrot.lane.b32.xlu0 %v1710, 12
      %v2050 = vpop.permute.xlu0 %2049
      %2051 = vrot.lane.b32.xlu0 %v1711, 12
      %v2052 = vpop.permute.xlu0 %2051
      %2053 = vrot.lane.b32.xlu0 %v1712, 12
      %v2054 = vpop.permute.xlu0 %2053
      %2055 = vrot.lane.b32.xlu0 %v1713, 12
      %v2056 = vpop.permute.xlu0 %2055
      %2057 = vrot.lane.b32.xlu0 %v1714, 12
      %v2058 = vpop.permute.xlu0 %2057
      %2059 = vrot.lane.b32.xlu0 %v1715, 12
      %v2060 = vpop.permute.xlu0 %2059
      %2061 = vrot.lane.b32.xlu0 %v1716, 12
      %v2062 = vpop.permute.xlu0 %2061
      %2063 = vrot.lane.b32.xlu0 %v1717, 12
      %v2064 = vpop.permute.xlu0 %2063
      %2065 = vrot.lane.b32.xlu0 %v1718, 12
      %v2066 = vpop.permute.xlu0 %2065
      %2067 = vrot.lane.b32.xlu0 %v1719, 12
      %v2068 = vpop.permute.xlu0 %2067
      %2069 = vrot.lane.b32.xlu0 %v1720, 12
      %v2070 = vpop.permute.xlu0 %2069
      %2071 = vrot.lane.b32.xlu0 %v1721, 12
      %v2072 = vpop.permute.xlu0 %2071
      %2073 = vrot.lane.b32.xlu0 %v1722, 12
      %v2074 = vpop.permute.xlu0 %2073
      %2075 = vrot.lane.b32.xlu0 %v1723, 12
      %v2076 = vpop.permute.xlu0 %2075
      %2077 = vrot.lane.b32.xlu0 %v1724, 12
      %v2078 = vpop.permute.xlu0 %2077
      %v2079 = vshll.u32 %v520, 16
      %v2081 = vrot.slane %v2079, 1
      %v2082 = vsel %vm1775, %v1908, %v2081
      %v2083 = vshrl.u32 %v520, 16
      %v2085 = vor.u32 %v2083, %v2081
      %2086 = vrot.lane.b32.xlu0 %v1793, 16
      %v2087 = vpop.permute.xlu0 %2086
      %2088 = vrot.lane.b32.xlu0 %v1801, 16
      %v2089 = vpop.permute.xlu0 %2088
      %2090 = vrot.lane.b32.xlu0 %v1809, 16
      %v2091 = vpop.permute.xlu0 %2090
      %2092 = vrot.lane.b32.xlu0 %v1817, 16
      %v2093 = vpop.permute.xlu0 %2092
      %2094 = vrot.lane.b32.xlu0 %v1825, 16
      %v2095 = vpop.permute.xlu0 %2094
      %2096 = vrot.lane.b32.xlu0 %v1833, 16
      %v2097 = vpop.permute.xlu0 %2096
      %2098 = vrot.lane.b32.xlu0 %v1841, 16
      %v2099 = vpop.permute.xlu0 %2098
      %2100 = vrot.lane.b32.xlu0 %v1849, 16
      %v2101 = vpop.permute.xlu0 %2100
      %2102 = vrot.lane.b32.xlu0 %v1857, 16
      %v2103 = vpop.permute.xlu0 %2102
      %2104 = vrot.lane.b32.xlu0 %v1865, 16
      %v2105 = vpop.permute.xlu0 %2104
      %2106 = vrot.lane.b32.xlu0 %v1873, 16
      %v2107 = vpop.permute.xlu0 %2106
      %2108 = vrot.lane.b32.xlu0 %v1881, 16
      %v2109 = vpop.permute.xlu0 %2108
      %2110 = vrot.lane.b32.xlu0 %v1889, 16
      %v2111 = vpop.permute.xlu0 %2110
      %2112 = vrot.lane.b32.xlu0 %v1897, 16
      %v2113 = vpop.permute.xlu0 %2112
      %2114 = vrot.lane.b32.xlu0 %v1905, 16
      %v2115 = vpop.permute.xlu0 %2114
      %2116 = vrot.lane.b32.xlu0 %v2082, 16
      %v2117 = vpop.permute.xlu0 %2116
      %2118 = vrot.lane.b32.xlu0 %v2085, 16
      %v2119 = vpop.permute.xlu0 %2118
      %v2137 = vrot.slane %v1726, 1
      %v2138 = vrot.slane %v1727, 1
      %v2139 = vsel %vm1960, %v2137, %v2138
      %v2140 = vrot.slane %v1728, 1
      %v2141 = vsel %vm1960, %v2138, %v2140
      %v2142 = vrot.slane %v1729, 1
      %v2143 = vsel %vm1960, %v2140, %v2142
      %v2144 = vrot.slane %v1730, 1
      %v2145 = vsel %vm1960, %v2142, %v2144
      %v2146 = vrot.slane %v1731, 1
      %v2147 = vsel %vm1960, %v2144, %v2146
      %v2148 = vrot.slane %v1732, 1
      %v2149 = vsel %vm1960, %v2146, %v2148
      %v2150 = vrot.slane %v1733, 1
      %v2151 = vsel %vm1960, %v2148, %v2150
      %v2152 = vrot.slane %v1734, 1
      %v2153 = vsel %vm1960, %v2150, %v2152
      %v2154 = vrot.slane %v1735, 1
      %v2155 = vsel %vm1960, %v2152, %v2154
      %v2156 = vrot.slane %v1736, 1
      %v2157 = vsel %vm1960, %v2154, %v2156
      %v2158 = vrot.slane %v1737, 1
      %v2159 = vsel %vm1960, %v2156, %v2158
      %v2160 = vrot.slane %v1738, 1
      %v2161 = vsel %vm1960, %v2158, %v2160
      %v2162 = vrot.slane %v1739, 1
      %v2163 = vsel %vm1960, %v2160, %v2162
      %v2164 = vrot.slane %v1740, 1
      %v2165 = vsel %vm1960, %v2162, %v2164
      %v2166 = vrot.slane %v1741, 1
      %v2167 = vsel %vm1960, %v2164, %v2166
      %v2168 = vrot.slane %v1742, 1
      %v2169 = vsel %vm1960, %v2166, %v2168
      %2170 = vrot.lane.b32.xlu0 %v2139, 20
      %v2171 = vpop.permute.xlu0 %2170
      %2172 = vrot.lane.b32.xlu0 %v2141, 20
      %v2173 = vpop.permute.xlu0 %2172
      %2174 = vrot.lane.b32.xlu0 %v2143, 20
      %v2175 = vpop.permute.xlu0 %2174
      %2176 = vrot.lane.b32.xlu0 %v2145, 20
      %v2177 = vpop.permute.xlu0 %2176
      %2178 = vrot.lane.b32.xlu0 %v2147, 20
      %v2179 = vpop.permute.xlu0 %2178
      %2180 = vrot.lane.b32.xlu0 %v2149, 20
      %v2181 = vpop.permute.xlu0 %2180
      %2182 = vrot.lane.b32.xlu0 %v2151, 20
      %v2183 = vpop.permute.xlu0 %2182
      %2184 = vrot.lane.b32.xlu0 %v2153, 20
      %v2185 = vpop.permute.xlu0 %2184
      %2186 = vrot.lane.b32.xlu0 %v2155, 20
      %v2187 = vpop.permute.xlu0 %2186
      %2188 = vrot.lane.b32.xlu0 %v2157, 20
      %v2189 = vpop.permute.xlu0 %2188
      %2190 = vrot.lane.b32.xlu0 %v2159, 20
      %v2191 = vpop.permute.xlu0 %2190
      %2192 = vrot.lane.b32.xlu0 %v2161, 20
      %v2193 = vpop.permute.xlu0 %2192
      %2194 = vrot.lane.b32.xlu0 %v2163, 20
      %v2195 = vpop.permute.xlu0 %2194
      %2196 = vrot.lane.b32.xlu0 %v2165, 20
      %v2197 = vpop.permute.xlu0 %2196
      %2198 = vrot.lane.b32.xlu0 %v2167, 20
      %v2199 = vpop.permute.xlu0 %2198
      %2200 = vrot.lane.b32.xlu0 %v2169, 20
      %v2201 = vpop.permute.xlu0 %2200
      %2202 = vrot.lane.b32.xlu0 %v2168, 20
      %v2203 = vpop.permute.xlu0 %2202
      %2220 = vrot.lane.b32.xlu0 %v1743, 24
      %v2221 = vpop.permute.xlu0 %2220
      %2222 = vrot.lane.b32.xlu0 %v1744, 24
      %v2223 = vpop.permute.xlu0 %2222
      %2224 = vrot.lane.b32.xlu0 %v1745, 24
      %v2225 = vpop.permute.xlu0 %2224
      %2226 = vrot.lane.b32.xlu0 %v1746, 24
      %v2227 = vpop.permute.xlu0 %2226
      %2228 = vrot.lane.b32.xlu0 %v1747, 24
      %v2229 = vpop.permute.xlu0 %2228
      %2230 = vrot.lane.b32.xlu0 %v1748, 24
      %v2231 = vpop.permute.xlu0 %2230
      %2232 = vrot.lane.b32.xlu0 %v1749, 24
      %v2233 = vpop.permute.xlu0 %2232
      %2234 = vrot.lane.b32.xlu0 %v1750, 24
      %v2235 = vpop.permute.xlu0 %2234
      %2236 = vrot.lane.b32.xlu0 %v1751, 24
      %v2237 = vpop.permute.xlu0 %2236
      %2238 = vrot.lane.b32.xlu0 %v1752, 24
      %v2239 = vpop.permute.xlu0 %2238
      %2240 = vrot.lane.b32.xlu0 %v1753, 24
      %v2241 = vpop.permute.xlu0 %2240
      %2242 = vrot.lane.b32.xlu0 %v1754, 24
      %v2243 = vpop.permute.xlu0 %2242
      %2244 = vrot.lane.b32.xlu0 %v1755, 24
      %v2245 = vpop.permute.xlu0 %2244
      %2246 = vrot.lane.b32.xlu0 %v1756, 24
      %v2247 = vpop.permute.xlu0 %2246
      %2248 = vrot.lane.b32.xlu0 %v1757, 24
      %v2249 = vpop.permute.xlu0 %2248
      %2250 = vrot.lane.b32.xlu0 %v1758, 24
      %v2251 = vpop.permute.xlu0 %2250
      %2252 = vrot.lane.b32.xlu0 0, 24
      %v2253 = vpop.permute.xlu0 %2252
      %v2254 = vsel %vm1775, %v2085, %v1780
      %2255 = vrot.lane.b32.xlu0 %v1801, 28
      %v2256 = vpop.permute.xlu0 %2255
      %2257 = vrot.lane.b32.xlu0 %v1809, 28
      %v2258 = vpop.permute.xlu0 %2257
      %2259 = vrot.lane.b32.xlu0 %v1817, 28
      %v2260 = vpop.permute.xlu0 %2259
      %2261 = vrot.lane.b32.xlu0 %v1825, 28
      %v2262 = vpop.permute.xlu0 %2261
      %2263 = vrot.lane.b32.xlu0 %v1833, 28
      %v2264 = vpop.permute.xlu0 %2263
      %2265 = vrot.lane.b32.xlu0 %v1841, 28
      %v2266 = vpop.permute.xlu0 %2265
      %2267 = vrot.lane.b32.xlu0 %v1849, 28
      %v2268 = vpop.permute.xlu0 %2267
      %2269 = vrot.lane.b32.xlu0 %v1857, 28
      %v2270 = vpop.permute.xlu0 %2269
      %2271 = vrot.lane.b32.xlu0 %v1865, 28
      %v2272 = vpop.permute.xlu0 %2271
      %2273 = vrot.lane.b32.xlu0 %v1873, 28
      %v2274 = vpop.permute.xlu0 %2273
      %2275 = vrot.lane.b32.xlu0 %v1881, 28
      %v2276 = vpop.permute.xlu0 %2275
      %2277 = vrot.lane.b32.xlu0 %v1889, 28
      %v2278 = vpop.permute.xlu0 %2277
      %2279 = vrot.lane.b32.xlu0 %v1897, 28
      %v2280 = vpop.permute.xlu0 %2279
      %2281 = vrot.lane.b32.xlu0 %v1905, 28
      %v2282 = vpop.permute.xlu0 %2281
      %2283 = vrot.lane.b32.xlu0 %v2082, 28
      %v2284 = vpop.permute.xlu0 %2283
      %2285 = vrot.lane.b32.xlu0 %v2254, 28
      %v2286 = vpop.permute.xlu0 %2285
      %2287 = vrot.lane.b32.xlu0 %v1781, 28
      %v2288 = vpop.permute.xlu0 %2287
      %v2305 = vrot.slane %v1759, 1
      %v2306 = vrot.slane %v1760, 1
      %v2307 = vsel %vm1960, %v2305, %v2306
      %v2308 = vrot.slane %v1761, 1
      %v2309 = vsel %vm1960, %v2306, %v2308
      %v2310 = vrot.slane %v1762, 1
      %v2311 = vsel %vm1960, %v2308, %v2310
      %v2312 = vrot.slane %v1763, 1
      %v2313 = vsel %vm1960, %v2310, %v2312
      %v2314 = vrot.slane %v1764, 1
      %v2315 = vsel %vm1960, %v2312, %v2314
      %v2316 = vrot.slane %v1765, 1
      %v2317 = vsel %vm1960, %v2314, %v2316
      %v2318 = vrot.slane %v1766, 1
      %v2319 = vsel %vm1960, %v2316, %v2318
      %v2320 = vrot.slane %v1767, 1
      %v2321 = vsel %vm1960, %v2318, %v2320
      %v2322 = vrot.slane %v1768, 1
      %v2323 = vsel %vm1960, %v2320, %v2322
      %v2324 = vrot.slane %v1769, 1
      %v2325 = vsel %vm1960, %v2322, %v2324
      %v2326 = vrot.slane %v1770, 1
      %v2327 = vsel %vm1960, %v2324, %v2326
      %v2328 = vrot.slane %v1771, 1
      %v2329 = vsel %vm1960, %v2326, %v2328
      %v2330 = vrot.slane %v1772, 1
      %v2331 = vsel %vm1960, %v2328, %v2330
      %v2332 = vrot.slane %v1773, 1
      %v2333 = vsel %vm1960, %v2330, %v2332
      %v2334 = vrot.slane %v1774, 1
      %v2335 = vsel %vm1960, %v2332, %v2334
      %v2336 = vsel %vm1960, %v2334, %v1961
      %2337 = vrot.lane.b32.xlu0 %v2307, 32
      %v2338 = vpop.permute.xlu0 %2337
      %2339 = vrot.lane.b32.xlu0 %v2309, 32
      %v2340 = vpop.permute.xlu0 %2339
      %2341 = vrot.lane.b32.xlu0 %v2311, 32
      %v2342 = vpop.permute.xlu0 %2341
      %2343 = vrot.lane.b32.xlu0 %v2313, 32
      %v2344 = vpop.permute.xlu0 %2343
      %2345 = vrot.lane.b32.xlu0 %v2315, 32
      %v2346 = vpop.permute.xlu0 %2345
      %2347 = vrot.lane.b32.xlu0 %v2317, 32
      %v2348 = vpop.permute.xlu0 %2347
      %2349 = vrot.lane.b32.xlu0 %v2319, 32
      %v2350 = vpop.permute.xlu0 %2349
      %2351 = vrot.lane.b32.xlu0 %v2321, 32
      %v2352 = vpop.permute.xlu0 %2351
      %2353 = vrot.lane.b32.xlu0 %v2323, 32
      %v2354 = vpop.permute.xlu0 %2353
      %2355 = vrot.lane.b32.xlu0 %v2325, 32
      %v2356 = vpop.permute.xlu0 %2355
      %2357 = vrot.lane.b32.xlu0 %v2327, 32
      %v2358 = vpop.permute.xlu0 %2357
      %2359 = vrot.lane.b32.xlu0 %v2329, 32
      %v2360 = vpop.permute.xlu0 %2359
      %2361 = vrot.lane.b32.xlu0 %v2331, 32
      %v2362 = vpop.permute.xlu0 %2361
      %2363 = vrot.lane.b32.xlu0 %v2333, 32
      %v2364 = vpop.permute.xlu0 %2363
      %2365 = vrot.lane.b32.xlu0 %v2335, 32
      %v2366 = vpop.permute.xlu0 %2365
      %2367 = vrot.lane.b32.xlu0 %v2336, 32
      %v2368 = vpop.permute.xlu0 %2367
      %2369 = vrot.lane.b32.xlu0 %v1961, 32
      %v2370 = vpop.permute.xlu0 %2369
      %vm2371 = vcmask 31744
      %v2373 = vsel %vm2371, 0, %v1910
      %v2376 = vsel %vm2371, %v1339, %v1912
      %v2379 = vsel %vm2371, %v1340, %v1914
      %v2382 = vsel %vm2371, %v1341, %v1916
      %v2385 = vsel %vm2371, %v1342, %v1918
      %v2388 = vsel %vm2371, %v1343, %v1920
      %v2391 = vsel %vm2371, %v1344, %v1922
      %v2394 = vsel %vm2371, %v1345, %v1924
      %v2397 = vsel %vm2371, %v1346, %v1926
      %v2400 = vsel %vm2371, %v1347, %v1928
      %v2403 = vsel %vm2371, %v1348, %v1930
      %v2406 = vsel %vm2371, %v1349, %v1932
      %v2409 = vsel %vm2371, %v1350, %v1934
      %v2412 = vsel %vm2371, %v1351, %v1936
      %v2415 = vsel %vm2371, %v1352, %v1938
      %v2418 = vsel %vm2371, %v1353, %v1940
      %v2421 = vsel %vm2371, %v1354, %v1942
      %vm2422 = vcmask 64512
      %v2424 = vsel %vm2422, %v2373, %v1995
      %v2426 = vsel %vm2422, %v2376, %v1997
      %v2428 = vsel %vm2422, %v2379, %v1999
      %v2430 = vsel %vm2422, %v2382, %v2001
      %v2432 = vsel %vm2422, %v2385, %v2003
      %v2434 = vsel %vm2422, %v2388, %v2005
      %v2436 = vsel %vm2422, %v2391, %v2007
      %v2438 = vsel %vm2422, %v2394, %v2009
      %v2440 = vsel %vm2422, %v2397, %v2011
      %v2442 = vsel %vm2422, %v2400, %v2013
      %v2444 = vsel %vm2422, %v2403, %v2015
      %v2446 = vsel %vm2422, %v2406, %v2017
      %v2448 = vsel %vm2422, %v2409, %v2019
      %v2450 = vsel %vm2422, %v2412, %v2021
      %v2452 = vsel %vm2422, %v2415, %v2023
      %v2454 = vsel %vm2422, %v2418, %v2025
      %v2456 = vsel %vm2422, %v2421, %v2027
      %vm2457 = vcmask 97280
      %v2459 = vsel %vm2457, %v2424, %v2046
      %v2461 = vsel %vm2457, %v2426, %v2048
      %v2463 = vsel %vm2457, %v2428, %v2050
      %v2465 = vsel %vm2457, %v2430, %v2052
      %v2467 = vsel %vm2457, %v2432, %v2054
      %v2469 = vsel %vm2457, %v2434, %v2056
      %v2471 = vsel %vm2457, %v2436, %v2058
      %v2473 = vsel %vm2457, %v2438, %v2060
      %v2475 = vsel %vm2457, %v2440, %v2062
      %v2477 = vsel %vm2457, %v2442, %v2064
      %v2479 = vsel %vm2457, %v2444, %v2066
      %v2481 = vsel %vm2457, %v2446, %v2068
      %v2483 = vsel %vm2457, %v2448, %v2070
      %v2485 = vsel %vm2457, %v2450, %v2072
      %v2487 = vsel %vm2457, %v2452, %v2074
      %v2489 = vsel %vm2457, %v2454, %v2076
      %v2491 = vsel %vm2457, %v2456, %v2078
      %vm2492 = vcmask 130048
      %v2494 = vsel %vm2492, %v2459, %v2087
      %v2496 = vsel %vm2492, %v2461, %v2089
      %v2498 = vsel %vm2492, %v2463, %v2091
      %v2500 = vsel %vm2492, %v2465, %v2093
      %v2502 = vsel %vm2492, %v2467, %v2095
      %v2504 = vsel %vm2492, %v2469, %v2097
      %v2506 = vsel %vm2492, %v2471, %v2099
      %v2508 = vsel %vm2492, %v2473, %v2101
      %v2510 = vsel %vm2492, %v2475, %v2103
      %v2512 = vsel %vm2492, %v2477, %v2105
      %v2514 = vsel %vm2492, %v2479, %v2107
      %v2516 = vsel %vm2492, %v2481, %v2109
      %v2518 = vsel %vm2492, %v2483, %v2111
      %v2520 = vsel %vm2492, %v2485, %v2113
      %v2522 = vsel %vm2492, %v2487, %v2115
      %v2524 = vsel %vm2492, %v2489, %v2117
      %v2526 = vsel %vm2492, %v2491, %v2119
      %vm2527 = vcmask 162816
      %v2529 = vsel %vm2527, %v2494, %v2171
      %v2531 = vsel %vm2527, %v2496, %v2173
      %v2533 = vsel %vm2527, %v2498, %v2175
      %v2535 = vsel %vm2527, %v2500, %v2177
      %v2537 = vsel %vm2527, %v2502, %v2179
      %v2539 = vsel %vm2527, %v2504, %v2181
      %v2541 = vsel %vm2527, %v2506, %v2183
      %v2543 = vsel %vm2527, %v2508, %v2185
      %v2545 = vsel %vm2527, %v2510, %v2187
      %v2547 = vsel %vm2527, %v2512, %v2189
      %v2549 = vsel %vm2527, %v2514, %v2191
      %v2551 = vsel %vm2527, %v2516, %v2193
      %v2553 = vsel %vm2527, %v2518, %v2195
      %v2555 = vsel %vm2527, %v2520, %v2197
      %v2557 = vsel %vm2527, %v2522, %v2199
      %v2559 = vsel %vm2527, %v2524, %v2201
      %v2561 = vsel %vm2527, %v2526, %v2203
      %vm2562 = vcmask 195584
      %v2564 = vsel %vm2562, %v2529, %v2221
      %v2566 = vsel %vm2562, %v2531, %v2223
      %v2568 = vsel %vm2562, %v2533, %v2225
      %v2570 = vsel %vm2562, %v2535, %v2227
      %v2572 = vsel %vm2562, %v2537, %v2229
      %v2574 = vsel %vm2562, %v2539, %v2231
      %v2576 = vsel %vm2562, %v2541, %v2233
      %v2578 = vsel %vm2562, %v2543, %v2235
      %v2580 = vsel %vm2562, %v2545, %v2237
      %v2582 = vsel %vm2562, %v2547, %v2239
      %v2584 = vsel %vm2562, %v2549, %v2241
      %v2586 = vsel %vm2562, %v2551, %v2243
      %v2588 = vsel %vm2562, %v2553, %v2245
      %v2590 = vsel %vm2562, %v2555, %v2247
      %v2592 = vsel %vm2562, %v2557, %v2249
      %v2594 = vsel %vm2562, %v2559, %v2251
      %v2596 = vsel %vm2562, %v2561, %v2253
      %vm2597 = vcmask 228352
      %v2599 = vsel %vm2597, %v2564, %v2256
      %v2601 = vsel %vm2597, %v2566, %v2258
      %v2603 = vsel %vm2597, %v2568, %v2260
      %v2605 = vsel %vm2597, %v2570, %v2262
      %v2607 = vsel %vm2597, %v2572, %v2264
      %v2609 = vsel %vm2597, %v2574, %v2266
      %v2611 = vsel %vm2597, %v2576, %v2268
      %v2613 = vsel %vm2597, %v2578, %v2270
      %v2615 = vsel %vm2597, %v2580, %v2272
      %v2617 = vsel %vm2597, %v2582, %v2274
      %v2619 = vsel %vm2597, %v2584, %v2276
      %v2621 = vsel %vm2597, %v2586, %v2278
      %v2623 = vsel %vm2597, %v2588, %v2280
      %v2625 = vsel %vm2597, %v2590, %v2282
      %v2627 = vsel %vm2597, %v2592, %v2284
      %v2629 = vsel %vm2597, %v2594, %v2286
      %v2631 = vsel %vm2597, %v2596, %v2288
      %vm2632 = vcmask 261120
      %v2634 = vsel %vm2632, %v2599, %v2338
      %v2636 = vsel %vm2632, %v2601, %v2340
      %v2638 = vsel %vm2632, %v2603, %v2342
      %v2640 = vsel %vm2632, %v2605, %v2344
      %v2642 = vsel %vm2632, %v2607, %v2346
      %v2644 = vsel %vm2632, %v2609, %v2348
      %v2646 = vsel %vm2632, %v2611, %v2350
      %v2648 = vsel %vm2632, %v2613, %v2352
      %v2650 = vsel %vm2632, %v2615, %v2354
      %v2652 = vsel %vm2632, %v2617, %v2356
      %v2654 = vsel %vm2632, %v2619, %v2358
      %v2656 = vsel %vm2632, %v2621, %v2360
      %v2658 = vsel %vm2632, %v2623, %v2362
      %v2660 = vsel %vm2632, %v2625, %v2364
      %v2662 = vsel %vm2632, %v2627, %v2366
      %v2664 = vsel %vm2632, %v2629, %v2368
      %v2666 = vsel %vm2632, %v2631, %v2370
      %v2667 = vld [vmem:[%s1] sm:$0xf]
      %v2668 = vld [vmem:[%s1 + $0x4] sm:$0xf]
      %v2669 = vld [vmem:[%s1 + $0x8] sm:$0xf]
      %v2670 = vld [vmem:[%s1 + $0xc] sm:$0xf]
      %v2671 = vld [vmem:[%s1 + $0x10] sm:$0x3]
      %v2672 = vld [vmem:[%s5] sm:$0x1]
      %v2674 = vlaneseq
      %v2675 = vshrl.u32 %v2674, 7
      %v2676 = vsub.s32 0, %v2675
      %v2677 = vrot.slane %v2672, %v2676
      %v2679 = vshrl.u32 %v2634, 16
      %v2681 = vrot.slane %v2679, 3
      %v2682 = vshll.u32 %v2634, 16
      %v2684 = vrot.slane %v2682, 4
      %v2685 = vor.u32 %v2681, %v2684
      %v2686 = vshrl.u32 %v2636, 16
      %v2688 = vrot.slane %v2686, 3
      %v2689 = vshll.u32 %v2636, 16
      %v2691 = vrot.slane %v2689, 4
      %v2692 = vor.u32 %v2688, %v2691
      %v2693 = vsel %vm1531, %v2685, %v2692
      %v2694 = vshrl.u32 %v2638, 16
      %v2696 = vrot.slane %v2694, 3
      %v2697 = vshll.u32 %v2638, 16
      %v2699 = vrot.slane %v2697, 4
      %v2700 = vor.u32 %v2696, %v2699
      %v2701 = vsel %vm1531, %v2692, %v2700
      %v2702 = vshrl.u32 %v2640, 16
      %v2704 = vrot.slane %v2702, 3
      %v2705 = vshll.u32 %v2640, 16
      %v2707 = vrot.slane %v2705, 4
      %v2708 = vor.u32 %v2704, %v2707
      %v2709 = vsel %vm1531, %v2700, %v2708
      %v2710 = vshrl.u32 %v2642, 16
      %v2712 = vrot.slane %v2710, 3
      %v2713 = vshll.u32 %v2642, 16
      %v2715 = vrot.slane %v2713, 4
      %v2716 = vor.u32 %v2712, %v2715
      %v2717 = vsel %vm1531, %v2708, %v2716
      %v2718 = vshrl.u32 %v2644, 16
      %v2720 = vrot.slane %v2718, 3
      %v2721 = vshll.u32 %v2644, 16
      %v2723 = vrot.slane %v2721, 4
      %v2724 = vor.u32 %v2720, %v2723
      %v2725 = vsel %vm1531, %v2716, %v2724
      %v2726 = vshrl.u32 %v2646, 16
      %v2728 = vrot.slane %v2726, 3
      %v2729 = vshll.u32 %v2646, 16
      %v2731 = vrot.slane %v2729, 4
      %v2732 = vor.u32 %v2728, %v2731
      %v2733 = vsel %vm1531, %v2724, %v2732
      %v2734 = vshrl.u32 %v2648, 16
      %v2736 = vrot.slane %v2734, 3
      %v2737 = vshll.u32 %v2648, 16
      %v2739 = vrot.slane %v2737, 4
      %v2740 = vor.u32 %v2736, %v2739
      %v2741 = vsel %vm1531, %v2732, %v2740
      %v2742 = vshrl.u32 %v2650, 16
      %v2744 = vrot.slane %v2742, 3
      %v2745 = vshll.u32 %v2650, 16
      %v2747 = vrot.slane %v2745, 4
      %v2748 = vor.u32 %v2744, %v2747
      %v2749 = vsel %vm1531, %v2740, %v2748
      %v2750 = vshrl.u32 %v2652, 16
      %v2752 = vrot.slane %v2750, 3
      %v2753 = vshll.u32 %v2652, 16
      %v2755 = vrot.slane %v2753, 4
      %v2756 = vor.u32 %v2752, %v2755
      %v2757 = vsel %vm1531, %v2748, %v2756
      %v2758 = vshrl.u32 %v2654, 16
      %v2760 = vrot.slane %v2758, 3
      %v2761 = vshll.u32 %v2654, 16
      %v2763 = vrot.slane %v2761, 4
      %v2764 = vor.u32 %v2760, %v2763
      %v2765 = vsel %vm1531, %v2756, %v2764
      %v2766 = vshrl.u32 %v2656, 16
      %v2768 = vrot.slane %v2766, 3
      %v2769 = vshll.u32 %v2656, 16
      %v2771 = vrot.slane %v2769, 4
      %v2772 = vor.u32 %v2768, %v2771
      %v2773 = vsel %vm1531, %v2764, %v2772
      %v2774 = vshrl.u32 %v2658, 16
      %v2776 = vrot.slane %v2774, 3
      %v2777 = vshll.u32 %v2658, 16
      %v2779 = vrot.slane %v2777, 4
      %v2780 = vor.u32 %v2776, %v2779
      %v2781 = vsel %vm1531, %v2772, %v2780
      %v2782 = vshrl.u32 %v2660, 16
      %v2784 = vrot.slane %v2782, 3
      %v2785 = vshll.u32 %v2660, 16
      %v2787 = vrot.slane %v2785, 4
      %v2788 = vor.u32 %v2784, %v2787
      %v2789 = vsel %vm1531, %v2780, %v2788
      %v2790 = vshrl.u32 %v2662, 16
      %v2792 = vrot.slane %v2790, 3
      %v2793 = vshll.u32 %v2662, 16
      %v2795 = vrot.slane %v2793, 4
      %v2796 = vor.u32 %v2792, %v2795
      %v2797 = vsel %vm1531, %v2788, %v2796
      %v2798 = vshrl.u32 %v2664, 16
      %v2800 = vrot.slane %v2798, 3
      %v2801 = vshll.u32 %v2664, 16
      %v2803 = vrot.slane %v2801, 4
      %v2804 = vor.u32 %v2800, %v2803
      %v2805 = vsel %vm1531, %v2796, %v2804
      %v2806 = vshrl.u32 %v2666, 16
      %v2808 = vrot.slane %v2806, 3
      %v2809 = vshll.u32 %v2666, 16
      %v2811 = vrot.slane %v2809, 4
      %v2812 = vor.u32 %v2808, %v2811
      %v2813 = vsel %vm1531, %v2804, %v2812
      %v2819 = vunpack.c.l.b16 %v2667
      %v2820 = vunpack.c.l.b16 %v2668
      %v2821 = vunpack.c.l.b16 %v2669
      %v2822 = vunpack.c.l.b16 %v2670
      %v2823 = vunpack.c.l.b16 %v2671
      %v2824 = vpack.c.b16 %v2820, %v2819
      %v2825 = vpack.c.b16 %v2822, %v2821
      %v2826 = vpack.c.b16 %v2823, %v2823
      %vm2829 = vcmask 293888
      %v2831 = vsel %vm2829, %v2693, 0
      %v2834 = vsel %vm2829, %v2701, 0
      %v2837 = vsel %vm2829, %v2709, 0
      %v2840 = vsel %vm2829, %v2717, 0
      %v2843 = vsel %vm2829, %v2725, 0
      %v2846 = vsel %vm2829, %v2733, 0
      %v2849 = vsel %vm2829, %v2741, 0
      %v2852 = vsel %vm2829, %v2749, 0
      %v2855 = vsel %vm2829, %v2757, 0
      %v2858 = vsel %vm2829, %v2765, 0
      %v2861 = vsel %vm2829, %v2773, 0
      %v2864 = vsel %vm2829, %v2781, 0
      %v2867 = vsel %vm2829, %v2789, 0
      %v2870 = vsel %vm2829, %v2797, 0
      %v2873 = vsel %vm2829, %v2805, 0
      %v2876 = vsel %vm2829, %v2813, 0
      %vm2878 = vcmask 1041408
      %v2880 = vsel %vm2878, %v2826, 0
      %2882 = vmatprep.subr.bf16.mxu0 0
      %2883 = vmatpush1.bf16.msra.mxu0 %v2824
      %2884 = vmatprep.subr.bf16.mxu0 0
      %2885 = vmatpush1.bf16.msra.mxu0 %v2825
      %2886 = vmatprep.subr.bf16.mxu0 0
      %2887 = vmatpush1.bf16.msra.mxu0 %v2880
      %2888 = vmatprep.subr.bf16.mxu0 0
      %2889 = vmatpush1.bf16.msra.mxu0 0
      %2890 = vmatprep.subr.bf16.mxu0 0
      %2891 = vmatpush1.bf16.msra.mxu0 0
      %2892 = vmatprep.subr.bf16.mxu0 0
      %2893 = vmatpush1.bf16.msra.mxu0 0
      %2894 = vmatprep.subr.bf16.mxu0 0
      %2895 = vmatpush1.bf16.msra.mxu0 0
      %2896 = vmatprep.subr.bf16.mxu0 0
      %2897 = vmatpush1.bf16.msra.mxu0 0
      %2898 = vmatprep.subr.bf16.mxu0 0
      %2899 = vmatpush1.bf16.msra.mxu0 0
      %2900 = vmatprep.subr.bf16.mxu0 0
      %2901 = vmatpush1.bf16.msra.mxu0 0
      %2902 = vmatprep.subr.bf16.mxu0 0
      %2903 = vmatpush1.bf16.msra.mxu0 0
      %2904 = vmatprep.subr.bf16.mxu0 0
      %2905 = vmatpush1.bf16.msra.mxu0 0
      %2906 = vmatprep.subr.bf16.mxu0 0
      %2907 = vmatpush1.bf16.msra.mxu0 0
      %2908 = vmatprep.subr.bf16.mxu0 0
      %2909 = vmatpush1.bf16.msra.mxu0 0
      %2910 = vmatprep.subr.bf16.mxu0 0
      %2911 = vmatpush1.bf16.msra.mxu0 0
      %2912 = vmatprep.subr.bf16.mxu0 0
      %2913 = vmatpush1.bf16.msra.mxu0 0
      %2914 = vmatprep.mubr.bf16.mxu0 0
      %2915 = vmatmul.mubr.bf16.gmra.mrb[0].mxu0 %v2831
      %v2916 = vpop.f32.mrb[0].mxu0
      %v2917 = vadd.f32 %v2677, %v2916
      %v2918 = vpop.f32.mrb[0].mxu0
      %v2919 = vpop.f32.mrb[0].mxu0
      %v2920 = vadd.f32 %v2677, %v2919
      %v2921 = vpop.f32.mrb[0].mxu0
      %2922 = vmatprep.mubr.bf16.mxu0 0
      %2923 = vmatmul.mubr.bf16.gmra.mrb[0].mxu0 %v2834
      %v2924 = vpop.f32.mrb[0].mxu0
      %v2925 = vadd.f32 %v2677, %v2924
      %v2926 = vpop.f32.mrb[0].mxu0
      %v2927 = vpop.f32.mrb[0].mxu0
      %v2928 = vadd.f32 %v2677, %v2927
      %v2929 = vpop.f32.mrb[0].mxu0
      %2930 = vmatprep.mubr.bf16.mxu0 0
      %2931 = vmatmul.mubr.bf16.gmra.mrb[0].mxu0 %v2837
      %v2932 = vpop.f32.mrb[0].mxu0
      %v2933 = vadd.f32 %v2677, %v2932
      %v2934 = vpop.f32.mrb[0].mxu0
      %v2935 = vpop.f32.mrb[0].mxu0
      %v2936 = vadd.f32 %v2677, %v2935
      %v2937 = vpop.f32.mrb[0].mxu0
      %2938 = vmatprep.mubr.bf16.mxu0 0
      %2939 = vmatmul.mubr.bf16.gmra.mrb[0].mxu0 %v2840
      %v2940 = vpop.f32.mrb[0].mxu0
      %v2941 = vadd.f32 %v2677, %v2940
      %v2942 = vpop.f32.mrb[0].mxu0
      %v2943 = vpop.f32.mrb[0].mxu0
      %v2944 = vadd.f32 %v2677, %v2943
      %v2945 = vpop.f32.mrb[0].mxu0
      %2946 = vmatprep.mubr.bf16.mxu0 0
      %2947 = vmatmul.mubr.bf16.gmra.mrb[0].mxu0 %v2843
      %v2948 = vpop.f32.mrb[0].mxu0
      %v2949 = vadd.f32 %v2677, %v2948
      %v2950 = vpop.f32.mrb[0].mxu0
      %v2951 = vpop.f32.mrb[0].mxu0
      %v2952 = vadd.f32 %v2677, %v2951
      %v2953 = vpop.f32.mrb[0].mxu0
      %2954 = vmatprep.mubr.bf16.mxu0 0
      %2955 = vmatmul.mubr.bf16.gmra.mrb[0].mxu0 %v2846
      %v2956 = vpop.f32.mrb[0].mxu0
      %v2957 = vadd.f32 %v2677, %v2956
      %v2958 = vpop.f32.mrb[0].mxu0
      %v2959 = vpop.f32.mrb[0].mxu0
      %v2960 = vadd.f32 %v2677, %v2959
      %v2961 = vpop.f32.mrb[0].mxu0
      %2962 = vmatprep.mubr.bf16.mxu0 0
      %2963 = vmatmul.mubr.bf16.gmra.mrb[0].mxu0 %v2849
      %v2964 = vpop.f32.mrb[0].mxu0
      %v2965 = vadd.f32 %v2677, %v2964
      %v2966 = vpop.f32.mrb[0].mxu0
      %v2967 = vpop.f32.mrb[0].mxu0
      %v2968 = vadd.f32 %v2677, %v2967
      %v2969 = vpop.f32.mrb[0].mxu0
      %2970 = vmatprep.mubr.bf16.mxu0 0
      %2971 = vmatmul.mubr.bf16.gmra.mrb[0].mxu0 %v2852
      %v2972 = vpop.f32.mrb[0].mxu0
      %v2973 = vadd.f32 %v2677, %v2972
      %v2974 = vpop.f32.mrb[0].mxu0
      %v2975 = vpop.f32.mrb[0].mxu0
      %v2976 = vadd.f32 %v2677, %v2975
      %v2977 = vpop.f32.mrb[0].mxu0
      %2978 = vmatprep.mubr.bf16.mxu0 0
      %2979 = vmatmul.mubr.bf16.gmra.mrb[0].mxu0 %v2855
      %v2980 = vpop.f32.mrb[0].mxu0
      %v2981 = vadd.f32 %v2677, %v2980
      %v2982 = vpop.f32.mrb[0].mxu0
      %v2983 = vpop.f32.mrb[0].mxu0
      %v2984 = vadd.f32 %v2677, %v2983
      %v2985 = vpop.f32.mrb[0].mxu0
      %2986 = vmatprep.mubr.bf16.mxu0 0
      %2987 = vmatmul.mubr.bf16.gmra.mrb[0].mxu0 %v2858
      %v2988 = vpop.f32.mrb[0].mxu0
      %v2989 = vadd.f32 %v2677, %v2988
      %v2990 = vpop.f32.mrb[0].mxu0
      %v2991 = vpop.f32.mrb[0].mxu0
      %v2992 = vadd.f32 %v2677, %v2991
      %v2993 = vpop.f32.mrb[0].mxu0
      %2994 = vmatprep.mubr.bf16.mxu0 0
      %2995 = vmatmul.mubr.bf16.gmra.mrb[0].mxu0 %v2861
      %v2996 = vpop.f32.mrb[0].mxu0
      %v2997 = vadd.f32 %v2677, %v2996
      %v2998 = vpop.f32.mrb[0].mxu0
      %v2999 = vpop.f32.mrb[0].mxu0
      %v3000 = vadd.f32 %v2677, %v2999
      %v3001 = vpop.f32.mrb[0].mxu0
      %3002 = vmatprep.mubr.bf16.mxu0 0
      %3003 = vmatmul.mubr.bf16.gmra.mrb[0].mxu0 %v2864
      %v3004 = vpop.f32.mrb[0].mxu0
      %v3005 = vadd.f32 %v2677, %v3004
      %v3006 = vpop.f32.mrb[0].mxu0
      %v3007 = vpop.f32.mrb[0].mxu0
      %v3008 = vadd.f32 %v2677, %v3007
      %v3009 = vpop.f32.mrb[0].mxu0
      %3010 = vmatprep.mubr.bf16.mxu0 0
      %3011 = vmatmul.mubr.bf16.gmra.mrb[0].mxu0 %v2867
      %v3012 = vpop.f32.mrb[0].mxu0
      %v3013 = vadd.f32 %v2677, %v3012
      %v3014 = vpop.f32.mrb[0].mxu0
      %v3015 = vpop.f32.mrb[0].mxu0
      %v3016 = vadd.f32 %v2677, %v3015
      %v3017 = vpop.f32.mrb[0].mxu0
      %3018 = vmatprep.mubr.bf16.mxu0 0
      %3019 = vmatmul.mubr.bf16.gmra.mrb[0].mxu0 %v2870
      %v3020 = vpop.f32.mrb[0].mxu0
      %v3021 = vadd.f32 %v2677, %v3020
      %v3022 = vpop.f32.mrb[0].mxu0
      %v3023 = vpop.f32.mrb[0].mxu0
      %v3024 = vadd.f32 %v2677, %v3023
      %v3025 = vpop.f32.mrb[0].mxu0
      %3026 = vmatprep.mubr.bf16.mxu0 0
      %3027 = vmatmul.mubr.bf16.gmra.mrb[0].mxu0 %v2873
      %v3028 = vpop.f32.mrb[0].mxu0
      %v3029 = vadd.f32 %v2677, %v3028
      %v3030 = vpop.f32.mrb[0].mxu0
      %v3031 = vpop.f32.mrb[0].mxu0
      %v3032 = vadd.f32 %v2677, %v3031
      %v3033 = vpop.f32.mrb[0].mxu0
      %3034 = vmatprep.mubr.bf16.mxu0 0
      %3035 = vmatmul.mubr.bf16.gmra.mrb[0].mxu0 %v2876
      %v3036 = vpop.f32.mrb[0].mxu0
      %v3037 = vadd.f32 %v2677, %v3036
      %v3038 = vpop.f32.mrb[0].mxu0
      %v3039 = vpop.f32.mrb[0].mxu0
      %v3040 = vadd.f32 %v2677, %v3039
      %v3041 = vpop.f32.mrb[0].mxu0
      %3042 = vdwg.mxu0
      %v3043 = vmax.f32 %v2917, 0.0
      %v3044 = vmax.f32 %v2920, 0.0
      %v3045 = vmax.f32 %v2925, 0.0
      %v3046 = vmax.f32 %v2928, 0.0
      %v3047 = vmax.f32 %v2933, 0.0
      %v3048 = vmax.f32 %v2936, 0.0
      %v3049 = vmax.f32 %v2941, 0.0
      %v3050 = vmax.f32 %v2944, 0.0
      %v3051 = vmax.f32 %v2949, 0.0
      %v3052 = vmax.f32 %v2952, 0.0
      %v3053 = vmax.f32 %v2957, 0.0
      %v3054 = vmax.f32 %v2960, 0.0
      %v3055 = vmax.f32 %v2965, 0.0
      %v3056 = vmax.f32 %v2968, 0.0
      %v3057 = vmax.f32 %v2973, 0.0
      %v3058 = vmax.f32 %v2976, 0.0
      %v3059 = vmax.f32 %v2981, 0.0
      %v3060 = vmax.f32 %v2984, 0.0
      %v3061 = vmax.f32 %v2989, 0.0
      %v3062 = vmax.f32 %v2992, 0.0
      %v3063 = vmax.f32 %v2997, 0.0
      %v3064 = vmax.f32 %v3000, 0.0
      %v3065 = vmax.f32 %v3005, 0.0
      %v3066 = vmax.f32 %v3008, 0.0
      %v3067 = vmax.f32 %v3013, 0.0
      %v3068 = vmax.f32 %v3016, 0.0
      %v3069 = vmax.f32 %v3021, 0.0
      %v3070 = vmax.f32 %v3024, 0.0
      %v3071 = vmax.f32 %v3029, 0.0
      %v3072 = vmax.f32 %v3032, 0.0
      %v3073 = vmax.f32 %v3037, 0.0
      %v3074 = vmax.f32 %v3040, 0.0
      %v3075 = vpack.c.bf16 %v3044, %v3043
      %v3076 = vpack.c.bf16 %v3046, %v3045
      %v3077 = vpack.c.bf16 %v3048, %v3047
      %v3078 = vpack.c.bf16 %v3050, %v3049
      %v3079 = vpack.c.bf16 %v3052, %v3051
      %v3080 = vpack.c.bf16 %v3054, %v3053
      %v3081 = vpack.c.bf16 %v3056, %v3055
      %v3082 = vpack.c.bf16 %v3058, %v3057
      %v3083 = vpack.c.bf16 %v3060, %v3059
      %v3084 = vpack.c.bf16 %v3062, %v3061
      %v3085 = vpack.c.bf16 %v3064, %v3063
      %v3086 = vpack.c.bf16 %v3066, %v3065
      %v3087 = vpack.c.bf16 %v3068, %v3067
      %v3088 = vpack.c.bf16 %v3070, %v3069
      %v3089 = vpack.c.bf16 %v3072, %v3071
      %v3090 = vpack.c.bf16 %v3074, %v3073
      %vm3107 = vcmask 1043456
      %v3108 = vrot.slane %v3075, 4
      %v3109 = vrot.slane %v3076, 4
      %v3110 = vsel %vm3107, %v3108, %v3109
      %v3111 = vrot.slane %v3077, 4
      %v3112 = vsel %vm3107, %v3109, %v3111
      %v3113 = vrot.slane %v3078, 4
      %v3114 = vsel %vm3107, %v3111, %v3113
      %v3115 = vrot.slane %v3079, 4
      %v3116 = vsel %vm3107, %v3113, %v3115
      %v3117 = vrot.slane %v3080, 4
      %v3118 = vsel %vm3107, %v3115, %v3117
      %v3119 = vrot.slane %v3081, 4
      %v3120 = vsel %vm3107, %v3117, %v3119
      %v3121 = vrot.slane %v3082, 4
      %v3122 = vsel %vm3107, %v3119, %v3121
      %v3123 = vrot.slane %v3083, 4
      %v3124 = vsel %vm3107, %v3121, %v3123
      %v3125 = vrot.slane %v3084, 4
      %v3126 = vsel %vm3107, %v3123, %v3125
      %v3127 = vrot.slane %v3085, 4
      %v3128 = vsel %vm3107, %v3125, %v3127
      %v3129 = vrot.slane %v3086, 4
      %v3130 = vsel %vm3107, %v3127, %v3129
      %v3131 = vrot.slane %v3087, 4
      %v3132 = vsel %vm3107, %v3129, %v3131
      %v3133 = vrot.slane %v3088, 4
      %v3134 = vsel %vm3107, %v3131, %v3133
      %v3135 = vrot.slane %v3089, 4
      %v3136 = vsel %vm3107, %v3133, %v3135
      %v3137 = vrot.slane %v3090, 4
      %v3138 = vsel %vm3107, %v3135, %v3137
      %v3155 = vsel %vm514, 0, %v3108
      %v3158 = vsel %vm514, %v3137, 0
      %v3160 = vsel %vm1323, %v3155, 0
      %v3161 = vsel %vm1324, %v3110, 0
      %v3162 = vsel %vm1325, %v3112, 0
      %v3163 = vsel %vm1326, %v3114, 0
      %v3164 = vsel %vm1327, %v3116, 0
      %v3165 = vsel %vm1328, %v3118, 0
      %v3166 = vsel %vm1329, %v3120, 0
      %v3167 = vsel %vm1330, %v3122, 0
      %v3168 = vsel %vm1331, %v3124, 0
      %v3169 = vsel %vm1332, %v3126, 0
      %v3170 = vsel %vm1333, %v3128, 0
      %v3171 = vsel %vm1334, %v3130, 0
      %v3172 = vsel %vm1335, %v3132, 0
      %v3173 = vsel %vm1336, %v3134, 0
      %v3174 = vsel %vm1337, %v3136, 0
      %v3175 = vsel %vm1338, %v3138, 0
      %v3176 = vsel %vm1675, %v3155, 0
      %v3177 = vsel %vm1676, %v3110, 0
      %v3178 = vsel %vm1677, %v3112, 0
      %v3179 = vsel %vm1678, %v3114, 0
      %v3180 = vsel %vm1679, %v3116, 0
      %v3181 = vsel %vm1680, %v3118, 0
      %v3182 = vsel %vm1681, %v3120, 0
      %v3183 = vsel %vm1682, %v3122, 0
      %v3184 = vsel %vm1683, %v3124, 0
      %v3185 = vsel %vm1684, %v3126, 0
      %v3186 = vsel %vm1685, %v3128, 0
      %v3187 = vsel %vm1686, %v3130, 0
      %v3188 = vsel %vm1687, %v3132, 0
      %v3189 = vsel %vm1688, %v3134, 0
      %v3190 = vsel %vm1689, %v3136, 0
      %v3191 = vsel %vm1690, %v3138, 0
      %v3192 = vsel %vm1707, %v3155, 0
      %v3193 = vsel %vm1323, %v3110, 0
      %v3194 = vsel %vm1324, %v3112, 0
      %v3195 = vsel %vm1325, %v3114, 0
      %v3196 = vsel %vm1326, %v3116, 0
      %v3197 = vsel %vm1327, %v3118, 0
      %v3198 = vsel %vm1328, %v3120, 0
      %v3199 = vsel %vm1329, %v3122, 0
      %v3200 = vsel %vm1330, %v3124, 0
      %v3201 = vsel %vm1331, %v3126, 0
      %v3202 = vsel %vm1332, %v3128, 0
      %v3203 = vsel %vm1333, %v3130, 0
      %v3204 = vsel %vm1334, %v3132, 0
      %v3205 = vsel %vm1335, %v3134, 0
      %v3206 = vsel %vm1336, %v3136, 0
      %v3207 = vsel %vm1337, %v3138, 0
      %v3208 = vsel %vm1338, %v3158, 0
      %v3209 = vsel %vm1725, %v3155, 0
      %v3210 = vsel %vm1675, %v3110, 0
      %v3211 = vsel %vm1676, %v3112, 0
      %v3212 = vsel %vm1677, %v3114, 0
      %v3213 = vsel %vm1678, %v3116, 0
      %v3214 = vsel %vm1679, %v3118, 0
      %v3215 = vsel %vm1680, %v3120, 0
      %v3216 = vsel %vm1681, %v3122, 0
      %v3217 = vsel %vm1682, %v3124, 0
      %v3218 = vsel %vm1683, %v3126, 0
      %v3219 = vsel %vm1684, %v3128, 0
      %v3220 = vsel %vm1685, %v3130, 0
      %v3221 = vsel %vm1686, %v3132, 0
      %v3222 = vsel %vm1687, %v3134, 0
      %v3223 = vsel %vm1688, %v3136, 0
      %v3224 = vsel %vm1689, %v3138, 0
      %v3225 = vsel %vm1690, %v3158, 0
      %v3226 = vsel %vm1707, %v3110, 0
      %v3227 = vsel %vm1323, %v3112, 0
      %v3228 = vsel %vm1324, %v3114, 0
      %v3229 = vsel %vm1325, %v3116, 0
      %v3230 = vsel %vm1326, %v3118, 0
      %v3231 = vsel %vm1327, %v3120, 0
      %v3232 = vsel %vm1328, %v3122, 0
      %v3233 = vsel %vm1329, %v3124, 0
      %v3234 = vsel %vm1330, %v3126, 0
      %v3235 = vsel %vm1331, %v3128, 0
      %v3236 = vsel %vm1332, %v3130, 0
      %v3237 = vsel %vm1333, %v3132, 0
      %v3238 = vsel %vm1334, %v3134, 0
      %v3239 = vsel %vm1335, %v3136, 0
      %v3240 = vsel %vm1336, %v3138, 0
      %v3241 = vsel %vm1337, %v3158, 0
      %v3242 = vsel %vm1725, %v3110, 0
      %v3243 = vsel %vm1675, %v3112, 0
      %v3244 = vsel %vm1676, %v3114, 0
      %v3245 = vsel %vm1677, %v3116, 0
      %v3246 = vsel %vm1678, %v3118, 0
      %v3247 = vsel %vm1679, %v3120, 0
      %v3248 = vsel %vm1680, %v3122, 0
      %v3249 = vsel %vm1681, %v3124, 0
      %v3250 = vsel %vm1682, %v3126, 0
      %v3251 = vsel %vm1683, %v3128, 0
      %v3252 = vsel %vm1684, %v3130, 0
      %v3253 = vsel %vm1685, %v3132, 0
      %v3254 = vsel %vm1686, %v3134, 0
      %v3255 = vsel %vm1687, %v3136, 0
      %v3256 = vsel %vm1688, %v3138, 0
      %v3257 = vsel %vm1689, %v3158, 0
      %v3258 = vshll.u32 %v3155, 16
      %v3260 = vrot.slane %v3258, 1
      %v3261 = vsel %vm1775, %v1781, %v3260
      %v3262 = vshrl.u32 %v3155, 16
      %v3264 = vor.u32 %v3262, %v3260
      %v3266 = vshll.u32 %v3110, 16
      %v3268 = vrot.slane %v3266, 1
      %v3269 = vsel %vm1775, %v3264, %v3268
      %v3270 = vshrl.u32 %v3110, 16
      %v3272 = vor.u32 %v3270, %v3268
      %v3274 = vshll.u32 %v3112, 16
      %v3276 = vrot.slane %v3274, 1
      %v3277 = vsel %vm1775, %v3272, %v3276
      %v3278 = vshrl.u32 %v3112, 16
      %v3280 = vor.u32 %v3278, %v3276
      %v3282 = vshll.u32 %v3114, 16
      %v3284 = vrot.slane %v3282, 1
      %v3285 = vsel %vm1775, %v3280, %v3284
      %v3286 = vshrl.u32 %v3114, 16
      %v3288 = vor.u32 %v3286, %v3284
      %v3290 = vshll.u32 %v3116, 16
      %v3292 = vrot.slane %v3290, 1
      %v3293 = vsel %vm1775, %v3288, %v3292
      %v3294 = vshrl.u32 %v3116, 16
      %v3296 = vor.u32 %v3294, %v3292
      %v3298 = vshll.u32 %v3118, 16
      %v3300 = vrot.slane %v3298, 1
      %v3301 = vsel %vm1775, %v3296, %v3300
      %v3302 = vshrl.u32 %v3118, 16
      %v3304 = vor.u32 %v3302, %v3300
      %v3306 = vshll.u32 %v3120, 16
      %v3308 = vrot.slane %v3306, 1
      %v3309 = vsel %vm1775, %v3304, %v3308
      %v3310 = vshrl.u32 %v3120, 16
      %v3312 = vor.u32 %v3310, %v3308
      %v3314 = vshll.u32 %v3122, 16
      %v3316 = vrot.slane %v3314, 1
      %v3317 = vsel %vm1775, %v3312, %v3316
      %v3318 = vshrl.u32 %v3122, 16
      %v3320 = vor.u32 %v3318, %v3316
      %v3322 = vshll.u32 %v3124, 16
      %v3324 = vrot.slane %v3322, 1
      %v3325 = vsel %vm1775, %v3320, %v3324
      %v3326 = vshrl.u32 %v3124, 16
      %v3328 = vor.u32 %v3326, %v3324
      %v3330 = vshll.u32 %v3126, 16
      %v3332 = vrot.slane %v3330, 1
      %v3333 = vsel %vm1775, %v3328, %v3332
      %v3334 = vshrl.u32 %v3126, 16
      %v3336 = vor.u32 %v3334, %v3332
      %v3338 = vshll.u32 %v3128, 16
      %v3340 = vrot.slane %v3338, 1
      %v3341 = vsel %vm1775, %v3336, %v3340
      %v3342 = vshrl.u32 %v3128, 16
      %v3344 = vor.u32 %v3342, %v3340
      %v3346 = vshll.u32 %v3130, 16
      %v3348 = vrot.slane %v3346, 1
      %v3349 = vsel %vm1775, %v3344, %v3348
      %v3350 = vshrl.u32 %v3130, 16
      %v3352 = vor.u32 %v3350, %v3348
      %v3354 = vshll.u32 %v3132, 16
      %v3356 = vrot.slane %v3354, 1
      %v3357 = vsel %vm1775, %v3352, %v3356
      %v3358 = vshrl.u32 %v3132, 16
      %v3360 = vor.u32 %v3358, %v3356
      %v3362 = vshll.u32 %v3134, 16
      %v3364 = vrot.slane %v3362, 1
      %v3365 = vsel %vm1775, %v3360, %v3364
      %v3366 = vshrl.u32 %v3134, 16
      %v3368 = vor.u32 %v3366, %v3364
      %v3370 = vshll.u32 %v3136, 16
      %v3372 = vrot.slane %v3370, 1
      %v3373 = vsel %vm1775, %v3368, %v3372
      %v3374 = vshrl.u32 %v3136, 16
      %v3376 = vor.u32 %v3374, %v3372
      %v3378 = vshll.u32 %v3138, 16
      %v3380 = vrot.slane %v3378, 1
      %v3381 = vsel %vm1775, %v3376, %v3380
      %v3382 = vshrl.u32 %v3138, 16
      %v3384 = vor.u32 %v3382, %v3380
      %3385 = vrot.lane.b32.xlu0 %v3261, 32
      %v3386 = vpop.permute.xlu0 %3385
      %3387 = vrot.lane.b32.xlu0 %v3269, 32
      %v3388 = vpop.permute.xlu0 %3387
      %3389 = vrot.lane.b32.xlu0 %v3277, 32
      %v3390 = vpop.permute.xlu0 %3389
      %3391 = vrot.lane.b32.xlu0 %v3285, 32
      %v3392 = vpop.permute.xlu0 %3391
      %3393 = vrot.lane.b32.xlu0 %v3293, 32
      %v3394 = vpop.permute.xlu0 %3393
      %3395 = vrot.lane.b32.xlu0 %v3301, 32
      %v3396 = vpop.permute.xlu0 %3395
      %3397 = vrot.lane.b32.xlu0 %v3309, 32
      %v3398 = vpop.permute.xlu0 %3397
      %3399 = vrot.lane.b32.xlu0 %v3317, 32
      %v3400 = vpop.permute.xlu0 %3399
      %3401 = vrot.lane.b32.xlu0 %v3325, 32
      %v3402 = vpop.permute.xlu0 %3401
      %3403 = vrot.lane.b32.xlu0 %v3333, 32
      %v3404 = vpop.permute.xlu0 %3403
      %3405 = vrot.lane.b32.xlu0 %v3341, 32
      %v3406 = vpop.permute.xlu0 %3405
      %3407 = vrot.lane.b32.xlu0 %v3349, 32
      %v3408 = vpop.permute.xlu0 %3407
      %3409 = vrot.lane.b32.xlu0 %v3357, 32
      %v3410 = vpop.permute.xlu0 %3409
      %3411 = vrot.lane.b32.xlu0 %v3365, 32
      %v3412 = vpop.permute.xlu0 %3411
      %3413 = vrot.lane.b32.xlu0 %v3373, 32
      %v3414 = vpop.permute.xlu0 %3413
      %3415 = vrot.lane.b32.xlu0 %v3381, 32
      %v3416 = vpop.permute.xlu0 %3415
      %3417 = vrot.lane.b32.xlu0 %v3384, 32
      %v3418 = vpop.permute.xlu0 %3417
      %v3435 = vrot.slane %v3176, 1
      %v3436 = vsel %vm1960, %v1961, %v3435
      %v3437 = vrot.slane %v3177, 1
      %v3438 = vsel %vm1960, %v3435, %v3437
      %v3439 = vrot.slane %v3178, 1
      %v3440 = vsel %vm1960, %v3437, %v3439
      %v3441 = vrot.slane %v3179, 1
      %v3442 = vsel %vm1960, %v3439, %v3441
      %v3443 = vrot.slane %v3180, 1
      %v3444 = vsel %vm1960, %v3441, %v3443
      %v3445 = vrot.slane %v3181, 1
      %v3446 = vsel %vm1960, %v3443, %v3445
      %v3447 = vrot.slane %v3182, 1
      %v3448 = vsel %vm1960, %v3445, %v3447
      %v3449 = vrot.slane %v3183, 1
      %v3450 = vsel %vm1960, %v3447, %v3449
      %v3451 = vrot.slane %v3184, 1
      %v3452 = vsel %vm1960, %v3449, %v3451
      %v3453 = vrot.slane %v3185, 1
      %v3454 = vsel %vm1960, %v3451, %v3453
      %v3455 = vrot.slane %v3186, 1
      %v3456 = vsel %vm1960, %v3453, %v3455
      %v3457 = vrot.slane %v3187, 1
      %v3458 = vsel %vm1960, %v3455, %v3457
      %v3459 = vrot.slane %v3188, 1
      %v3460 = vsel %vm1960, %v3457, %v3459
      %v3461 = vrot.slane %v3189, 1
      %v3462 = vsel %vm1960, %v3459, %v3461
      %v3463 = vrot.slane %v3190, 1
      %v3464 = vsel %vm1960, %v3461, %v3463
      %v3465 = vrot.slane %v3191, 1
      %v3466 = vsel %vm1960, %v3463, %v3465
      %3467 = vrot.lane.b32.xlu0 %v3436, 64
      %v3468 = vpop.permute.xlu0 %3467
      %3469 = vrot.lane.b32.xlu0 %v3438, 64
      %v3470 = vpop.permute.xlu0 %3469
      %3471 = vrot.lane.b32.xlu0 %v3440, 64
      %v3472 = vpop.permute.xlu0 %3471
      %3473 = vrot.lane.b32.xlu0 %v3442, 64
      %v3474 = vpop.permute.xlu0 %3473
      %3475 = vrot.lane.b32.xlu0 %v3444, 64
      %v3476 = vpop.permute.xlu0 %3475
      %3477 = vrot.lane.b32.xlu0 %v3446, 64
      %v3478 = vpop.permute.xlu0 %3477
      %3479 = vrot.lane.b32.xlu0 %v3448, 64
      %v3480 = vpop.permute.xlu0 %3479
      %3481 = vrot.lane.b32.xlu0 %v3450, 64
      %v3482 = vpop.permute.xlu0 %3481
      %3483 = vrot.lane.b32.xlu0 %v3452, 64
      %v3484 = vpop.permute.xlu0 %3483
      %3485 = vrot.lane.b32.xlu0 %v3454, 64
      %v3486 = vpop.permute.xlu0 %3485
      %3487 = vrot.lane.b32.xlu0 %v3456, 64
      %v3488 = vpop.permute.xlu0 %3487
      %3489 = vrot.lane.b32.xlu0 %v3458, 64
      %v3490 = vpop.permute.xlu0 %3489
      %3491 = vrot.lane.b32.xlu0 %v3460, 64
      %v3492 = vpop.permute.xlu0 %3491
      %3493 = vrot.lane.b32.xlu0 %v3462, 64
      %v3494 = vpop.permute.xlu0 %3493
      %3495 = vrot.lane.b32.xlu0 %v3464, 64
      %v3496 = vpop.permute.xlu0 %3495
      %3497 = vrot.lane.b32.xlu0 %v3466, 64
      %v3498 = vpop.permute.xlu0 %3497
      %3499 = vrot.lane.b32.xlu0 %v3465, 64
      %v3500 = vpop.permute.xlu0 %3499
      %3518 = vrot.lane.b32.xlu0 %v3192, 96
      %v3519 = vpop.permute.xlu0 %3518
      %3520 = vrot.lane.b32.xlu0 %v3193, 96
      %v3521 = vpop.permute.xlu0 %3520
      %3522 = vrot.lane.b32.xlu0 %v3194, 96
      %v3523 = vpop.permute.xlu0 %3522
      %3524 = vrot.lane.b32.xlu0 %v3195, 96
      %v3525 = vpop.permute.xlu0 %3524
      %3526 = vrot.lane.b32.xlu0 %v3196, 96
      %v3527 = vpop.permute.xlu0 %3526
      %3528 = vrot.lane.b32.xlu0 %v3197, 96
      %v3529 = vpop.permute.xlu0 %3528
      %3530 = vrot.lane.b32.xlu0 %v3198, 96
      %v3531 = vpop.permute.xlu0 %3530
      %3532 = vrot.lane.b32.xlu0 %v3199, 96
      %v3533 = vpop.permute.xlu0 %3532
      %3534 = vrot.lane.b32.xlu0 %v3200, 96
      %v3535 = vpop.permute.xlu0 %3534
      %3536 = vrot.lane.b32.xlu0 %v3201, 96
      %v3537 = vpop.permute.xlu0 %3536
      %3538 = vrot.lane.b32.xlu0 %v3202, 96
      %v3539 = vpop.permute.xlu0 %3538
      %3540 = vrot.lane.b32.xlu0 %v3203, 96
      %v3541 = vpop.permute.xlu0 %3540
      %3542 = vrot.lane.b32.xlu0 %v3204, 96
      %v3543 = vpop.permute.xlu0 %3542
      %3544 = vrot.lane.b32.xlu0 %v3205, 96
      %v3545 = vpop.permute.xlu0 %3544
      %3546 = vrot.lane.b32.xlu0 %v3206, 96
      %v3547 = vpop.permute.xlu0 %3546
      %3548 = vrot.lane.b32.xlu0 %v3207, 96
      %v3549 = vpop.permute.xlu0 %3548
      %3550 = vrot.lane.b32.xlu0 %v3208, 96
      %v3551 = vpop.permute.xlu0 %3550
      %v3552 = vshll.u32 %v3158, 16
      %v3554 = vrot.slane %v3552, 1
      %v3555 = vsel %vm1775, %v3384, %v3554
      %v3556 = vshrl.u32 %v3158, 16
      %v3558 = vor.u32 %v3556, %v3554
      %v3576 = vrot.slane %v3209, 1
      %v3577 = vrot.slane %v3210, 1
      %v3578 = vsel %vm1960, %v3576, %v3577
      %v3579 = vrot.slane %v3211, 1
      %v3580 = vsel %vm1960, %v3577, %v3579
      %v3581 = vrot.slane %v3212, 1
      %v3582 = vsel %vm1960, %v3579, %v3581
      %v3583 = vrot.slane %v3213, 1
      %v3584 = vsel %vm1960, %v3581, %v3583
      %v3585 = vrot.slane %v3214, 1
      %v3586 = vsel %vm1960, %v3583, %v3585
      %v3587 = vrot.slane %v3215, 1
      %v3588 = vsel %vm1960, %v3585, %v3587
      %v3589 = vrot.slane %v3216, 1
      %v3590 = vsel %vm1960, %v3587, %v3589
      %v3591 = vrot.slane %v3217, 1
      %v3592 = vsel %vm1960, %v3589, %v3591
      %v3593 = vrot.slane %v3218, 1
      %v3594 = vsel %vm1960, %v3591, %v3593
      %v3595 = vrot.slane %v3219, 1
      %v3596 = vsel %vm1960, %v3593, %v3595
      %v3597 = vrot.slane %v3220, 1
      %v3598 = vsel %vm1960, %v3595, %v3597
      %v3599 = vrot.slane %v3221, 1
      %v3600 = vsel %vm1960, %v3597, %v3599
      %v3601 = vrot.slane %v3222, 1
      %v3602 = vsel %vm1960, %v3599, %v3601
      %v3603 = vrot.slane %v3223, 1
      %v3604 = vsel %vm1960, %v3601, %v3603
      %v3605 = vrot.slane %v3224, 1
      %v3606 = vsel %vm1960, %v3603, %v3605
      %v3607 = vrot.slane %v3225, 1
      %v3608 = vsel %vm1960, %v3605, %v3607
      %3609 = vrot.lane.b32.xlu0 %v3578, 32
      %v3610 = vpop.permute.xlu0 %3609
      %3611 = vrot.lane.b32.xlu0 %v3580, 32
      %v3612 = vpop.permute.xlu0 %3611
      %3613 = vrot.lane.b32.xlu0 %v3582, 32
      %v3614 = vpop.permute.xlu0 %3613
      %3615 = vrot.lane.b32.xlu0 %v3584, 32
      %v3616 = vpop.permute.xlu0 %3615
      %3617 = vrot.lane.b32.xlu0 %v3586, 32
      %v3618 = vpop.permute.xlu0 %3617
      %3619 = vrot.lane.b32.xlu0 %v3588, 32
      %v3620 = vpop.permute.xlu0 %3619
      %3621 = vrot.lane.b32.xlu0 %v3590, 32
      %v3622 = vpop.permute.xlu0 %3621
      %3623 = vrot.lane.b32.xlu0 %v3592, 32
      %v3624 = vpop.permute.xlu0 %3623
      %3625 = vrot.lane.b32.xlu0 %v3594, 32
      %v3626 = vpop.permute.xlu0 %3625
      %3627 = vrot.lane.b32.xlu0 %v3596, 32
      %v3628 = vpop.permute.xlu0 %3627
      %3629 = vrot.lane.b32.xlu0 %v3598, 32
      %v3630 = vpop.permute.xlu0 %3629
      %3631 = vrot.lane.b32.xlu0 %v3600, 32
      %v3632 = vpop.permute.xlu0 %3631
      %3633 = vrot.lane.b32.xlu0 %v3602, 32
      %v3634 = vpop.permute.xlu0 %3633
      %3635 = vrot.lane.b32.xlu0 %v3604, 32
      %v3636 = vpop.permute.xlu0 %3635
      %3637 = vrot.lane.b32.xlu0 %v3606, 32
      %v3638 = vpop.permute.xlu0 %3637
      %3639 = vrot.lane.b32.xlu0 %v3608, 32
      %v3640 = vpop.permute.xlu0 %3639
      %3641 = vrot.lane.b32.xlu0 %v3607, 32
      %v3642 = vpop.permute.xlu0 %3641
      %3659 = vrot.lane.b32.xlu0 %v3226, 64
      %v3660 = vpop.permute.xlu0 %3659
      %3661 = vrot.lane.b32.xlu0 %v3227, 64
      %v3662 = vpop.permute.xlu0 %3661
      %3663 = vrot.lane.b32.xlu0 %v3228, 64
      %v3664 = vpop.permute.xlu0 %3663
      %3665 = vrot.lane.b32.xlu0 %v3229, 64
      %v3666 = vpop.permute.xlu0 %3665
      %3667 = vrot.lane.b32.xlu0 %v3230, 64
      %v3668 = vpop.permute.xlu0 %3667
      %3669 = vrot.lane.b32.xlu0 %v3231, 64
      %v3670 = vpop.permute.xlu0 %3669
      %3671 = vrot.lane.b32.xlu0 %v3232, 64
      %v3672 = vpop.permute.xlu0 %3671
      %3673 = vrot.lane.b32.xlu0 %v3233, 64
      %v3674 = vpop.permute.xlu0 %3673
      %3675 = vrot.lane.b32.xlu0 %v3234, 64
      %v3676 = vpop.permute.xlu0 %3675
      %3677 = vrot.lane.b32.xlu0 %v3235, 64
      %v3678 = vpop.permute.xlu0 %3677
      %3679 = vrot.lane.b32.xlu0 %v3236, 64
      %v3680 = vpop.permute.xlu0 %3679
      %3681 = vrot.lane.b32.xlu0 %v3237, 64
      %v3682 = vpop.permute.xlu0 %3681
      %3683 = vrot.lane.b32.xlu0 %v3238, 64
      %v3684 = vpop.permute.xlu0 %3683
      %3685 = vrot.lane.b32.xlu0 %v3239, 64
      %v3686 = vpop.permute.xlu0 %3685
      %3687 = vrot.lane.b32.xlu0 %v3240, 64
      %v3688 = vpop.permute.xlu0 %3687
      %3689 = vrot.lane.b32.xlu0 %v3241, 64
      %v3690 = vpop.permute.xlu0 %3689
      %3691 = vrot.lane.b32.xlu0 0, 64
      %v3692 = vpop.permute.xlu0 %3691
      %v3693 = vsel %vm1775, %v3558, %v1780
      %3694 = vrot.lane.b32.xlu0 %v3277, 96
      %v3695 = vpop.permute.xlu0 %3694
      %3696 = vrot.lane.b32.xlu0 %v3285, 96
      %v3697 = vpop.permute.xlu0 %3696
      %3698 = vrot.lane.b32.xlu0 %v3293, 96
      %v3699 = vpop.permute.xlu0 %3698
      %3700 = vrot.lane.b32.xlu0 %v3301, 96
      %v3701 = vpop.permute.xlu0 %3700
      %3702 = vrot.lane.b32.xlu0 %v3309, 96
      %v3703 = vpop.permute.xlu0 %3702
      %3704 = vrot.lane.b32.xlu0 %v3317, 96
      %v3705 = vpop.permute.xlu0 %3704
      %3706 = vrot.lane.b32.xlu0 %v3325, 96
      %v3707 = vpop.permute.xlu0 %3706
      %3708 = vrot.lane.b32.xlu0 %v3333, 96
      %v3709 = vpop.permute.xlu0 %3708
      %3710 = vrot.lane.b32.xlu0 %v3341, 96
      %v3711 = vpop.permute.xlu0 %3710
      %3712 = vrot.lane.b32.xlu0 %v3349, 96
      %v3713 = vpop.permute.xlu0 %3712
      %3714 = vrot.lane.b32.xlu0 %v3357, 96
      %v3715 = vpop.permute.xlu0 %3714
      %3716 = vrot.lane.b32.xlu0 %v3365, 96
      %v3717 = vpop.permute.xlu0 %3716
      %3718 = vrot.lane.b32.xlu0 %v3373, 96
      %v3719 = vpop.permute.xlu0 %3718
      %3720 = vrot.lane.b32.xlu0 %v3381, 96
      %v3721 = vpop.permute.xlu0 %3720
      %3722 = vrot.lane.b32.xlu0 %v3555, 96
      %v3723 = vpop.permute.xlu0 %3722
      %3724 = vrot.lane.b32.xlu0 %v3693, 96
      %v3725 = vpop.permute.xlu0 %3724
      %3726 = vrot.lane.b32.xlu0 %v1781, 96
      %v3727 = vpop.permute.xlu0 %3726
      %v3744 = vrot.slane %v3242, 1
      %v3745 = vrot.slane %v3243, 1
      %v3746 = vsel %vm1960, %v3744, %v3745
      %v3747 = vrot.slane %v3244, 1
      %v3748 = vsel %vm1960, %v3745, %v3747
      %v3749 = vrot.slane %v3245, 1
      %v3750 = vsel %vm1960, %v3747, %v3749
      %v3751 = vrot.slane %v3246, 1
      %v3752 = vsel %vm1960, %v3749, %v3751
      %v3753 = vrot.slane %v3247, 1
      %v3754 = vsel %vm1960, %v3751, %v3753
      %v3755 = vrot.slane %v3248, 1
      %v3756 = vsel %vm1960, %v3753, %v3755
      %v3757 = vrot.slane %v3249, 1
      %v3758 = vsel %vm1960, %v3755, %v3757
      %v3759 = vrot.slane %v3250, 1
      %v3760 = vsel %vm1960, %v3757, %v3759
      %v3761 = vrot.slane %v3251, 1
      %v3762 = vsel %vm1960, %v3759, %v3761
      %v3763 = vrot.slane %v3252, 1
      %v3764 = vsel %vm1960, %v3761, %v3763
      %v3765 = vrot.slane %v3253, 1
      %v3766 = vsel %vm1960, %v3763, %v3765
      %v3767 = vrot.slane %v3254, 1
      %v3768 = vsel %vm1960, %v3765, %v3767
      %v3769 = vrot.slane %v3255, 1
      %v3770 = vsel %vm1960, %v3767, %v3769
      %v3771 = vrot.slane %v3256, 1
      %v3772 = vsel %vm1960, %v3769, %v3771
      %v3773 = vrot.slane %v3257, 1
      %v3774 = vsel %vm1960, %v3771, %v3773
      %v3775 = vsel %vm1960, %v3773, %v1961
      %v3777 = vsel %vm2632, 0, %v3386
      %v3780 = vsel %vm2632, %v3160, %v3388
      %v3783 = vsel %vm2632, %v3161, %v3390
      %v3786 = vsel %vm2632, %v3162, %v3392
      %v3789 = vsel %vm2632, %v3163, %v3394
      %v3792 = vsel %vm2632, %v3164, %v3396
      %v3795 = vsel %vm2632, %v3165, %v3398
      %v3798 = vsel %vm2632, %v3166, %v3400
      %v3801 = vsel %vm2632, %v3167, %v3402
      %v3804 = vsel %vm2632, %v3168, %v3404
      %v3807 = vsel %vm2632, %v3169, %v3406
      %v3810 = vsel %vm2632, %v3170, %v3408
      %v3813 = vsel %vm2632, %v3171, %v3410
      %v3816 = vsel %vm2632, %v3172, %v3412
      %v3819 = vsel %vm2632, %v3173, %v3414
      %v3822 = vsel %vm2632, %v3174, %v3416
      %v3825 = vsel %vm2632, %v3175, %v3418
      %vm3826 = vcmask 523264
      %v3828 = vsel %vm3826, %v3777, %v3468
      %v3830 = vsel %vm3826, %v3780, %v3470
      %v3832 = vsel %vm3826, %v3783, %v3472
      %v3834 = vsel %vm3826, %v3786, %v3474
      %v3836 = vsel %vm3826, %v3789, %v3476
      %v3838 = vsel %vm3826, %v3792, %v3478
      %v3840 = vsel %vm3826, %v3795, %v3480
      %v3842 = vsel %vm3826, %v3798, %v3482
      %v3844 = vsel %vm3826, %v3801, %v3484
      %v3846 = vsel %vm3826, %v3804, %v3486
      %v3848 = vsel %vm3826, %v3807, %v3488
      %v3850 = vsel %vm3826, %v3810, %v3490
      %v3852 = vsel %vm3826, %v3813, %v3492
      %v3854 = vsel %vm3826, %v3816, %v3494
      %v3856 = vsel %vm3826, %v3819, %v3496
      %v3858 = vsel %vm3826, %v3822, %v3498
      %v3860 = vsel %vm3826, %v3825, %v3500
      %vm3861 = vcmask 785408
      %v3863 = vsel %vm3861, %v3828, %v3519
      %v3865 = vsel %vm3861, %v3830, %v3521
      %v3867 = vsel %vm3861, %v3832, %v3523
      %v3869 = vsel %vm3861, %v3834, %v3525
      %v3871 = vsel %vm3861, %v3836, %v3527
      %v3873 = vsel %vm3861, %v3838, %v3529
      %v3875 = vsel %vm3861, %v3840, %v3531
      %v3877 = vsel %vm3861, %v3842, %v3533
      %v3879 = vsel %vm3861, %v3844, %v3535
      %v3881 = vsel %vm3861, %v3846, %v3537
      %v3883 = vsel %vm3861, %v3848, %v3539
      %v3885 = vsel %vm3861, %v3850, %v3541
      %v3887 = vsel %vm3861, %v3852, %v3543
      %v3889 = vsel %vm3861, %v3854, %v3545
      %v3891 = vsel %vm3861, %v3856, %v3547
      %v3893 = vsel %vm3861, %v3858, %v3549
      %v3895 = vsel %vm3861, %v3860, %v3551
      %v3898 = vsel %vm2632, %v3269, %v3610
      %v3901 = vsel %vm2632, %v3277, %v3612
      %v3904 = vsel %vm2632, %v3285, %v3614
      %v3907 = vsel %vm2632, %v3293, %v3616
      %v3910 = vsel %vm2632, %v3301, %v3618
      %v3913 = vsel %vm2632, %v3309, %v3620
      %v3916 = vsel %vm2632, %v3317, %v3622
      %v3919 = vsel %vm2632, %v3325, %v3624
      %v3922 = vsel %vm2632, %v3333, %v3626
      %v3925 = vsel %vm2632, %v3341, %v3628
      %v3928 = vsel %vm2632, %v3349, %v3630
      %v3931 = vsel %vm2632, %v3357, %v3632
      %v3934 = vsel %vm2632, %v3365, %v3634
      %v3937 = vsel %vm2632, %v3373, %v3636
      %v3940 = vsel %vm2632, %v3381, %v3638
      %v3943 = vsel %vm2632, %v3555, %v3640
      %v3946 = vsel %vm2632, %v3558, %v3642
      %v3948 = vsel %vm3826, %v3898, %v3660
      %v3950 = vsel %vm3826, %v3901, %v3662
      %v3952 = vsel %vm3826, %v3904, %v3664
      %v3954 = vsel %vm3826, %v3907, %v3666
      %v3956 = vsel %vm3826, %v3910, %v3668
      %v3958 = vsel %vm3826, %v3913, %v3670
      %v3960 = vsel %vm3826, %v3916, %v3672
      %v3962 = vsel %vm3826, %v3919, %v3674
      %v3964 = vsel %vm3826, %v3922, %v3676
      %v3966 = vsel %vm3826, %v3925, %v3678
      %v3968 = vsel %vm3826, %v3928, %v3680
      %v3970 = vsel %vm3826, %v3931, %v3682
      %v3972 = vsel %vm3826, %v3934, %v3684
      %v3974 = vsel %vm3826, %v3937, %v3686
      %v3976 = vsel %vm3826, %v3940, %v3688
      %v3978 = vsel %vm3826, %v3943, %v3690
      %v3980 = vsel %vm3826, %v3946, %v3692
      %v3982 = vsel %vm3861, %v3948, %v3695
      %v3984 = vsel %vm3861, %v3950, %v3697
      %v3986 = vsel %vm3861, %v3952, %v3699
      %v3988 = vsel %vm3861, %v3954, %v3701
      %v3990 = vsel %vm3861, %v3956, %v3703
      %v3992 = vsel %vm3861, %v3958, %v3705
      %v3994 = vsel %vm3861, %v3960, %v3707
      %v3996 = vsel %vm3861, %v3962, %v3709
      %v3998 = vsel %vm3861, %v3964, %v3711
      %v4000 = vsel %vm3861, %v3966, %v3713
      %v4002 = vsel %vm3861, %v3968, %v3715
      %v4004 = vsel %vm3861, %v3970, %v3717
      %v4006 = vsel %vm3861, %v3972, %v3719
      %v4008 = vsel %vm3861, %v3974, %v3721
      %v4010 = vsel %vm3861, %v3976, %v3723
      %v4012 = vsel %vm3861, %v3978, %v3725
      %v4014 = vsel %vm3861, %v3980, %v3727
      %v4015 = vld [vmem:[%s2] sm:$0xf]
      %v4016 = vld [vmem:[%s2 + $0x4] sm:$0xf]
      %v4017 = vld [vmem:[%s2 + $0x8] sm:$0xf]
      %v4018 = vld [vmem:[%s2 + $0xc] sm:$0xf]
      %v4019 = vld [vmem:[%s2 + $0x10] sm:$0xf]
      %v4020 = vld [vmem:[%s2 + $0x14] sm:$0xf]
      %v4021 = vld [vmem:[%s2 + $0x18] sm:$0xf]
      %v4022 = vld [vmem:[%s2 + $0x1c] sm:$0xf]
      %v4023 = vld [vmem:[%s2 + $0x20] sm:$0xf]
      %v4024 = vld [vmem:[%s2 + $0x24] sm:$0xf]
      %v4025 = vld [vmem:[%s2 + $0x28] sm:$0xf]
      %v4026 = vld [vmem:[%s2 + $0x2c] sm:$0xf]
      %v4027 = vld [vmem:[%s2 + $0x30] sm:$0xf]
      %v4028 = vld [vmem:[%s2 + $0x34] sm:$0xf]
      %v4029 = vld [vmem:[%s2 + $0x38] sm:$0xf]
      %v4030 = vld [vmem:[%s2 + $0x3c] sm:$0xf]
      %v4031 = vld [vmem:[%s2 + $0x40] sm:$0xf]
      %v4032 = vld [vmem:[%s2 + $0x44] sm:$0xf]
      %v4033 = vld [vmem:[%s2 + $0x48] sm:$0xf]
      %v4034 = vld [vmem:[%s2 + $0x4c] sm:$0xf]
      %v4035 = vld [vmem:[%s2 + $0x50] sm:$0xf]
      %v4036 = vld [vmem:[%s2 + $0x54] sm:$0xf]
      %v4037 = vld [vmem:[%s2 + $0x58] sm:$0xf]
      %v4038 = vld [vmem:[%s2 + $0x5c] sm:$0xf]
      %v4039 = vld [vmem:[%s2 + $0x60] sm:$0xf]
      %v4040 = vld [vmem:[%s2 + $0x64] sm:$0xf]
      %v4041 = vld [vmem:[%s2 + $0x68] sm:$0xf]
      %v4042 = vld [vmem:[%s2 + $0x6c] sm:$0xf]
      %v4043 = vld [vmem:[%s2 + $0x70] sm:$0xf]
      %v4044 = vld [vmem:[%s2 + $0x74] sm:$0xf]
      %v4045 = vld [vmem:[%s2 + $0x78] sm:$0xf]
      %v4046 = vld [vmem:[%s2 + $0x7c] sm:$0xf]
      %v4047 = vld [vmem:[%s2 + $0x80] sm:$0xf]
      %v4048 = vld [vmem:[%s2 + $0x84] sm:$0xf]
      %v4049 = vld [vmem:[%s2 + $0x88] sm:$0xf]
      %v4050 = vld [vmem:[%s2 + $0x8c] sm:$0xf]
      %v4051 = vld [vmem:[%s6] sm:$0x1]
      %v4053 = vlaneseq
      %v4054 = vshrl.u32 %v4053, 7
      %v4055 = vsub.s32 0, %v4054
      %v4056 = vrot.slane %v4051, %v4055
      %v4058 = vshrl.u32 %v3863, 16
      %v4060 = vrot.slane %v4058, 3
      %v4061 = vshll.u32 %v3863, 16
      %v4063 = vrot.slane %v4061, 4
      %v4064 = vor.u32 %v4060, %v4063
      %v4065 = vshrl.u32 %v3865, 16
      %v4067 = vrot.slane %v4065, 3
      %v4068 = vshll.u32 %v3865, 16
      %v4070 = vrot.slane %v4068, 4
      %v4071 = vor.u32 %v4067, %v4070
      %v4072 = vsel %vm1531, %v4064, %v4071
      %v4073 = vshrl.u32 %v3982, 16
      %v4075 = vrot.slane %v4073, 3
      %v4076 = vshll.u32 %v3982, 16
      %v4078 = vrot.slane %v4076, 4
      %v4079 = vor.u32 %v4075, %v4078
      %v4080 = vshrl.u32 %v3984, 16
      %v4082 = vrot.slane %v4080, 3
      %v4083 = vshll.u32 %v3984, 16
      %v4085 = vrot.slane %v4083, 4
      %v4086 = vor.u32 %v4082, %v4085
      %v4087 = vsel %vm1531, %v4079, %v4086
      %v4089 = vshrl.u32 %v3746, 16
      %v4091 = vrot.slane %v4089, 3
      %v4092 = vshll.u32 %v3746, 16
      %v4094 = vrot.slane %v4092, 4
      %v4095 = vor.u32 %v4091, %v4094
      %v4097 = vshrl.u32 %v3748, 16
      %v4099 = vrot.slane %v4097, 3
      %v4100 = vshll.u32 %v3748, 16
      %v4102 = vrot.slane %v4100, 4
      %v4103 = vor.u32 %v4099, %v4102
      %v4104 = vsel %vm1531, %v4095, %v4103
      %v4105 = vshrl.u32 %v3867, 16
      %v4107 = vrot.slane %v4105, 3
      %v4108 = vshll.u32 %v3867, 16
      %v4110 = vrot.slane %v4108, 4
      %v4111 = vor.u32 %v4107, %v4110
      %v4112 = vsel %vm1531, %v4071, %v4111
      %v4113 = vshrl.u32 %v3986, 16
      %v4115 = vrot.slane %v4113, 3
      %v4116 = vshll.u32 %v3986, 16
      %v4118 = vrot.slane %v4116, 4
      %v4119 = vor.u32 %v4115, %v4118
      %v4120 = vsel %vm1531, %v4086, %v4119
      %v4122 = vshrl.u32 %v3750, 16
      %v4124 = vrot.slane %v4122, 3
      %v4125 = vshll.u32 %v3750, 16
      %v4127 = vrot.slane %v4125, 4
      %v4128 = vor.u32 %v4124, %v4127
      %v4129 = vsel %vm1531, %v4103, %v4128
      %v4130 = vshrl.u32 %v3869, 16
      %v4132 = vrot.slane %v4130, 3
      %v4133 = vshll.u32 %v3869, 16
      %v4135 = vrot.slane %v4133, 4
      %v4136 = vor.u32 %v4132, %v4135
      %v4137 = vsel %vm1531, %v4111, %v4136
      %v4138 = vshrl.u32 %v3988, 16
      %v4140 = vrot.slane %v4138, 3
      %v4141 = vshll.u32 %v3988, 16
      %v4143 = vrot.slane %v4141, 4
      %v4144 = vor.u32 %v4140, %v4143
      %v4145 = vsel %vm1531, %v4119, %v4144
      %v4147 = vshrl.u32 %v3752, 16
      %v4149 = vrot.slane %v4147, 3
      %v4150 = vshll.u32 %v3752, 16
      %v4152 = vrot.slane %v4150, 4
      %v4153 = vor.u32 %v4149, %v4152
      %v4154 = vsel %vm1531, %v4128, %v4153
      %v4155 = vshrl.u32 %v3871, 16
      %v4157 = vrot.slane %v4155, 3
      %v4158 = vshll.u32 %v3871, 16
      %v4160 = vrot.slane %v4158, 4
      %v4161 = vor.u32 %v4157, %v4160
      %v4162 = vsel %vm1531, %v4136, %v4161
      %v4163 = vshrl.u32 %v3990, 16
      %v4165 = vrot.slane %v4163, 3
      %v4166 = vshll.u32 %v3990, 16
      %v4168 = vrot.slane %v4166, 4
      %v4169 = vor.u32 %v4165, %v4168
      %v4170 = vsel %vm1531, %v4144, %v4169
      %v4172 = vshrl.u32 %v3754, 16
      %v4174 = vrot.slane %v4172, 3
      %v4175 = vshll.u32 %v3754, 16
      %v4177 = vrot.slane %v4175, 4
      %v4178 = vor.u32 %v4174, %v4177
      %v4179 = vsel %vm1531, %v4153, %v4178
      %v4180 = vshrl.u32 %v3873, 16
      %v4182 = vrot.slane %v4180, 3
      %v4183 = vshll.u32 %v3873, 16
      %v4185 = vrot.slane %v4183, 4
      %v4186 = vor.u32 %v4182, %v4185
      %v4187 = vsel %vm1531, %v4161, %v4186
      %v4188 = vshrl.u32 %v3992, 16
      %v4190 = vrot.slane %v4188, 3
      %v4191 = vshll.u32 %v3992, 16
      %v4193 = vrot.slane %v4191, 4
      %v4194 = vor.u32 %v4190, %v4193
      %v4195 = vsel %vm1531, %v4169, %v4194
      %v4197 = vshrl.u32 %v3756, 16
      %v4199 = vrot.slane %v4197, 3
      %v4200 = vshll.u32 %v3756, 16
      %v4202 = vrot.slane %v4200, 4
      %v4203 = vor.u32 %v4199, %v4202
      %v4204 = vsel %vm1531, %v4178, %v4203
      %v4205 = vshrl.u32 %v3875, 16
      %v4207 = vrot.slane %v4205, 3
      %v4208 = vshll.u32 %v3875, 16
      %v4210 = vrot.slane %v4208, 4
      %v4211 = vor.u32 %v4207, %v4210
      %v4212 = vsel %vm1531, %v4186, %v4211
      %v4213 = vshrl.u32 %v3994, 16
      %v4215 = vrot.slane %v4213, 3
      %v4216 = vshll.u32 %v3994, 16
      %v4218 = vrot.slane %v4216, 4
      %v4219 = vor.u32 %v4215, %v4218
      %v4220 = vsel %vm1531, %v4194, %v4219
      %v4222 = vshrl.u32 %v3758, 16
      %v4224 = vrot.slane %v4222, 3
      %v4225 = vshll.u32 %v3758, 16
      %v4227 = vrot.slane %v4225, 4
      %v4228 = vor.u32 %v4224, %v4227
      %v4229 = vsel %vm1531, %v4203, %v4228
      %v4230 = vshrl.u32 %v3877, 16
      %v4232 = vrot.slane %v4230, 3
      %v4233 = vshll.u32 %v3877, 16
      %v4235 = vrot.slane %v4233, 4
      %v4236 = vor.u32 %v4232, %v4235
      %v4237 = vsel %vm1531, %v4211, %v4236
      %v4238 = vshrl.u32 %v3996, 16
      %v4240 = vrot.slane %v4238, 3
      %v4241 = vshll.u32 %v3996, 16
      %v4243 = vrot.slane %v4241, 4
      %v4244 = vor.u32 %v4240, %v4243
      %v4245 = vsel %vm1531, %v4219, %v4244
      %v4247 = vshrl.u32 %v3760, 16
      %v4249 = vrot.slane %v4247, 3
      %v4250 = vshll.u32 %v3760, 16
      %v4252 = vrot.slane %v4250, 4
      %v4253 = vor.u32 %v4249, %v4252
      %v4254 = vsel %vm1531, %v4228, %v4253
      %v4255 = vshrl.u32 %v3879, 16
      %v4257 = vrot.slane %v4255, 3
      %v4258 = vshll.u32 %v3879, 16
      %v4260 = vrot.slane %v4258, 4
      %v4261 = vor.u32 %v4257, %v4260
      %v4262 = vsel %vm1531, %v4236, %v4261
      %v4263 = vshrl.u32 %v3998, 16
      %v4265 = vrot.slane %v4263, 3
      %v4266 = vshll.u32 %v3998, 16
      %v4268 = vrot.slane %v4266, 4
      %v4269 = vor.u32 %v4265, %v4268
      %v4270 = vsel %vm1531, %v4244, %v4269
      %v4272 = vshrl.u32 %v3762, 16
      %v4274 = vrot.slane %v4272, 3
      %v4275 = vshll.u32 %v3762, 16
      %v4277 = vrot.slane %v4275, 4
      %v4278 = vor.u32 %v4274, %v4277
      %v4279 = vsel %vm1531, %v4253, %v4278
      %v4280 = vshrl.u32 %v3881, 16
      %v4282 = vrot.slane %v4280, 3
      %v4283 = vshll.u32 %v3881, 16
      %v4285 = vrot.slane %v4283, 4
      %v4286 = vor.u32 %v4282, %v4285
      %v4287 = vsel %vm1531, %v4261, %v4286
      %v4288 = vshrl.u32 %v4000, 16
      %v4290 = vrot.slane %v4288, 3
      %v4291 = vshll.u32 %v4000, 16
      %v4293 = vrot.slane %v4291, 4
      %v4294 = vor.u32 %v4290, %v4293
      %v4295 = vsel %vm1531, %v4269, %v4294
      %v4297 = vshrl.u32 %v3764, 16
      %v4299 = vrot.slane %v4297, 3
      %v4300 = vshll.u32 %v3764, 16
      %v4302 = vrot.slane %v4300, 4
      %v4303 = vor.u32 %v4299, %v4302
      %v4304 = vsel %vm1531, %v4278, %v4303
      %v4305 = vshrl.u32 %v3883, 16
      %v4307 = vrot.slane %v4305, 3
      %v4308 = vshll.u32 %v3883, 16
      %v4310 = vrot.slane %v4308, 4
      %v4311 = vor.u32 %v4307, %v4310
      %v4312 = vsel %vm1531, %v4286, %v4311
      %v4313 = vshrl.u32 %v4002, 16
      %v4315 = vrot.slane %v4313, 3
      %v4316 = vshll.u32 %v4002, 16
      %v4318 = vrot.slane %v4316, 4
      %v4319 = vor.u32 %v4315, %v4318
      %v4320 = vsel %vm1531, %v4294, %v4319
      %v4322 = vshrl.u32 %v3766, 16
      %v4324 = vrot.slane %v4322, 3
      %v4325 = vshll.u32 %v3766, 16
      %v4327 = vrot.slane %v4325, 4
      %v4328 = vor.u32 %v4324, %v4327
      %v4329 = vsel %vm1531, %v4303, %v4328
      %v4330 = vshrl.u32 %v3885, 16
      %v4332 = vrot.slane %v4330, 3
      %v4333 = vshll.u32 %v3885, 16
      %v4335 = vrot.slane %v4333, 4
      %v4336 = vor.u32 %v4332, %v4335
      %v4337 = vsel %vm1531, %v4311, %v4336
      %v4338 = vshrl.u32 %v4004, 16
      %v4340 = vrot.slane %v4338, 3
      %v4341 = vshll.u32 %v4004, 16
      %v4343 = vrot.slane %v4341, 4
      %v4344 = vor.u32 %v4340, %v4343
      %v4345 = vsel %vm1531, %v4319, %v4344
      %v4347 = vshrl.u32 %v3768, 16
      %v4349 = vrot.slane %v4347, 3
      %v4350 = vshll.u32 %v3768, 16
      %v4352 = vrot.slane %v4350, 4
      %v4353 = vor.u32 %v4349, %v4352
      %v4354 = vsel %vm1531, %v4328, %v4353
      %v4355 = vshrl.u32 %v3887, 16
      %v4357 = vrot.slane %v4355, 3
      %v4358 = vshll.u32 %v3887, 16
      %v4360 = vrot.slane %v4358, 4
      %v4361 = vor.u32 %v4357, %v4360
      %v4362 = vsel %vm1531, %v4336, %v4361
      %v4363 = vshrl.u32 %v4006, 16
      %v4365 = vrot.slane %v4363, 3
      %v4366 = vshll.u32 %v4006, 16
      %v4368 = vrot.slane %v4366, 4
      %v4369 = vor.u32 %v4365, %v4368
      %v4370 = vsel %vm1531, %v4344, %v4369
      %v4372 = vshrl.u32 %v3770, 16
      %v4374 = vrot.slane %v4372, 3
      %v4375 = vshll.u32 %v3770, 16
      %v4377 = vrot.slane %v4375, 4
      %v4378 = vor.u32 %v4374, %v4377
      %v4379 = vsel %vm1531, %v4353, %v4378
      %v4380 = vshrl.u32 %v3889, 16
      %v4382 = vrot.slane %v4380, 3
      %v4383 = vshll.u32 %v3889, 16
      %v4385 = vrot.slane %v4383, 4
      %v4386 = vor.u32 %v4382, %v4385
      %v4387 = vsel %vm1531, %v4361, %v4386
      %v4388 = vshrl.u32 %v4008, 16
      %v4390 = vrot.slane %v4388, 3
      %v4391 = vshll.u32 %v4008, 16
      %v4393 = vrot.slane %v4391, 4
      %v4394 = vor.u32 %v4390, %v4393
      %v4395 = vsel %vm1531, %v4369, %v4394
      %v4397 = vshrl.u32 %v3772, 16
      %v4399 = vrot.slane %v4397, 3
      %v4400 = vshll.u32 %v3772, 16
      %v4402 = vrot.slane %v4400, 4
      %v4403 = vor.u32 %v4399, %v4402
      %v4404 = vsel %vm1531, %v4378, %v4403
      %v4405 = vshrl.u32 %v3891, 16
      %v4407 = vrot.slane %v4405, 3
      %v4408 = vshll.u32 %v3891, 16
      %v4410 = vrot.slane %v4408, 4
      %v4411 = vor.u32 %v4407, %v4410
      %v4412 = vsel %vm1531, %v4386, %v4411
      %v4413 = vshrl.u32 %v4010, 16
      %v4415 = vrot.slane %v4413, 3
      %v4416 = vshll.u32 %v4010, 16
      %v4418 = vrot.slane %v4416, 4
      %v4419 = vor.u32 %v4415, %v4418
      %v4420 = vsel %vm1531, %v4394, %v4419
      %v4422 = vshrl.u32 %v3774, 16
      %v4424 = vrot.slane %v4422, 3
      %v4425 = vshll.u32 %v3774, 16
      %v4427 = vrot.slane %v4425, 4
      %v4428 = vor.u32 %v4424, %v4427
      %v4429 = vsel %vm1531, %v4403, %v4428
      %v4430 = vshrl.u32 %v3893, 16
      %v4432 = vrot.slane %v4430, 3
      %v4433 = vshll.u32 %v3893, 16
      %v4435 = vrot.slane %v4433, 4
      %v4436 = vor.u32 %v4432, %v4435
      %v4437 = vsel %vm1531, %v4411, %v4436
      %v4438 = vshrl.u32 %v4012, 16
      %v4440 = vrot.slane %v4438, 3
      %v4441 = vshll.u32 %v4012, 16
      %v4443 = vrot.slane %v4441, 4
      %v4444 = vor.u32 %v4440, %v4443
      %v4445 = vsel %vm1531, %v4419, %v4444
      %v4447 = vshrl.u32 %v3775, 16
      %v4449 = vrot.slane %v4447, 3
      %v4450 = vshll.u32 %v3775, 16
      %v4452 = vrot.slane %v4450, 4
      %v4453 = vor.u32 %v4449, %v4452
      %v4454 = vsel %vm1531, %v4428, %v4453
      %v4455 = vshrl.u32 %v3895, 16
      %v4457 = vrot.slane %v4455, 3
      %v4458 = vshll.u32 %v3895, 16
      %v4460 = vrot.slane %v4458, 4
      %v4461 = vor.u32 %v4457, %v4460
      %v4462 = vsel %vm1531, %v4436, %v4461
      %v4463 = vshrl.u32 %v4014, 16
      %v4465 = vrot.slane %v4463, 3
      %v4466 = vshll.u32 %v4014, 16
      %v4468 = vrot.slane %v4466, 4
      %v4469 = vor.u32 %v4465, %v4468
      %v4470 = vsel %vm1531, %v4444, %v4469
      %v4472 = vshrl.u32 %v1961, 16
      %v4474 = vrot.slane %v4472, 3
      %v4475 = vshll.u32 %v1961, 16
      %v4477 = vrot.slane %v4475, 4
      %v4478 = vor.u32 %v4474, %v4477
      %v4479 = vsel %vm1531, %v4453, %v4478
      %v4548 = vunpack.c.l.b16 %v4015
      %v4549 = vunpack.c.l.b16 %v4016
      %v4550 = vunpack.c.l.b16 %v4017
      %v4551 = vunpack.c.l.b16 %v4018
      %v4552 = vunpack.c.l.b16 %v4019
      %v4553 = vunpack.c.l.b16 %v4020
      %v4554 = vunpack.c.l.b16 %v4021
      %v4555 = vunpack.c.l.b16 %v4022
      %v4556 = vunpack.c.l.b16 %v4023
      %v4557 = vunpack.c.l.b16 %v4024
      %v4558 = vunpack.c.l.b16 %v4025
      %v4559 = vunpack.c.l.b16 %v4026
      %v4560 = vunpack.c.l.b16 %v4027
      %v4561 = vunpack.c.l.b16 %v4028
      %v4562 = vunpack.c.l.b16 %v4029
      %v4563 = vunpack.c.l.b16 %v4030
      %v4564 = vunpack.c.l.b16 %v4031
      %v4565 = vunpack.c.l.b16 %v4032
      %v4566 = vunpack.c.l.b16 %v4033
      %v4567 = vunpack.c.l.b16 %v4034
      %v4568 = vunpack.c.l.b16 %v4035
      %v4569 = vunpack.c.l.b16 %v4036
      %v4570 = vunpack.c.l.b16 %v4037
      %v4571 = vunpack.c.l.b16 %v4038
      %v4572 = vunpack.c.l.b16 %v4039
      %v4573 = vunpack.c.l.b16 %v4040
      %v4574 = vunpack.c.l.b16 %v4041
      %v4575 = vunpack.c.l.b16 %v4042
      %v4576 = vunpack.c.l.b16 %v4043
      %v4577 = vunpack.c.l.b16 %v4044
      %v4578 = vunpack.c.l.b16 %v4045
      %v4579 = vunpack.c.l.b16 %v4046
      %v4580 = vunpack.c.l.b16 %v4047
      %v4581 = vunpack.c.l.b16 %v4048
      %v4582 = vunpack.c.l.b16 %v4049
      %v4583 = vunpack.c.l.b16 %v4050
      %v4584 = vpack.c.b16 %v4549, %v4548
      %v4585 = vpack.c.b16 %v4551, %v4550
      %v4586 = vpack.c.b16 %v4553, %v4552
      %v4587 = vpack.c.b16 %v4555, %v4554
      %v4588 = vpack.c.b16 %v4557, %v4556
      %v4589 = vpack.c.b16 %v4559, %v4558
      %v4590 = vpack.c.b16 %v4561, %v4560
      %v4591 = vpack.c.b16 %v4563, %v4562
      %v4592 = vpack.c.b16 %v4565, %v4564
      %v4593 = vpack.c.b16 %v4567, %v4566
      %v4594 = vpack.c.b16 %v4569, %v4568
      %v4595 = vpack.c.b16 %v4571, %v4570
      %v4596 = vpack.c.b16 %v4573, %v4572
      %v4597 = vpack.c.b16 %v4575, %v4574
      %v4598 = vpack.c.b16 %v4577, %v4576
      %v4599 = vpack.c.b16 %v4579, %v4578
      %v4600 = vpack.c.b16 %v4581, %v4580
      %v4601 = vpack.c.b16 %v4583, %v4582
      %v4621 = vsel %vm2632, %v4104, 0
      %v4624 = vsel %vm2632, %v4129, 0
      %v4627 = vsel %vm2632, %v4154, 0
      %v4630 = vsel %vm2632, %v4179, 0
      %v4633 = vsel %vm2632, %v4204, 0
      %v4636 = vsel %vm2632, %v4229, 0
      %v4639 = vsel %vm2632, %v4254, 0
      %v4642 = vsel %vm2632, %v4279, 0
      %v4645 = vsel %vm2632, %v4304, 0
      %v4648 = vsel %vm2632, %v4329, 0
      %v4651 = vsel %vm2632, %v4354, 0
      %v4654 = vsel %vm2632, %v4379, 0
      %v4657 = vsel %vm2632, %v4404, 0
      %v4660 = vsel %vm2632, %v4429, 0
      %v4663 = vsel %vm2632, %v4454, 0
      %v4666 = vsel %vm2632, %v4479, 0
      %4668 = vmatprep.subr.bf16.mxu0 0
      %4669 = vmatpush1.bf16.msra.mxu0 %v4584
      %4670 = vmatprep.subr.bf16.mxu0 0
      %4671 = vmatpush1.bf16.msra.mxu0 %v4585
      %4672 = vmatprep.subr.bf16.mxu0 0
      %4673 = vmatpush1.bf16.msra.mxu0 %v4586
      %4674 = vmatprep.subr.bf16.mxu0 0
      %4675 = vmatpush1.bf16.msra.mxu0 %v4587
      %4676 = vmatprep.subr.bf16.mxu0 0
      %4677 = vmatpush1.bf16.msra.mxu0 %v4588
      %4678 = vmatprep.subr.bf16.mxu0 0
      %4679 = vmatpush1.bf16.msra.mxu0 %v4589
      %4680 = vmatprep.subr.bf16.mxu0 0
      %4681 = vmatpush1.bf16.msra.mxu0 %v4590
      %4682 = vmatprep.subr.bf16.mxu0 0
      %4683 = vmatpush1.bf16.msra.mxu0 %v4591
      %4684 = vmatprep.subr.bf16.mxu0 0
      %4685 = vmatpush1.bf16.msra.mxu0 %v4592
      %4686 = vmatprep.subr.bf16.mxu0 0
      %4687 = vmatpush1.bf16.msra.mxu0 %v4593
      %4688 = vmatprep.subr.bf16.mxu0 0
      %4689 = vmatpush1.bf16.msra.mxu0 %v4594
      %4690 = vmatprep.subr.bf16.mxu0 0
      %4691 = vmatpush1.bf16.msra.mxu0 %v4595
      %4692 = vmatprep.subr.bf16.mxu0 0
      %4693 = vmatpush1.bf16.msra.mxu0 %v4596
      %4694 = vmatprep.subr.bf16.mxu0 0
      %4695 = vmatpush1.bf16.msra.mxu0 %v4597
      %4696 = vmatprep.subr.bf16.mxu0 0
      %4697 = vmatpush1.bf16.msra.mxu0 %v4598
      %4698 = vmatprep.subr.bf16.mxu0 0
      %4699 = vmatpush1.bf16.msra.mxu0 %v4599
      %4700 = vmatprep.mubr.bf16.mxu0 %v4087
      %4701 = vmatmul.mubr.bf16.gmra.mrb[0].mxu0 %v4072
      %v4702 = vpop.f32.mrb[0].mxu0
      %v4703 = vadd.f32 %v4056, %v4702
      %v4704 = vpop.f32.mrb[0].mxu0
      %v4705 = vpop.f32.mrb[0].mxu0
      %v4706 = vadd.f32 %v4056, %v4705
      %v4707 = vpop.f32.mrb[0].mxu0
      %4708 = vmatprep.mubr.bf16.mxu0 %v4120
      %4709 = vmatmul.mubr.bf16.gmra.mrb[0].mxu0 %v4112
      %v4710 = vpop.f32.mrb[0].mxu0
      %v4711 = vadd.f32 %v4056, %v4710
      %v4712 = vpop.f32.mrb[0].mxu0
      %v4713 = vpop.f32.mrb[0].mxu0
      %v4714 = vadd.f32 %v4056, %v4713
      %v4715 = vpop.f32.mrb[0].mxu0
      %4716 = vmatprep.mubr.bf16.mxu0 %v4145
      %4717 = vmatmul.mubr.bf16.gmra.mrb[0].mxu0 %v4137
      %v4718 = vpop.f32.mrb[0].mxu0
      %v4719 = vadd.f32 %v4056, %v4718
      %v4720 = vpop.f32.mrb[0].mxu0
      %v4721 = vpop.f32.mrb[0].mxu0
      %v4722 = vadd.f32 %v4056, %v4721
      %v4723 = vpop.f32.mrb[0].mxu0
      %4724 = vmatprep.mubr.bf16.mxu0 %v4170
      %4725 = vmatmul.mubr.bf16.gmra.mrb[0].mxu0 %v4162
      %v4726 = vpop.f32.mrb[0].mxu0
      %v4727 = vadd.f32 %v4056, %v4726
      %v4728 = vpop.f32.mrb[0].mxu0
      %v4729 = vpop.f32.mrb[0].mxu0
      %v4730 = vadd.f32 %v4056, %v4729
      %v4731 = vpop.f32.mrb[0].mxu0
      %4732 = vmatprep.mubr.bf16.mxu0 %v4195
      %4733 = vmatmul.mubr.bf16.gmra.mrb[0].mxu0 %v4187
      %v4734 = vpop.f32.mrb[0].mxu0
      %v4735 = vadd.f32 %v4056, %v4734
      %v4736 = vpop.f32.mrb[0].mxu0
      %v4737 = vpop.f32.mrb[0].mxu0
      %v4738 = vadd.f32 %v4056, %v4737
      %v4739 = vpop.f32.mrb[0].mxu0
      %4740 = vmatprep.mubr.bf16.mxu0 %v4220
      %4741 = vmatmul.mubr.bf16.gmra.mrb[0].mxu0 %v4212
      %v4742 = vpop.f32.mrb[0].mxu0
      %v4743 = vadd.f32 %v4056, %v4742
      %v4744 = vpop.f32.mrb[0].mxu0
      %v4745 = vpop.f32.mrb[0].mxu0
      %v4746 = vadd.f32 %v4056, %v4745
      %v4747 = vpop.f32.mrb[0].mxu0
      %4748 = vmatprep.mubr.bf16.mxu0 %v4245
      %4749 = vmatmul.mubr.bf16.gmra.mrb[0].mxu0 %v4237
      %v4750 = vpop.f32.mrb[0].mxu0
      %v4751 = vadd.f32 %v4056, %v4750
      %v4752 = vpop.f32.mrb[0].mxu0
      %v4753 = vpop.f32.mrb[0].mxu0
      %v4754 = vadd.f32 %v4056, %v4753
      %v4755 = vpop.f32.mrb[0].mxu0
      %4756 = vmatprep.mubr.bf16.mxu0 %v4270
      %4757 = vmatmul.mubr.bf16.gmra.mrb[0].mxu0 %v4262
      %v4758 = vpop.f32.mrb[0].mxu0
      %v4759 = vadd.f32 %v4056, %v4758
      %v4760 = vpop.f32.mrb[0].mxu0
      %v4761 = vpop.f32.mrb[0].mxu0
      %v4762 = vadd.f32 %v4056, %v4761
      %v4763 = vpop.f32.mrb[0].mxu0
      %4764 = vmatprep.mubr.bf16.mxu0 %v4295
      %4765 = vmatmul.mubr.bf16.gmra.mrb[0].mxu0 %v4287
      %v4766 = vpop.f32.mrb[0].mxu0
      %v4767 = vadd.f32 %v4056, %v4766
      %v4768 = vpop.f32.mrb[0].mxu0
      %v4769 = vpop.f32.mrb[0].mxu0
      %v4770 = vadd.f32 %v4056, %v4769
      %v4771 = vpop.f32.mrb[0].mxu0
      %4772 = vmatprep.mubr.bf16.mxu0 %v4320
      %4773 = vmatmul.mubr.bf16.gmra.mrb[0].mxu0 %v4312
      %v4774 = vpop.f32.mrb[0].mxu0
      %v4775 = vadd.f32 %v4056, %v4774
      %v4776 = vpop.f32.mrb[0].mxu0
      %v4777 = vpop.f32.mrb[0].mxu0
      %v4778 = vadd.f32 %v4056, %v4777
      %v4779 = vpop.f32.mrb[0].mxu0
      %4780 = vmatprep.mubr.bf16.mxu0 %v4345
      %4781 = vmatmul.mubr.bf16.gmra.mrb[0].mxu0 %v4337
      %v4782 = vpop.f32.mrb[0].mxu0
      %v4783 = vadd.f32 %v4056, %v4782
      %v4784 = vpop.f32.mrb[0].mxu0
      %v4785 = vpop.f32.mrb[0].mxu0
      %v4786 = vadd.f32 %v4056, %v4785
      %v4787 = vpop.f32.mrb[0].mxu0
      %4788 = vmatprep.mubr.bf16.mxu0 %v4370
      %4789 = vmatmul.mubr.bf16.gmra.mrb[0].mxu0 %v4362
      %v4790 = vpop.f32.mrb[0].mxu0
      %v4791 = vadd.f32 %v4056, %v4790
      %v4792 = vpop.f32.mrb[0].mxu0
      %v4793 = vpop.f32.mrb[0].mxu0
      %v4794 = vadd.f32 %v4056, %v4793
      %v4795 = vpop.f32.mrb[0].mxu0
      %4796 = vmatprep.mubr.bf16.mxu0 %v4395
      %4797 = vmatmul.mubr.bf16.gmra.mrb[0].mxu0 %v4387
      %v4798 = vpop.f32.mrb[0].mxu0
      %v4799 = vadd.f32 %v4056, %v4798
      %v4800 = vpop.f32.mrb[0].mxu0
      %v4801 = vpop.f32.mrb[0].mxu0
      %v4802 = vadd.f32 %v4056, %v4801
      %v4803 = vpop.f32.mrb[0].mxu0
      %4804 = vmatprep.mubr.bf16.mxu0 %v4420
      %4805 = vmatmul.mubr.bf16.gmra.mrb[0].mxu0 %v4412
      %v4806 = vpop.f32.mrb[0].mxu0
      %v4807 = vadd.f32 %v4056, %v4806
      %v4808 = vpop.f32.mrb[0].mxu0
      %v4809 = vpop.f32.mrb[0].mxu0
      %v4810 = vadd.f32 %v4056, %v4809
      %v4811 = vpop.f32.mrb[0].mxu0
      %4812 = vmatprep.mubr.bf16.mxu0 %v4445
      %4813 = vmatmul.mubr.bf16.gmra.mrb[0].mxu0 %v4437
      %v4814 = vpop.f32.mrb[0].mxu0
      %v4815 = vadd.f32 %v4056, %v4814
      %v4816 = vpop.f32.mrb[0].mxu0
      %v4817 = vpop.f32.mrb[0].mxu0
      %v4818 = vadd.f32 %v4056, %v4817
      %v4819 = vpop.f32.mrb[0].mxu0
      %4820 = vmatprep.mubr.bf16.mxu0 %v4470
      %4821 = vmatmul.mubr.bf16.gmra.mrb[0].mxu0 %v4462
      %v4822 = vpop.f32.mrb[0].mxu0
      %v4823 = vadd.f32 %v4056, %v4822
      %v4824 = vpop.f32.mrb[0].mxu0
      %v4825 = vpop.f32.mrb[0].mxu0
      %v4826 = vadd.f32 %v4056, %v4825
      %v4827 = vpop.f32.mrb[0].mxu0
      %4828 = vdwg.mxu0
      %4829 = vmatprep.subr.bf16.mxu0 0
      %4830 = vmatpush1.bf16.msra.mxu0 %v4600
      %4831 = vmatprep.subr.bf16.mxu0 0
      %4832 = vmatpush1.bf16.msra.mxu0 %v4601
      %4833 = vmatprep.subr.bf16.mxu0 0
      %4834 = vmatpush1.bf16.msra.mxu0 0
      %4835 = vmatprep.subr.bf16.mxu0 0
      %4836 = vmatpush1.bf16.msra.mxu0 0
      %4837 = vmatprep.subr.bf16.mxu0 0
      %4838 = vmatpush1.bf16.msra.mxu0 0
      %4839 = vmatprep.subr.bf16.mxu0 0
      %4840 = vmatpush1.bf16.msra.mxu0 0
      %4841 = vmatprep.subr.bf16.mxu0 0
      %4842 = vmatpush1.bf16.msra.mxu0 0
      %4843 = vmatprep.subr.bf16.mxu0 0
      %4844 = vmatpush1.bf16.msra.mxu0 0
      %4845 = vmatprep.subr.bf16.mxu0 0
      %4846 = vmatpush1.bf16.msra.mxu0 0
      %4847 = vmatprep.subr.bf16.mxu0 0
      %4848 = vmatpush1.bf16.msra.mxu0 0
      %4849 = vmatprep.subr.bf16.mxu0 0
      %4850 = vmatpush1.bf16.msra.mxu0 0
      %4851 = vmatprep.subr.bf16.mxu0 0
      %4852 = vmatpush1.bf16.msra.mxu0 0
      %4853 = vmatprep.subr.bf16.mxu0 0
      %4854 = vmatpush1.bf16.msra.mxu0 0
      %4855 = vmatprep.subr.bf16.mxu0 0
      %4856 = vmatpush1.bf16.msra.mxu0 0
      %4857 = vmatprep.subr.bf16.mxu0 0
      %4858 = vmatpush1.bf16.msra.mxu0 0
      %4859 = vmatprep.subr.bf16.mxu0 0
      %4860 = vmatpush1.bf16.msra.mxu0 0
      %4861 = vmatprep.mubr.bf16.mxu0 0
      %4862 = vmatmul.mubr.bf16.gmra.mrb[0].mxu0 %v4621
      %v4863 = vpop.f32.mrb[0].mxu0
      %v4864 = vadd.f32 %v4703, %v4863
      %v4865 = vpop.f32.mrb[0].mxu0
      %v4866 = vpop.f32.mrb[0].mxu0
      %v4867 = vadd.f32 %v4706, %v4866
      %v4868 = vpop.f32.mrb[0].mxu0
      %4869 = vmatprep.mubr.bf16.mxu0 0
      %4870 = vmatmul.mubr.bf16.gmra.mrb[0].mxu0 %v4624
      %v4871 = vpop.f32.mrb[0].mxu0
      %v4872 = vadd.f32 %v4711, %v4871
      %v4873 = vpop.f32.mrb[0].mxu0
      %v4874 = vpop.f32.mrb[0].mxu0
      %v4875 = vadd.f32 %v4714, %v4874
      %v4876 = vpop.f32.mrb[0].mxu0
      %4877 = vmatprep.mubr.bf16.mxu0 0
      %4878 = vmatmul.mubr.bf16.gmra.mrb[0].mxu0 %v4627
      %v4879 = vpop.f32.mrb[0].mxu0
      %v4880 = vadd.f32 %v4719, %v4879
      %v4881 = vpop.f32.mrb[0].mxu0
      %v4882 = vpop.f32.mrb[0].mxu0
      %v4883 = vadd.f32 %v4722, %v4882
      %v4884 = vpop.f32.mrb[0].mxu0
      %4885 = vmatprep.mubr.bf16.mxu0 0
      %4886 = vmatmul.mubr.bf16.gmra.mrb[0].mxu0 %v4630
      %v4887 = vpop.f32.mrb[0].mxu0
      %v4888 = vadd.f32 %v4727, %v4887
      %v4889 = vpop.f32.mrb[0].mxu0
      %v4890 = vpop.f32.mrb[0].mxu0
      %v4891 = vadd.f32 %v4730, %v4890
      %v4892 = vpop.f32.mrb[0].mxu0
      %4893 = vmatprep.mubr.bf16.mxu0 0
      %4894 = vmatmul.mubr.bf16.gmra.mrb[0].mxu0 %v4633
      %v4895 = vpop.f32.mrb[0].mxu0
      %v4896 = vadd.f32 %v4735, %v4895
      %v4897 = vpop.f32.mrb[0].mxu0
      %v4898 = vpop.f32.mrb[0].mxu0
      %v4899 = vadd.f32 %v4738, %v4898
      %v4900 = vpop.f32.mrb[0].mxu0
      %4901 = vmatprep.mubr.bf16.mxu0 0
      %4902 = vmatmul.mubr.bf16.gmra.mrb[0].mxu0 %v4636
      %v4903 = vpop.f32.mrb[0].mxu0
      %v4904 = vadd.f32 %v4743, %v4903
      %v4905 = vpop.f32.mrb[0].mxu0
      %v4906 = vpop.f32.mrb[0].mxu0
      %v4907 = vadd.f32 %v4746, %v4906
      %v4908 = vpop.f32.mrb[0].mxu0
      %4909 = vmatprep.mubr.bf16.mxu0 0
      %4910 = vmatmul.mubr.bf16.gmra.mrb[0].mxu0 %v4639
      %v4911 = vpop.f32.mrb[0].mxu0
      %v4912 = vadd.f32 %v4751, %v4911
      %v4913 = vpop.f32.mrb[0].mxu0
      %v4914 = vpop.f32.mrb[0].mxu0
      %v4915 = vadd.f32 %v4754, %v4914
      %v4916 = vpop.f32.mrb[0].mxu0
      %4917 = vmatprep.mubr.bf16.mxu0 0
      %4918 = vmatmul.mubr.bf16.gmra.mrb[0].mxu0 %v4642
      %v4919 = vpop.f32.mrb[0].mxu0
      %v4920 = vadd.f32 %v4759, %v4919
      %v4921 = vpop.f32.mrb[0].mxu0
      %v4922 = vpop.f32.mrb[0].mxu0
      %v4923 = vadd.f32 %v4762, %v4922
      %v4924 = vpop.f32.mrb[0].mxu0
      %4925 = vmatprep.mubr.bf16.mxu0 0
      %4926 = vmatmul.mubr.bf16.gmra.mrb[0].mxu0 %v4645
      %v4927 = vpop.f32.mrb[0].mxu0
      %v4928 = vadd.f32 %v4767, %v4927
      %v4929 = vpop.f32.mrb[0].mxu0
      %v4930 = vpop.f32.mrb[0].mxu0
      %v4931 = vadd.f32 %v4770, %v4930
      %v4932 = vpop.f32.mrb[0].mxu0
      %4933 = vmatprep.mubr.bf16.mxu0 0
      %4934 = vmatmul.mubr.bf16.gmra.mrb[0].mxu0 %v4648
      %v4935 = vpop.f32.mrb[0].mxu0
      %v4936 = vadd.f32 %v4775, %v4935
      %v4937 = vpop.f32.mrb[0].mxu0
      %v4938 = vpop.f32.mrb[0].mxu0
      %v4939 = vadd.f32 %v4778, %v4938
      %v4940 = vpop.f32.mrb[0].mxu0
      %4941 = vmatprep.mubr.bf16.mxu0 0
      %4942 = vmatmul.mubr.bf16.gmra.mrb[0].mxu0 %v4651
      %v4943 = vpop.f32.mrb[0].mxu0
      %v4944 = vadd.f32 %v4783, %v4943
      %v4945 = vpop.f32.mrb[0].mxu0
      %v4946 = vpop.f32.mrb[0].mxu0
      %v4947 = vadd.f32 %v4786, %v4946
      %v4948 = vpop.f32.mrb[0].mxu0
      %4949 = vmatprep.mubr.bf16.mxu0 0
      %4950 = vmatmul.mubr.bf16.gmra.mrb[0].mxu0 %v4654
      %v4951 = vpop.f32.mrb[0].mxu0
      %v4952 = vadd.f32 %v4791, %v4951
      %v4953 = vpop.f32.mrb[0].mxu0
      %v4954 = vpop.f32.mrb[0].mxu0
      %v4955 = vadd.f32 %v4794, %v4954
      %v4956 = vpop.f32.mrb[0].mxu0
      %4957 = vmatprep.mubr.bf16.mxu0 0
      %4958 = vmatmul.mubr.bf16.gmra.mrb[0].mxu0 %v4657
      %v4959 = vpop.f32.mrb[0].mxu0
      %v4960 = vadd.f32 %v4799, %v4959
      %v4961 = vpop.f32.mrb[0].mxu0
      %v4962 = vpop.f32.mrb[0].mxu0
      %v4963 = vadd.f32 %v4802, %v4962
      %v4964 = vpop.f32.mrb[0].mxu0
      %4965 = vmatprep.mubr.bf16.mxu0 0
      %4966 = vmatmul.mubr.bf16.gmra.mrb[0].mxu0 %v4660
      %v4967 = vpop.f32.mrb[0].mxu0
      %v4968 = vadd.f32 %v4807, %v4967
      %v4969 = vpop.f32.mrb[0].mxu0
      %v4970 = vpop.f32.mrb[0].mxu0
      %v4971 = vadd.f32 %v4810, %v4970
      %v4972 = vpop.f32.mrb[0].mxu0
      %4973 = vmatprep.mubr.bf16.mxu0 0
      %4974 = vmatmul.mubr.bf16.gmra.mrb[0].mxu0 %v4663
      %v4975 = vpop.f32.mrb[0].mxu0
      %v4976 = vadd.f32 %v4815, %v4975
      %v4977 = vpop.f32.mrb[0].mxu0
      %v4978 = vpop.f32.mrb[0].mxu0
      %v4979 = vadd.f32 %v4818, %v4978
      %v4980 = vpop.f32.mrb[0].mxu0
      %4981 = vmatprep.mubr.bf16.mxu0 0
      %4982 = vmatmul.mubr.bf16.gmra.mrb[0].mxu0 %v4666
      %v4983 = vpop.f32.mrb[0].mxu0
      %v4984 = vadd.f32 %v4823, %v4983
      %v4985 = vpop.f32.mrb[0].mxu0
      %v4986 = vpop.f32.mrb[0].mxu0
      %v4987 = vadd.f32 %v4826, %v4986
      %v4988 = vpop.f32.mrb[0].mxu0
      %4989 = vdwg.mxu0
      %v4990 = vmax.f32 %v4864, 0.0
      %v4991 = vmax.f32 %v4867, 0.0
      %v4992 = vmax.f32 %v4872, 0.0
      %v4993 = vmax.f32 %v4875, 0.0
      %v4994 = vmax.f32 %v4880, 0.0
      %v4995 = vmax.f32 %v4883, 0.0
      %v4996 = vmax.f32 %v4888, 0.0
      %v4997 = vmax.f32 %v4891, 0.0
      %v4998 = vmax.f32 %v4896, 0.0
      %v4999 = vmax.f32 %v4899, 0.0
      %v5000 = vmax.f32 %v4904, 0.0
      %v5001 = vmax.f32 %v4907, 0.0
      %v5002 = vmax.f32 %v4912, 0.0
      %v5003 = vmax.f32 %v4915, 0.0
      %v5004 = vmax.f32 %v4920, 0.0
      %v5005 = vmax.f32 %v4923, 0.0
      %v5006 = vmax.f32 %v4928, 0.0
      %v5007 = vmax.f32 %v4931, 0.0
      %v5008 = vmax.f32 %v4936, 0.0
      %v5009 = vmax.f32 %v4939, 0.0
      %v5010 = vmax.f32 %v4944, 0.0
      %v5011 = vmax.f32 %v4947, 0.0
      %v5012 = vmax.f32 %v4952, 0.0
      %v5013 = vmax.f32 %v4955, 0.0
      %v5014 = vmax.f32 %v4960, 0.0
      %v5015 = vmax.f32 %v4963, 0.0
      %v5016 = vmax.f32 %v4968, 0.0
      %v5017 = vmax.f32 %v4971, 0.0
      %v5018 = vmax.f32 %v4976, 0.0
      %v5019 = vmax.f32 %v4979, 0.0
      %v5020 = vmax.f32 %v4984, 0.0
      %v5021 = vmax.f32 %v4987, 0.0
      %5022 = vst.msk [vmem:[#allocation2] sm:$0xff] %vm2632, %v4990
      %5023 = vst.msk [vmem:[#allocation2 + $0x8] sm:$0xff] %vm2632, %v4991
      %5024 = vst.msk [vmem:[#allocation2 + $0x10] sm:$0xff] %vm2632, %v4992
      %5025 = vst.msk [vmem:[#allocation2 + $0x18] sm:$0xff] %vm2632, %v4993
      %5026 = vst.msk [vmem:[#allocation2 + $0x20] sm:$0xff] %vm2632, %v4994
      %5027 = vst.msk [vmem:[#allocation2 + $0x28] sm:$0xff] %vm2632, %v4995
      %5028 = vst.msk [vmem:[#allocation2 + $0x30] sm:$0xff] %vm2632, %v4996
      %5029 = vst.msk [vmem:[#allocation2 + $0x38] sm:$0xff] %vm2632, %v4997
      %5030 = vst.msk [vmem:[#allocation2 + $0x40] sm:$0xff] %vm2632, %v4998
      %5031 = vst.msk [vmem:[#allocation2 + $0x48] sm:$0xff] %vm2632, %v4999
      %5032 = vst.msk [vmem:[#allocation2 + $0x50] sm:$0xff] %vm2632, %v5000
      %5033 = vst.msk [vmem:[#allocation2 + $0x58] sm:$0xff] %vm2632, %v5001
      %5034 = vst.msk [vmem:[#allocation2 + $0x60] sm:$0xff] %vm2632, %v5002
      %5035 = vst.msk [vmem:[#allocation2 + $0x68] sm:$0xff] %vm2632, %v5003
      %5036 = vst.msk [vmem:[#allocation2 + $0x70] sm:$0xff] %vm2632, %v5004
      %5037 = vst.msk [vmem:[#allocation2 + $0x78] sm:$0xff] %vm2632, %v5005
      %5038 = vst.msk [vmem:[#allocation2 + $0x80] sm:$0xff] %vm2632, %v5006
      %5039 = vst.msk [vmem:[#allocation2 + $0x88] sm:$0xff] %vm2632, %v5007
      %5040 = vst.msk [vmem:[#allocation2 + $0x90] sm:$0xff] %vm2632, %v5008
      %5041 = vst.msk [vmem:[#allocation2 + $0x98] sm:$0xff] %vm2632, %v5009
      %5042 = vst.msk [vmem:[#allocation2 + $0xa0] sm:$0xff] %vm2632, %v5010
      %5043 = vst.msk [vmem:[#allocation2 + $0xa8] sm:$0xff] %vm2632, %v5011
      %5044 = vst.msk [vmem:[#allocation2 + $0xb0] sm:$0xff] %vm2632, %v5012
      %5045 = vst.msk [vmem:[#allocation2 + $0xb8] sm:$0xff] %vm2632, %v5013
      %5046 = vst.msk [vmem:[#allocation2 + $0xc0] sm:$0xff] %vm2632, %v5014
      %5047 = vst.msk [vmem:[#allocation2 + $0xc8] sm:$0xff] %vm2632, %v5015
      %5048 = vst.msk [vmem:[#allocation2 + $0xd0] sm:$0xff] %vm2632, %v5016
      %5049 = vst.msk [vmem:[#allocation2 + $0xd8] sm:$0xff] %vm2632, %v5017
      %5050 = vst.msk [vmem:[#allocation2 + $0xe0] sm:$0xff] %vm2632, %v5018
      %5051 = vst.msk [vmem:[#allocation2 + $0xe8] sm:$0xff] %vm2632, %v5019
      %5052 = vst.msk [vmem:[#allocation2 + $0xf0] sm:$0xff] %vm2632, %v5020
      %5053 = vst.msk [vmem:[#allocation2 + $0xf8] sm:$0xff] %vm2632, %v5021
      %v5054 = vld [vmem:[#allocation2] ss:$2 sm:$0xff]
      %s5055 = scalar_lea.vmem [#allocation2], 16
      %v5056 = vld [vmem:[%s5055] ss:$2 sm:$0xff]
      %s5057 = scalar_lea.vmem [#allocation2], 32
      %v5058 = vld [vmem:[%s5057] ss:$2 sm:$0xff]
      %s5059 = scalar_lea.vmem [#allocation2], 48
      %v5060 = vld [vmem:[%s5059] ss:$2 sm:$0xff]
      %s5061 = scalar_lea.vmem [#allocation2], 64
      %v5062 = vld [vmem:[%s5061] ss:$2 sm:$0xff]
      %s5063 = scalar_lea.vmem [#allocation2], 80
      %v5064 = vld [vmem:[%s5063] ss:$2 sm:$0xff]
      %s5065 = scalar_lea.vmem [#allocation2], 96
      %v5066 = vld [vmem:[%s5065] ss:$2 sm:$0xff]
      %s5067 = scalar_lea.vmem [#allocation2], 112
      %v5068 = vld [vmem:[%s5067] ss:$2 sm:$0xff]
      %s5069 = scalar_lea.vmem [#allocation2], 128
      %v5070 = vld [vmem:[%s5069] ss:$2 sm:$0xff]
      %s5071 = scalar_lea.vmem [#allocation2], 144
      %v5072 = vld [vmem:[%s5071] ss:$2 sm:$0xff]
      %s5073 = scalar_lea.vmem [#allocation2], 160
      %v5074 = vld [vmem:[%s5073] ss:$2 sm:$0xff]
      %s5075 = scalar_lea.vmem [#allocation2], 176
      %v5076 = vld [vmem:[%s5075] ss:$2 sm:$0xff]
      %s5077 = scalar_lea.vmem [#allocation2], 192
      %v5078 = vld [vmem:[%s5077] ss:$2 sm:$0xff]
      %s5079 = scalar_lea.vmem [#allocation2], 208
      %v5080 = vld [vmem:[%s5079] ss:$2 sm:$0xff]
      %s5081 = scalar_lea.vmem [#allocation2], 224
      %v5082 = vld [vmem:[%s5081] ss:$2 sm:$0xff]
      %s5083 = scalar_lea.vmem [#allocation2], 240
      %v5084 = vld [vmem:[%s5083] ss:$2 sm:$0xff]
      %s5085 = scalar_lea.vmem [#allocation2], 1
      %v5086 = vld [vmem:[%s5085] ss:$2 sm:$0xff]
      %s5087 = scalar_lea.vmem [#allocation2], 17
      %v5088 = vld [vmem:[%s5087] ss:$2 sm:$0xff]
      %s5089 = scalar_lea.vmem [#allocation2], 33
      %v5090 = vld [vmem:[%s5089] ss:$2 sm:$0xff]
      %s5091 = scalar_lea.vmem [#allocation2], 49
      %v5092 = vld [vmem:[%s5091] ss:$2 sm:$0xff]
      %s5093 = scalar_lea.vmem [#allocation2], 65
      %v5094 = vld [vmem:[%s5093] ss:$2 sm:$0xff]
      %s5095 = scalar_lea.vmem [#allocation2], 81
      %v5096 = vld [vmem:[%s5095] ss:$2 sm:$0xff]
      %s5097 = scalar_lea.vmem [#allocation2], 97
      %v5098 = vld [vmem:[%s5097] ss:$2 sm:$0xff]
      %s5099 = scalar_lea.vmem [#allocation2], 113
      %v5100 = vld [vmem:[%s5099] ss:$2 sm:$0xff]
      %s5101 = scalar_lea.vmem [#allocation2], 129
      %v5102 = vld [vmem:[%s5101] ss:$2 sm:$0xff]
      %s5103 = scalar_lea.vmem [#allocation2], 145
      %v5104 = vld [vmem:[%s5103] ss:$2 sm:$0xff]
      %s5105 = scalar_lea.vmem [#allocation2], 161
      %v5106 = vld [vmem:[%s5105] ss:$2 sm:$0xff]
      %s5107 = scalar_lea.vmem [#allocation2], 177
      %v5108 = vld [vmem:[%s5107] ss:$2 sm:$0xff]
      %s5109 = scalar_lea.vmem [#allocation2], 193
      %v5110 = vld [vmem:[%s5109] ss:$2 sm:$0xff]
      %s5111 = scalar_lea.vmem [#allocation2], 209
      %v5112 = vld [vmem:[%s5111] ss:$2 sm:$0xff]
      %s5113 = scalar_lea.vmem [#allocation2], 225
      %v5114 = vld [vmem:[%s5113] ss:$2 sm:$0xff]
      %s5115 = scalar_lea.vmem [#allocation2], 241
      %v5116 = vld [vmem:[%s5115] ss:$2 sm:$0xff]
      %v5117 = vadd.f32 %v5054, %v5086
      %v5118 = vadd.f32 %v5056, %v5088
      %v5119 = vadd.f32 %v5058, %v5090
      %v5120 = vadd.f32 %v5060, %v5092
      %v5121 = vadd.f32 %v5062, %v5094
      %v5122 = vadd.f32 %v5064, %v5096
      %v5123 = vadd.f32 %v5066, %v5098
      %v5124 = vadd.f32 %v5068, %v5100
      %v5125 = vadd.f32 %v5070, %v5102
      %v5126 = vadd.f32 %v5072, %v5104
      %v5127 = vadd.f32 %v5074, %v5106
      %v5128 = vadd.f32 %v5076, %v5108
      %v5129 = vadd.f32 %v5078, %v5110
      %v5130 = vadd.f32 %v5080, %v5112
      %v5131 = vadd.f32 %v5082, %v5114
      %v5132 = vadd.f32 %v5084, %v5116
      %v5133 = vadd.f32 %v5117, %v5118
      %v5134 = vadd.f32 %v5119, %v5120
      %v5135 = vadd.f32 %v5121, %v5122
      %v5136 = vadd.f32 %v5123, %v5124
      %v5137 = vadd.f32 %v5125, %v5126
      %v5138 = vadd.f32 %v5127, %v5128
      %v5139 = vadd.f32 %v5129, %v5130
      %v5140 = vadd.f32 %v5131, %v5132
      %v5141 = vmul.f32 %v5133, 0.25
      %v5142 = vmul.f32 %v5134, 0.25
      %v5143 = vmul.f32 %v5135, 0.25
      %v5144 = vmul.f32 %v5136, 0.25
      %v5145 = vmul.f32 %v5137, 0.25
      %v5146 = vmul.f32 %v5138, 0.25
      %v5147 = vmul.f32 %v5139, 0.25
      %v5148 = vmul.f32 %v5140, 0.25
      %v5149 = vpack.c.bf16 %v5142, %v5141
      %v5150 = vpack.c.bf16 %v5144, %v5143
      %v5151 = vpack.c.bf16 %v5146, %v5145
      %v5152 = vpack.c.bf16 %v5148, %v5147
      %vm5153 = vcmp.lt.s32.totalorder %v523, 0
      %v5154 = vsub.s32 0, %v523
      %v5155 = vsel %vm5153, %v5154, %v523
      %v5156 = vshrl.u32 %v5155, 3
      %v5157 = vand.u32 %v5155, 7
      %v5158 = vsub.s32 0, %v5157
      %v5159 = vsel %vm5153, %v5158, %v5157
      %vm5160 = vcmp.lt.s32.totalorder %v524, 0
      %v5161 = vsub.s32 0, %v524
      %v5162 = vsel %vm5160, %v5161, %v524
      %v5163 = vshrl.u32 %v5162, 3
      %v5164 = vand.u32 %v5162, 7
      %v5165 = vsub.s32 0, %v5164
      %v5166 = vsel %vm5160, %v5165, %v5164
      %vm5167 = vcmp.lt.s32.totalorder %v525, 0
      %v5168 = vsub.s32 0, %v525
      %v5169 = vsel %vm5167, %v5168, %v525
      %v5170 = vshrl.u32 %v5169, 3
      %v5171 = vand.u32 %v5169, 7
      %v5172 = vsub.s32 0, %v5171
      %v5173 = vsel %vm5167, %v5172, %v5171
      %vm5174 = vcmp.lt.s32.totalorder %v526, 0
      %v5175 = vsub.s32 0, %v526
      %v5176 = vsel %vm5174, %v5175, %v526
      %v5177 = vshrl.u32 %v5176, 3
      %v5178 = vand.u32 %v5176, 7
      %v5179 = vsub.s32 0, %v5178
      %v5180 = vsel %vm5174, %v5179, %v5178
      %vm5181 = vcmp.lt.s32.totalorder %v527, 0
      %v5182 = vsub.s32 0, %v527
      %v5183 = vsel %vm5181, %v5182, %v527
      %v5184 = vshrl.u32 %v5183, 3
      %v5185 = vand.u32 %v5183, 7
      %v5186 = vsub.s32 0, %v5185
      %v5187 = vsel %vm5181, %v5186, %v5185
      %vm5188 = vcmp.lt.s32.totalorder %v528, 0
      %v5189 = vsub.s32 0, %v528
      %v5190 = vsel %vm5188, %v5189, %v528
      %v5191 = vshrl.u32 %v5190, 3
      %v5192 = vand.u32 %v5190, 7
      %v5193 = vsub.s32 0, %v5192
      %v5194 = vsel %vm5188, %v5193, %v5192
      %vm5195 = vcmp.lt.s32.totalorder %v529, 0
      %v5196 = vsub.s32 0, %v529
      %v5197 = vsel %vm5195, %v5196, %v529
      %v5198 = vshrl.u32 %v5197, 3
      %v5199 = vand.u32 %v5197, 7
      %v5200 = vsub.s32 0, %v5199
      %v5201 = vsel %vm5195, %v5200, %v5199
      %vm5202 = vcmp.lt.s32.totalorder %v530, 0
      %v5203 = vsub.s32 0, %v530
      %v5204 = vsel %vm5202, %v5203, %v530
      %v5205 = vshrl.u32 %v5204, 3
      %v5206 = vand.u32 %v5204, 7
      %v5207 = vsub.s32 0, %v5206
      %v5208 = vsel %vm5202, %v5207, %v5206
      %vm5209 = vcmp.ne.s32.totalorder %v5159, 0
      %vm5210 = vcmp.ne.s32.totalorder %v5166, 0
      %vm5211 = vcmp.ne.s32.totalorder %v5173, 0
      %vm5212 = vcmp.ne.s32.totalorder %v5180, 0
      %vm5213 = vcmp.ne.s32.totalorder %v5187, 0
      %vm5214 = vcmp.ne.s32.totalorder %v5194, 0
      %vm5215 = vcmp.ne.s32.totalorder %v5201, 0
      %vm5216 = vcmp.ne.s32.totalorder %v5208, 0
      %vm5217 = vcmp.lt.s32.totalorder %v5159, 0
      %vm5218 = vcmp.lt.s32.totalorder %v5166, 0
      %vm5219 = vcmp.lt.s32.totalorder %v5173, 0
      %vm5220 = vcmp.lt.s32.totalorder %v5180, 0
      %vm5221 = vcmp.lt.s32.totalorder %v5187, 0
      %vm5222 = vcmp.lt.s32.totalorder %v5194, 0
      %vm5223 = vcmp.lt.s32.totalorder %v5201, 0
      %vm5224 = vcmp.lt.s32.totalorder %v5208, 0
      %vm5225 = vmand %vm5217, %vm5209
      %vm5226 = vmand %vm5218, %vm5210
      %vm5227 = vmand %vm5219, %vm5211
      %vm5228 = vmand %vm5220, %vm5212
      %vm5229 = vmand %vm5221, %vm5213
      %vm5230 = vmand %vm5222, %vm5214
      %vm5231 = vmand %vm5223, %vm5215
      %vm5232 = vmand %vm5224, %vm5216
      %v5233 = vadd.s32 %v5159, 8
      %v5234 = vadd.s32 %v5166, 8
      %v5235 = vadd.s32 %v5173, 8
      %v5236 = vadd.s32 %v5180, 8
      %v5237 = vadd.s32 %v5187, 8
      %v5238 = vadd.s32 %v5194, 8
      %v5239 = vadd.s32 %v5201, 8
      %v5240 = vadd.s32 %v5208, 8
      %v5241 = vsel %vm5225, %v5233, %v5159
      %v5242 = vsel %vm5226, %v5234, %v5166
      %v5243 = vsel %vm5227, %v5235, %v5173
      %v5244 = vsel %vm5228, %v5236, %v5180
      %v5245 = vsel %vm5229, %v5237, %v5187
      %v5246 = vsel %vm5230, %v5238, %v5194
      %v5247 = vsel %vm5231, %v5239, %v5201
      %v5248 = vsel %vm5232, %v5240, %v5208
      %vm5249 = vcmp.ge.s32.totalorder %v5241, 1
      %vm5250 = vcmp.ge.s32.totalorder %v5242, 1
      %vm5251 = vcmp.ge.s32.totalorder %v5243, 1
      %vm5252 = vcmp.ge.s32.totalorder %v5244, 1
      %vm5253 = vcmp.ge.s32.totalorder %v5245, 1
      %vm5254 = vcmp.ge.s32.totalorder %v5246, 1
      %vm5255 = vcmp.ge.s32.totalorder %v5247, 1
      %vm5256 = vcmp.ge.s32.totalorder %v5248, 1
      %vm5257 = vcmp.le.s32.totalorder %v5241, 6
      %vm5258 = vcmp.le.s32.totalorder %v5242, 6
      %vm5259 = vcmp.le.s32.totalorder %v5243, 6
      %vm5260 = vcmp.le.s32.totalorder %v5244, 6
      %vm5261 = vcmp.le.s32.totalorder %v5245, 6
      %vm5262 = vcmp.le.s32.totalorder %v5246, 6
      %vm5263 = vcmp.le.s32.totalorder %v5247, 6
      %vm5264 = vcmp.le.s32.totalorder %v5248, 6
      %v5265 = vsel %vm5249, 1, 0
      %v5266 = vsel %vm5250, 1, 0
      %v5267 = vsel %vm5251, 1, 0
      %v5268 = vsel %vm5252, 1, 0
      %v5269 = vsel %vm5253, 1, 0
      %v5270 = vsel %vm5254, 1, 0
      %v5271 = vsel %vm5255, 1, 0
      %v5272 = vsel %vm5256, 1, 0
      %vm5273 = vcmp.eq.s32.totalorder %v5265, 1
      %vm5274 = vcmp.eq.s32.totalorder %v5266, 1
      %vm5275 = vcmp.eq.s32.totalorder %v5267, 1
      %vm5276 = vcmp.eq.s32.totalorder %v5268, 1
      %vm5277 = vcmp.eq.s32.totalorder %v5269, 1
      %vm5278 = vcmp.eq.s32.totalorder %v5270, 1
      %vm5279 = vcmp.eq.s32.totalorder %v5271, 1
      %vm5280 = vcmp.eq.s32.totalorder %v5272, 1
      %vm5281 = vmpackc.low %vm5273, %vm5273
      %vm5282 = vmpackc.low %vm5274, %vm5274
      %vm5283 = vmpackc.low %vm5275, %vm5275
      %vm5284 = vmpackc.low %vm5276, %vm5276
      %vm5285 = vmpackc.low %vm5277, %vm5277
      %vm5286 = vmpackc.low %vm5278, %vm5278
      %vm5287 = vmpackc.low %vm5279, %vm5279
      %vm5288 = vmpackc.low %vm5280, %vm5280
      %v5289 = vsel %vm5281, 65537, 0
      %v5290 = vsel %vm5282, 65537, 0
      %v5291 = vsel %vm5283, 65537, 0
      %v5292 = vsel %vm5284, 65537, 0
      %v5293 = vsel %vm5285, 65537, 0
      %v5294 = vsel %vm5286, 65537, 0
      %v5295 = vsel %vm5287, 65537, 0
      %v5296 = vsel %vm5288, 65537, 0
      %v5297 = vunpack.c.l.b16 %v5289
      %v5298 = vunpack.c.l.b16 %v5290
      %v5299 = vunpack.c.l.b16 %v5291
      %v5300 = vunpack.c.l.b16 %v5292
      %v5301 = vunpack.c.l.b16 %v5293
      %v5302 = vunpack.c.l.b16 %v5294
      %v5303 = vunpack.c.l.b16 %v5295
      %v5304 = vunpack.c.l.b16 %v5296
      %v5305 = vpack.c.b16 %v5298, %v5297
      %v5306 = vpack.c.b16 %v5300, %v5299
      %v5307 = vpack.c.b16 %v5302, %v5301
      %v5308 = vpack.c.b16 %v5304, %v5303
      %v5310 = vshrl.u32 %v5305, 16
      %v5312 = vrot.slane %v5310, 4
      %v5313 = vshll.u32 %v5305, 16
      %v5315 = vrot.slane %v5313, 5
      %v5316 = vor.u32 %v5312, %v5315
      %v5318 = vshrl.u32 %v5306, 16
      %v5320 = vrot.slane %v5318, 4
      %v5321 = vshll.u32 %v5306, 16
      %v5323 = vrot.slane %v5321, 5
      %v5324 = vor.u32 %v5320, %v5323
      %v5325 = vsel %vm1179, %v5316, %v5324
      %v5327 = vshrl.u32 %v5307, 16
      %v5329 = vrot.slane %v5327, 4
      %v5330 = vshll.u32 %v5307, 16
      %v5332 = vrot.slane %v5330, 5
      %v5333 = vor.u32 %v5329, %v5332
      %v5334 = vsel %vm1179, %v5324, %v5333
      %v5336 = vshrl.u32 %v5308, 16
      %v5338 = vrot.slane %v5336, 4
      %v5339 = vshll.u32 %v5308, 16
      %v5341 = vrot.slane %v5339, 5
      %v5342 = vor.u32 %v5338, %v5341
      %v5343 = vsel %vm1179, %v5333, %v5342
      %vm5344 = vcmp.ne.s16.totalorder %v5325, 0
      %vm5345 = vcmp.ne.s16.totalorder %v5334, 0
      %vm5346 = vcmp.ne.s16.totalorder %v5343, 0
      %vm5347 = vcmp.ne.s16.totalorder %v5342, 0
      %v5348 = vsel %vm5344, %v5149, 0
      %v5349 = vsel %vm5345, %v5150, 0
      %v5350 = vsel %vm5346, %v5151, 0
      %v5351 = vsel %vm5347, %v5152, 0
      %v5352 = vsel %vm5257, 1, 0
      %v5353 = vsel %vm5258, 1, 0
      %v5354 = vsel %vm5259, 1, 0
      %v5355 = vsel %vm5260, 1, 0
      %v5356 = vsel %vm5261, 1, 0
      %v5357 = vsel %vm5262, 1, 0
      %v5358 = vsel %vm5263, 1, 0
      %v5359 = vsel %vm5264, 1, 0
      %vm5360 = vcmp.eq.s32.totalorder %v5352, 1
      %vm5361 = vcmp.eq.s32.totalorder %v5353, 1
      %vm5362 = vcmp.eq.s32.totalorder %v5354, 1
      %vm5363 = vcmp.eq.s32.totalorder %v5355, 1
      %vm5364 = vcmp.eq.s32.totalorder %v5356, 1
      %vm5365 = vcmp.eq.s32.totalorder %v5357, 1
      %vm5366 = vcmp.eq.s32.totalorder %v5358, 1
      %vm5367 = vcmp.eq.s32.totalorder %v5359, 1
      %vm5368 = vmpackc.low %vm5360, %vm5360
      %vm5369 = vmpackc.low %vm5361, %vm5361
      %vm5370 = vmpackc.low %vm5362, %vm5362
      %vm5371 = vmpackc.low %vm5363, %vm5363
      %vm5372 = vmpackc.low %vm5364, %vm5364
      %vm5373 = vmpackc.low %vm5365, %vm5365
      %vm5374 = vmpackc.low %vm5366, %vm5366
      %vm5375 = vmpackc.low %vm5367, %vm5367
      %v5376 = vsel %vm5368, 65537, 0
      %v5377 = vsel %vm5369, 65537, 0
      %v5378 = vsel %vm5370, 65537, 0
      %v5379 = vsel %vm5371, 65537, 0
      %v5380 = vsel %vm5372, 65537, 0
      %v5381 = vsel %vm5373, 65537, 0
      %v5382 = vsel %vm5374, 65537, 0
      %v5383 = vsel %vm5375, 65537, 0
      %v5384 = vunpack.c.l.b16 %v5376
      %v5385 = vunpack.c.l.b16 %v5377
      %v5386 = vunpack.c.l.b16 %v5378
      %v5387 = vunpack.c.l.b16 %v5379
      %v5388 = vunpack.c.l.b16 %v5380
      %v5389 = vunpack.c.l.b16 %v5381
      %v5390 = vunpack.c.l.b16 %v5382
      %v5391 = vunpack.c.l.b16 %v5383
      %v5392 = vpack.c.b16 %v5385, %v5384
      %v5393 = vpack.c.b16 %v5387, %v5386
      %v5394 = vpack.c.b16 %v5389, %v5388
      %v5395 = vpack.c.b16 %v5391, %v5390
      %v5397 = vshrl.u32 %v5392, 16
      %v5399 = vrot.slane %v5397, 3
      %v5400 = vshll.u32 %v5392, 16
      %v5402 = vrot.slane %v5400, 4
      %v5403 = vor.u32 %v5399, %v5402
      %v5405 = vshrl.u32 %v5393, 16
      %v5407 = vrot.slane %v5405, 3
      %v5408 = vshll.u32 %v5393, 16
      %v5410 = vrot.slane %v5408, 4
      %v5411 = vor.u32 %v5407, %v5410
      %v5412 = vsel %vm1531, %v5403, %v5411
      %v5414 = vshrl.u32 %v5394, 16
      %v5416 = vrot.slane %v5414, 3
      %v5417 = vshll.u32 %v5394, 16
      %v5419 = vrot.slane %v5417, 4
      %v5420 = vor.u32 %v5416, %v5419
      %v5421 = vsel %vm1531, %v5411, %v5420
      %v5423 = vshrl.u32 %v5395, 16
      %v5425 = vrot.slane %v5423, 3
      %v5426 = vshll.u32 %v5395, 16
      %v5428 = vrot.slane %v5426, 4
      %v5429 = vor.u32 %v5425, %v5428
      %v5430 = vsel %vm1531, %v5420, %v5429
      %vm5431 = vcmp.ne.s16.totalorder %v5412, 0
      %vm5432 = vcmp.ne.s16.totalorder %v5421, 0
      %vm5433 = vcmp.ne.s16.totalorder %v5430, 0
      %vm5434 = vcmp.ne.s16.totalorder %v5429, 0
      %v5435 = vsel %vm5431, %v5149, 0
      %v5436 = vsel %vm5432, %v5150, 0
      %v5437 = vsel %vm5433, %v5151, 0
      %v5438 = vsel %vm5434, %v5152, 0
      %v5439 = vrot.slane %v5313, 1
      %v5440 = vor.u32 %v5310, %v5439
      %v5441 = vrot.slane %v5321, 1
      %v5442 = vsel %vm1775, %v5440, %v5441
      %v5443 = vor.u32 %v5318, %v5441
      %v5444 = vrot.slane %v5330, 1
      %v5445 = vsel %vm1775, %v5443, %v5444
      %v5446 = vor.u32 %v5327, %v5444
      %v5447 = vrot.slane %v5339, 1
      %v5448 = vsel %vm1775, %v5446, %v5447
      %v5449 = vor.u32 %v5336, %v5447
      %vm5450 = vcmp.ne.s16.totalorder %v5442, 0
      %vm5451 = vcmp.ne.s16.totalorder %v5445, 0
      %vm5452 = vcmp.ne.s16.totalorder %v5448, 0
      %vm5453 = vcmp.ne.s16.totalorder %v5449, 0
      %v5454 = vsel %vm5450, %v5149, 0
      %v5455 = vsel %vm5451, %v5150, 0
      %v5456 = vsel %vm5452, %v5151, 0
      %v5457 = vsel %vm5453, %v5152, 0
      %vm5458 = vsmask.f32 256
      %v5459 = vrot.slane %v5397, 7
      %v5460 = vor.u32 %v5459, %v5400
      %v5461 = vrot.slane %v5405, 7
      %v5462 = vor.u32 %v5461, %v5408
      %v5463 = vsel %vm5458, %v5459, %v5462
      %v5464 = vrot.slane %v5414, 7
      %v5465 = vor.u32 %v5464, %v5417
      %v5466 = vsel %vm5458, %v5461, %v5465
      %v5467 = vrot.slane %v5423, 7
      %v5468 = vor.u32 %v5467, %v5426
      %v5469 = vsel %vm5458, %v5464, %v5468
      %vm5470 = vcmp.ne.s16.totalorder %v5460, 0
      %vm5471 = vcmp.ne.s16.totalorder %v5463, 0
      %vm5472 = vcmp.ne.s16.totalorder %v5466, 0
      %vm5473 = vcmp.ne.s16.totalorder %v5469, 0
      %v5474 = vsel %vm5470, %v5149, 0
      %v5475 = vsel %vm5471, %v5150, 0
      %v5476 = vsel %vm5472, %v5151, 0
      %v5477 = vsel %vm5473, %v5152, 0
      %vm5478 = vcmp.ne.s16.totalorder %v5316, 0
      %v5479 = vsel %vm5478, %v5149, 0
      %v5480 = vsel %vm5344, %v5150, 0
      %v5481 = vsel %vm5345, %v5151, 0
      %v5482 = vsel %vm5346, %v5152, 0
      %vm5483 = vcmp.ne.s16.totalorder %v5403, 0
      %v5484 = vsel %vm5483, %v5149, 0
      %v5485 = vsel %vm5431, %v5150, 0
      %v5486 = vsel %vm5432, %v5151, 0
      %v5487 = vsel %vm5433, %v5152, 0
      %v5489 = vshll.u32 %v5149, 16
      %v5491 = vrot.slane %v5489, 1
      %v5492 = vsel %vm1775, %v1781, %v5491
      %v5493 = vshrl.u32 %v5149, 16
      %v5495 = vor.u32 %v5493, %v5491
      %v5497 = vshll.u32 %v5150, 16
      %v5499 = vrot.slane %v5497, 1
      %v5500 = vsel %vm1775, %v5495, %v5499
      %v5501 = vshrl.u32 %v5150, 16
      %v5503 = vor.u32 %v5501, %v5499
      %v5505 = vshll.u32 %v5151, 16
      %v5507 = vrot.slane %v5505, 1
      %v5508 = vsel %vm1775, %v5503, %v5507
      %v5509 = vshrl.u32 %v5151, 16
      %v5511 = vor.u32 %v5509, %v5507
      %v5513 = vshll.u32 %v5152, 16
      %v5515 = vrot.slane %v5513, 1
      %v5516 = vsel %vm1775, %v5511, %v5515
      %v5517 = vshrl.u32 %v5152, 16
      %v5519 = vor.u32 %v5517, %v5515
      %5520 = vrot.lane.b32.xlu0 %v5492, 32
      %v5521 = vpop.permute.xlu0 %5520
      %5522 = vrot.lane.b32.xlu0 %v5500, 32
      %v5523 = vpop.permute.xlu0 %5522
      %5524 = vrot.lane.b32.xlu0 %v5508, 32
      %v5525 = vpop.permute.xlu0 %5524
      %5526 = vrot.lane.b32.xlu0 %v5516, 32
      %v5527 = vpop.permute.xlu0 %5526
      %5528 = vrot.lane.b32.xlu0 %v5519, 32
      %v5529 = vpop.permute.xlu0 %5528
      %v5534 = vrot.slane %v5435, 1
      %v5535 = vsel %vm1960, %v1961, %v5534
      %v5536 = vrot.slane %v5436, 1
      %v5537 = vsel %vm1960, %v5534, %v5536
      %v5538 = vrot.slane %v5437, 1
      %v5539 = vsel %vm1960, %v5536, %v5538
      %v5540 = vrot.slane %v5438, 1
      %v5541 = vsel %vm1960, %v5538, %v5540
      %5542 = vrot.lane.b32.xlu0 %v5535, 64
      %v5543 = vpop.permute.xlu0 %5542
      %5544 = vrot.lane.b32.xlu0 %v5537, 64
      %v5545 = vpop.permute.xlu0 %5544
      %5546 = vrot.lane.b32.xlu0 %v5539, 64
      %v5547 = vpop.permute.xlu0 %5546
      %5548 = vrot.lane.b32.xlu0 %v5541, 64
      %v5549 = vpop.permute.xlu0 %5548
      %5550 = vrot.lane.b32.xlu0 %v5540, 64
      %v5551 = vpop.permute.xlu0 %5550
      %v5556 = vrot.slane 0, 4
      %v5557 = vrot.slane %v5454, 4
      %v5558 = vsel %vm3107, %v5556, %v5557
      %v5559 = vrot.slane %v5455, 4
      %v5560 = vsel %vm3107, %v5557, %v5559
      %v5561 = vrot.slane %v5456, 4
      %v5562 = vsel %vm3107, %v5559, %v5561
      %v5563 = vrot.slane %v5457, 4
      %v5564 = vsel %vm3107, %v5561, %v5563
      %5565 = vrot.lane.b32.xlu0 %v5558, 96
      %v5566 = vpop.permute.xlu0 %5565
      %5567 = vrot.lane.b32.xlu0 %v5560, 96
      %v5568 = vpop.permute.xlu0 %5567
      %5569 = vrot.lane.b32.xlu0 %v5562, 96
      %v5570 = vpop.permute.xlu0 %5569
      %5571 = vrot.lane.b32.xlu0 %v5564, 96
      %v5572 = vpop.permute.xlu0 %5571
      %5573 = vrot.lane.b32.xlu0 %v5563, 96
      %v5574 = vpop.permute.xlu0 %5573
      %v5575 = vrot.slane %v5493, 4
      %v5576 = vrot.slane %v5489, 5
      %v5577 = vor.u32 %v5575, %v5576
      %v5578 = vrot.slane %v5501, 4
      %v5579 = vrot.slane %v5497, 5
      %v5580 = vor.u32 %v5578, %v5579
      %v5581 = vsel %vm1179, %v5577, %v5580
      %v5582 = vrot.slane %v5509, 4
      %v5583 = vrot.slane %v5505, 5
      %v5584 = vor.u32 %v5582, %v5583
      %v5585 = vsel %vm1179, %v5580, %v5584
      %v5586 = vrot.slane %v5517, 4
      %v5587 = vrot.slane %v5513, 5
      %v5588 = vor.u32 %v5586, %v5587
      %v5589 = vsel %vm1179, %v5584, %v5588
      %vm5594 = vcmask 1042432
      %v5595 = vrot.slane %v5474, 5
      %v5596 = vrot.slane %v5475, 5
      %v5597 = vsel %vm5594, %v5595, %v5596
      %v5598 = vrot.slane %v5476, 5
      %v5599 = vsel %vm5594, %v5596, %v5598
      %v5600 = vrot.slane %v5477, 5
      %v5601 = vsel %vm5594, %v5598, %v5600
      %v5602 = vrot.slane 0, 5
      %v5603 = vsel %vm5594, %v5600, %v5602
      %5604 = vrot.lane.b32.xlu0 %v5595, 32
      %v5605 = vpop.permute.xlu0 %5604
      %5606 = vrot.lane.b32.xlu0 %v5597, 32
      %v5607 = vpop.permute.xlu0 %5606
      %5608 = vrot.lane.b32.xlu0 %v5599, 32
      %v5609 = vpop.permute.xlu0 %5608
      %5610 = vrot.lane.b32.xlu0 %v5601, 32
      %v5611 = vpop.permute.xlu0 %5610
      %5612 = vrot.lane.b32.xlu0 %v5603, 32
      %v5613 = vpop.permute.xlu0 %5612
      %5618 = vrot.lane.b32.xlu0 %v5479, 64
      %v5619 = vpop.permute.xlu0 %5618
      %5620 = vrot.lane.b32.xlu0 %v5480, 64
      %v5621 = vpop.permute.xlu0 %5620
      %5622 = vrot.lane.b32.xlu0 %v5481, 64
      %v5623 = vpop.permute.xlu0 %5622
      %5624 = vrot.lane.b32.xlu0 %v5482, 64
      %v5625 = vpop.permute.xlu0 %5624
      %v5626 = vsel %vm1775, %v5519, %v1780
      %5627 = vrot.lane.b32.xlu0 %v5500, 96
      %v5628 = vpop.permute.xlu0 %5627
      %5629 = vrot.lane.b32.xlu0 %v5508, 96
      %v5630 = vpop.permute.xlu0 %5629
      %5631 = vrot.lane.b32.xlu0 %v5516, 96
      %v5632 = vpop.permute.xlu0 %5631
      %5633 = vrot.lane.b32.xlu0 %v5626, 96
      %v5634 = vpop.permute.xlu0 %5633
      %v5639 = vrot.slane %v5484, 1
      %v5640 = vrot.slane %v5485, 1
      %v5641 = vsel %vm1960, %v5639, %v5640
      %v5642 = vrot.slane %v5486, 1
      %v5643 = vsel %vm1960, %v5640, %v5642
      %v5644 = vrot.slane %v5487, 1
      %v5645 = vsel %vm1960, %v5642, %v5644
      %v5646 = vsel %vm1960, %v5644, %v1961
      %v5648 = vsel %vm2632, 0, %v5521
      %v5651 = vsel %vm2632, %v5348, %v5523
      %v5654 = vsel %vm2632, %v5349, %v5525
      %v5657 = vsel %vm2632, %v5350, %v5527
      %v5660 = vsel %vm2632, %v5351, %v5529
      %v5662 = vsel %vm3826, %v5648, %v5543
      %v5664 = vsel %vm3826, %v5651, %v5545
      %v5666 = vsel %vm3826, %v5654, %v5547
      %v5668 = vsel %vm3826, %v5657, %v5549
      %v5670 = vsel %vm3826, %v5660, %v5551
      %v5672 = vsel %vm3861, %v5662, %v5566
      %v5674 = vsel %vm3861, %v5664, %v5568
      %v5676 = vsel %vm3861, %v5666, %v5570
      %v5678 = vsel %vm3861, %v5668, %v5572
      %v5680 = vsel %vm3861, %v5670, %v5574
      %v5683 = vsel %vm2632, %v5577, %v5605
      %v5686 = vsel %vm2632, %v5581, %v5607
      %v5689 = vsel %vm2632, %v5585, %v5609
      %v5692 = vsel %vm2632, %v5589, %v5611
      %v5695 = vsel %vm2632, %v5588, %v5613
      %v5697 = vsel %vm3826, %v5683, %v5619
      %v5699 = vsel %vm3826, %v5686, %v5621
      %v5701 = vsel %vm3826, %v5689, %v5623
      %v5703 = vsel %vm3826, %v5692, %v5625
      %v5704 = vsel %vm3826, %v5695, %v3692
      %v5706 = vsel %vm3861, %v5697, %v5628
      %v5708 = vsel %vm3861, %v5699, %v5630
      %v5710 = vsel %vm3861, %v5701, %v5632
      %v5712 = vsel %vm3861, %v5703, %v5634
      %v5713 = vsel %vm3861, %v5704, %v3727
      %v5714 = vld [vmem:[%s3] sm:$0xf]
      %v5715 = vld [vmem:[%s3 + $0x4] sm:$0xf]
      %v5716 = vld [vmem:[%s3 + $0x8] sm:$0xf]
      %v5717 = vld [vmem:[%s3 + $0xc] sm:$0xf]
      %v5718 = vld [vmem:[%s3 + $0x10] sm:$0xf]
      %v5719 = vld [vmem:[%s3 + $0x14] sm:$0xf]
      %v5720 = vld [vmem:[%s3 + $0x18] sm:$0xf]
      %v5721 = vld [vmem:[%s3 + $0x1c] sm:$0xf]
      %v5722 = vld [vmem:[%s3 + $0x20] sm:$0xf]
      %v5723 = vld [vmem:[%s3 + $0x24] sm:$0xf]
      %v5724 = vld [vmem:[%s3 + $0x28] sm:$0xf]
      %v5725 = vld [vmem:[%s3 + $0x2c] sm:$0xf]
      %v5726 = vld [vmem:[%s3 + $0x30] sm:$0xf]
      %v5727 = vld [vmem:[%s3 + $0x34] sm:$0xf]
      %v5728 = vld [vmem:[%s3 + $0x38] sm:$0xf]
      %v5729 = vld [vmem:[%s3 + $0x3c] sm:$0xf]
      %v5730 = vld [vmem:[%s3 + $0x40] sm:$0xf]
      %v5731 = vld [vmem:[%s3 + $0x44] sm:$0xf]
      %v5732 = vld [vmem:[%s3 + $0x48] sm:$0xf]
      %v5733 = vld [vmem:[%s3 + $0x4c] sm:$0xf]
      %v5734 = vld [vmem:[%s3 + $0x50] sm:$0xf]
      %v5735 = vld [vmem:[%s3 + $0x54] sm:$0xf]
      %v5736 = vld [vmem:[%s3 + $0x58] sm:$0xf]
      %v5737 = vld [vmem:[%s3 + $0x5c] sm:$0xf]
      %v5738 = vld [vmem:[%s3 + $0x60] sm:$0xf]
      %v5739 = vld [vmem:[%s3 + $0x64] sm:$0xf]
      %v5740 = vld [vmem:[%s3 + $0x68] sm:$0xf]
      %v5741 = vld [vmem:[%s3 + $0x6c] sm:$0xf]
      %v5742 = vld [vmem:[%s3 + $0x70] sm:$0xf]
      %v5743 = vld [vmem:[%s3 + $0x74] sm:$0xf]
      %v5744 = vld [vmem:[%s3 + $0x78] sm:$0xf]
      %v5745 = vld [vmem:[%s3 + $0x7c] sm:$0xf]
      %v5746 = vld [vmem:[%s3 + $0x80] sm:$0xf]
      %v5747 = vld [vmem:[%s3 + $0x84] sm:$0xf]
      %v5748 = vld [vmem:[%s3 + $0x88] sm:$0xf]
      %v5749 = vld [vmem:[%s3 + $0x8c] sm:$0xf]
      %v5750 = vld [vmem:[%s7] sm:$0x1]
      %v5752 = vlaneseq
      %v5753 = vshrl.u32 %v5752, 7
      %v5754 = vsub.s32 0, %v5753
      %v5755 = vrot.slane %v5750, %v5754
      %v5757 = vshrl.u32 %v5672, 16
      %v5759 = vrot.slane %v5757, 3
      %v5760 = vshll.u32 %v5672, 16
      %v5762 = vrot.slane %v5760, 4
      %v5763 = vor.u32 %v5759, %v5762
      %v5764 = vshrl.u32 %v5674, 16
      %v5766 = vrot.slane %v5764, 3
      %v5767 = vshll.u32 %v5674, 16
      %v5769 = vrot.slane %v5767, 4
      %v5770 = vor.u32 %v5766, %v5769
      %v5771 = vsel %vm1531, %v5763, %v5770
      %v5772 = vshrl.u32 %v5706, 16
      %v5774 = vrot.slane %v5772, 3
      %v5775 = vshll.u32 %v5706, 16
      %v5777 = vrot.slane %v5775, 4
      %v5778 = vor.u32 %v5774, %v5777
      %v5779 = vshrl.u32 %v5708, 16
      %v5781 = vrot.slane %v5779, 3
      %v5782 = vshll.u32 %v5708, 16
      %v5784 = vrot.slane %v5782, 4
      %v5785 = vor.u32 %v5781, %v5784
      %v5786 = vsel %vm1531, %v5778, %v5785
      %v5788 = vshrl.u32 %v5641, 16
      %v5790 = vrot.slane %v5788, 3
      %v5791 = vshll.u32 %v5641, 16
      %v5793 = vrot.slane %v5791, 4
      %v5794 = vor.u32 %v5790, %v5793
      %v5796 = vshrl.u32 %v5643, 16
      %v5798 = vrot.slane %v5796, 3
      %v5799 = vshll.u32 %v5643, 16
      %v5801 = vrot.slane %v5799, 4
      %v5802 = vor.u32 %v5798, %v5801
      %v5803 = vsel %vm1531, %v5794, %v5802
      %v5804 = vshrl.u32 %v5676, 16
      %v5806 = vrot.slane %v5804, 3
      %v5807 = vshll.u32 %v5676, 16
      %v5809 = vrot.slane %v5807, 4
      %v5810 = vor.u32 %v5806, %v5809
      %v5811 = vsel %vm1531, %v5770, %v5810
      %v5812 = vshrl.u32 %v5710, 16
      %v5814 = vrot.slane %v5812, 3
      %v5815 = vshll.u32 %v5710, 16
      %v5817 = vrot.slane %v5815, 4
      %v5818 = vor.u32 %v5814, %v5817
      %v5819 = vsel %vm1531, %v5785, %v5818
      %v5821 = vshrl.u32 %v5645, 16
      %v5823 = vrot.slane %v5821, 3
      %v5824 = vshll.u32 %v5645, 16
      %v5826 = vrot.slane %v5824, 4
      %v5827 = vor.u32 %v5823, %v5826
      %v5828 = vsel %vm1531, %v5802, %v5827
      %v5829 = vshrl.u32 %v5678, 16
      %v5831 = vrot.slane %v5829, 3
      %v5832 = vshll.u32 %v5678, 16
      %v5834 = vrot.slane %v5832, 4
      %v5835 = vor.u32 %v5831, %v5834
      %v5836 = vsel %vm1531, %v5810, %v5835
      %v5837 = vshrl.u32 %v5712, 16
      %v5839 = vrot.slane %v5837, 3
      %v5840 = vshll.u32 %v5712, 16
      %v5842 = vrot.slane %v5840, 4
      %v5843 = vor.u32 %v5839, %v5842
      %v5844 = vsel %vm1531, %v5818, %v5843
      %v5846 = vshrl.u32 %v5646, 16
      %v5848 = vrot.slane %v5846, 3
      %v5849 = vshll.u32 %v5646, 16
      %v5851 = vrot.slane %v5849, 4
      %v5852 = vor.u32 %v5848, %v5851
      %v5853 = vsel %vm1531, %v5827, %v5852
      %v5854 = vshrl.u32 %v5680, 16
      %v5856 = vrot.slane %v5854, 3
      %v5857 = vshll.u32 %v5680, 16
      %v5859 = vrot.slane %v5857, 4
      %v5860 = vor.u32 %v5856, %v5859
      %v5861 = vsel %vm1531, %v5835, %v5860
      %v5862 = vshrl.u32 %v5713, 16
      %v5864 = vrot.slane %v5862, 3
      %v5865 = vshll.u32 %v5713, 16
      %v5867 = vrot.slane %v5865, 4
      %v5868 = vor.u32 %v5864, %v5867
      %v5869 = vsel %vm1531, %v5843, %v5868
      %v5870 = vsel %vm1531, %v5852, %v4478
      %v5915 = vunpack.c.l.b16 %v5714
      %v5916 = vunpack.c.l.b16 %v5715
      %v5917 = vunpack.c.l.b16 %v5716
      %v5918 = vunpack.c.l.b16 %v5717
      %v5919 = vunpack.c.l.b16 %v5718
      %v5920 = vunpack.c.l.b16 %v5719
      %v5921 = vunpack.c.l.b16 %v5720
      %v5922 = vunpack.c.l.b16 %v5721
      %v5923 = vunpack.c.l.b16 %v5722
      %v5924 = vunpack.c.l.b16 %v5723
      %v5925 = vunpack.c.l.b16 %v5724
      %v5926 = vunpack.c.l.b16 %v5725
      %v5927 = vunpack.c.l.b16 %v5726
      %v5928 = vunpack.c.l.b16 %v5727
      %v5929 = vunpack.c.l.b16 %v5728
      %v5930 = vunpack.c.l.b16 %v5729
      %v5931 = vunpack.c.l.b16 %v5730
      %v5932 = vunpack.c.l.b16 %v5731
      %v5933 = vunpack.c.l.b16 %v5732
      %v5934 = vunpack.c.l.b16 %v5733
      %v5935 = vunpack.c.l.b16 %v5734
      %v5936 = vunpack.c.l.b16 %v5735
      %v5937 = vunpack.c.l.b16 %v5736
      %v5938 = vunpack.c.l.b16 %v5737
      %v5939 = vunpack.c.l.b16 %v5738
      %v5940 = vunpack.c.l.b16 %v5739
      %v5941 = vunpack.c.l.b16 %v5740
      %v5942 = vunpack.c.l.b16 %v5741
      %v5943 = vunpack.c.l.b16 %v5742
      %v5944 = vunpack.c.l.b16 %v5743
      %v5945 = vunpack.c.l.b16 %v5744
      %v5946 = vunpack.c.l.b16 %v5745
      %v5947 = vunpack.c.l.b16 %v5746
      %v5948 = vunpack.c.l.b16 %v5747
      %v5949 = vunpack.c.l.b16 %v5748
      %v5950 = vunpack.c.l.b16 %v5749
      %v5951 = vpack.c.b16 %v5916, %v5915
      %v5952 = vpack.c.b16 %v5918, %v5917
      %v5953 = vpack.c.b16 %v5920, %v5919
      %v5954 = vpack.c.b16 %v5922, %v5921
      %v5955 = vpack.c.b16 %v5924, %v5923
      %v5956 = vpack.c.b16 %v5926, %v5925
      %v5957 = vpack.c.b16 %v5928, %v5927
      %v5958 = vpack.c.b16 %v5930, %v5929
      %v5959 = vpack.c.b16 %v5932, %v5931
      %v5960 = vpack.c.b16 %v5934, %v5933
      %v5961 = vpack.c.b16 %v5936, %v5935
      %v5962 = vpack.c.b16 %v5938, %v5937
      %v5963 = vpack.c.b16 %v5940, %v5939
      %v5964 = vpack.c.b16 %v5942, %v5941
      %v5965 = vpack.c.b16 %v5944, %v5943
      %v5966 = vpack.c.b16 %v5946, %v5945
      %v5967 = vpack.c.b16 %v5948, %v5947
      %v5968 = vpack.c.b16 %v5950, %v5949
      %v5988 = vsel %vm2632, %v5803, 0
      %v5991 = vsel %vm2632, %v5828, 0
      %v5994 = vsel %vm2632, %v5853, 0
      %v5997 = vsel %vm2632, %v5870, 0
      %5999 = vmatprep.subr.bf16.mxu0 0
      %6000 = vmatpush1.bf16.msra.mxu0 %v5951
      %6001 = vmatprep.subr.bf16.mxu0 0
      %6002 = vmatpush1.bf16.msra.mxu0 %v5952
      %6003 = vmatprep.subr.bf16.mxu0 0
      %6004 = vmatpush1.bf16.msra.mxu0 %v5953
      %6005 = vmatprep.subr.bf16.mxu0 0
      %6006 = vmatpush1.bf16.msra.mxu0 %v5954
      %6007 = vmatprep.subr.bf16.mxu0 0
      %6008 = vmatpush1.bf16.msra.mxu0 %v5955
      %6009 = vmatprep.subr.bf16.mxu0 0
      %6010 = vmatpush1.bf16.msra.mxu0 %v5956
      %6011 = vmatprep.subr.bf16.mxu0 0
      %6012 = vmatpush1.bf16.msra.mxu0 %v5957
      %6013 = vmatprep.subr.bf16.mxu0 0
      %6014 = vmatpush1.bf16.msra.mxu0 %v5958
      %6015 = vmatprep.subr.bf16.mxu0 0
      %6016 = vmatpush1.bf16.msra.mxu0 %v5959
      %6017 = vmatprep.subr.bf16.mxu0 0
      %6018 = vmatpush1.bf16.msra.mxu0 %v5960
      %6019 = vmatprep.subr.bf16.mxu0 0
      %6020 = vmatpush1.bf16.msra.mxu0 %v5961
      %6021 = vmatprep.subr.bf16.mxu0 0
      %6022 = vmatpush1.bf16.msra.mxu0 %v5962
      %6023 = vmatprep.subr.bf16.mxu0 0
      %6024 = vmatpush1.bf16.msra.mxu0 %v5963
      %6025 = vmatprep.subr.bf16.mxu0 0
      %6026 = vmatpush1.bf16.msra.mxu0 %v5964
      %6027 = vmatprep.subr.bf16.mxu0 0
      %6028 = vmatpush1.bf16.msra.mxu0 %v5965
      %6029 = vmatprep.subr.bf16.mxu0 0
      %6030 = vmatpush1.bf16.msra.mxu0 %v5966
      %6031 = vmatprep.mubr.bf16.mxu0 %v5786
      %6032 = vmatmul.mubr.bf16.gmra.mrb[0].mxu0 %v5771
      %v6033 = vpop.f32.mrb[0].mxu0
      %v6034 = vadd.f32 %v5755, %v6033
      %v6035 = vpop.f32.mrb[0].mxu0
      %v6036 = vpop.f32.mrb[0].mxu0
      %v6037 = vadd.f32 %v5755, %v6036
      %v6038 = vpop.f32.mrb[0].mxu0
      %6039 = vmatprep.mubr.bf16.mxu0 %v5819
      %6040 = vmatmul.mubr.bf16.gmra.mrb[0].mxu0 %v5811
      %v6041 = vpop.f32.mrb[0].mxu0
      %v6042 = vadd.f32 %v5755, %v6041
      %v6043 = vpop.f32.mrb[0].mxu0
      %v6044 = vpop.f32.mrb[0].mxu0
      %v6045 = vadd.f32 %v5755, %v6044
      %v6046 = vpop.f32.mrb[0].mxu0
      %6047 = vmatprep.mubr.bf16.mxu0 %v5844
      %6048 = vmatmul.mubr.bf16.gmra.mrb[0].mxu0 %v5836
      %v6049 = vpop.f32.mrb[0].mxu0
      %v6050 = vadd.f32 %v5755, %v6049
      %v6051 = vpop.f32.mrb[0].mxu0
      %v6052 = vpop.f32.mrb[0].mxu0
      %v6053 = vadd.f32 %v5755, %v6052
      %v6054 = vpop.f32.mrb[0].mxu0
      %6055 = vmatprep.mubr.bf16.mxu0 %v5869
      %6056 = vmatmul.mubr.bf16.gmra.mrb[0].mxu0 %v5861
      %v6057 = vpop.f32.mrb[0].mxu0
      %v6058 = vadd.f32 %v5755, %v6057
      %v6059 = vpop.f32.mrb[0].mxu0
      %v6060 = vpop.f32.mrb[0].mxu0
      %v6061 = vadd.f32 %v5755, %v6060
      %v6062 = vpop.f32.mrb[0].mxu0
      %6063 = vdwg.mxu0
      %6064 = vmatprep.subr.bf16.mxu0 0
      %6065 = vmatpush1.bf16.msra.mxu0 %v5967
      %6066 = vmatprep.subr.bf16.mxu0 0
      %6067 = vmatpush1.bf16.msra.mxu0 %v5968
      %6068 = vmatprep.subr.bf16.mxu0 0
      %6069 = vmatpush1.bf16.msra.mxu0 0
      %6070 = vmatprep.subr.bf16.mxu0 0
      %6071 = vmatpush1.bf16.msra.mxu0 0
      %6072 = vmatprep.subr.bf16.mxu0 0
      %6073 = vmatpush1.bf16.msra.mxu0 0
      %6074 = vmatprep.subr.bf16.mxu0 0
      %6075 = vmatpush1.bf16.msra.mxu0 0
      %6076 = vmatprep.subr.bf16.mxu0 0
      %6077 = vmatpush1.bf16.msra.mxu0 0
      %6078 = vmatprep.subr.bf16.mxu0 0
      %6079 = vmatpush1.bf16.msra.mxu0 0
      %6080 = vmatprep.subr.bf16.mxu0 0
      %6081 = vmatpush1.bf16.msra.mxu0 0
      %6082 = vmatprep.subr.bf16.mxu0 0
      %6083 = vmatpush1.bf16.msra.mxu0 0
      %6084 = vmatprep.subr.bf16.mxu0 0
      %6085 = vmatpush1.bf16.msra.mxu0 0
      %6086 = vmatprep.subr.bf16.mxu0 0
      %6087 = vmatpush1.bf16.msra.mxu0 0
      %6088 = vmatprep.subr.bf16.mxu0 0
      %6089 = vmatpush1.bf16.msra.mxu0 0
      %6090 = vmatprep.subr.bf16.mxu0 0
      %6091 = vmatpush1.bf16.msra.mxu0 0
      %6092 = vmatprep.subr.bf16.mxu0 0
      %6093 = vmatpush1.bf16.msra.mxu0 0
      %6094 = vmatprep.subr.bf16.mxu0 0
      %6095 = vmatpush1.bf16.msra.mxu0 0
      %6096 = vmatprep.mubr.bf16.mxu0 0
      %6097 = vmatmul.mubr.bf16.gmra.mrb[0].mxu0 %v5988
      %v6098 = vpop.f32.mrb[0].mxu0
      %v6099 = vadd.f32 %v6034, %v6098
      %v6100 = vpop.f32.mrb[0].mxu0
      %v6101 = vpop.f32.mrb[0].mxu0
      %v6102 = vadd.f32 %v6037, %v6101
      %v6103 = vpop.f32.mrb[0].mxu0
      %6104 = vmatprep.mubr.bf16.mxu0 0
      %6105 = vmatmul.mubr.bf16.gmra.mrb[0].mxu0 %v5991
      %v6106 = vpop.f32.mrb[0].mxu0
      %v6107 = vadd.f32 %v6042, %v6106
      %v6108 = vpop.f32.mrb[0].mxu0
      %v6109 = vpop.f32.mrb[0].mxu0
      %v6110 = vadd.f32 %v6045, %v6109
      %v6111 = vpop.f32.mrb[0].mxu0
      %6112 = vmatprep.mubr.bf16.mxu0 0
      %6113 = vmatmul.mubr.bf16.gmra.mrb[0].mxu0 %v5994
      %v6114 = vpop.f32.mrb[0].mxu0
      %v6115 = vadd.f32 %v6050, %v6114
      %v6116 = vpop.f32.mrb[0].mxu0
      %v6117 = vpop.f32.mrb[0].mxu0
      %v6118 = vadd.f32 %v6053, %v6117
      %v6119 = vpop.f32.mrb[0].mxu0
      %6120 = vmatprep.mubr.bf16.mxu0 0
      %6121 = vmatmul.mubr.bf16.gmra.mrb[0].mxu0 %v5997
      %v6122 = vpop.f32.mrb[0].mxu0
      %v6123 = vadd.f32 %v6058, %v6122
      %v6124 = vpop.f32.mrb[0].mxu0
      %v6125 = vpop.f32.mrb[0].mxu0
      %v6126 = vadd.f32 %v6061, %v6125
      %v6127 = vpop.f32.mrb[0].mxu0
      %6128 = vdwg.mxu0
      %v6129 = vmax.f32 %v6099, 0.0
      %v6130 = vmax.f32 %v6102, 0.0
      %v6131 = vmax.f32 %v6107, 0.0
      %v6132 = vmax.f32 %v6110, 0.0
      %v6133 = vmax.f32 %v6115, 0.0
      %v6134 = vmax.f32 %v6118, 0.0
      %v6135 = vmax.f32 %v6123, 0.0
      %v6136 = vmax.f32 %v6126, 0.0
      %v6137 = vpack.c.bf16 %v6130, %v6129
      %v6138 = vpack.c.bf16 %v6132, %v6131
      %v6139 = vpack.c.bf16 %v6134, %v6133
      %v6140 = vpack.c.bf16 %v6136, %v6135
      %v6141 = vsel %vm5344, %v6137, 0
      %v6142 = vsel %vm5345, %v6138, 0
      %v6143 = vsel %vm5346, %v6139, 0
      %v6144 = vsel %vm5347, %v6140, 0
      %v6145 = vsel %vm5431, %v6137, 0
      %v6146 = vsel %vm5432, %v6138, 0
      %v6147 = vsel %vm5433, %v6139, 0
      %v6148 = vsel %vm5434, %v6140, 0
      %v6149 = vsel %vm5450, %v6137, 0
      %v6150 = vsel %vm5451, %v6138, 0
      %v6151 = vsel %vm5452, %v6139, 0
      %v6152 = vsel %vm5453, %v6140, 0
      %v6153 = vsel %vm5470, %v6137, 0
      %v6154 = vsel %vm5471, %v6138, 0
      %v6155 = vsel %vm5472, %v6139, 0
      %v6156 = vsel %vm5473, %v6140, 0
      %v6157 = vsel %vm5478, %v6137, 0
      %v6158 = vsel %vm5344, %v6138, 0
      %v6159 = vsel %vm5345, %v6139, 0
      %v6160 = vsel %vm5346, %v6140, 0
      %v6161 = vsel %vm5483, %v6137, 0
      %v6162 = vsel %vm5431, %v6138, 0
      %v6163 = vsel %vm5432, %v6139, 0
      %v6164 = vsel %vm5433, %v6140, 0
      %v6166 = vshll.u32 %v6137, 16
      %v6168 = vrot.slane %v6166, 1
      %v6169 = vsel %vm1775, %v1781, %v6168
      %v6170 = vshrl.u32 %v6137, 16
      %v6172 = vor.u32 %v6170, %v6168
      %v6174 = vshll.u32 %v6138, 16
      %v6176 = vrot.slane %v6174, 1
      %v6177 = vsel %vm1775, %v6172, %v6176
      %v6178 = vshrl.u32 %v6138, 16
      %v6180 = vor.u32 %v6178, %v6176
      %v6182 = vshll.u32 %v6139, 16
      %v6184 = vrot.slane %v6182, 1
      %v6185 = vsel %vm1775, %v6180, %v6184
      %v6186 = vshrl.u32 %v6139, 16
      %v6188 = vor.u32 %v6186, %v6184
      %v6190 = vshll.u32 %v6140, 16
      %v6192 = vrot.slane %v6190, 1
      %v6193 = vsel %vm1775, %v6188, %v6192
      %v6194 = vshrl.u32 %v6140, 16
      %v6196 = vor.u32 %v6194, %v6192
      %6197 = vrot.lane.b32.xlu0 %v6169, 64
      %v6198 = vpop.permute.xlu0 %6197
      %6199 = vrot.lane.b32.xlu0 %v6177, 64
      %v6200 = vpop.permute.xlu0 %6199
      %6201 = vrot.lane.b32.xlu0 %v6185, 64
      %v6202 = vpop.permute.xlu0 %6201
      %6203 = vrot.lane.b32.xlu0 %v6193, 64
      %v6204 = vpop.permute.xlu0 %6203
      %6205 = vrot.lane.b32.xlu0 %v6196, 64
      %v6206 = vpop.permute.xlu0 %6205
      %v6211 = vrot.slane %v6145, 1
      %v6212 = vsel %vm1960, %v1961, %v6211
      %v6213 = vrot.slane %v6146, 1
      %v6214 = vsel %vm1960, %v6211, %v6213
      %v6215 = vrot.slane %v6147, 1
      %v6216 = vsel %vm1960, %v6213, %v6215
      %v6217 = vrot.slane %v6148, 1
      %v6218 = vsel %vm1960, %v6215, %v6217
      %v6223 = vrot.slane %v6149, 4
      %v6224 = vsel %vm3107, %v5556, %v6223
      %v6225 = vrot.slane %v6150, 4
      %v6226 = vsel %vm3107, %v6223, %v6225
      %v6227 = vrot.slane %v6151, 4
      %v6228 = vsel %vm3107, %v6225, %v6227
      %v6229 = vrot.slane %v6152, 4
      %v6230 = vsel %vm3107, %v6227, %v6229
      %6231 = vrot.lane.b32.xlu0 %v6224, 64
      %v6232 = vpop.permute.xlu0 %6231
      %6233 = vrot.lane.b32.xlu0 %v6226, 64
      %v6234 = vpop.permute.xlu0 %6233
      %6235 = vrot.lane.b32.xlu0 %v6228, 64
      %v6236 = vpop.permute.xlu0 %6235
      %6237 = vrot.lane.b32.xlu0 %v6230, 64
      %v6238 = vpop.permute.xlu0 %6237
      %6239 = vrot.lane.b32.xlu0 %v6229, 64
      %v6240 = vpop.permute.xlu0 %6239
      %v6241 = vrot.slane %v6170, 4
      %v6242 = vrot.slane %v6166, 5
      %v6243 = vor.u32 %v6241, %v6242
      %v6244 = vrot.slane %v6178, 4
      %v6245 = vrot.slane %v6174, 5
      %v6246 = vor.u32 %v6244, %v6245
      %v6247 = vsel %vm1179, %v6243, %v6246
      %v6248 = vrot.slane %v6186, 4
      %v6249 = vrot.slane %v6182, 5
      %v6250 = vor.u32 %v6248, %v6249
      %v6251 = vsel %vm1179, %v6246, %v6250
      %v6252 = vrot.slane %v6194, 4
      %v6253 = vrot.slane %v6190, 5
      %v6254 = vor.u32 %v6252, %v6253
      %v6255 = vsel %vm1179, %v6250, %v6254
      %v6260 = vrot.slane %v6153, 5
      %v6261 = vrot.slane %v6154, 5
      %v6262 = vsel %vm5594, %v6260, %v6261
      %v6263 = vrot.slane %v6155, 5
      %v6264 = vsel %vm5594, %v6261, %v6263
      %v6265 = vrot.slane %v6156, 5
      %v6266 = vsel %vm5594, %v6263, %v6265
      %v6267 = vsel %vm5594, %v6265, %v5602
      %6268 = vrot.lane.b32.xlu0 %v6260, 64
      %v6269 = vpop.permute.xlu0 %6268
      %6270 = vrot.lane.b32.xlu0 %v6262, 64
      %v6271 = vpop.permute.xlu0 %6270
      %6272 = vrot.lane.b32.xlu0 %v6264, 64
      %v6273 = vpop.permute.xlu0 %6272
      %6274 = vrot.lane.b32.xlu0 %v6266, 64
      %v6275 = vpop.permute.xlu0 %6274
      %6276 = vrot.lane.b32.xlu0 %v6267, 64
      %v6277 = vpop.permute.xlu0 %6276
      %v6278 = vsel %vm1775, %v6196, %v1780
      %6279 = vrot.lane.b32.xlu0 %v6278, 64
      %v6280 = vpop.permute.xlu0 %6279
      %6281 = vrot.lane.b32.xlu0 %v1781, 64
      %v6282 = vpop.permute.xlu0 %6281
      %v6287 = vrot.slane %v6161, 1
      %v6288 = vrot.slane %v6162, 1
      %v6289 = vsel %vm1960, %v6287, %v6288
      %v6290 = vrot.slane %v6163, 1
      %v6291 = vsel %vm1960, %v6288, %v6290
      %v6292 = vrot.slane %v6164, 1
      %v6293 = vsel %vm1960, %v6290, %v6292
      %v6294 = vsel %vm1960, %v6292, %v1961
      %v6296 = vsel %vm3826, 0, %v6198
      %v6299 = vsel %vm3826, %v6141, %v6200
      %v6302 = vsel %vm3826, %v6142, %v6202
      %v6305 = vsel %vm3826, %v6143, %v6204
      %v6308 = vsel %vm3826, %v6144, %v6206
      %v6311 = vsel %vm3826, %v6212, %v6232
      %v6314 = vsel %vm3826, %v6214, %v6234
      %v6317 = vsel %vm3826, %v6216, %v6236
      %v6320 = vsel %vm3826, %v6218, %v6238
      %v6323 = vsel %vm3826, %v6217, %v6240
      %v6326 = vsel %vm3826, %v6243, %v6269
      %v6329 = vsel %vm3826, %v6247, %v6271
      %v6332 = vsel %vm3826, %v6251, %v6273
      %v6335 = vsel %vm3826, %v6255, %v6275
      %v6338 = vsel %vm3826, %v6254, %v6277
      %v6340 = vsel %vm3826, %v6157, %v6200
      %v6342 = vsel %vm3826, %v6158, %v6202
      %v6344 = vsel %vm3826, %v6159, %v6204
      %v6347 = vsel %vm3826, %v6160, %v6280
      %v6349 = vsel %vm3826, 0, %v6282
      %v6350 = vld [vmem:[%s4] sm:$0xf]
      %v6351 = vld [vmem:[%s4 + $0x4] sm:$0xf]
      %v6352 = vld [vmem:[%s4 + $0x8] sm:$0xf]
      %v6353 = vld [vmem:[%s4 + $0xc] sm:$0xf]
      %v6354 = vld [vmem:[%s4 + $0x10] sm:$0xf]
      %v6355 = vld [vmem:[%s4 + $0x14] sm:$0xf]
      %v6356 = vld [vmem:[%s4 + $0x18] sm:$0xf]
      %v6357 = vld [vmem:[%s4 + $0x1c] sm:$0xf]
      %v6358 = vld [vmem:[%s4 + $0x20] sm:$0xf]
      %v6359 = vld [vmem:[%s4 + $0x24] sm:$0xf]
      %v6360 = vld [vmem:[%s4 + $0x28] sm:$0xf]
      %v6361 = vld [vmem:[%s4 + $0x2c] sm:$0xf]
      %v6362 = vld [vmem:[%s4 + $0x30] sm:$0xf]
      %v6363 = vld [vmem:[%s4 + $0x34] sm:$0xf]
      %v6364 = vld [vmem:[%s4 + $0x38] sm:$0xf]
      %v6365 = vld [vmem:[%s4 + $0x3c] sm:$0xf]
      %v6366 = vld [vmem:[%s4 + $0x40] sm:$0xf]
      %v6367 = vld [vmem:[%s4 + $0x44] sm:$0xf]
      %v6368 = vld [vmem:[%s4 + $0x48] sm:$0xf]
      %v6369 = vld [vmem:[%s4 + $0x4c] sm:$0xf]
      %v6370 = vld [vmem:[%s4 + $0x50] sm:$0xf]
      %v6371 = vld [vmem:[%s4 + $0x54] sm:$0xf]
      %v6372 = vld [vmem:[%s4 + $0x58] sm:$0xf]
      %v6373 = vld [vmem:[%s4 + $0x5c] sm:$0xf]
      %v6374 = vld [vmem:[%s4 + $0x60] sm:$0xf]
      %v6375 = vld [vmem:[%s4 + $0x64] sm:$0xf]
      %v6376 = vld [vmem:[%s4 + $0x68] sm:$0xf]
      %v6377 = vld [vmem:[%s4 + $0x6c] sm:$0xf]
      %v6378 = vld [vmem:[%s4 + $0x70] sm:$0xf]
      %v6379 = vld [vmem:[%s4 + $0x74] sm:$0xf]
      %v6380 = vld [vmem:[%s4 + $0x78] sm:$0xf]
      %v6381 = vld [vmem:[%s4 + $0x7c] sm:$0xf]
      %v6382 = vld [vmem:[%s4 + $0x80] sm:$0xf]
      %v6383 = vld [vmem:[%s4 + $0x84] sm:$0xf]
      %v6384 = vld [vmem:[%s4 + $0x88] sm:$0xf]
      %v6385 = vld [vmem:[%s4 + $0x8c] sm:$0xf]
      %v6386 = vld [vmem:[%s4 + $0x90] sm:$0xf]
      %v6387 = vld [vmem:[%s4 + $0x94] sm:$0xf]
      %v6388 = vld [vmem:[%s4 + $0x98] sm:$0xf]
      %v6389 = vld [vmem:[%s4 + $0x9c] sm:$0xf]
      %v6390 = vld [vmem:[%s4 + $0xa0] sm:$0xf]
      %v6391 = vld [vmem:[%s4 + $0xa4] sm:$0xf]
      %v6392 = vld [vmem:[%s4 + $0xa8] sm:$0xf]
      %v6393 = vld [vmem:[%s4 + $0xac] sm:$0xf]
      %v6394 = vld [vmem:[%s4 + $0xb0] sm:$0xf]
      %v6395 = vld [vmem:[%s4 + $0xb4] sm:$0xf]
      %v6396 = vld [vmem:[%s4 + $0xb8] sm:$0xf]
      %v6397 = vld [vmem:[%s4 + $0xbc] sm:$0xf]
      %v6398 = vld [vmem:[%s4 + $0xc0] sm:$0xf]
      %v6399 = vld [vmem:[%s4 + $0xc4] sm:$0xf]
      %v6400 = vld [vmem:[%s4 + $0xc8] sm:$0xf]
      %v6401 = vld [vmem:[%s4 + $0xcc] sm:$0xf]
      %v6402 = vld [vmem:[%s4 + $0xd0] sm:$0xf]
      %v6403 = vld [vmem:[%s4 + $0xd4] sm:$0xf]
      %v6404 = vld [vmem:[%s4 + $0xd8] sm:$0xf]
      %v6405 = vld [vmem:[%s4 + $0xdc] sm:$0xf]
      %v6406 = vld [vmem:[%s4 + $0xe0] sm:$0xf]
      %v6407 = vld [vmem:[%s4 + $0xe4] sm:$0xf]
      %v6408 = vld [vmem:[%s4 + $0xe8] sm:$0xf]
      %v6409 = vld [vmem:[%s4 + $0xec] sm:$0xf]
      %v6410 = vld [vmem:[%s4 + $0xf0] sm:$0xf]
      %v6411 = vld [vmem:[%s4 + $0xf4] sm:$0xf]
      %v6412 = vld [vmem:[%s4 + $0xf8] sm:$0xf]
      %v6413 = vld [vmem:[%s4 + $0xfc] sm:$0xf]
      %v6414 = vld [vmem:[%s4 + $0x100] sm:$0xf]
      %v6415 = vld [vmem:[%s4 + $0x104] sm:$0xf]
      %v6416 = vld [vmem:[%s4 + $0x108] sm:$0xf]
      %v6417 = vld [vmem:[%s4 + $0x10c] sm:$0xf]
      %v6418 = vld [vmem:[%s4 + $0x110] sm:$0xf]
      %v6419 = vld [vmem:[%s4 + $0x114] sm:$0xf]
      %v6420 = vld [vmem:[%s4 + $0x118] sm:$0xf]
      %v6421 = vld [vmem:[%s4 + $0x11c] sm:$0xf]
      %v6422 = vld [vmem:[%s8] sm:$0x1]
      %v6424 = vlaneseq
      %v6425 = vshrl.u32 %v6424, 7
      %v6426 = vsub.s32 0, %v6425
      %v6427 = vrot.slane %v6422, %v6426
      %v6429 = vshrl.u32 %v6296, 16
      %v6431 = vrot.slane %v6429, 3
      %v6432 = vshll.u32 %v6296, 16
      %v6434 = vrot.slane %v6432, 4
      %v6435 = vor.u32 %v6431, %v6434
      %v6436 = vshrl.u32 %v6299, 16
      %v6438 = vrot.slane %v6436, 3
      %v6439 = vshll.u32 %v6299, 16
      %v6441 = vrot.slane %v6439, 4
      %v6442 = vor.u32 %v6438, %v6441
      %v6443 = vsel %vm1531, %v6435, %v6442
      %v6444 = vshrl.u32 %v6311, 16
      %v6446 = vrot.slane %v6444, 3
      %v6447 = vshll.u32 %v6311, 16
      %v6449 = vrot.slane %v6447, 4
      %v6450 = vor.u32 %v6446, %v6449
      %v6451 = vshrl.u32 %v6314, 16
      %v6453 = vrot.slane %v6451, 3
      %v6454 = vshll.u32 %v6314, 16
      %v6456 = vrot.slane %v6454, 4
      %v6457 = vor.u32 %v6453, %v6456
      %v6458 = vsel %vm1531, %v6450, %v6457
      %v6459 = vshrl.u32 %v6326, 16
      %v6461 = vrot.slane %v6459, 3
      %v6462 = vshll.u32 %v6326, 16
      %v6464 = vrot.slane %v6462, 4
      %v6465 = vor.u32 %v6461, %v6464
      %v6466 = vshrl.u32 %v6329, 16
      %v6468 = vrot.slane %v6466, 3
      %v6469 = vshll.u32 %v6329, 16
      %v6471 = vrot.slane %v6469, 4
      %v6472 = vor.u32 %v6468, %v6471
      %v6473 = vsel %vm1531, %v6465, %v6472
      %v6474 = vshrl.u32 %v6340, 16
      %v6476 = vrot.slane %v6474, 3
      %v6477 = vshll.u32 %v6340, 16
      %v6479 = vrot.slane %v6477, 4
      %v6480 = vor.u32 %v6476, %v6479
      %v6481 = vshrl.u32 %v6342, 16
      %v6483 = vrot.slane %v6481, 3
      %v6484 = vshll.u32 %v6342, 16
      %v6486 = vrot.slane %v6484, 4
      %v6487 = vor.u32 %v6483, %v6486
      %v6488 = vsel %vm1531, %v6480, %v6487
      %v6490 = vshrl.u32 %v6289, 16
      %v6492 = vrot.slane %v6490, 3
      %v6493 = vshll.u32 %v6289, 16
      %v6495 = vrot.slane %v6493, 4
      %v6496 = vor.u32 %v6492, %v6495
      %v6498 = vshrl.u32 %v6291, 16
      %v6500 = vrot.slane %v6498, 3
      %v6501 = vshll.u32 %v6291, 16
      %v6503 = vrot.slane %v6501, 4
      %v6504 = vor.u32 %v6500, %v6503
      %v6505 = vsel %vm1531, %v6496, %v6504
      %v6506 = vshrl.u32 %v6302, 16
      %v6508 = vrot.slane %v6506, 3
      %v6509 = vshll.u32 %v6302, 16
      %v6511 = vrot.slane %v6509, 4
      %v6512 = vor.u32 %v6508, %v6511
      %v6513 = vsel %vm1531, %v6442, %v6512
      %v6514 = vshrl.u32 %v6317, 16
      %v6516 = vrot.slane %v6514, 3
      %v6517 = vshll.u32 %v6317, 16
      %v6519 = vrot.slane %v6517, 4
      %v6520 = vor.u32 %v6516, %v6519
      %v6521 = vsel %vm1531, %v6457, %v6520
      %v6522 = vshrl.u32 %v6332, 16
      %v6524 = vrot.slane %v6522, 3
      %v6525 = vshll.u32 %v6332, 16
      %v6527 = vrot.slane %v6525, 4
      %v6528 = vor.u32 %v6524, %v6527
      %v6529 = vsel %vm1531, %v6472, %v6528
      %v6530 = vshrl.u32 %v6344, 16
      %v6532 = vrot.slane %v6530, 3
      %v6533 = vshll.u32 %v6344, 16
      %v6535 = vrot.slane %v6533, 4
      %v6536 = vor.u32 %v6532, %v6535
      %v6537 = vsel %vm1531, %v6487, %v6536
      %v6539 = vshrl.u32 %v6293, 16
      %v6541 = vrot.slane %v6539, 3
      %v6542 = vshll.u32 %v6293, 16
      %v6544 = vrot.slane %v6542, 4
      %v6545 = vor.u32 %v6541, %v6544
      %v6546 = vsel %vm1531, %v6504, %v6545
      %v6547 = vshrl.u32 %v6305, 16
      %v6549 = vrot.slane %v6547, 3
      %v6550 = vshll.u32 %v6305, 16
      %v6552 = vrot.slane %v6550, 4
      %v6553 = vor.u32 %v6549, %v6552
      %v6554 = vsel %vm1531, %v6512, %v6553
      %v6555 = vshrl.u32 %v6320, 16
      %v6557 = vrot.slane %v6555, 3
      %v6558 = vshll.u32 %v6320, 16
      %v6560 = vrot.slane %v6558, 4
      %v6561 = vor.u32 %v6557, %v6560
      %v6562 = vsel %vm1531, %v6520, %v6561
      %v6563 = vshrl.u32 %v6335, 16
      %v6565 = vrot.slane %v6563, 3
      %v6566 = vshll.u32 %v6335, 16
      %v6568 = vrot.slane %v6566, 4
      %v6569 = vor.u32 %v6565, %v6568
      %v6570 = vsel %vm1531, %v6528, %v6569
      %v6571 = vshrl.u32 %v6347, 16
      %v6573 = vrot.slane %v6571, 3
      %v6574 = vshll.u32 %v6347, 16
      %v6576 = vrot.slane %v6574, 4
      %v6577 = vor.u32 %v6573, %v6576
      %v6578 = vsel %vm1531, %v6536, %v6577
      %v6580 = vshrl.u32 %v6294, 16
      %v6582 = vrot.slane %v6580, 3
      %v6583 = vshll.u32 %v6294, 16
      %v6585 = vrot.slane %v6583, 4
      %v6586 = vor.u32 %v6582, %v6585
      %v6587 = vsel %vm1531, %v6545, %v6586
      %v6588 = vshrl.u32 %v6308, 16
      %v6590 = vrot.slane %v6588, 3
      %v6591 = vshll.u32 %v6308, 16
      %v6593 = vrot.slane %v6591, 4
      %v6594 = vor.u32 %v6590, %v6593
      %v6595 = vsel %vm1531, %v6553, %v6594
      %v6596 = vshrl.u32 %v6323, 16
      %v6598 = vrot.slane %v6596, 3
      %v6599 = vshll.u32 %v6323, 16
      %v6601 = vrot.slane %v6599, 4
      %v6602 = vor.u32 %v6598, %v6601
      %v6603 = vsel %vm1531, %v6561, %v6602
      %v6604 = vshrl.u32 %v6338, 16
      %v6606 = vrot.slane %v6604, 3
      %v6607 = vshll.u32 %v6338, 16
      %v6609 = vrot.slane %v6607, 4
      %v6610 = vor.u32 %v6606, %v6609
      %v6611 = vsel %vm1531, %v6569, %v6610
      %v6612 = vshrl.u32 %v6349, 16
      %v6614 = vrot.slane %v6612, 3
      %v6615 = vshll.u32 %v6349, 16
      %v6617 = vrot.slane %v6615, 4
      %v6618 = vor.u32 %v6614, %v6617
      %v6619 = vsel %vm1531, %v6577, %v6618
      %v6620 = vsel %vm1531, %v6586, %v4478
      %v6709 = vunpack.c.l.b16 %v6350
      %v6710 = vunpack.c.l.b16 %v6351
      %v6711 = vunpack.c.l.b16 %v6352
      %v6712 = vunpack.c.l.b16 %v6353
      %v6713 = vunpack.c.l.b16 %v6354
      %v6714 = vunpack.c.l.b16 %v6355
      %v6715 = vunpack.c.l.b16 %v6356
      %v6716 = vunpack.c.l.b16 %v6357
      %v6717 = vunpack.c.l.b16 %v6358
      %v6718 = vunpack.c.l.b16 %v6359
      %v6719 = vunpack.c.l.b16 %v6360
      %v6720 = vunpack.c.l.b16 %v6361
      %v6721 = vunpack.c.l.b16 %v6362
      %v6722 = vunpack.c.l.b16 %v6363
      %v6723 = vunpack.c.l.b16 %v6364
      %v6724 = vunpack.c.l.b16 %v6365
      %v6725 = vunpack.c.l.b16 %v6366
      %v6726 = vunpack.c.l.b16 %v6367
      %v6727 = vunpack.c.l.b16 %v6368
      %v6728 = vunpack.c.l.b16 %v6369
      %v6729 = vunpack.c.l.b16 %v6370
      %v6730 = vunpack.c.l.b16 %v6371
      %v6731 = vunpack.c.l.b16 %v6372
      %v6732 = vunpack.c.l.b16 %v6373
      %v6733 = vunpack.c.l.b16 %v6374
      %v6734 = vunpack.c.l.b16 %v6375
      %v6735 = vunpack.c.l.b16 %v6376
      %v6736 = vunpack.c.l.b16 %v6377
      %v6737 = vunpack.c.l.b16 %v6378
      %v6738 = vunpack.c.l.b16 %v6379
      %v6739 = vunpack.c.l.b16 %v6380
      %v6740 = vunpack.c.l.b16 %v6381
      %v6741 = vunpack.c.l.b16 %v6382
      %v6742 = vunpack.c.l.b16 %v6383
      %v6743 = vunpack.c.l.b16 %v6384
      %v6744 = vunpack.c.l.b16 %v6385
      %v6745 = vunpack.c.l.b16 %v6386
      %v6746 = vunpack.c.l.b16 %v6387
      %v6747 = vunpack.c.l.b16 %v6388
      %v6748 = vunpack.c.l.b16 %v6389
      %v6749 = vunpack.c.l.b16 %v6390
      %v6750 = vunpack.c.l.b16 %v6391
      %v6751 = vunpack.c.l.b16 %v6392
      %v6752 = vunpack.c.l.b16 %v6393
      %v6753 = vunpack.c.l.b16 %v6394
      %v6754 = vunpack.c.l.b16 %v6395
      %v6755 = vunpack.c.l.b16 %v6396
      %v6756 = vunpack.c.l.b16 %v6397
      %v6757 = vunpack.c.l.b16 %v6398
      %v6758 = vunpack.c.l.b16 %v6399
      %v6759 = vunpack.c.l.b16 %v6400
      %v6760 = vunpack.c.l.b16 %v6401
      %v6761 = vunpack.c.l.b16 %v6402
      %v6762 = vunpack.c.l.b16 %v6403
      %v6763 = vunpack.c.l.b16 %v6404
      %v6764 = vunpack.c.l.b16 %v6405
      %v6765 = vunpack.c.l.b16 %v6406
      %v6766 = vunpack.c.l.b16 %v6407
      %v6767 = vunpack.c.l.b16 %v6408
      %v6768 = vunpack.c.l.b16 %v6409
      %v6769 = vunpack.c.l.b16 %v6410
      %v6770 = vunpack.c.l.b16 %v6411
      %v6771 = vunpack.c.l.b16 %v6412
      %v6772 = vunpack.c.l.b16 %v6413
      %v6773 = vunpack.c.l.b16 %v6414
      %v6774 = vunpack.c.l.b16 %v6415
      %v6775 = vunpack.c.l.b16 %v6416
      %v6776 = vunpack.c.l.b16 %v6417
      %v6777 = vunpack.c.l.b16 %v6418
      %v6778 = vunpack.c.l.b16 %v6419
      %v6779 = vunpack.c.l.b16 %v6420
      %v6780 = vunpack.c.l.b16 %v6421
      %v6781 = vpack.c.b16 %v6710, %v6709
      %v6782 = vpack.c.b16 %v6712, %v6711
      %v6783 = vpack.c.b16 %v6714, %v6713
      %v6784 = vpack.c.b16 %v6716, %v6715
      %v6785 = vpack.c.b16 %v6718, %v6717
      %v6786 = vpack.c.b16 %v6720, %v6719
      %v6787 = vpack.c.b16 %v6722, %v6721
      %v6788 = vpack.c.b16 %v6724, %v6723
      %v6789 = vpack.c.b16 %v6726, %v6725
      %v6790 = vpack.c.b16 %v6728, %v6727
      %v6791 = vpack.c.b16 %v6730, %v6729
      %v6792 = vpack.c.b16 %v6732, %v6731
      %v6793 = vpack.c.b16 %v6734, %v6733
      %v6794 = vpack.c.b16 %v6736, %v6735
      %v6795 = vpack.c.b16 %v6738, %v6737
      %v6796 = vpack.c.b16 %v6740, %v6739
      %v6797 = vpack.c.b16 %v6742, %v6741
      %v6798 = vpack.c.b16 %v6744, %v6743
      %v6799 = vpack.c.b16 %v6746, %v6745
      %v6800 = vpack.c.b16 %v6748, %v6747
      %v6801 = vpack.c.b16 %v6750, %v6749
      %v6802 = vpack.c.b16 %v6752, %v6751
      %v6803 = vpack.c.b16 %v6754, %v6753
      %v6804 = vpack.c.b16 %v6756, %v6755
      %v6805 = vpack.c.b16 %v6758, %v6757
      %v6806 = vpack.c.b16 %v6760, %v6759
      %v6807 = vpack.c.b16 %v6762, %v6761
      %v6808 = vpack.c.b16 %v6764, %v6763
      %v6809 = vpack.c.b16 %v6766, %v6765
      %v6810 = vpack.c.b16 %v6768, %v6767
      %v6811 = vpack.c.b16 %v6770, %v6769
      %v6812 = vpack.c.b16 %v6772, %v6771
      %v6813 = vpack.c.b16 %v6774, %v6773
      %v6814 = vpack.c.b16 %v6776, %v6775
      %v6815 = vpack.c.b16 %v6778, %v6777
      %v6816 = vpack.c.b16 %v6780, %v6779
      %v6854 = vsel %vm3826, %v6505, 0
      %v6857 = vsel %vm3826, %v6546, 0
      %v6860 = vsel %vm3826, %v6587, 0
      %v6863 = vsel %vm3826, %v6620, 0
      %6865 = vmatprep.subr.bf16.mxu0 0
      %6866 = vmatpush1.bf16.msra.mxu0 %v6781
      %6867 = vmatprep.subr.bf16.mxu0 0
      %6868 = vmatpush1.bf16.msra.mxu0 %v6782
      %6869 = vmatprep.subr.bf16.mxu0 0
      %6870 = vmatpush1.bf16.msra.mxu0 %v6783
      %6871 = vmatprep.subr.bf16.mxu0 0
      %6872 = vmatpush1.bf16.msra.mxu0 %v6784
      %6873 = vmatprep.subr.bf16.mxu0 0
      %6874 = vmatpush1.bf16.msra.mxu0 %v6785
      %6875 = vmatprep.subr.bf16.mxu0 0
      %6876 = vmatpush1.bf16.msra.mxu0 %v6786
      %6877 = vmatprep.subr.bf16.mxu0 0
      %6878 = vmatpush1.bf16.msra.mxu0 %v6787
      %6879 = vmatprep.subr.bf16.mxu0 0
      %6880 = vmatpush1.bf16.msra.mxu0 %v6788
      %6881 = vmatprep.subr.bf16.mxu0 0
      %6882 = vmatpush1.bf16.msra.mxu0 %v6789
      %6883 = vmatprep.subr.bf16.mxu0 0
      %6884 = vmatpush1.bf16.msra.mxu0 %v6790
      %6885 = vmatprep.subr.bf16.mxu0 0
      %6886 = vmatpush1.bf16.msra.mxu0 %v6791
      %6887 = vmatprep.subr.bf16.mxu0 0
      %6888 = vmatpush1.bf16.msra.mxu0 %v6792
      %6889 = vmatprep.subr.bf16.mxu0 0
      %6890 = vmatpush1.bf16.msra.mxu0 %v6793
      %6891 = vmatprep.subr.bf16.mxu0 0
      %6892 = vmatpush1.bf16.msra.mxu0 %v6794
      %6893 = vmatprep.subr.bf16.mxu0 0
      %6894 = vmatpush1.bf16.msra.mxu0 %v6795
      %6895 = vmatprep.subr.bf16.mxu0 0
      %6896 = vmatpush1.bf16.msra.mxu0 %v6796
      %6897 = vmatprep.mubr.bf16.mxu0 %v6458
      %6898 = vmatmul.mubr.bf16.gmra.mrb[0].mxu0 %v6443
      %v6899 = vpop.f32.mrb[0].mxu0
      %v6900 = vadd.f32 %v6427, %v6899
      %v6901 = vpop.f32.mrb[0].mxu0
      %v6902 = vpop.f32.mrb[0].mxu0
      %v6903 = vadd.f32 %v6427, %v6902
      %v6904 = vpop.f32.mrb[0].mxu0
      %6905 = vmatprep.mubr.bf16.mxu0 %v6521
      %6906 = vmatmul.mubr.bf16.gmra.mrb[0].mxu0 %v6513
      %v6907 = vpop.f32.mrb[0].mxu0
      %v6908 = vadd.f32 %v6427, %v6907
      %v6909 = vpop.f32.mrb[0].mxu0
      %v6910 = vpop.f32.mrb[0].mxu0
      %v6911 = vadd.f32 %v6427, %v6910
      %v6912 = vpop.f32.mrb[0].mxu0
      %6913 = vmatprep.mubr.bf16.mxu0 %v6562
      %6914 = vmatmul.mubr.bf16.gmra.mrb[0].mxu0 %v6554
      %v6915 = vpop.f32.mrb[0].mxu0
      %v6916 = vadd.f32 %v6427, %v6915
      %v6917 = vpop.f32.mrb[0].mxu0
      %v6918 = vpop.f32.mrb[0].mxu0
      %v6919 = vadd.f32 %v6427, %v6918
      %v6920 = vpop.f32.mrb[0].mxu0
      %6921 = vmatprep.mubr.bf16.mxu0 %v6603
      %6922 = vmatmul.mubr.bf16.gmra.mrb[0].mxu0 %v6595
      %v6923 = vpop.f32.mrb[0].mxu0
      %v6924 = vadd.f32 %v6427, %v6923
      %v6925 = vpop.f32.mrb[0].mxu0
      %v6926 = vpop.f32.mrb[0].mxu0
      %v6927 = vadd.f32 %v6427, %v6926
      %v6928 = vpop.f32.mrb[0].mxu0
      %6929 = vdwg.mxu0
      %6930 = vmatprep.subr.bf16.mxu0 0
      %6931 = vmatpush1.bf16.msra.mxu0 %v6797
      %6932 = vmatprep.subr.bf16.mxu0 0
      %6933 = vmatpush1.bf16.msra.mxu0 %v6798
      %6934 = vmatprep.subr.bf16.mxu0 0
      %6935 = vmatpush1.bf16.msra.mxu0 %v6799
      %6936 = vmatprep.subr.bf16.mxu0 0
      %6937 = vmatpush1.bf16.msra.mxu0 %v6800
      %6938 = vmatprep.subr.bf16.mxu0 0
      %6939 = vmatpush1.bf16.msra.mxu0 %v6801
      %6940 = vmatprep.subr.bf16.mxu0 0
      %6941 = vmatpush1.bf16.msra.mxu0 %v6802
      %6942 = vmatprep.subr.bf16.mxu0 0
      %6943 = vmatpush1.bf16.msra.mxu0 %v6803
      %6944 = vmatprep.subr.bf16.mxu0 0
      %6945 = vmatpush1.bf16.msra.mxu0 %v6804
      %6946 = vmatprep.subr.bf16.mxu0 0
      %6947 = vmatpush1.bf16.msra.mxu0 %v6805
      %6948 = vmatprep.subr.bf16.mxu0 0
      %6949 = vmatpush1.bf16.msra.mxu0 %v6806
      %6950 = vmatprep.subr.bf16.mxu0 0
      %6951 = vmatpush1.bf16.msra.mxu0 %v6807
      %6952 = vmatprep.subr.bf16.mxu0 0
      %6953 = vmatpush1.bf16.msra.mxu0 %v6808
      %6954 = vmatprep.subr.bf16.mxu0 0
      %6955 = vmatpush1.bf16.msra.mxu0 %v6809
      %6956 = vmatprep.subr.bf16.mxu0 0
      %6957 = vmatpush1.bf16.msra.mxu0 %v6810
      %6958 = vmatprep.subr.bf16.mxu0 0
      %6959 = vmatpush1.bf16.msra.mxu0 %v6811
      %6960 = vmatprep.subr.bf16.mxu0 0
      %6961 = vmatpush1.bf16.msra.mxu0 %v6812
      %6962 = vmatprep.mubr.bf16.mxu0 %v6488
      %6963 = vmatmul.mubr.bf16.gmra.mrb[0].mxu0 %v6473
      %v6964 = vpop.f32.mrb[0].mxu0
      %v6965 = vadd.f32 %v6900, %v6964
      %v6966 = vpop.f32.mrb[0].mxu0
      %v6967 = vpop.f32.mrb[0].mxu0
      %v6968 = vadd.f32 %v6903, %v6967
      %v6969 = vpop.f32.mrb[0].mxu0
      %6970 = vmatprep.mubr.bf16.mxu0 %v6537
      %6971 = vmatmul.mubr.bf16.gmra.mrb[0].mxu0 %v6529
      %v6972 = vpop.f32.mrb[0].mxu0
      %v6973 = vadd.f32 %v6908, %v6972
      %v6974 = vpop.f32.mrb[0].mxu0
      %v6975 = vpop.f32.mrb[0].mxu0
      %v6976 = vadd.f32 %v6911, %v6975
      %v6977 = vpop.f32.mrb[0].mxu0
      %6978 = vmatprep.mubr.bf16.mxu0 %v6578
      %6979 = vmatmul.mubr.bf16.gmra.mrb[0].mxu0 %v6570
      %v6980 = vpop.f32.mrb[0].mxu0
      %v6981 = vadd.f32 %v6916, %v6980
      %v6982 = vpop.f32.mrb[0].mxu0
      %v6983 = vpop.f32.mrb[0].mxu0
      %v6984 = vadd.f32 %v6919, %v6983
      %v6985 = vpop.f32.mrb[0].mxu0
      %6986 = vmatprep.mubr.bf16.mxu0 %v6619
      %6987 = vmatmul.mubr.bf16.gmra.mrb[0].mxu0 %v6611
      %v6988 = vpop.f32.mrb[0].mxu0
      %v6989 = vadd.f32 %v6924, %v6988
      %v6990 = vpop.f32.mrb[0].mxu0
      %v6991 = vpop.f32.mrb[0].mxu0
      %v6992 = vadd.f32 %v6927, %v6991
      %v6993 = vpop.f32.mrb[0].mxu0
      %6994 = vdwg.mxu0
      %6995 = vmatprep.subr.bf16.mxu0 0
      %6996 = vmatpush1.bf16.msra.mxu0 %v6813
      %6997 = vmatprep.subr.bf16.mxu0 0
      %6998 = vmatpush1.bf16.msra.mxu0 %v6814
      %6999 = vmatprep.subr.bf16.mxu0 0
      %7000 = vmatpush1.bf16.msra.mxu0 %v6815
      %7001 = vmatprep.subr.bf16.mxu0 0
      %7002 = vmatpush1.bf16.msra.mxu0 %v6816
      %7003 = vmatprep.subr.bf16.mxu0 0
      %7004 = vmatpush1.bf16.msra.mxu0 0
      %7005 = vmatprep.subr.bf16.mxu0 0
      %7006 = vmatpush1.bf16.msra.mxu0 0
      %7007 = vmatprep.subr.bf16.mxu0 0
      %7008 = vmatpush1.bf16.msra.mxu0 0
      %7009 = vmatprep.subr.bf16.mxu0 0
      %7010 = vmatpush1.bf16.msra.mxu0 0
      %7011 = vmatprep.subr.bf16.mxu0 0
      %7012 = vmatpush1.bf16.msra.mxu0 0
      %7013 = vmatprep.subr.bf16.mxu0 0
      %7014 = vmatpush1.bf16.msra.mxu0 0
      %7015 = vmatprep.subr.bf16.mxu0 0
      %7016 = vmatpush1.bf16.msra.mxu0 0
      %7017 = vmatprep.subr.bf16.mxu0 0
      %7018 = vmatpush1.bf16.msra.mxu0 0
      %7019 = vmatprep.subr.bf16.mxu0 0
      %7020 = vmatpush1.bf16.msra.mxu0 0
      %7021 = vmatprep.subr.bf16.mxu0 0
      %7022 = vmatpush1.bf16.msra.mxu0 0
      %7023 = vmatprep.subr.bf16.mxu0 0
      %7024 = vmatpush1.bf16.msra.mxu0 0
      %7025 = vmatprep.subr.bf16.mxu0 0
      %7026 = vmatpush1.bf16.msra.mxu0 0
      %7027 = vmatprep.mubr.bf16.mxu0 0
      %7028 = vmatmul.mubr.bf16.gmra.mrb[0].mxu0 %v6854
      %v7029 = vpop.f32.mrb[0].mxu0
      %v7030 = vadd.f32 %v6965, %v7029
      %v7031 = vpop.f32.mrb[0].mxu0
      %v7032 = vpop.f32.mrb[0].mxu0
      %v7033 = vadd.f32 %v6968, %v7032
      %v7034 = vpop.f32.mrb[0].mxu0
      %7035 = vmatprep.mubr.bf16.mxu0 0
      %7036 = vmatmul.mubr.bf16.gmra.mrb[0].mxu0 %v6857
      %v7037 = vpop.f32.mrb[0].mxu0
      %v7038 = vadd.f32 %v6973, %v7037
      %v7039 = vpop.f32.mrb[0].mxu0
      %v7040 = vpop.f32.mrb[0].mxu0
      %v7041 = vadd.f32 %v6976, %v7040
      %v7042 = vpop.f32.mrb[0].mxu0
      %7043 = vmatprep.mubr.bf16.mxu0 0
      %7044 = vmatmul.mubr.bf16.gmra.mrb[0].mxu0 %v6860
      %v7045 = vpop.f32.mrb[0].mxu0
      %v7046 = vadd.f32 %v6981, %v7045
      %v7047 = vpop.f32.mrb[0].mxu0
      %v7048 = vpop.f32.mrb[0].mxu0
      %v7049 = vadd.f32 %v6984, %v7048
      %v7050 = vpop.f32.mrb[0].mxu0
      %7051 = vmatprep.mubr.bf16.mxu0 0
      %7052 = vmatmul.mubr.bf16.gmra.mrb[0].mxu0 %v6863
      %v7053 = vpop.f32.mrb[0].mxu0
      %v7054 = vadd.f32 %v6989, %v7053
      %v7055 = vpop.f32.mrb[0].mxu0
      %v7056 = vpop.f32.mrb[0].mxu0
      %v7057 = vadd.f32 %v6992, %v7056
      %v7058 = vpop.f32.mrb[0].mxu0
      %7059 = vdwg.mxu0
      %v7060 = vmax.f32 %v7030, 0.0
      %v7061 = vmax.f32 %v7033, 0.0
      %v7062 = vmax.f32 %v7038, 0.0
      %v7063 = vmax.f32 %v7041, 0.0
      %v7064 = vmax.f32 %v7046, 0.0
      %v7065 = vmax.f32 %v7049, 0.0
      %v7066 = vmax.f32 %v7054, 0.0
      %v7067 = vmax.f32 %v7057, 0.0
      %v7068 = vsel %vm3826, %v7060, 0.0
      %v7069 = vsel %vm3826, %v7061, 0.0
      %v7070 = vadd.f32 %v7068, %v7069
      %v7071 = vsel %vm3826, %v7062, 0.0
      %v7072 = vadd.f32 %v7070, %v7071
      %v7073 = vsel %vm3826, %v7063, 0.0
      %v7074 = vadd.f32 %v7072, %v7073
      %v7075 = vsel %vm3826, %v7064, 0.0
      %v7076 = vadd.f32 %v7074, %v7075
      %v7077 = vsel %vm3826, %v7065, 0.0
      %v7078 = vadd.f32 %v7076, %v7077
      %v7079 = vsel %vm3826, %v7066, 0.0
      %v7080 = vadd.f32 %v7078, %v7079
      %v7081 = vsel %vm3826, %v7067, 0.0
      %v7082 = vadd.f32 %v7080, %v7081
      %v7083 = vrot.slane %v7082, 4
      %v7084 = vadd.f32 %v7082, %v7083
      %v7085 = vrot.slane %v7084, 2
      %v7086 = vadd.f32 %v7084, %v7085
      %v7087 = vrot.slane %v7086, 1
      %v7088 = vadd.f32 %v7086, %v7087
      %v7089 = vmul.f32 %v7088, 0.015625
      %v7090 = vld [vmem:[%s9] sm:$0xff]
      %v7091 = vld [vmem:[%s9 + $0x8] sm:$0xff]
      %v7092 = vld [vmem:[%s9 + $0x10] sm:$0xff]
      %v7093 = vld [vmem:[%s9 + $0x18] sm:$0xff]
      %v7094 = vld [vmem:[%s9 + $0x20] sm:$0xff]
      %v7095 = vld [vmem:[%s9 + $0x28] sm:$0xff]
      %v7096 = vld [vmem:[%s9 + $0x30] sm:$0xff]
      %v7097 = vld [vmem:[%s9 + $0x38] sm:$0xff]
      %v7098 = vld [vmem:[%s10] sm:$0x1]
      %v7100 = vsel %vm3826, %v7089, 0
      %7102 = vmatprep.subr.mxu0 0.0
      %7103 = vmatpush1.msra.mxu0 %v7090
      %7104 = vmatprep.subr.mxu0 0.0
      %7105 = vmatpush1.msra.mxu0 %v7091
      %7106 = vmatprep.subr.mxu0 0.0
      %7107 = vmatpush1.msra.mxu0 %v7092
      %7108 = vmatprep.subr.mxu0 0.0
      %7109 = vmatpush1.msra.mxu0 %v7093
      %7110 = vmatprep.subr.mxu0 0.0
      %7111 = vmatpush1.msra.mxu0 %v7094
      %7112 = vmatprep.subr.mxu0 0.0
      %7113 = vmatpush1.msra.mxu0 %v7095
      %7114 = vmatprep.subr.mxu0 0.0
      %7115 = vmatpush1.msra.mxu0 %v7096
      %7116 = vmatprep.subr.mxu0 0.0
      %7117 = vmatpush1.msra.mxu0 %v7097
      %7118 = vmatprep.subr.mxu0 0.0
      %7119 = vmatpush1.msra.mxu0 0.0
      %7120 = vmatprep.subr.mxu0 0.0
      %7121 = vmatpush1.msra.mxu0 0.0
      %7122 = vmatprep.subr.mxu0 0.0
      %7123 = vmatpush1.msra.mxu0 0.0
      %7124 = vmatprep.subr.mxu0 0.0
      %7125 = vmatpush1.msra.mxu0 0.0
      %7126 = vmatprep.subr.mxu0 0.0
      %7127 = vmatpush1.msra.mxu0 0.0
      %7128 = vmatprep.subr.mxu0 0.0
      %7129 = vmatpush1.msra.mxu0 0.0
      %7130 = vmatprep.subr.mxu0 0.0
      %7131 = vmatpush1.msra.mxu0 0.0
      %7132 = vmatprep.subr.mxu0 0.0
      %7133 = vmatpush1.msra.mxu0 0.0
      %7134 = vmatprep.subr.mxu0 0.0
      %7135 = vmatpush1.msra.mxu0 0.0
      %7136 = vmatprep.subr.mxu0 0.0
      %7137 = vmatpush1.msra.mxu0 0.0
      %7138 = vmatprep.subr.mxu0 0.0
      %7139 = vmatpush1.msra.mxu0 0.0
      %7140 = vmatprep.subr.mxu0 0.0
      %7141 = vmatpush1.msra.mxu0 0.0
      %7142 = vmatprep.subr.mxu0 0.0
      %7143 = vmatpush1.msra.mxu0 0.0
      %7144 = vmatprep.subr.mxu0 0.0
      %7145 = vmatpush1.msra.mxu0 0.0
      %7146 = vmatprep.subr.mxu0 0.0
      %7147 = vmatpush1.msra.mxu0 0.0
      %7148 = vmatprep.subr.mxu0 0.0
      %7149 = vmatpush1.msra.mxu0 0.0
      %7150 = vmatprep.subr.mxu0 0.0
      %7151 = vmatpush1.msra.mxu0 0.0
      %7152 = vmatprep.subr.mxu0 0.0
      %7153 = vmatpush1.msra.mxu0 0.0
      %7154 = vmatprep.subr.mxu0 0.0
      %7155 = vmatpush1.msra.mxu0 0.0
      %7156 = vmatprep.subr.mxu0 0.0
      %7157 = vmatpush1.msra.mxu0 0.0
      %7158 = vmatprep.subr.mxu0 0.0
      %7159 = vmatpush1.msra.mxu0 0.0
      %7160 = vmatprep.subr.mxu0 0.0
      %7161 = vmatpush1.msra.mxu0 0.0
      %7162 = vmatprep.subr.mxu0 0.0
      %7163 = vmatpush1.msra.mxu0 0.0
      %7164 = vmatprep.subr.mxu0 0.0
      %7165 = vmatpush1.msra.mxu0 0.0
      %7166 = vmatprep.mubr.f32.mxu0 0.0
      %7167 = vmatmul.mubr.f32.gmra.mrb[0].mxu0 %v7100
      %v7168 = vpop.f32.mrb[0].mxu0
      %v7169 = vadd.f32 %v7098, %v7168
      %v7170 = vpop.f32.mrb[0].mxu0
      %7171 = vdwg.mxu0
      %vm7172 = vcmask 90112
      %7173 = vst.msk [vmem:[%s382] sm:$0x1] %vm7172, %v7169
      %p7174 = scmp.lt.s32.totalorder %s22, 1
      %s7175 = scalar_select %p7174, %s22, 1
      %s7176 = scalar_lea.vmem %s11, %s7175
      // Predicated region
      $region65: #{axis_aligned_conv_gaussian_forward.1} parent=63 // pred_check
        %p7177 = pneg %p276
      $region66: #{axis_aligned_conv_gaussian_forward.1} parent=63 // pred_check_branch
        %7179 = sbr.rel (%p7177) target = $region68
      $region67: #{axis_aligned_conv_gaussian_forward.1} parent=63 // pred_region
        _
      $region68: #{axis_aligned_conv_gaussian_forward.1} parent=63 // pred_fallthru
        _
    $region64: #{axis_aligned_conv_gaussian_forward.1} parent=5 // pred_fallthru
      _
    %p7180 = scmp.le.s32.totalorder 2, %s17
    // Predicated region
    $region69: #{axis_aligned_conv_gaussian_forward.1} parent=5 // pred_check
      %p7181 = pneg %p7180
    $region70: #{axis_aligned_conv_gaussian_forward.1} parent=5 // pred_check_branch
      %7183 = sbr.rel (%p7181) target = $region72
    $region71: #{axis_aligned_conv_gaussian_forward.1} parent=5 // pred_region
      %s7184 = ssub.s32 %s17, 2
      // Predicated region
      $region73: #{axis_aligned_conv_gaussian_forward.1} parent=71 // pred_check
        %p7185 = pneg %p282
      $region74: #{axis_aligned_conv_gaussian_forward.1} parent=71 // pred_check_branch
        %7187 = sbr.rel (%p7185) target = $region76
      $region75: #{axis_aligned_conv_gaussian_forward.1} parent=71 // pred_region
        %p7188 = scmp.lt.s32.totalorder %s23, 1
        %s7189 = scalar_select %p7188, %s23, 1
        %s7190 = scalar_lea.vmem %s11, %s7189
      $region76: #{axis_aligned_conv_gaussian_forward.1} parent=71 // pred_fallthru
        _
    $region72: #{axis_aligned_conv_gaussian_forward.1} parent=5 // pred_fallthru
      _
  $region6: #{axis_aligned_conv_gaussian_forward.1} parent=0 // loop_footer
    %s21 = sadd.s32 1, %s17
  $region7: #{axis_aligned_conv_gaussian_forward.1} parent=0 // loop_footer_branch
    %16 = sbr.rel target = $region3
  $region8: #{axis_aligned_conv_gaussian_forward.1} parent=0 // loop_exit
    _

</llo_original>
